<compile_context>
chip_gen: v5e
topology: v5e:2x2
jax: 0.10.0
libtpu: 0.0.40
codegen_flags: <defaults>
</compile_context>

<pallas_src>
import functools

import jax
import jax.numpy as jnp
from jax.experimental import pallas as pl
from jax.experimental.pallas import tpu as pltpu


LANE = 128                          # lane-dense channel padding
_VMEM_LIMIT = 32 * 1024 * 1024      # fits v5e / v6e / v7x scoped budgets


def _round_up(x, m):
    return ((x + m - 1) // m) * m


def _pick_tile(n, cap=512):
    for t in (cap, 256, 128):
        if t <= n and n % t == 0:
            return t
    return n


def _pad_last(x, target):
    pad = target - x.shape[-1]
    return x if pad == 0 else jnp.pad(x, [(0, 0)] * (x.ndim - 1) + [(0, pad)])


# ----------------------------- Pallas kernels ------------------------------

def _convt_bn_relu_kernel(a_ref, b_ref, gamma_ref, beta_ref, o_ref, *,
                          groups, eps):
    """Grouped ConvTranspose matmul with fused BatchNorm(train)+ReLU epilogue.

    a_ref: (G, M, tk) bf16, b_ref: (G, tk, Np) bf16, o_ref: (G, M, Np) f32
    accumulator kept resident across the K grid axis.
    """
    k = pl.program_id(0)

    @pl.when(k == 0)
    def _():
        o_ref[...] = jnp.zeros_like(o_ref)

    for g in range(groups):            # static unroll: all ref indices static
        o_ref[g] = o_ref[g] + jnp.dot(
            a_ref[g], b_ref[g], preferred_element_type=jnp.float32)

    @pl.when(k == pl.num_programs(0) - 1)
    def _():
        h = o_ref[...]                                    # (G, M, Np) f32
        cnt = h.shape[0] * h.shape[1]                     # == N*OH*OW
        s = jnp.sum(jnp.sum(h, axis=1, keepdims=True), axis=0, keepdims=True)
        ss = jnp.sum(jnp.sum(jnp.square(h), axis=1, keepdims=True),
                     axis=0, keepdims=True)
        mean = s / cnt
        var = ss / cnt - jnp.square(mean)                 # single-pass variance
        xhat = (h - mean) * jax.lax.rsqrt(var + eps)
        o_ref[...] = jnp.maximum(xhat * gamma_ref[...] + beta_ref[...], 0.0)


def convt_bn_relu(a, b, gamma, beta, *, eps=1e-5):
    """a: (G, M, K) bf16, b: (G, K, Np) bf16 -> (G, M, Np) f32 (BN+ReLU)."""
    # TODO(synk): for very large batch*spatial sizes, stream M-tiles with a
    # partial sum/sum^2 scratch instead of keeping the (G, M, Np) slab resident.
    G, M, K = a.shape
    Np = b.shape[-1]
    tk = _pick_tile(K)
    nk = K // tk
    flops = 2 * G * M * K * Np
    bytes_accessed = (a.size * a.dtype.itemsize + b.size * b.dtype.itemsize
                      + G * M * Np * 4)
    return pl.pallas_call(
        functools.partial(_convt_bn_relu_kernel, groups=G, eps=eps),
        out_shape=jax.ShapeDtypeStruct((G, M, Np), jnp.float32),
        grid=(nk,),
        in_specs=[
            pl.BlockSpec((G, M, tk), lambda k: (0, 0, k)),
            pl.BlockSpec((G, tk, Np), lambda k: (0, k, 0)),
            pl.BlockSpec((1, Np), lambda k: (0, 0)),
            pl.BlockSpec((1, Np), lambda k: (0, 0)),
        ],
        out_specs=pl.BlockSpec((G, M, Np), lambda k: (0, 0, 0)),
        compiler_params=pltpu.CompilerParams(
            dimension_semantics=("arbitrary",),
            vmem_limit_bytes=_VMEM_LIMIT),
        cost_estimate=pl.CostEstimate(flops=flops, transcendentals=Np,
                                      bytes_accessed=bytes_accessed),
    )(a, b, gamma, beta)


def _convt_tanh_kernel(a_ref, b_ref, o_ref):
    k = pl.program_id(2)

    @pl.when(k == 0)
    def _():
        o_ref[...] = jnp.zeros_like(o_ref)

    o_ref[0] = o_ref[0] + jnp.dot(a_ref[0], b_ref[0],
                                  preferred_element_type=jnp.float32)

    @pl.when(k == pl.num_programs(2) - 1)
    def _():
        o_ref[...] = jnp.tanh(o_ref[...])


def convt_tanh(a, b):
    """a: (G, M, K) bf16, b: (G, K, Np) bf16 -> tanh(a @ b), tiled over G/M/K."""
    G, M, K = a.shape
    Np = b.shape[-1]
    tm = _pick_tile(M)
    tk = _pick_tile(K)
    flops = 2 * G * M * K * Np
    bytes_accessed = (a.size * a.dtype.itemsize + b.size * b.dtype.itemsize
                      + G * M * Np * 4)
    return pl.pallas_call(
        _convt_tanh_kernel,
        out_shape=jax.ShapeDtypeStruct((G, M, Np), jnp.float32),
        grid=(G, M // tm, K // tk),
        in_specs=[
            pl.BlockSpec((1, tm, tk), lambda g, m, k: (g, m, k)),
            pl.BlockSpec((1, tk, Np), lambda g, m, k: (g, k, 0)),
        ],
        out_specs=pl.BlockSpec((1, tm, Np), lambda g, m, k: (g, m, 0)),
        compiler_params=pltpu.CompilerParams(
            dimension_semantics=("parallel", "parallel", "arbitrary"),
            vmem_limit_bytes=_VMEM_LIMIT),
        cost_estimate=pl.CostEstimate(flops=flops, transcendentals=G * M * Np,
                                      bytes_accessed=bytes_accessed),
    )(a, b)


# ----------------------- ConvTranspose2d operand glue -----------------------

def convt_1x1_operands(z, w, kpad, npad):
    """First layer: ConvTranspose2d(k=4, s=1, p=0) on a 1x1 spatial input.

    out[n, co, ky, kx] = sum_ci z[n, ci] * w[ci, co, ky, kx]
    -> G = 16 kernel positions, each a dense (N, Cin) @ (Cin, Cout) matmul.
    """
    N, Cin = z.shape
    _, Cout, kh, kw = w.shape
    a = jnp.broadcast_to(z[None], (kh * kw, N, Cin))
    b = jnp.transpose(w, (2, 3, 0, 1)).reshape(kh * kw, Cin, Cout)
    a = _pad_last(a, kpad).astype(jnp.bfloat16)
    b = jnp.pad(b, ((0, 0), (0, kpad - Cin),
                    (0, npad - Cout))).astype(jnp.bfloat16)
    return a, b


def convt_s2_operands(x, w, kpad, npad):
    """Stride-2 ConvTranspose2d(k=4, p=1) as 4 sub-pixel phases, each a dense
    2x2 effective kernel (no zero-dilated im2col).

    out[n, 2i+py, 2j+px, co] =
        sum_{a,b in {0,1}} sum_ci xpad[n, i+py+a, j+px+b, ci]
                                   * wflip[ci, co, py+2a, px+2b]
    """
    N, H, W, Cin = x.shape
    _, Cout, _, _ = w.shape
    xp = jnp.pad(x, ((0, 0), (1, 1), (1, 1), (0, 0)))
    wf = jnp.flip(w, axis=(2, 3))
    a_list, b_list = [], []
    for py in (0, 1):
        for px in (0, 1):
            cols = [xp[:, py + a:py + a + H, px + b:px + b + W, :]
                    for a in (0, 1) for b in (0, 1)]
            a_list.append(
                jnp.concatenate(cols, axis=-1).reshape(N * H * W, 4 * Cin))
            sub = wf[:, :, py::2, px::2]                  # (Cin, Cout, 2, 2)
            b_list.append(
                jnp.transpose(sub, (2, 3, 0, 1)).reshape(4 * Cin, Cout))
    a = jnp.stack(a_list)                                 # (4, N*H*W, 4*Cin)
    b = jnp.stack(b_list)                                 # (4, 4*Cin, Cout)
    a = _pad_last(a, kpad).astype(jnp.bfloat16)
    b = jnp.pad(b, ((0, 0), (0, kpad - 4 * Cin),
                    (0, npad - Cout))).astype(jnp.bfloat16)
    return a, b


# ------------------------------- Generator ---------------------------------

def build_generator_params(key, latent_dim, gen_features, image_size):
    gf = gen_features
    ks = jax.random.split(key, 8)

    def w(k, cin, cout):
        return jax.random.normal(k, (cin, cout, 4, 4), jnp.float32) * 0.02

    layers = [
        dict(w=w(ks[0], latent_dim, gf * 8), s=1, p=0, bn=True),
        dict(w=w(ks[1], gf * 8, gf * 4), s=2, p=1, bn=True),
        dict(w=w(ks[2], gf * 4, gf * 2), s=2, p=1, bn=True),
    ]
    if image_size > 32:
        layers += [dict(w=w(ks[3], gf * 2, gf), s=2, p=1, bn=True),
                   dict(w=w(ks[4], gf, 1), s=2, p=1, bn=False)]
    else:
        layers += [dict(w=w(ks[3], gf * 2, 1), s=2, p=1, bn=False)]
    for L in layers:
        if L["bn"]:
            c = L["w"].shape[1]
            L["gamma"] = jnp.ones((c,), jnp.float32)
            L["beta"] = jnp.zeros((c,), jnp.float32)
    return layers


def generator_forward(z_nchw, layers):
    """z: (N, latent_dim, 1, 1) -> (N, 1, image_size, image_size) in [-1, 1]."""
    N = z_nchw.shape[0]
    x = jnp.transpose(z_nchw, (0, 2, 3, 1)).astype(jnp.float32)   # NHWC
    for L in layers:
        w = L["w"]
        Cin, Cout = int(w.shape[0]), int(w.shape[1])
        npad = _round_up(Cout, LANE)
        if L["s"] == 1:                                   # first layer, 1x1 input
            kpad = _round_up(Cin, LANE)
            a, b = convt_1x1_operands(x.reshape(N, Cin), w, kpad, npad)
        else:
            kpad = _round_up(4 * Cin, LANE)
            a, b = convt_s2_operands(x, w, kpad, npad)

        if L["bn"]:
            gamma = jnp.pad(L["gamma"], (0, npad - Cout)).reshape(1, npad)
            beta = jnp.pad(L["beta"], (0, npad - Cout)).reshape(1, npad)
            h = convt_bn_relu(a, b, gamma, beta)          # (G, M, npad) f32
        else:
            h = convt_tanh(a, b)                          # (G, M, npad) f32
        h = h[:, :, :Cout]                                # drop lane padding

        if L["s"] == 1:                                   # groups = (ky, kx)
            x = h.reshape(4, 4, N, Cout).transpose(2, 0, 1, 3)      # (N,4,4,C)
        else:                                             # groups = (py, px)
            H, W = x.shape[1], x.shape[2]
            x = h.reshape(2, 2, N, H, W, Cout).transpose(2, 3, 0, 4, 1, 5)
            x = x.reshape(N, 2 * H, 2 * W, Cout)
    return jnp.transpose(x, (0, 3, 1, 2))                 # back to NCHW


# ------------------------- pure-JAX reference check -------------------------

def reference_forward(z_nchw, layers, eps=1e-5):
    x = jnp.transpose(z_nchw, (0, 2, 3, 1)).astype(jnp.float32)
    for L in layers:
        w = L["w"]
        k = w.shape[2]
        pad = k - 1 - L["p"]
        rhs = jnp.transpose(jnp.flip(w, axis=(2, 3)), (2, 3, 0, 1))  # HWIO
        x = jax.lax.conv_general_dilated(
            x, rhs, window_strides=(1, 1),
            padding=[(pad, pad), (pad, pad)],
            lhs_dilation=(L["s"], L["s"]),
            dimension_numbers=("NHWC", "HWIO", "NHWC"),
            precision=jax.lax.Precision.HIGHEST)
        if L["bn"]:
            mean = jnp.mean(x, axis=(0, 1, 2), keepdims=True)
            var = jnp.mean(jnp.square(x - mean), axis=(0, 1, 2), keepdims=True)
            x = (x - mean) * jax.lax.rsqrt(var + eps)
            x = jnp.maximum(x * L["gamma"] + L["beta"], 0.0)
        else:
            x = jnp.tanh(x)
    return jnp.transpose(x, (0, 3, 1, 2))


# ---------------------------------- main ------------------------------------

if __name__ == "__main__":
    latent_dim = 16
    gen_features = 8
    image_size = 32       # <=32 branch: 4 ConvTranspose layers, 1x1 -> 32x32
    batch = 2

    key = jax.random.PRNGKey(0)
    kz, kp = jax.random.split(key)
    layers = build_generator_params(kp, latent_dim, gen_features, image_size)
    z = jax.random.normal(kz, (batch, latent_dim, 1, 1), jnp.float32)

    fwd = jax.jit(lambda zz: generator_forward(zz, layers))
    out = jax.block_until_ready(fwd(z))

    assert out.shape == (batch, 1, image_size, image_size), out.shape
    assert bool(jnp.all(jnp.isfinite(out)))
    assert float(jnp.max(jnp.abs(out))) <= 1.0 + 1e-6     # tanh range

    ref = jax.block_until_ready(reference_forward(z, layers))
    err = float(jnp.max(jnp.abs(out - ref)))
    assert err < 6e-2, f"max abs error vs reference: {err}"

    print("KERNEL_OK")
</pallas_src>

<mosaic_0001>
module attributes {stable_mosaic.version = 11 : i64} {
  func.func @_convt_bn_relu_kernel(%arg0: i32, %arg1: memref<16x2x128xbf16, #tpu.memory_space<vmem>>, %arg2: memref<16x128x128xbf16, #tpu.memory_space<vmem>>, %arg3: memref<1x128xf32, #tpu.memory_space<vmem>>, %arg4: memref<1x128xf32, #tpu.memory_space<vmem>>, %arg5: memref<16x2x128xf32, #tpu.memory_space<vmem>>) attributes {dimension_semantics = [#tpu.dimension_semantics<arbitrary>], iteration_bounds = array<i64: 1>, scalar_prefetch = 0 : i64, scratch_operands = 0 : i64, tpu.core_type = #tpu.core_type<tc>, window_params = [{transform_indices = @transform_0, window_bounds = array<i64: 16, 2, 128>}, {transform_indices = @transform_1, window_bounds = array<i64: 16, 128, 128>}, {pipeline_mode = #tpu.pipeline_mode<synchronous>, transform_indices = @transform_2, window_bounds = array<i64: 1, 128>}, {pipeline_mode = #tpu.pipeline_mode<synchronous>, transform_indices = @transform_3, window_bounds = array<i64: 1, 128>}, {pipeline_mode = #tpu.pipeline_mode<synchronous>, transform_indices = @transform_4, window_bounds = array<i64: 16, 2, 128>}]} {
    %c0_i32 = arith.constant 0 : i32
    %0 = arith.cmpi eq, %arg0, %c0_i32 : i32
    %1 = arith.extui %0 : i1 to i32
    %c0_i32_0 = arith.constant 0 : i32
    %2 = arith.cmpi ne, %1, %c0_i32_0 : i32
    scf.if %2 {
      %cst_194 = arith.constant 0.000000e+00 : f32
      %182 = vector.broadcast %cst_194 : f32 to vector<16x2x128xf32>
      %c0_195 = arith.constant 0 : index
      %c0_196 = arith.constant 0 : index
      %c0_197 = arith.constant 0 : index
      %183 = vector.load %arg5[%c0_195, %c0_196, %c0_197] : memref<16x2x128xf32, #tpu.memory_space<vmem>>, vector<16x2x128xf32>
      tpu.vector_store %arg5[%c0_195, %c0_196, %c0_197], %182 {strides = array<i32>} : memref<16x2x128xf32, #tpu.memory_space<vmem>>, vector<16x2x128xf32>,
    } else {
    }
    %c0 = arith.constant 0 : index
    %c0_1 = arith.constant 0 : index
    %c0_2 = arith.constant 0 : index
    %3 = vector.load %arg5[%c0, %c0_1, %c0_2] : memref<16x2x128xf32, #tpu.memory_space<vmem>>, vector<1x2x128xf32>
    %4 = vector.shape_cast %3 : vector<1x2x128xf32> to vector<2x128xf32>
    %c0_3 = arith.constant 0 : index
    %c0_4 = arith.constant 0 : index
    %c0_5 = arith.constant 0 : index
    %5 = vector.load %arg1[%c0_3, %c0_4, %c0_5] : memref<16x2x128xbf16, #tpu.memory_space<vmem>>, vector<1x2x128xbf16>
    %6 = vector.shape_cast %5 : vector<1x2x128xbf16> to vector<2x128xbf16>
    %c0_6 = arith.constant 0 : index
    %c0_7 = arith.constant 0 : index
    %c0_8 = arith.constant 0 : index
    %7 = vector.load %arg2[%c0_6, %c0_7, %c0_8] : memref<16x128x128xbf16, #tpu.memory_space<vmem>>, vector<1x128x128xbf16>
    %8 = vector.shape_cast %7 : vector<1x128x128xbf16> to vector<128x128xbf16>
    %cst = arith.constant dense<0.000000e+00> : vector<2x128xf32>
    %9 = tpu.matmul %6, %8, %cst {dimension_numbers = #tpu.dot_dimension_numbers<[1], [0], [0], [1], [0, 0, 1, 1], [], []>} : vector<2x128xbf16>, vector<128x128xbf16>, vector<2x128xf32> -> vector<2x128xf32>
    %10 = arith.addf %4, %9 : vector<2x128xf32>
    %c0_9 = arith.constant 0 : index
    %c0_10 = arith.constant 0 : index
    %c0_11 = arith.constant 0 : index
    %11 = vector.load %arg5[%c0_9, %c0_10, %c0_11] : memref<16x2x128xf32, #tpu.memory_space<vmem>>, vector<1x2x128xf32>
    %12 = vector.shape_cast %11 : vector<1x2x128xf32> to vector<2x128xf32>
    %13 = vector.shape_cast %10 : vector<2x128xf32> to vector<1x2x128xf32>
    tpu.vector_store %arg5[%c0_9, %c0_10, %c0_11], %13 {strides = array<i32>} : memref<16x2x128xf32, #tpu.memory_space<vmem>>, vector<1x2x128xf32>,
    %c1 = arith.constant 1 : index
    %c0_12 = arith.constant 0 : index
    %c0_13 = arith.constant 0 : index
    %14 = vector.load %arg5[%c1, %c0_12, %c0_13] : memref<16x2x128xf32, #tpu.memory_space<vmem>>, vector<1x2x128xf32>
    %15 = vector.shape_cast %14 : vector<1x2x128xf32> to vector<2x128xf32>
    %c1_14 = arith.constant 1 : index
    %c0_15 = arith.constant 0 : index
    %c0_16 = arith.constant 0 : index
    %16 = vector.load %arg1[%c1_14, %c0_15, %c0_16] : memref<16x2x128xbf16, #tpu.memory_space<vmem>>, vector<1x2x128xbf16>
    %17 = vector.shape_cast %16 : vector<1x2x128xbf16> to vector<2x128xbf16>
    %c1_17 = arith.constant 1 : index
    %c0_18 = arith.constant 0 : index
    %c0_19 = arith.constant 0 : index
    %18 = vector.load %arg2[%c1_17, %c0_18, %c0_19] : memref<16x128x128xbf16, #tpu.memory_space<vmem>>, vector<1x128x128xbf16>
    %19 = vector.shape_cast %18 : vector<1x128x128xbf16> to vector<128x128xbf16>
    %cst_20 = arith.constant dense<0.000000e+00> : vector<2x128xf32>
    %20 = tpu.matmul %17, %19, %cst_20 {dimension_numbers = #tpu.dot_dimension_numbers<[1], [0], [0], [1], [0, 0, 1, 1], [], []>} : vector<2x128xbf16>, vector<128x128xbf16>, vector<2x128xf32> -> vector<2x128xf32>
    %21 = arith.addf %15, %20 : vector<2x128xf32>
    %c1_21 = arith.constant 1 : index
    %c0_22 = arith.constant 0 : index
    %c0_23 = arith.constant 0 : index
    %22 = vector.load %arg5[%c1_21, %c0_22, %c0_23] : memref<16x2x128xf32, #tpu.memory_space<vmem>>, vector<1x2x128xf32>
    %23 = vector.shape_cast %22 : vector<1x2x128xf32> to vector<2x128xf32>
    %24 = vector.shape_cast %21 : vector<2x128xf32> to vector<1x2x128xf32>
    tpu.vector_store %arg5[%c1_21, %c0_22, %c0_23], %24 {strides = array<i32>} : memref<16x2x128xf32, #tpu.memory_space<vmem>>, vector<1x2x128xf32>,
    %c2 = arith.constant 2 : index
    %c0_24 = arith.constant 0 : index
    %c0_25 = arith.constant 0 : index
    %25 = vector.load %arg5[%c2, %c0_24, %c0_25] : memref<16x2x128xf32, #tpu.memory_space<vmem>>, vector<1x2x128xf32>
    %26 = vector.shape_cast %25 : vector<1x2x128xf32> to vector<2x128xf32>
    %c2_26 = arith.constant 2 : index
    %c0_27 = arith.constant 0 : index
    %c0_28 = arith.constant 0 : index
    %27 = vector.load %arg1[%c2_26, %c0_27, %c0_28] : memref<16x2x128xbf16, #tpu.memory_space<vmem>>, vector<1x2x128xbf16>
    %28 = vector.shape_cast %27 : vector<1x2x128xbf16> to vector<2x128xbf16>
    %c2_29 = arith.constant 2 : index
    %c0_30 = arith.constant 0 : index
    %c0_31 = arith.constant 0 : index
    %29 = vector.load %arg2[%c2_29, %c0_30, %c0_31] : memref<16x128x128xbf16, #tpu.memory_space<vmem>>, vector<1x128x128xbf16>
    %30 = vector.shape_cast %29 : vector<1x128x128xbf16> to vector<128x128xbf16>
    %cst_32 = arith.constant dense<0.000000e+00> : vector<2x128xf32>
    %31 = tpu.matmul %28, %30, %cst_32 {dimension_numbers = #tpu.dot_dimension_numbers<[1], [0], [0], [1], [0, 0, 1, 1], [], []>} : vector<2x128xbf16>, vector<128x128xbf16>, vector<2x128xf32> -> vector<2x128xf32>
    %32 = arith.addf %26, %31 : vector<2x128xf32>
    %c2_33 = arith.constant 2 : index
    %c0_34 = arith.constant 0 : index
    %c0_35 = arith.constant 0 : index
    %33 = vector.load %arg5[%c2_33, %c0_34, %c0_35] : memref<16x2x128xf32, #tpu.memory_space<vmem>>, vector<1x2x128xf32>
    %34 = vector.shape_cast %33 : vector<1x2x128xf32> to vector<2x128xf32>
    %35 = vector.shape_cast %32 : vector<2x128xf32> to vector<1x2x128xf32>
    tpu.vector_store %arg5[%c2_33, %c0_34, %c0_35], %35 {strides = array<i32>} : memref<16x2x128xf32, #tpu.memory_space<vmem>>, vector<1x2x128xf32>,
    %c3 = arith.constant 3 : index
    %c0_36 = arith.constant 0 : index
    %c0_37 = arith.constant 0 : index
    %36 = vector.load %arg5[%c3, %c0_36, %c0_37] : memref<16x2x128xf32, #tpu.memory_space<vmem>>, vector<1x2x128xf32>
    %37 = vector.shape_cast %36 : vector<1x2x128xf32> to vector<2x128xf32>
    %c3_38 = arith.constant 3 : index
    %c0_39 = arith.constant 0 : index
    %c0_40 = arith.constant 0 : index
    %38 = vector.load %arg1[%c3_38, %c0_39, %c0_40] : memref<16x2x128xbf16, #tpu.memory_space<vmem>>, vector<1x2x128xbf16>
    %39 = vector.shape_cast %38 : vector<1x2x128xbf16> to vector<2x128xbf16>
    %c3_41 = arith.constant 3 : index
    %c0_42 = arith.constant 0 : index
    %c0_43 = arith.constant 0 : index
    %40 = vector.load %arg2[%c3_41, %c0_42, %c0_43] : memref<16x128x128xbf16, #tpu.memory_space<vmem>>, vector<1x128x128xbf16>
    %41 = vector.shape_cast %40 : vector<1x128x128xbf16> to vector<128x128xbf16>
    %cst_44 = arith.constant dense<0.000000e+00> : vector<2x128xf32>
    %42 = tpu.matmul %39, %41, %cst_44 {dimension_numbers = #tpu.dot_dimension_numbers<[1], [0], [0], [1], [0, 0, 1, 1], [], []>} : vector<2x128xbf16>, vector<128x128xbf16>, vector<2x128xf32> -> vector<2x128xf32>
    %43 = arith.addf %37, %42 : vector<2x128xf32>
    %c3_45 = arith.constant 3 : index
    %c0_46 = arith.constant 0 : index
    %c0_47 = arith.constant 0 : index
    %44 = vector.load %arg5[%c3_45, %c0_46, %c0_47] : memref<16x2x128xf32, #tpu.memory_space<vmem>>, vector<1x2x128xf32>
    %45 = vector.shape_cast %44 : vector<1x2x128xf32> to vector<2x128xf32>
    %46 = vector.shape_cast %43 : vector<2x128xf32> to vector<1x2x128xf32>
    tpu.vector_store %arg5[%c3_45, %c0_46, %c0_47], %46 {strides = array<i32>} : memref<16x2x128xf32, #tpu.memory_space<vmem>>, vector<1x2x128xf32>,
    %c4 = arith.constant 4 : index
    %c0_48 = arith.constant 0 : index
    %c0_49 = arith.constant 0 : index
    %47 = vector.load %arg5[%c4, %c0_48, %c0_49] : memref<16x2x128xf32, #tpu.memory_space<vmem>>, vector<1x2x128xf32>
    %48 = vector.shape_cast %47 : vector<1x2x128xf32> to vector<2x128xf32>
    %c4_50 = arith.constant 4 : index
    %c0_51 = arith.constant 0 : index
    %c0_52 = arith.constant 0 : index
    %49 = vector.load %arg1[%c4_50, %c0_51, %c0_52] : memref<16x2x128xbf16, #tpu.memory_space<vmem>>, vector<1x2x128xbf16>
    %50 = vector.shape_cast %49 : vector<1x2x128xbf16> to vector<2x128xbf16>
    %c4_53 = arith.constant 4 : index
    %c0_54 = arith.constant 0 : index
    %c0_55 = arith.constant 0 : index
    %51 = vector.load %arg2[%c4_53, %c0_54, %c0_55] : memref<16x128x128xbf16, #tpu.memory_space<vmem>>, vector<1x128x128xbf16>
    %52 = vector.shape_cast %51 : vector<1x128x128xbf16> to vector<128x128xbf16>
    %cst_56 = arith.constant dense<0.000000e+00> : vector<2x128xf32>
    %53 = tpu.matmul %50, %52, %cst_56 {dimension_numbers = #tpu.dot_dimension_numbers<[1], [0], [0], [1], [0, 0, 1, 1], [], []>} : vector<2x128xbf16>, vector<128x128xbf16>, vector<2x128xf32> -> vector<2x128xf32>
    %54 = arith.addf %48, %53 : vector<2x128xf32>
    %c4_57 = arith.constant 4 : index
    %c0_58 = arith.constant 0 : index
    %c0_59 = arith.constant 0 : index
    %55 = vector.load %arg5[%c4_57, %c0_58, %c0_59] : memref<16x2x128xf32, #tpu.memory_space<vmem>>, vector<1x2x128xf32>
    %56 = vector.shape_cast %55 : vector<1x2x128xf32> to vector<2x128xf32>
    %57 = vector.shape_cast %54 : vector<2x128xf32> to vector<1x2x128xf32>
    tpu.vector_store %arg5[%c4_57, %c0_58, %c0_59], %57 {strides = array<i32>} : memref<16x2x128xf32, #tpu.memory_space<vmem>>, vector<1x2x128xf32>,
    %c5 = arith.constant 5 : index
    %c0_60 = arith.constant 0 : index
    %c0_61 = arith.constant 0 : index
    %58 = vector.load %arg5[%c5, %c0_60, %c0_61] : memref<16x2x128xf32, #tpu.memory_space<vmem>>, vector<1x2x128xf32>
    %59 = vector.shape_cast %58 : vector<1x2x128xf32> to vector<2x128xf32>
    %c5_62 = arith.constant 5 : index
    %c0_63 = arith.constant 0 : index
    %c0_64 = arith.constant 0 : index
    %60 = vector.load %arg1[%c5_62, %c0_63, %c0_64] : memref<16x2x128xbf16, #tpu.memory_space<vmem>>, vector<1x2x128xbf16>
    %61 = vector.shape_cast %60 : vector<1x2x128xbf16> to vector<2x128xbf16>
    %c5_65 = arith.constant 5 : index
    %c0_66 = arith.constant 0 : index
    %c0_67 = arith.constant 0 : index
    %62 = vector.load %arg2[%c5_65, %c0_66, %c0_67] : memref<16x128x128xbf16, #tpu.memory_space<vmem>>, vector<1x128x128xbf16>
    %63 = vector.shape_cast %62 : vector<1x128x128xbf16> to vector<128x128xbf16>
    %cst_68 = arith.constant dense<0.000000e+00> : vector<2x128xf32>
    %64 = tpu.matmul %61, %63, %cst_68 {dimension_numbers = #tpu.dot_dimension_numbers<[1], [0], [0], [1], [0, 0, 1, 1], [], []>} : vector<2x128xbf16>, vector<128x128xbf16>, vector<2x128xf32> -> vector<2x128xf32>
    %65 = arith.addf %59, %64 : vector<2x128xf32>
    %c5_69 = arith.constant 5 : index
    %c0_70 = arith.constant 0 : index
    %c0_71 = arith.constant 0 : index
    %66 = vector.load %arg5[%c5_69, %c0_70, %c0_71] : memref<16x2x128xf32, #tpu.memory_space<vmem>>, vector<1x2x128xf32>
    %67 = vector.shape_cast %66 : vector<1x2x128xf32> to vector<2x128xf32>
    %68 = vector.shape_cast %65 : vector<2x128xf32> to vector<1x2x128xf32>
    tpu.vector_store %arg5[%c5_69, %c0_70, %c0_71], %68 {strides = array<i32>} : memref<16x2x128xf32, #tpu.memory_space<vmem>>, vector<1x2x128xf32>,
    %c6 = arith.constant 6 : index
    %c0_72 = arith.constant 0 : index
    %c0_73 = arith.constant 0 : index
    %69 = vector.load %arg5[%c6, %c0_72, %c0_73] : memref<16x2x128xf32, #tpu.memory_space<vmem>>, vector<1x2x128xf32>
    %70 = vector.shape_cast %69 : vector<1x2x128xf32> to vector<2x128xf32>
    %c6_74 = arith.constant 6 : index
    %c0_75 = arith.constant 0 : index
    %c0_76 = arith.constant 0 : index
    %71 = vector.load %arg1[%c6_74, %c0_75, %c0_76] : memref<16x2x128xbf16, #tpu.memory_space<vmem>>, vector<1x2x128xbf16>
    %72 = vector.shape_cast %71 : vector<1x2x128xbf16> to vector<2x128xbf16>
    %c6_77 = arith.constant 6 : index
    %c0_78 = arith.constant 0 : index
    %c0_79 = arith.constant 0 : index
    %73 = vector.load %arg2[%c6_77, %c0_78, %c0_79] : memref<16x128x128xbf16, #tpu.memory_space<vmem>>, vector<1x128x128xbf16>
    %74 = vector.shape_cast %73 : vector<1x128x128xbf16> to vector<128x128xbf16>
    %cst_80 = arith.constant dense<0.000000e+00> : vector<2x128xf32>
    %75 = tpu.matmul %72, %74, %cst_80 {dimension_numbers = #tpu.dot_dimension_numbers<[1], [0], [0], [1], [0, 0, 1, 1], [], []>} : vector<2x128xbf16>, vector<128x128xbf16>, vector<2x128xf32> -> vector<2x128xf32>
    %76 = arith.addf %70, %75 : vector<2x128xf32>
    %c6_81 = arith.constant 6 : index
    %c0_82 = arith.constant 0 : index
    %c0_83 = arith.constant 0 : index
    %77 = vector.load %arg5[%c6_81, %c0_82, %c0_83] : memref<16x2x128xf32, #tpu.memory_space<vmem>>, vector<1x2x128xf32>
    %78 = vector.shape_cast %77 : vector<1x2x128xf32> to vector<2x128xf32>
    %79 = vector.shape_cast %76 : vector<2x128xf32> to vector<1x2x128xf32>
    tpu.vector_store %arg5[%c6_81, %c0_82, %c0_83], %79 {strides = array<i32>} : memref<16x2x128xf32, #tpu.memory_space<vmem>>, vector<1x2x128xf32>,
    %c7 = arith.constant 7 : index
    %c0_84 = arith.constant 0 : index
    %c0_85 = arith.constant 0 : index
    %80 = vector.load %arg5[%c7, %c0_84, %c0_85] : memref<16x2x128xf32, #tpu.memory_space<vmem>>, vector<1x2x128xf32>
    %81 = vector.shape_cast %80 : vector<1x2x128xf32> to vector<2x128xf32>
    %c7_86 = arith.constant 7 : index
    %c0_87 = arith.constant 0 : index
    %c0_88 = arith.constant 0 : index
    %82 = vector.load %arg1[%c7_86, %c0_87, %c0_88] : memref<16x2x128xbf16, #tpu.memory_space<vmem>>, vector<1x2x128xbf16>
    %83 = vector.shape_cast %82 : vector<1x2x128xbf16> to vector<2x128xbf16>
    %c7_89 = arith.constant 7 : index
    %c0_90 = arith.constant 0 : index
    %c0_91 = arith.constant 0 : index
    %84 = vector.load %arg2[%c7_89, %c0_90, %c0_91] : memref<16x128x128xbf16, #tpu.memory_space<vmem>>, vector<1x128x128xbf16>
    %85 = vector.shape_cast %84 : vector<1x128x128xbf16> to vector<128x128xbf16>
    %cst_92 = arith.constant dense<0.000000e+00> : vector<2x128xf32>
    %86 = tpu.matmul %83, %85, %cst_92 {dimension_numbers = #tpu.dot_dimension_numbers<[1], [0], [0], [1], [0, 0, 1, 1], [], []>} : vector<2x128xbf16>, vector<128x128xbf16>, vector<2x128xf32> -> vector<2x128xf32>
    %87 = arith.addf %81, %86 : vector<2x128xf32>
    %c7_93 = arith.constant 7 : index
    %c0_94 = arith.constant 0 : index
    %c0_95 = arith.constant 0 : index
    %88 = vector.load %arg5[%c7_93, %c0_94, %c0_95] : memref<16x2x128xf32, #tpu.memory_space<vmem>>, vector<1x2x128xf32>
    %89 = vector.shape_cast %88 : vector<1x2x128xf32> to vector<2x128xf32>
    %90 = vector.shape_cast %87 : vector<2x128xf32> to vector<1x2x128xf32>
    tpu.vector_store %arg5[%c7_93, %c0_94, %c0_95], %90 {strides = array<i32>} : memref<16x2x128xf32, #tpu.memory_space<vmem>>, vector<1x2x128xf32>,
    %c8 = arith.constant 8 : index
    %c0_96 = arith.constant 0 : index
    %c0_97 = arith.constant 0 : index
    %91 = vector.load %arg5[%c8, %c0_96, %c0_97] : memref<16x2x128xf32, #tpu.memory_space<vmem>>, vector<1x2x128xf32>
    %92 = vector.shape_cast %91 : vector<1x2x128xf32> to vector<2x128xf32>
    %c8_98 = arith.constant 8 : index
    %c0_99 = arith.constant 0 : index
    %c0_100 = arith.constant 0 : index
    %93 = vector.load %arg1[%c8_98, %c0_99, %c0_100] : memref<16x2x128xbf16, #tpu.memory_space<vmem>>, vector<1x2x128xbf16>
    %94 = vector.shape_cast %93 : vector<1x2x128xbf16> to vector<2x128xbf16>
    %c8_101 = arith.constant 8 : index
    %c0_102 = arith.constant 0 : index
    %c0_103 = arith.constant 0 : index
    %95 = vector.load %arg2[%c8_101, %c0_102, %c0_103] : memref<16x128x128xbf16, #tpu.memory_space<vmem>>, vector<1x128x128xbf16>
    %96 = vector.shape_cast %95 : vector<1x128x128xbf16> to vector<128x128xbf16>
    %cst_104 = arith.constant dense<0.000000e+00> : vector<2x128xf32>
    %97 = tpu.matmul %94, %96, %cst_104 {dimension_numbers = #tpu.dot_dimension_numbers<[1], [0], [0], [1], [0, 0, 1, 1], [], []>} : vector<2x128xbf16>, vector<128x128xbf16>, vector<2x128xf32> -> vector<2x128xf32>
    %98 = arith.addf %92, %97 : vector<2x128xf32>
    %c8_105 = arith.constant 8 : index
    %c0_106 = arith.constant 0 : index
    %c0_107 = arith.constant 0 : index
    %99 = vector.load %arg5[%c8_105, %c0_106, %c0_107] : memref<16x2x128xf32, #tpu.memory_space<vmem>>, vector<1x2x128xf32>
    %100 = vector.shape_cast %99 : vector<1x2x128xf32> to vector<2x128xf32>
    %101 = vector.shape_cast %98 : vector<2x128xf32> to vector<1x2x128xf32>
    tpu.vector_store %arg5[%c8_105, %c0_106, %c0_107], %101 {strides = array<i32>} : memref<16x2x128xf32, #tpu.memory_space<vmem>>, vector<1x2x128xf32>,
    %c9 = arith.constant 9 : index
    %c0_108 = arith.constant 0 : index
    %c0_109 = arith.constant 0 : index
    %102 = vector.load %arg5[%c9, %c0_108, %c0_109] : memref<16x2x128xf32, #tpu.memory_space<vmem>>, vector<1x2x128xf32>
    %103 = vector.shape_cast %102 : vector<1x2x128xf32> to vector<2x128xf32>
    %c9_110 = arith.constant 9 : index
    %c0_111 = arith.constant 0 : index
    %c0_112 = arith.constant 0 : index
    %104 = vector.load %arg1[%c9_110, %c0_111, %c0_112] : memref<16x2x128xbf16, #tpu.memory_space<vmem>>, vector<1x2x128xbf16>
    %105 = vector.shape_cast %104 : vector<1x2x128xbf16> to vector<2x128xbf16>
    %c9_113 = arith.constant 9 : index
    %c0_114 = arith.constant 0 : index
    %c0_115 = arith.constant 0 : index
    %106 = vector.load %arg2[%c9_113, %c0_114, %c0_115] : memref<16x128x128xbf16, #tpu.memory_space<vmem>>, vector<1x128x128xbf16>
    %107 = vector.shape_cast %106 : vector<1x128x128xbf16> to vector<128x128xbf16>
    %cst_116 = arith.constant dense<0.000000e+00> : vector<2x128xf32>
    %108 = tpu.matmul %105, %107, %cst_116 {dimension_numbers = #tpu.dot_dimension_numbers<[1], [0], [0], [1], [0, 0, 1, 1], [], []>} : vector<2x128xbf16>, vector<128x128xbf16>, vector<2x128xf32> -> vector<2x128xf32>
    %109 = arith.addf %103, %108 : vector<2x128xf32>
    %c9_117 = arith.constant 9 : index
    %c0_118 = arith.constant 0 : index
    %c0_119 = arith.constant 0 : index
    %110 = vector.load %arg5[%c9_117, %c0_118, %c0_119] : memref<16x2x128xf32, #tpu.memory_space<vmem>>, vector<1x2x128xf32>
    %111 = vector.shape_cast %110 : vector<1x2x128xf32> to vector<2x128xf32>
    %112 = vector.shape_cast %109 : vector<2x128xf32> to vector<1x2x128xf32>
    tpu.vector_store %arg5[%c9_117, %c0_118, %c0_119], %112 {strides = array<i32>} : memref<16x2x128xf32, #tpu.memory_space<vmem>>, vector<1x2x128xf32>,
    %c10 = arith.constant 10 : index
    %c0_120 = arith.constant 0 : index
    %c0_121 = arith.constant 0 : index
    %113 = vector.load %arg5[%c10, %c0_120, %c0_121] : memref<16x2x128xf32, #tpu.memory_space<vmem>>, vector<1x2x128xf32>
    %114 = vector.shape_cast %113 : vector<1x2x128xf32> to vector<2x128xf32>
    %c10_122 = arith.constant 10 : index
    %c0_123 = arith.constant 0 : index
    %c0_124 = arith.constant 0 : index
    %115 = vector.load %arg1[%c10_122, %c0_123, %c0_124] : memref<16x2x128xbf16, #tpu.memory_space<vmem>>, vector<1x2x128xbf16>
    %116 = vector.shape_cast %115 : vector<1x2x128xbf16> to vector<2x128xbf16>
    %c10_125 = arith.constant 10 : index
    %c0_126 = arith.constant 0 : index
    %c0_127 = arith.constant 0 : index
    %117 = vector.load %arg2[%c10_125, %c0_126, %c0_127] : memref<16x128x128xbf16, #tpu.memory_space<vmem>>, vector<1x128x128xbf16>
    %118 = vector.shape_cast %117 : vector<1x128x128xbf16> to vector<128x128xbf16>
    %cst_128 = arith.constant dense<0.000000e+00> : vector<2x128xf32>
    %119 = tpu.matmul %116, %118, %cst_128 {dimension_numbers = #tpu.dot_dimension_numbers<[1], [0], [0], [1], [0, 0, 1, 1], [], []>} : vector<2x128xbf16>, vector<128x128xbf16>, vector<2x128xf32> -> vector<2x128xf32>
    %120 = arith.addf %114, %119 : vector<2x128xf32>
    %c10_129 = arith.constant 10 : index
    %c0_130 = arith.constant 0 : index
    %c0_131 = arith.constant 0 : index
    %121 = vector.load %arg5[%c10_129, %c0_130, %c0_131] : memref<16x2x128xf32, #tpu.memory_space<vmem>>, vector<1x2x128xf32>
    %122 = vector.shape_cast %121 : vector<1x2x128xf32> to vector<2x128xf32>
    %123 = vector.shape_cast %120 : vector<2x128xf32> to vector<1x2x128xf32>
    tpu.vector_store %arg5[%c10_129, %c0_130, %c0_131], %123 {strides = array<i32>} : memref<16x2x128xf32, #tpu.memory_space<vmem>>, vector<1x2x128xf32>,
    %c11 = arith.constant 11 : index
    %c0_132 = arith.constant 0 : index
    %c0_133 = arith.constant 0 : index
    %124 = vector.load %arg5[%c11, %c0_132, %c0_133] : memref<16x2x128xf32, #tpu.memory_space<vmem>>, vector<1x2x128xf32>
    %125 = vector.shape_cast %124 : vector<1x2x128xf32> to vector<2x128xf32>
    %c11_134 = arith.constant 11 : index
    %c0_135 = arith.constant 0 : index
    %c0_136 = arith.constant 0 : index
    %126 = vector.load %arg1[%c11_134, %c0_135, %c0_136] : memref<16x2x128xbf16, #tpu.memory_space<vmem>>, vector<1x2x128xbf16>
    %127 = vector.shape_cast %126 : vector<1x2x128xbf16> to vector<2x128xbf16>
    %c11_137 = arith.constant 11 : index
    %c0_138 = arith.constant 0 : index
    %c0_139 = arith.constant 0 : index
    %128 = vector.load %arg2[%c11_137, %c0_138, %c0_139] : memref<16x128x128xbf16, #tpu.memory_space<vmem>>, vector<1x128x128xbf16>
    %129 = vector.shape_cast %128 : vector<1x128x128xbf16> to vector<128x128xbf16>
    %cst_140 = arith.constant dense<0.000000e+00> : vector<2x128xf32>
    %130 = tpu.matmul %127, %129, %cst_140 {dimension_numbers = #tpu.dot_dimension_numbers<[1], [0], [0], [1], [0, 0, 1, 1], [], []>} : vector<2x128xbf16>, vector<128x128xbf16>, vector<2x128xf32> -> vector<2x128xf32>
    %131 = arith.addf %125, %130 : vector<2x128xf32>
    %c11_141 = arith.constant 11 : index
    %c0_142 = arith.constant 0 : index
    %c0_143 = arith.constant 0 : index
    %132 = vector.load %arg5[%c11_141, %c0_142, %c0_143] : memref<16x2x128xf32, #tpu.memory_space<vmem>>, vector<1x2x128xf32>
    %133 = vector.shape_cast %132 : vector<1x2x128xf32> to vector<2x128xf32>
    %134 = vector.shape_cast %131 : vector<2x128xf32> to vector<1x2x128xf32>
    tpu.vector_store %arg5[%c11_141, %c0_142, %c0_143], %134 {strides = array<i32>} : memref<16x2x128xf32, #tpu.memory_space<vmem>>, vector<1x2x128xf32>,
    %c12 = arith.constant 12 : index
    %c0_144 = arith.constant 0 : index
    %c0_145 = arith.constant 0 : index
    %135 = vector.load %arg5[%c12, %c0_144, %c0_145] : memref<16x2x128xf32, #tpu.memory_space<vmem>>, vector<1x2x128xf32>
    %136 = vector.shape_cast %135 : vector<1x2x128xf32> to vector<2x128xf32>
    %c12_146 = arith.constant 12 : index
    %c0_147 = arith.constant 0 : index
    %c0_148 = arith.constant 0 : index
    %137 = vector.load %arg1[%c12_146, %c0_147, %c0_148] : memref<16x2x128xbf16, #tpu.memory_space<vmem>>, vector<1x2x128xbf16>
    %138 = vector.shape_cast %137 : vector<1x2x128xbf16> to vector<2x128xbf16>
    %c12_149 = arith.constant 12 : index
    %c0_150 = arith.constant 0 : index
    %c0_151 = arith.constant 0 : index
    %139 = vector.load %arg2[%c12_149, %c0_150, %c0_151] : memref<16x128x128xbf16, #tpu.memory_space<vmem>>, vector<1x128x128xbf16>
    %140 = vector.shape_cast %139 : vector<1x128x128xbf16> to vector<128x128xbf16>
    %cst_152 = arith.constant dense<0.000000e+00> : vector<2x128xf32>
    %141 = tpu.matmul %138, %140, %cst_152 {dimension_numbers = #tpu.dot_dimension_numbers<[1], [0], [0], [1], [0, 0, 1, 1], [], []>} : vector<2x128xbf16>, vector<128x128xbf16>, vector<2x128xf32> -> vector<2x128xf32>
    %142 = arith.addf %136, %141 : vector<2x128xf32>
    %c12_153 = arith.constant 12 : index
    %c0_154 = arith.constant 0 : index
    %c0_155 = arith.constant 0 : index
    %143 = vector.load %arg5[%c12_153, %c0_154, %c0_155] : memref<16x2x128xf32, #tpu.memory_space<vmem>>, vector<1x2x128xf32>
    %144 = vector.shape_cast %143 : vector<1x2x128xf32> to vector<2x128xf32>
    %145 = vector.shape_cast %142 : vector<2x128xf32> to vector<1x2x128xf32>
    tpu.vector_store %arg5[%c12_153, %c0_154, %c0_155], %145 {strides = array<i32>} : memref<16x2x128xf32, #tpu.memory_space<vmem>>, vector<1x2x128xf32>,
    %c13 = arith.constant 13 : index
    %c0_156 = arith.constant 0 : index
    %c0_157 = arith.constant 0 : index
    %146 = vector.load %arg5[%c13, %c0_156, %c0_157] : memref<16x2x128xf32, #tpu.memory_space<vmem>>, vector<1x2x128xf32>
    %147 = vector.shape_cast %146 : vector<1x2x128xf32> to vector<2x128xf32>
    %c13_158 = arith.constant 13 : index
    %c0_159 = arith.constant 0 : index
    %c0_160 = arith.constant 0 : index
    %148 = vector.load %arg1[%c13_158, %c0_159, %c0_160] : memref<16x2x128xbf16, #tpu.memory_space<vmem>>, vector<1x2x128xbf16>
    %149 = vector.shape_cast %148 : vector<1x2x128xbf16> to vector<2x128xbf16>
    %c13_161 = arith.constant 13 : index
    %c0_162 = arith.constant 0 : index
    %c0_163 = arith.constant 0 : index
    %150 = vector.load %arg2[%c13_161, %c0_162, %c0_163] : memref<16x128x128xbf16, #tpu.memory_space<vmem>>, vector<1x128x128xbf16>
    %151 = vector.shape_cast %150 : vector<1x128x128xbf16> to vector<128x128xbf16>
    %cst_164 = arith.constant dense<0.000000e+00> : vector<2x128xf32>
    %152 = tpu.matmul %149, %151, %cst_164 {dimension_numbers = #tpu.dot_dimension_numbers<[1], [0], [0], [1], [0, 0, 1, 1], [], []>} : vector<2x128xbf16>, vector<128x128xbf16>, vector<2x128xf32> -> vector<2x128xf32>
    %153 = arith.addf %147, %152 : vector<2x128xf32>
    %c13_165 = arith.constant 13 : index
    %c0_166 = arith.constant 0 : index
    %c0_167 = arith.constant 0 : index
    %154 = vector.load %arg5[%c13_165, %c0_166, %c0_167] : memref<16x2x128xf32, #tpu.memory_space<vmem>>, vector<1x2x128xf32>
    %155 = vector.shape_cast %154 : vector<1x2x128xf32> to vector<2x128xf32>
    %156 = vector.shape_cast %153 : vector<2x128xf32> to vector<1x2x128xf32>
    tpu.vector_store %arg5[%c13_165, %c0_166, %c0_167], %156 {strides = array<i32>} : memref<16x2x128xf32, #tpu.memory_space<vmem>>, vector<1x2x128xf32>,
    %c14 = arith.constant 14 : index
    %c0_168 = arith.constant 0 : index
    %c0_169 = arith.constant 0 : index
    %157 = vector.load %arg5[%c14, %c0_168, %c0_169] : memref<16x2x128xf32, #tpu.memory_space<vmem>>, vector<1x2x128xf32>
    %158 = vector.shape_cast %157 : vector<1x2x128xf32> to vector<2x128xf32>
    %c14_170 = arith.constant 14 : index
    %c0_171 = arith.constant 0 : index
    %c0_172 = arith.constant 0 : index
    %159 = vector.load %arg1[%c14_170, %c0_171, %c0_172] : memref<16x2x128xbf16, #tpu.memory_space<vmem>>, vector<1x2x128xbf16>
    %160 = vector.shape_cast %159 : vector<1x2x128xbf16> to vector<2x128xbf16>
    %c14_173 = arith.constant 14 : index
    %c0_174 = arith.constant 0 : index
    %c0_175 = arith.constant 0 : index
    %161 = vector.load %arg2[%c14_173, %c0_174, %c0_175] : memref<16x128x128xbf16, #tpu.memory_space<vmem>>, vector<1x128x128xbf16>
    %162 = vector.shape_cast %161 : vector<1x128x128xbf16> to vector<128x128xbf16>
    %cst_176 = arith.constant dense<0.000000e+00> : vector<2x128xf32>
    %163 = tpu.matmul %160, %162, %cst_176 {dimension_numbers = #tpu.dot_dimension_numbers<[1], [0], [0], [1], [0, 0, 1, 1], [], []>} : vector<2x128xbf16>, vector<128x128xbf16>, vector<2x128xf32> -> vector<2x128xf32>
    %164 = arith.addf %158, %163 : vector<2x128xf32>
    %c14_177 = arith.constant 14 : index
    %c0_178 = arith.constant 0 : index
    %c0_179 = arith.constant 0 : index
    %165 = vector.load %arg5[%c14_177, %c0_178, %c0_179] : memref<16x2x128xf32, #tpu.memory_space<vmem>>, vector<1x2x128xf32>
    %166 = vector.shape_cast %165 : vector<1x2x128xf32> to vector<2x128xf32>
    %167 = vector.shape_cast %164 : vector<2x128xf32> to vector<1x2x128xf32>
    tpu.vector_store %arg5[%c14_177, %c0_178, %c0_179], %167 {strides = array<i32>} : memref<16x2x128xf32, #tpu.memory_space<vmem>>, vector<1x2x128xf32>,
    %c15 = arith.constant 15 : index
    %c0_180 = arith.constant 0 : index
    %c0_181 = arith.constant 0 : index
    %168 = vector.load %arg5[%c15, %c0_180, %c0_181] : memref<16x2x128xf32, #tpu.memory_space<vmem>>, vector<1x2x128xf32>
    %169 = vector.shape_cast %168 : vector<1x2x128xf32> to vector<2x128xf32>
    %c15_182 = arith.constant 15 : index
    %c0_183 = arith.constant 0 : index
    %c0_184 = arith.constant 0 : index
    %170 = vector.load %arg1[%c15_182, %c0_183, %c0_184] : memref<16x2x128xbf16, #tpu.memory_space<vmem>>, vector<1x2x128xbf16>
    %171 = vector.shape_cast %170 : vector<1x2x128xbf16> to vector<2x128xbf16>
    %c15_185 = arith.constant 15 : index
    %c0_186 = arith.constant 0 : index
    %c0_187 = arith.constant 0 : index
    %172 = vector.load %arg2[%c15_185, %c0_186, %c0_187] : memref<16x128x128xbf16, #tpu.memory_space<vmem>>, vector<1x128x128xbf16>
    %173 = vector.shape_cast %172 : vector<1x128x128xbf16> to vector<128x128xbf16>
    %cst_188 = arith.constant dense<0.000000e+00> : vector<2x128xf32>
    %174 = tpu.matmul %171, %173, %cst_188 {dimension_numbers = #tpu.dot_dimension_numbers<[1], [0], [0], [1], [0, 0, 1, 1], [], []>} : vector<2x128xbf16>, vector<128x128xbf16>, vector<2x128xf32> -> vector<2x128xf32>
    %175 = arith.addf %169, %174 : vector<2x128xf32>
    %c15_189 = arith.constant 15 : index
    %c0_190 = arith.constant 0 : index
    %c0_191 = arith.constant 0 : index
    %176 = vector.load %arg5[%c15_189, %c0_190, %c0_191] : memref<16x2x128xf32, #tpu.memory_space<vmem>>, vector<1x2x128xf32>
    %177 = vector.shape_cast %176 : vector<1x2x128xf32> to vector<2x128xf32>
    %178 = vector.shape_cast %175 : vector<2x128xf32> to vector<1x2x128xf32>
    tpu.vector_store %arg5[%c15_189, %c0_190, %c0_191], %178 {strides = array<i32>} : memref<16x2x128xf32, #tpu.memory_space<vmem>>, vector<1x2x128xf32>,
    %c0_i32_192 = arith.constant 0 : i32
    %179 = arith.cmpi eq, %arg0, %c0_i32_192 : i32
    %180 = arith.extui %179 : i1 to i32
    %c0_i32_193 = arith.constant 0 : i32
    %181 = arith.cmpi ne, %180, %c0_i32_193 : i32
    scf.if %181 {
      %c0_194 = arith.constant 0 : index
      %c0_195 = arith.constant 0 : index
      %c0_196 = arith.constant 0 : index
      %182 = vector.load %arg5[%c0_194, %c0_195, %c0_196] : memref<16x2x128xf32, #tpu.memory_space<vmem>>, vector<16x2x128xf32>
      %cst_197 = arith.constant dense<0.000000e+00> : vector<16x128xf32>
      %183 = vector.multi_reduction <add>, %182, %cst_197 [1] : vector<16x2x128xf32> to vector<16x128xf32>
      %184 = vector.shape_cast %183 : vector<16x128xf32> to vector<16x1x128xf32>
      %cst_198 = arith.constant dense<0.000000e+00> : vector<1x128xf32>
      %185 = vector.multi_reduction <add>, %184, %cst_198 [0] : vector<16x1x128xf32> to vector<1x128xf32>
      %186 = vector.shape_cast %185 : vector<1x128xf32> to vector<1x1x128xf32>
      %187 = arith.mulf %182, %182 : vector<16x2x128xf32>
      %cst_199 = arith.constant dense<0.000000e+00> : vector<16x128xf32>
      %188 = vector.multi_reduction <add>, %187, %cst_199 [1] : vector<16x2x128xf32> to vector<16x128xf32>
      %189 = vector.shape_cast %188 : vector<16x128xf32> to vector<16x1x128xf32>
      %cst_200 = arith.constant dense<0.000000e+00> : vector<1x128xf32>
      %190 = vector.multi_reduction <add>, %189, %cst_200 [0] : vector<16x1x128xf32> to vector<1x128xf32>
      %191 = vector.shape_cast %190 : vector<1x128xf32> to vector<1x1x128xf32>
      %cst_201 = arith.constant 3.200000e+01 : f32
      %192 = vector.broadcast %cst_201 : f32 to vector<1x1x128xf32>
      %193 = arith.divf %186, %192 : vector<1x1x128xf32>
      %cst_202 = arith.constant 3.200000e+01 : f32
      %194 = vector.broadcast %cst_202 : f32 to vector<1x1x128xf32>
      %195 = arith.divf %191, %194 : vector<1x1x128xf32>
      %196 = arith.mulf %193, %193 : vector<1x1x128xf32>
      %197 = arith.subf %195, %196 : vector<1x1x128xf32>
      %198 = vector.broadcast %193 : vector<1x1x128xf32> to vector<16x2x128xf32>
      %199 = arith.subf %182, %198 : vector<16x2x128xf32>
      %cst_203 = arith.constant 9.99999974E-6 : f32
      %200 = vector.broadcast %cst_203 : f32 to vector<1x1x128xf32>
      %201 = arith.addf %197, %200 : vector<1x1x128xf32>
      %202 = math.rsqrt %201 : vector<1x1x128xf32>
      %203 = vector.broadcast %202 : vector<1x1x128xf32> to vector<16x2x128xf32>
      %204 = arith.mulf %199, %203 : vector<16x2x128xf32>
      %c0_204 = arith.constant 0 : index
      %c0_205 = arith.constant 0 : index
      %205 = vector.load %arg3[%c0_204, %c0_205] : memref<1x128xf32, #tpu.memory_space<vmem>>, vector<1x128xf32>
      %206 = vector.shape_cast %205 : vector<1x128xf32> to vector<1x1x128xf32>
      %207 = vector.broadcast %206 : vector<1x1x128xf32> to vector<16x2x128xf32>
      %208 = arith.mulf %204, %207 : vector<16x2x128xf32>
      %c0_206 = arith.constant 0 : index
      %c0_207 = arith.constant 0 : index
      %209 = vector.load %arg4[%c0_206, %c0_207] : memref<1x128xf32, #tpu.memory_space<vmem>>, vector<1x128xf32>
      %210 = vector.shape_cast %209 : vector<1x128xf32> to vector<1x1x128xf32>
      %211 = vector.broadcast %210 : vector<1x1x128xf32> to vector<16x2x128xf32>
      %212 = arith.addf %208, %211 : vector<16x2x128xf32>
      %cst_208 = arith.constant 0.000000e+00 : f32
      %213 = vector.broadcast %cst_208 : f32 to vector<16x2x128xf32>
      %214 = arith.maximumf %212, %213 : vector<16x2x128xf32>
      %c0_209 = arith.constant 0 : index
      %c0_210 = arith.constant 0 : index
      %c0_211 = arith.constant 0 : index
      %215 = vector.load %arg5[%c0_209, %c0_210, %c0_211] : memref<16x2x128xf32, #tpu.memory_space<vmem>>, vector<16x2x128xf32>
      tpu.vector_store %arg5[%c0_209, %c0_210, %c0_211], %214 {strides = array<i32>} : memref<16x2x128xf32, #tpu.memory_space<vmem>>, vector<16x2x128xf32>,
    } else {
    }
    return
  }
  func.func @transform_0(%arg0: i32) -> (i32, i32, i32) {
    %c0_i32 = arith.constant 0 : i32
    %c0_i32_0 = arith.constant 0 : i32
    %c0_i32_1 = arith.constant 0 : i32
    return %c0_i32, %c0_i32_0, %arg0 : i32, i32, i32
  }
  func.func @transform_1(%arg0: i32) -> (i32, i32, i32) {
    %c0_i32 = arith.constant 0 : i32
    %c0_i32_0 = arith.constant 0 : i32
    %c0_i32_1 = arith.constant 0 : i32
    return %c0_i32, %arg0, %c0_i32_0 : i32, i32, i32
  }
  func.func @transform_2(%arg0: i32) -> (i32, i32) {
    %c0_i32 = arith.constant 0 : i32
    %c0_i32_0 = arith.constant 0 : i32
    %c0_i32_1 = arith.constant 0 : i32
    return %c0_i32, %c0_i32_0 : i32, i32
  }
  func.func @transform_3(%arg0: i32) -> (i32, i32) {
    %c0_i32 = arith.constant 0 : i32
    %c0_i32_0 = arith.constant 0 : i32
    %c0_i32_1 = arith.constant 0 : i32
    return %c0_i32, %c0_i32_0 : i32, i32
  }
  func.func @transform_4(%arg0: i32) -> (i32, i32, i32) {
    %c0_i32 = arith.constant 0 : i32
    %c0_i32_0 = arith.constant 0 : i32
    %c0_i32_1 = arith.constant 0 : i32
    %c0_i32_2 = arith.constant 0 : i32
    return %c0_i32, %c0_i32_0, %c0_i32_1 : i32, i32, i32
  }
}

module attributes {stable_mosaic.version = 11 : i64} {
  func.func @_convt_bn_relu_kernel(%arg0: i32, %arg1: memref<4x32x256xbf16, #tpu.memory_space<vmem>>, %arg2: memref<4x256x128xbf16, #tpu.memory_space<vmem>>, %arg3: memref<1x128xf32, #tpu.memory_space<vmem>>, %arg4: memref<1x128xf32, #tpu.memory_space<vmem>>, %arg5: memref<4x32x128xf32, #tpu.memory_space<vmem>>) attributes {dimension_semantics = [#tpu.dimension_semantics<arbitrary>], iteration_bounds = array<i64: 1>, scalar_prefetch = 0 : i64, scratch_operands = 0 : i64, tpu.core_type = #tpu.core_type<tc>, window_params = [{transform_indices = @transform_0, window_bounds = array<i64: 4, 32, 256>}, {transform_indices = @transform_1, window_bounds = array<i64: 4, 256, 128>}, {pipeline_mode = #tpu.pipeline_mode<synchronous>, transform_indices = @transform_2, window_bounds = array<i64: 1, 128>}, {pipeline_mode = #tpu.pipeline_mode<synchronous>, transform_indices = @transform_3, window_bounds = array<i64: 1, 128>}, {pipeline_mode = #tpu.pipeline_mode<synchronous>, transform_indices = @transform_4, window_bounds = array<i64: 4, 32, 128>}]} {
    %c0_i32 = arith.constant 0 : i32
    %0 = arith.cmpi eq, %arg0, %c0_i32 : i32
    %1 = arith.extui %0 : i1 to i32
    %c0_i32_0 = arith.constant 0 : i32
    %2 = arith.cmpi ne, %1, %c0_i32_0 : i32
    scf.if %2 {
      %cst_50 = arith.constant 0.000000e+00 : f32
      %50 = vector.broadcast %cst_50 : f32 to vector<4x32x128xf32>
      %c0_51 = arith.constant 0 : index
      %c0_52 = arith.constant 0 : index
      %c0_53 = arith.constant 0 : index
      %51 = vector.load %arg5[%c0_51, %c0_52, %c0_53] : memref<4x32x128xf32, #tpu.memory_space<vmem>>, vector<4x32x128xf32>
      tpu.vector_store %arg5[%c0_51, %c0_52, %c0_53], %50 {strides = array<i32>} : memref<4x32x128xf32, #tpu.memory_space<vmem>>, vector<4x32x128xf32>,
    } else {
    }
    %c0 = arith.constant 0 : index
    %c0_1 = arith.constant 0 : index
    %c0_2 = arith.constant 0 : index
    %3 = vector.load %arg5[%c0, %c0_1, %c0_2] : memref<4x32x128xf32, #tpu.memory_space<vmem>>, vector<1x32x128xf32>
    %4 = vector.shape_cast %3 : vector<1x32x128xf32> to vector<32x128xf32>
    %c0_3 = arith.constant 0 : index
    %c0_4 = arith.constant 0 : index
    %c0_5 = arith.constant 0 : index
    %5 = vector.load %arg1[%c0_3, %c0_4, %c0_5] : memref<4x32x256xbf16, #tpu.memory_space<vmem>>, vector<1x32x256xbf16>
    %6 = vector.shape_cast %5 : vector<1x32x256xbf16> to vector<32x256xbf16>
    %c0_6 = arith.constant 0 : index
    %c0_7 = arith.constant 0 : index
    %c0_8 = arith.constant 0 : index
    %7 = vector.load %arg2[%c0_6, %c0_7, %c0_8] : memref<4x256x128xbf16, #tpu.memory_space<vmem>>, vector<1x256x128xbf16>
    %8 = vector.shape_cast %7 : vector<1x256x128xbf16> to vector<256x128xbf16>
    %cst = arith.constant dense<0.000000e+00> : vector<32x128xf32>
    %9 = tpu.matmul %6, %8, %cst {dimension_numbers = #tpu.dot_dimension_numbers<[1], [0], [0], [1], [0, 0, 1, 1], [], []>} : vector<32x256xbf16>, vector<256x128xbf16>, vector<32x128xf32> -> vector<32x128xf32>
    %10 = arith.addf %4, %9 : vector<32x128xf32>
    %c0_9 = arith.constant 0 : index
    %c0_10 = arith.constant 0 : index
    %c0_11 = arith.constant 0 : index
    %11 = vector.load %arg5[%c0_9, %c0_10, %c0_11] : memref<4x32x128xf32, #tpu.memory_space<vmem>>, vector<1x32x128xf32>
    %12 = vector.shape_cast %11 : vector<1x32x128xf32> to vector<32x128xf32>
    %13 = vector.shape_cast %10 : vector<32x128xf32> to vector<1x32x128xf32>
    tpu.vector_store %arg5[%c0_9, %c0_10, %c0_11], %13 {strides = array<i32>} : memref<4x32x128xf32, #tpu.memory_space<vmem>>, vector<1x32x128xf32>,
    %c1 = arith.constant 1 : index
    %c0_12 = arith.constant 0 : index
    %c0_13 = arith.constant 0 : index
    %14 = vector.load %arg5[%c1, %c0_12, %c0_13] : memref<4x32x128xf32, #tpu.memory_space<vmem>>, vector<1x32x128xf32>
    %15 = vector.shape_cast %14 : vector<1x32x128xf32> to vector<32x128xf32>
    %c1_14 = arith.constant 1 : index
    %c0_15 = arith.constant 0 : index
    %c0_16 = arith.constant 0 : index
    %16 = vector.load %arg1[%c1_14, %c0_15, %c0_16] : memref<4x32x256xbf16, #tpu.memory_space<vmem>>, vector<1x32x256xbf16>
    %17 = vector.shape_cast %16 : vector<1x32x256xbf16> to vector<32x256xbf16>
    %c1_17 = arith.constant 1 : index
    %c0_18 = arith.constant 0 : index
    %c0_19 = arith.constant 0 : index
    %18 = vector.load %arg2[%c1_17, %c0_18, %c0_19] : memref<4x256x128xbf16, #tpu.memory_space<vmem>>, vector<1x256x128xbf16>
    %19 = vector.shape_cast %18 : vector<1x256x128xbf16> to vector<256x128xbf16>
    %cst_20 = arith.constant dense<0.000000e+00> : vector<32x128xf32>
    %20 = tpu.matmul %17, %19, %cst_20 {dimension_numbers = #tpu.dot_dimension_numbers<[1], [0], [0], [1], [0, 0, 1, 1], [], []>} : vector<32x256xbf16>, vector<256x128xbf16>, vector<32x128xf32> -> vector<32x128xf32>
    %21 = arith.addf %15, %20 : vector<32x128xf32>
    %c1_21 = arith.constant 1 : index
    %c0_22 = arith.constant 0 : index
    %c0_23 = arith.constant 0 : index
    %22 = vector.load %arg5[%c1_21, %c0_22, %c0_23] : memref<4x32x128xf32, #tpu.memory_space<vmem>>, vector<1x32x128xf32>
    %23 = vector.shape_cast %22 : vector<1x32x128xf32> to vector<32x128xf32>
    %24 = vector.shape_cast %21 : vector<32x128xf32> to vector<1x32x128xf32>
    tpu.vector_store %arg5[%c1_21, %c0_22, %c0_23], %24 {strides = array<i32>} : memref<4x32x128xf32, #tpu.memory_space<vmem>>, vector<1x32x128xf32>,
    %c2 = arith.constant 2 : index
    %c0_24 = arith.constant 0 : index
    %c0_25 = arith.constant 0 : index
    %25 = vector.load %arg5[%c2, %c0_24, %c0_25] : memref<4x32x128xf32, #tpu.memory_space<vmem>>, vector<1x32x128xf32>
    %26 = vector.shape_cast %25 : vector<1x32x128xf32> to vector<32x128xf32>
    %c2_26 = arith.constant 2 : index
    %c0_27 = arith.constant 0 : index
    %c0_28 = arith.constant 0 : index
    %27 = vector.load %arg1[%c2_26, %c0_27, %c0_28] : memref<4x32x256xbf16, #tpu.memory_space<vmem>>, vector<1x32x256xbf16>
    %28 = vector.shape_cast %27 : vector<1x32x256xbf16> to vector<32x256xbf16>
    %c2_29 = arith.constant 2 : index
    %c0_30 = arith.constant 0 : index
    %c0_31 = arith.constant 0 : index
    %29 = vector.load %arg2[%c2_29, %c0_30, %c0_31] : memref<4x256x128xbf16, #tpu.memory_space<vmem>>, vector<1x256x128xbf16>
    %30 = vector.shape_cast %29 : vector<1x256x128xbf16> to vector<256x128xbf16>
    %cst_32 = arith.constant dense<0.000000e+00> : vector<32x128xf32>
    %31 = tpu.matmul %28, %30, %cst_32 {dimension_numbers = #tpu.dot_dimension_numbers<[1], [0], [0], [1], [0, 0, 1, 1], [], []>} : vector<32x256xbf16>, vector<256x128xbf16>, vector<32x128xf32> -> vector<32x128xf32>
    %32 = arith.addf %26, %31 : vector<32x128xf32>
    %c2_33 = arith.constant 2 : index
    %c0_34 = arith.constant 0 : index
    %c0_35 = arith.constant 0 : index
    %33 = vector.load %arg5[%c2_33, %c0_34, %c0_35] : memref<4x32x128xf32, #tpu.memory_space<vmem>>, vector<1x32x128xf32>
    %34 = vector.shape_cast %33 : vector<1x32x128xf32> to vector<32x128xf32>
    %35 = vector.shape_cast %32 : vector<32x128xf32> to vector<1x32x128xf32>
    tpu.vector_store %arg5[%c2_33, %c0_34, %c0_35], %35 {strides = array<i32>} : memref<4x32x128xf32, #tpu.memory_space<vmem>>, vector<1x32x128xf32>,
    %c3 = arith.constant 3 : index
    %c0_36 = arith.constant 0 : index
    %c0_37 = arith.constant 0 : index
    %36 = vector.load %arg5[%c3, %c0_36, %c0_37] : memref<4x32x128xf32, #tpu.memory_space<vmem>>, vector<1x32x128xf32>
    %37 = vector.shape_cast %36 : vector<1x32x128xf32> to vector<32x128xf32>
    %c3_38 = arith.constant 3 : index
    %c0_39 = arith.constant 0 : index
    %c0_40 = arith.constant 0 : index
    %38 = vector.load %arg1[%c3_38, %c0_39, %c0_40] : memref<4x32x256xbf16, #tpu.memory_space<vmem>>, vector<1x32x256xbf16>
    %39 = vector.shape_cast %38 : vector<1x32x256xbf16> to vector<32x256xbf16>
    %c3_41 = arith.constant 3 : index
    %c0_42 = arith.constant 0 : index
    %c0_43 = arith.constant 0 : index
    %40 = vector.load %arg2[%c3_41, %c0_42, %c0_43] : memref<4x256x128xbf16, #tpu.memory_space<vmem>>, vector<1x256x128xbf16>
    %41 = vector.shape_cast %40 : vector<1x256x128xbf16> to vector<256x128xbf16>
    %cst_44 = arith.constant dense<0.000000e+00> : vector<32x128xf32>
    %42 = tpu.matmul %39, %41, %cst_44 {dimension_numbers = #tpu.dot_dimension_numbers<[1], [0], [0], [1], [0, 0, 1, 1], [], []>} : vector<32x256xbf16>, vector<256x128xbf16>, vector<32x128xf32> -> vector<32x128xf32>
    %43 = arith.addf %37, %42 : vector<32x128xf32>
    %c3_45 = arith.constant 3 : index
    %c0_46 = arith.constant 0 : index
    %c0_47 = arith.constant 0 : index
    %44 = vector.load %arg5[%c3_45, %c0_46, %c0_47] : memref<4x32x128xf32, #tpu.memory_space<vmem>>, vector<1x32x128xf32>
    %45 = vector.shape_cast %44 : vector<1x32x128xf32> to vector<32x128xf32>
    %46 = vector.shape_cast %43 : vector<32x128xf32> to vector<1x32x128xf32>
    tpu.vector_store %arg5[%c3_45, %c0_46, %c0_47], %46 {strides = array<i32>} : memref<4x32x128xf32, #tpu.memory_space<vmem>>, vector<1x32x128xf32>,
    %c0_i32_48 = arith.constant 0 : i32
    %47 = arith.cmpi eq, %arg0, %c0_i32_48 : i32
    %48 = arith.extui %47 : i1 to i32
    %c0_i32_49 = arith.constant 0 : i32
    %49 = arith.cmpi ne, %48, %c0_i32_49 : i32
    scf.if %49 {
      %c0_50 = arith.constant 0 : index
      %c0_51 = arith.constant 0 : index
      %c0_52 = arith.constant 0 : index
      %50 = vector.load %arg5[%c0_50, %c0_51, %c0_52] : memref<4x32x128xf32, #tpu.memory_space<vmem>>, vector<4x32x128xf32>
      %cst_53 = arith.constant dense<0.000000e+00> : vector<4x128xf32>
      %51 = vector.multi_reduction <add>, %50, %cst_53 [1] : vector<4x32x128xf32> to vector<4x128xf32>
      %52 = vector.shape_cast %51 : vector<4x128xf32> to vector<4x1x128xf32>
      %cst_54 = arith.constant dense<0.000000e+00> : vector<1x128xf32>
      %53 = vector.multi_reduction <add>, %52, %cst_54 [0] : vector<4x1x128xf32> to vector<1x128xf32>
      %54 = vector.shape_cast %53 : vector<1x128xf32> to vector<1x1x128xf32>
      %55 = arith.mulf %50, %50 : vector<4x32x128xf32>
      %cst_55 = arith.constant dense<0.000000e+00> : vector<4x128xf32>
      %56 = vector.multi_reduction <add>, %55, %cst_55 [1] : vector<4x32x128xf32> to vector<4x128xf32>
      %57 = vector.shape_cast %56 : vector<4x128xf32> to vector<4x1x128xf32>
      %cst_56 = arith.constant dense<0.000000e+00> : vector<1x128xf32>
      %58 = vector.multi_reduction <add>, %57, %cst_56 [0] : vector<4x1x128xf32> to vector<1x128xf32>
      %59 = vector.shape_cast %58 : vector<1x128xf32> to vector<1x1x128xf32>
      %cst_57 = arith.constant 1.280000e+02 : f32
      %60 = vector.broadcast %cst_57 : f32 to vector<1x1x128xf32>
      %61 = arith.divf %54, %60 : vector<1x1x128xf32>
      %cst_58 = arith.constant 1.280000e+02 : f32
      %62 = vector.broadcast %cst_58 : f32 to vector<1x1x128xf32>
      %63 = arith.divf %59, %62 : vector<1x1x128xf32>
      %64 = arith.mulf %61, %61 : vector<1x1x128xf32>
      %65 = arith.subf %63, %64 : vector<1x1x128xf32>
      %66 = vector.broadcast %61 : vector<1x1x128xf32> to vector<4x32x128xf32>
      %67 = arith.subf %50, %66 : vector<4x32x128xf32>
      %cst_59 = arith.constant 9.99999974E-6 : f32
      %68 = vector.broadcast %cst_59 : f32 to vector<1x1x128xf32>
      %69 = arith.addf %65, %68 : vector<1x1x128xf32>
      %70 = math.rsqrt %69 : vector<1x1x128xf32>
      %71 = vector.broadcast %70 : vector<1x1x128xf32> to vector<4x32x128xf32>
      %72 = arith.mulf %67, %71 : vector<4x32x128xf32>
      %c0_60 = arith.constant 0 : index
      %c0_61 = arith.constant 0 : index
      %73 = vector.load %arg3[%c0_60, %c0_61] : memref<1x128xf32, #tpu.memory_space<vmem>>, vector<1x128xf32>
      %74 = vector.shape_cast %73 : vector<1x128xf32> to vector<1x1x128xf32>
      %75 = vector.broadcast %74 : vector<1x1x128xf32> to vector<4x32x128xf32>
      %76 = arith.mulf %72, %75 : vector<4x32x128xf32>
      %c0_62 = arith.constant 0 : index
      %c0_63 = arith.constant 0 : index
      %77 = vector.load %arg4[%c0_62, %c0_63] : memref<1x128xf32, #tpu.memory_space<vmem>>, vector<1x128xf32>
      %78 = vector.shape_cast %77 : vector<1x128xf32> to vector<1x1x128xf32>
      %79 = vector.broadcast %78 : vector<1x1x128xf32> to vector<4x32x128xf32>
      %80 = arith.addf %76, %79 : vector<4x32x128xf32>
      %cst_64 = arith.constant 0.000000e+00 : f32
      %81 = vector.broadcast %cst_64 : f32 to vector<4x32x128xf32>
      %82 = arith.maximumf %80, %81 : vector<4x32x128xf32>
      %c0_65 = arith.constant 0 : index
      %c0_66 = arith.constant 0 : index
      %c0_67 = arith.constant 0 : index
      %83 = vector.load %arg5[%c0_65, %c0_66, %c0_67] : memref<4x32x128xf32, #tpu.memory_space<vmem>>, vector<4x32x128xf32>
      tpu.vector_store %arg5[%c0_65, %c0_66, %c0_67], %82 {strides = array<i32>} : memref<4x32x128xf32, #tpu.memory_space<vmem>>, vector<4x32x128xf32>,
    } else {
    }
    return
  }
  func.func @transform_0(%arg0: i32) -> (i32, i32, i32) {
    %c0_i32 = arith.constant 0 : i32
    %c0_i32_0 = arith.constant 0 : i32
    %c0_i32_1 = arith.constant 0 : i32
    return %c0_i32, %c0_i32_0, %arg0 : i32, i32, i32
  }
  func.func @transform_1(%arg0: i32) -> (i32, i32, i32) {
    %c0_i32 = arith.constant 0 : i32
    %c0_i32_0 = arith.constant 0 : i32
    %c0_i32_1 = arith.constant 0 : i32
    return %c0_i32, %arg0, %c0_i32_0 : i32, i32, i32
  }
  func.func @transform_2(%arg0: i32) -> (i32, i32) {
    %c0_i32 = arith.constant 0 : i32
    %c0_i32_0 = arith.constant 0 : i32
    %c0_i32_1 = arith.constant 0 : i32
    return %c0_i32, %c0_i32_0 : i32, i32
  }
  func.func @transform_3(%arg0: i32) -> (i32, i32) {
    %c0_i32 = arith.constant 0 : i32
    %c0_i32_0 = arith.constant 0 : i32
    %c0_i32_1 = arith.constant 0 : i32
    return %c0_i32, %c0_i32_0 : i32, i32
  }
  func.func @transform_4(%arg0: i32) -> (i32, i32, i32) {
    %c0_i32 = arith.constant 0 : i32
    %c0_i32_0 = arith.constant 0 : i32
    %c0_i32_1 = arith.constant 0 : i32
    %c0_i32_2 = arith.constant 0 : i32
    return %c0_i32, %c0_i32_0, %c0_i32_1 : i32, i32, i32
  }
}

module attributes {stable_mosaic.version = 11 : i64} {
  func.func @_convt_bn_relu_kernel(%arg0: i32, %arg1: memref<4x128x128xbf16, #tpu.memory_space<vmem>>, %arg2: memref<4x128x128xbf16, #tpu.memory_space<vmem>>, %arg3: memref<1x128xf32, #tpu.memory_space<vmem>>, %arg4: memref<1x128xf32, #tpu.memory_space<vmem>>, %arg5: memref<4x128x128xf32, #tpu.memory_space<vmem>>) attributes {dimension_semantics = [#tpu.dimension_semantics<arbitrary>], iteration_bounds = array<i64: 1>, scalar_prefetch = 0 : i64, scratch_operands = 0 : i64, tpu.core_type = #tpu.core_type<tc>, window_params = [{transform_indices = @transform_0, window_bounds = array<i64: 4, 128, 128>}, {transform_indices = @transform_1, window_bounds = array<i64: 4, 128, 128>}, {pipeline_mode = #tpu.pipeline_mode<synchronous>, transform_indices = @transform_2, window_bounds = array<i64: 1, 128>}, {pipeline_mode = #tpu.pipeline_mode<synchronous>, transform_indices = @transform_3, window_bounds = array<i64: 1, 128>}, {pipeline_mode = #tpu.pipeline_mode<synchronous>, transform_indices = @transform_4, window_bounds = array<i64: 4, 128, 128>}]} {
    %c0_i32 = arith.constant 0 : i32
    %0 = arith.cmpi eq, %arg0, %c0_i32 : i32
    %1 = arith.extui %0 : i1 to i32
    %c0_i32_0 = arith.constant 0 : i32
    %2 = arith.cmpi ne, %1, %c0_i32_0 : i32
    scf.if %2 {
      %cst_50 = arith.constant 0.000000e+00 : f32
      %50 = vector.broadcast %cst_50 : f32 to vector<4x128x128xf32>
      %c0_51 = arith.constant 0 : index
      %c0_52 = arith.constant 0 : index
      %c0_53 = arith.constant 0 : index
      %51 = vector.load %arg5[%c0_51, %c0_52, %c0_53] : memref<4x128x128xf32, #tpu.memory_space<vmem>>, vector<4x128x128xf32>
      tpu.vector_store %arg5[%c0_51, %c0_52, %c0_53], %50 {strides = array<i32>} : memref<4x128x128xf32, #tpu.memory_space<vmem>>, vector<4x128x128xf32>,
    } else {
    }
    %c0 = arith.constant 0 : index
    %c0_1 = arith.constant 0 : index
    %c0_2 = arith.constant 0 : index
    %3 = vector.load %arg5[%c0, %c0_1, %c0_2] : memref<4x128x128xf32, #tpu.memory_space<vmem>>, vector<1x128x128xf32>
    %4 = vector.shape_cast %3 : vector<1x128x128xf32> to vector<128x128xf32>
    %c0_3 = arith.constant 0 : index
    %c0_4 = arith.constant 0 : index
    %c0_5 = arith.constant 0 : index
    %5 = vector.load %arg1[%c0_3, %c0_4, %c0_5] : memref<4x128x128xbf16, #tpu.memory_space<vmem>>, vector<1x128x128xbf16>
    %6 = vector.shape_cast %5 : vector<1x128x128xbf16> to vector<128x128xbf16>
    %c0_6 = arith.constant 0 : index
    %c0_7 = arith.constant 0 : index
    %c0_8 = arith.constant 0 : index
    %7 = vector.load %arg2[%c0_6, %c0_7, %c0_8] : memref<4x128x128xbf16, #tpu.memory_space<vmem>>, vector<1x128x128xbf16>
    %8 = vector.shape_cast %7 : vector<1x128x128xbf16> to vector<128x128xbf16>
    %cst = arith.constant dense<0.000000e+00> : vector<128x128xf32>
    %9 = tpu.matmul %6, %8, %cst {dimension_numbers = #tpu.dot_dimension_numbers<[1], [0], [0], [1], [0, 0, 1, 1], [], []>} : vector<128x128xbf16>, vector<128x128xbf16>, vector<128x128xf32> -> vector<128x128xf32>
    %10 = arith.addf %4, %9 : vector<128x128xf32>
    %c0_9 = arith.constant 0 : index
    %c0_10 = arith.constant 0 : index
    %c0_11 = arith.constant 0 : index
    %11 = vector.load %arg5[%c0_9, %c0_10, %c0_11] : memref<4x128x128xf32, #tpu.memory_space<vmem>>, vector<1x128x128xf32>
    %12 = vector.shape_cast %11 : vector<1x128x128xf32> to vector<128x128xf32>
    %13 = vector.shape_cast %10 : vector<128x128xf32> to vector<1x128x128xf32>
    tpu.vector_store %arg5[%c0_9, %c0_10, %c0_11], %13 {strides = array<i32>} : memref<4x128x128xf32, #tpu.memory_space<vmem>>, vector<1x128x128xf32>,
    %c1 = arith.constant 1 : index
    %c0_12 = arith.constant 0 : index
    %c0_13 = arith.constant 0 : index
    %14 = vector.load %arg5[%c1, %c0_12, %c0_13] : memref<4x128x128xf32, #tpu.memory_space<vmem>>, vector<1x128x128xf32>
    %15 = vector.shape_cast %14 : vector<1x128x128xf32> to vector<128x128xf32>
    %c1_14 = arith.constant 1 : index
    %c0_15 = arith.constant 0 : index
    %c0_16 = arith.constant 0 : index
    %16 = vector.load %arg1[%c1_14, %c0_15, %c0_16] : memref<4x128x128xbf16, #tpu.memory_space<vmem>>, vector<1x128x128xbf16>
    %17 = vector.shape_cast %16 : vector<1x128x128xbf16> to vector<128x128xbf16>
    %c1_17 = arith.constant 1 : index
    %c0_18 = arith.constant 0 : index
    %c0_19 = arith.constant 0 : index
    %18 = vector.load %arg2[%c1_17, %c0_18, %c0_19] : memref<4x128x128xbf16, #tpu.memory_space<vmem>>, vector<1x128x128xbf16>
    %19 = vector.shape_cast %18 : vector<1x128x128xbf16> to vector<128x128xbf16>
    %cst_20 = arith.constant dense<0.000000e+00> : vector<128x128xf32>
    %20 = tpu.matmul %17, %19, %cst_20 {dimension_numbers = #tpu.dot_dimension_numbers<[1], [0], [0], [1], [0, 0, 1, 1], [], []>} : vector<128x128xbf16>, vector<128x128xbf16>, vector<128x128xf32> -> vector<128x128xf32>
    %21 = arith.addf %15, %20 : vector<128x128xf32>
    %c1_21 = arith.constant 1 : index
    %c0_22 = arith.constant 0 : index
    %c0_23 = arith.constant 0 : index
    %22 = vector.load %arg5[%c1_21, %c0_22, %c0_23] : memref<4x128x128xf32, #tpu.memory_space<vmem>>, vector<1x128x128xf32>
    %23 = vector.shape_cast %22 : vector<1x128x128xf32> to vector<128x128xf32>
    %24 = vector.shape_cast %21 : vector<128x128xf32> to vector<1x128x128xf32>
    tpu.vector_store %arg5[%c1_21, %c0_22, %c0_23], %24 {strides = array<i32>} : memref<4x128x128xf32, #tpu.memory_space<vmem>>, vector<1x128x128xf32>,
    %c2 = arith.constant 2 : index
    %c0_24 = arith.constant 0 : index
    %c0_25 = arith.constant 0 : index
    %25 = vector.load %arg5[%c2, %c0_24, %c0_25] : memref<4x128x128xf32, #tpu.memory_space<vmem>>, vector<1x128x128xf32>
    %26 = vector.shape_cast %25 : vector<1x128x128xf32> to vector<128x128xf32>
    %c2_26 = arith.constant 2 : index
    %c0_27 = arith.constant 0 : index
    %c0_28 = arith.constant 0 : index
    %27 = vector.load %arg1[%c2_26, %c0_27, %c0_28] : memref<4x128x128xbf16, #tpu.memory_space<vmem>>, vector<1x128x128xbf16>
    %28 = vector.shape_cast %27 : vector<1x128x128xbf16> to vector<128x128xbf16>
    %c2_29 = arith.constant 2 : index
    %c0_30 = arith.constant 0 : index
    %c0_31 = arith.constant 0 : index
    %29 = vector.load %arg2[%c2_29, %c0_30, %c0_31] : memref<4x128x128xbf16, #tpu.memory_space<vmem>>, vector<1x128x128xbf16>
    %30 = vector.shape_cast %29 : vector<1x128x128xbf16> to vector<128x128xbf16>
    %cst_32 = arith.constant dense<0.000000e+00> : vector<128x128xf32>
    %31 = tpu.matmul %28, %30, %cst_32 {dimension_numbers = #tpu.dot_dimension_numbers<[1], [0], [0], [1], [0, 0, 1, 1], [], []>} : vector<128x128xbf16>, vector<128x128xbf16>, vector<128x128xf32> -> vector<128x128xf32>
    %32 = arith.addf %26, %31 : vector<128x128xf32>
    %c2_33 = arith.constant 2 : index
    %c0_34 = arith.constant 0 : index
    %c0_35 = arith.constant 0 : index
    %33 = vector.load %arg5[%c2_33, %c0_34, %c0_35] : memref<4x128x128xf32, #tpu.memory_space<vmem>>, vector<1x128x128xf32>
    %34 = vector.shape_cast %33 : vector<1x128x128xf32> to vector<128x128xf32>
    %35 = vector.shape_cast %32 : vector<128x128xf32> to vector<1x128x128xf32>
    tpu.vector_store %arg5[%c2_33, %c0_34, %c0_35], %35 {strides = array<i32>} : memref<4x128x128xf32, #tpu.memory_space<vmem>>, vector<1x128x128xf32>,
    %c3 = arith.constant 3 : index
    %c0_36 = arith.constant 0 : index
    %c0_37 = arith.constant 0 : index
    %36 = vector.load %arg5[%c3, %c0_36, %c0_37] : memref<4x128x128xf32, #tpu.memory_space<vmem>>, vector<1x128x128xf32>
    %37 = vector.shape_cast %36 : vector<1x128x128xf32> to vector<128x128xf32>
    %c3_38 = arith.constant 3 : index
    %c0_39 = arith.constant 0 : index
    %c0_40 = arith.constant 0 : index
    %38 = vector.load %arg1[%c3_38, %c0_39, %c0_40] : memref<4x128x128xbf16, #tpu.memory_space<vmem>>, vector<1x128x128xbf16>
    %39 = vector.shape_cast %38 : vector<1x128x128xbf16> to vector<128x128xbf16>
    %c3_41 = arith.constant 3 : index
    %c0_42 = arith.constant 0 : index
    %c0_43 = arith.constant 0 : index
    %40 = vector.load %arg2[%c3_41, %c0_42, %c0_43] : memref<4x128x128xbf16, #tpu.memory_space<vmem>>, vector<1x128x128xbf16>
    %41 = vector.shape_cast %40 : vector<1x128x128xbf16> to vector<128x128xbf16>
    %cst_44 = arith.constant dense<0.000000e+00> : vector<128x128xf32>
    %42 = tpu.matmul %39, %41, %cst_44 {dimension_numbers = #tpu.dot_dimension_numbers<[1], [0], [0], [1], [0, 0, 1, 1], [], []>} : vector<128x128xbf16>, vector<128x128xbf16>, vector<128x128xf32> -> vector<128x128xf32>
    %43 = arith.addf %37, %42 : vector<128x128xf32>
    %c3_45 = arith.constant 3 : index
    %c0_46 = arith.constant 0 : index
    %c0_47 = arith.constant 0 : index
    %44 = vector.load %arg5[%c3_45, %c0_46, %c0_47] : memref<4x128x128xf32, #tpu.memory_space<vmem>>, vector<1x128x128xf32>
    %45 = vector.shape_cast %44 : vector<1x128x128xf32> to vector<128x128xf32>
    %46 = vector.shape_cast %43 : vector<128x128xf32> to vector<1x128x128xf32>
    tpu.vector_store %arg5[%c3_45, %c0_46, %c0_47], %46 {strides = array<i32>} : memref<4x128x128xf32, #tpu.memory_space<vmem>>, vector<1x128x128xf32>,
    %c0_i32_48 = arith.constant 0 : i32
    %47 = arith.cmpi eq, %arg0, %c0_i32_48 : i32
    %48 = arith.extui %47 : i1 to i32
    %c0_i32_49 = arith.constant 0 : i32
    %49 = arith.cmpi ne, %48, %c0_i32_49 : i32
    scf.if %49 {
      %c0_50 = arith.constant 0 : index
      %c0_51 = arith.constant 0 : index
      %c0_52 = arith.constant 0 : index
      %50 = vector.load %arg5[%c0_50, %c0_51, %c0_52] : memref<4x128x128xf32, #tpu.memory_space<vmem>>, vector<4x128x128xf32>
      %cst_53 = arith.constant dense<0.000000e+00> : vector<4x128xf32>
      %51 = vector.multi_reduction <add>, %50, %cst_53 [1] : vector<4x128x128xf32> to vector<4x128xf32>
      %52 = vector.shape_cast %51 : vector<4x128xf32> to vector<4x1x128xf32>
      %cst_54 = arith.constant dense<0.000000e+00> : vector<1x128xf32>
      %53 = vector.multi_reduction <add>, %52, %cst_54 [0] : vector<4x1x128xf32> to vector<1x128xf32>
      %54 = vector.shape_cast %53 : vector<1x128xf32> to vector<1x1x128xf32>
      %55 = arith.mulf %50, %50 : vector<4x128x128xf32>
      %cst_55 = arith.constant dense<0.000000e+00> : vector<4x128xf32>
      %56 = vector.multi_reduction <add>, %55, %cst_55 [1] : vector<4x128x128xf32> to vector<4x128xf32>
      %57 = vector.shape_cast %56 : vector<4x128xf32> to vector<4x1x128xf32>
      %cst_56 = arith.constant dense<0.000000e+00> : vector<1x128xf32>
      %58 = vector.multi_reduction <add>, %57, %cst_56 [0] : vector<4x1x128xf32> to vector<1x128xf32>
      %59 = vector.shape_cast %58 : vector<1x128xf32> to vector<1x1x128xf32>
      %cst_57 = arith.constant 5.120000e+02 : f32
      %60 = vector.broadcast %cst_57 : f32 to vector<1x1x128xf32>
      %61 = arith.divf %54, %60 : vector<1x1x128xf32>
      %cst_58 = arith.constant 5.120000e+02 : f32
      %62 = vector.broadcast %cst_58 : f32 to vector<1x1x128xf32>
      %63 = arith.divf %59, %62 : vector<1x1x128xf32>
      %64 = arith.mulf %61, %61 : vector<1x1x128xf32>
      %65 = arith.subf %63, %64 : vector<1x1x128xf32>
      %66 = vector.broadcast %61 : vector<1x1x128xf32> to vector<4x128x128xf32>
      %67 = arith.subf %50, %66 : vector<4x128x128xf32>
      %cst_59 = arith.constant 9.99999974E-6 : f32
      %68 = vector.broadcast %cst_59 : f32 to vector<1x1x128xf32>
      %69 = arith.addf %65, %68 : vector<1x1x128xf32>
      %70 = math.rsqrt %69 : vector<1x1x128xf32>
      %71 = vector.broadcast %70 : vector<1x1x128xf32> to vector<4x128x128xf32>
      %72 = arith.mulf %67, %71 : vector<4x128x128xf32>
      %c0_60 = arith.constant 0 : index
      %c0_61 = arith.constant 0 : index
      %73 = vector.load %arg3[%c0_60, %c0_61] : memref<1x128xf32, #tpu.memory_space<vmem>>, vector<1x128xf32>
      %74 = vector.shape_cast %73 : vector<1x128xf32> to vector<1x1x128xf32>
      %75 = vector.broadcast %74 : vector<1x1x128xf32> to vector<4x128x128xf32>
      %76 = arith.mulf %72, %75 : vector<4x128x128xf32>
      %c0_62 = arith.constant 0 : index
      %c0_63 = arith.constant 0 : index
      %77 = vector.load %arg4[%c0_62, %c0_63] : memref<1x128xf32, #tpu.memory_space<vmem>>, vector<1x128xf32>
      %78 = vector.shape_cast %77 : vector<1x128xf32> to vector<1x1x128xf32>
      %79 = vector.broadcast %78 : vector<1x1x128xf32> to vector<4x128x128xf32>
      %80 = arith.addf %76, %79 : vector<4x128x128xf32>
      %cst_64 = arith.constant 0.000000e+00 : f32
      %81 = vector.broadcast %cst_64 : f32 to vector<4x128x128xf32>
      %82 = arith.maximumf %80, %81 : vector<4x128x128xf32>
      %c0_65 = arith.constant 0 : index
      %c0_66 = arith.constant 0 : index
      %c0_67 = arith.constant 0 : index
      %83 = vector.load %arg5[%c0_65, %c0_66, %c0_67] : memref<4x128x128xf32, #tpu.memory_space<vmem>>, vector<4x128x128xf32>
      tpu.vector_store %arg5[%c0_65, %c0_66, %c0_67], %82 {strides = array<i32>} : memref<4x128x128xf32, #tpu.memory_space<vmem>>, vector<4x128x128xf32>,
    } else {
    }
    return
  }
  func.func @transform_0(%arg0: i32) -> (i32, i32, i32) {
    %c0_i32 = arith.constant 0 : i32
    %c0_i32_0 = arith.constant 0 : i32
    %c0_i32_1 = arith.constant 0 : i32
    return %c0_i32, %c0_i32_0, %arg0 : i32, i32, i32
  }
  func.func @transform_1(%arg0: i32) -> (i32, i32, i32) {
    %c0_i32 = arith.constant 0 : i32
    %c0_i32_0 = arith.constant 0 : i32
    %c0_i32_1 = arith.constant 0 : i32
    return %c0_i32, %arg0, %c0_i32_0 : i32, i32, i32
  }
  func.func @transform_2(%arg0: i32) -> (i32, i32) {
    %c0_i32 = arith.constant 0 : i32
    %c0_i32_0 = arith.constant 0 : i32
    %c0_i32_1 = arith.constant 0 : i32
    return %c0_i32, %c0_i32_0 : i32, i32
  }
  func.func @transform_3(%arg0: i32) -> (i32, i32) {
    %c0_i32 = arith.constant 0 : i32
    %c0_i32_0 = arith.constant 0 : i32
    %c0_i32_1 = arith.constant 0 : i32
    return %c0_i32, %c0_i32_0 : i32, i32
  }
  func.func @transform_4(%arg0: i32) -> (i32, i32, i32) {
    %c0_i32 = arith.constant 0 : i32
    %c0_i32_0 = arith.constant 0 : i32
    %c0_i32_1 = arith.constant 0 : i32
    %c0_i32_2 = arith.constant 0 : i32
    return %c0_i32, %c0_i32_0, %c0_i32_1 : i32, i32, i32
  }
}

module attributes {stable_mosaic.version = 11 : i64} {
  func.func @_convt_tanh_kernel(%arg0: i32, %arg1: i32, %arg2: i32, %arg3: memref<1x512x128xbf16, #tpu.memory_space<vmem>>, %arg4: memref<1x128x128xbf16, #tpu.memory_space<vmem>>, %arg5: memref<1x512x128xf32, #tpu.memory_space<vmem>>) attributes {dimension_semantics = [#tpu.dimension_semantics<parallel>, #tpu.dimension_semantics<parallel>, #tpu.dimension_semantics<arbitrary>], iteration_bounds = array<i64: 4, 1, 1>, scalar_prefetch = 0 : i64, scratch_operands = 0 : i64, tpu.core_type = #tpu.core_type<tc>, window_params = [{transform_indices = @transform_0, window_bounds = array<i64: 1, 512, 128>}, {transform_indices = @transform_1, window_bounds = array<i64: 1, 128, 128>}, {transform_indices = @transform_2, window_bounds = array<i64: 1, 512, 128>}]} {
    %c0_i32 = arith.constant 0 : i32
    %0 = arith.cmpi eq, %arg2, %c0_i32 : i32
    %1 = arith.extui %0 : i1 to i32
    %c0_i32_0 = arith.constant 0 : i32
    %2 = arith.cmpi ne, %1, %c0_i32_0 : i32
    scf.if %2 {
      %cst_14 = arith.constant 0.000000e+00 : f32
      %17 = vector.broadcast %cst_14 : f32 to vector<1x512x128xf32>
      %c0_15 = arith.constant 0 : index
      %c0_16 = arith.constant 0 : index
      %c0_17 = arith.constant 0 : index
      %18 = vector.load %arg5[%c0_15, %c0_16, %c0_17] : memref<1x512x128xf32, #tpu.memory_space<vmem>>, vector<1x512x128xf32>
      tpu.vector_store %arg5[%c0_15, %c0_16, %c0_17], %17 {strides = array<i32>} : memref<1x512x128xf32, #tpu.memory_space<vmem>>, vector<1x512x128xf32>,
    } else {
    }
    %c0 = arith.constant 0 : index
    %c0_1 = arith.constant 0 : index
    %c0_2 = arith.constant 0 : index
    %3 = vector.load %arg5[%c0, %c0_1, %c0_2] : memref<1x512x128xf32, #tpu.memory_space<vmem>>, vector<1x512x128xf32>
    %4 = vector.shape_cast %3 : vector<1x512x128xf32> to vector<512x128xf32>
    %c0_3 = arith.constant 0 : index
    %c0_4 = arith.constant 0 : index
    %c0_5 = arith.constant 0 : index
    %5 = vector.load %arg3[%c0_3, %c0_4, %c0_5] : memref<1x512x128xbf16, #tpu.memory_space<vmem>>, vector<1x512x128xbf16>
    %6 = vector.shape_cast %5 : vector<1x512x128xbf16> to vector<512x128xbf16>
    %c0_6 = arith.constant 0 : index
    %c0_7 = arith.constant 0 : index
    %c0_8 = arith.constant 0 : index
    %7 = vector.load %arg4[%c0_6, %c0_7, %c0_8] : memref<1x128x128xbf16, #tpu.memory_space<vmem>>, vector<1x128x128xbf16>
    %8 = vector.shape_cast %7 : vector<1x128x128xbf16> to vector<128x128xbf16>
    %cst = arith.constant dense<0.000000e+00> : vector<512x128xf32>
    %9 = tpu.matmul %6, %8, %cst {dimension_numbers = #tpu.dot_dimension_numbers<[1], [0], [0], [1], [0, 0, 1, 1], [], []>} : vector<512x128xbf16>, vector<128x128xbf16>, vector<512x128xf32> -> vector<512x128xf32>
    %10 = arith.addf %4, %9 : vector<512x128xf32>
    %c0_9 = arith.constant 0 : index
    %c0_10 = arith.constant 0 : index
    %c0_11 = arith.constant 0 : index
    %11 = vector.load %arg5[%c0_9, %c0_10, %c0_11] : memref<1x512x128xf32, #tpu.memory_space<vmem>>, vector<1x512x128xf32>
    %12 = vector.shape_cast %11 : vector<1x512x128xf32> to vector<512x128xf32>
    %13 = vector.shape_cast %10 : vector<512x128xf32> to vector<1x512x128xf32>
    tpu.vector_store %arg5[%c0_9, %c0_10, %c0_11], %13 {strides = array<i32>} : memref<1x512x128xf32, #tpu.memory_space<vmem>>, vector<1x512x128xf32>,
    %c0_i32_12 = arith.constant 0 : i32
    %14 = arith.cmpi eq, %arg2, %c0_i32_12 : i32
    %15 = arith.extui %14 : i1 to i32
    %c0_i32_13 = arith.constant 0 : i32
    %16 = arith.cmpi ne, %15, %c0_i32_13 : i32
    scf.if %16 {
      %c0_14 = arith.constant 0 : index
      %c0_15 = arith.constant 0 : index
      %c0_16 = arith.constant 0 : index
      %17 = vector.load %arg5[%c0_14, %c0_15, %c0_16] : memref<1x512x128xf32, #tpu.memory_space<vmem>>, vector<1x512x128xf32>
      %18 = math.tanh %17 : vector<1x512x128xf32>
      %c0_17 = arith.constant 0 : index
      %c0_18 = arith.constant 0 : index
      %c0_19 = arith.constant 0 : index
      %19 = vector.load %arg5[%c0_17, %c0_18, %c0_19] : memref<1x512x128xf32, #tpu.memory_space<vmem>>, vector<1x512x128xf32>
      tpu.vector_store %arg5[%c0_17, %c0_18, %c0_19], %18 {strides = array<i32>} : memref<1x512x128xf32, #tpu.memory_space<vmem>>, vector<1x512x128xf32>,
    } else {
    }
    return
  }
  func.func @transform_0(%arg0: i32, %arg1: i32, %arg2: i32) -> (i32, i32, i32) {
    %c0_i32 = arith.constant 0 : i32
    return %arg0, %arg1, %arg2 : i32, i32, i32
  }
  func.func @transform_1(%arg0: i32, %arg1: i32, %arg2: i32) -> (i32, i32, i32) {
    %c0_i32 = arith.constant 0 : i32
    %c0_i32_0 = arith.constant 0 : i32
    return %arg0, %arg2, %c0_i32 : i32, i32, i32
  }
  func.func @transform_2(%arg0: i32, %arg1: i32, %arg2: i32) -> (i32, i32, i32) {
    %c0_i32 = arith.constant 0 : i32
    %c0_i32_0 = arith.constant 0 : i32
    return %arg0, %arg1, %c0_i32 : i32, i32, i32
  }
}

</mosaic_0001>

<llo_original>
// kernel: _lambda_.5
$region0: #{_lambda_.5}
  #allocation0 [shape = 'u32[]', space=smem, size = 0x4, offset = 0x4, fixed_abs, tag = 'smem constant byte address 0x4 - core index']
  #allocation1 [shape = 'u32[72,128]{1,0:T(1,128)}', space=vmem, size = 0x9000, scoped, tag = 'internal scratch']
  %s0 = inlined_call_operand.vmem [shape: bf16[4,32,256], index: 0, kind: input, shape index: {}]
  %s1 = inlined_call_operand.vmem [shape: bf16[4,256,128], index: 1, kind: input, shape index: {}]
  %s2 = inlined_call_operand.vmem [shape: f32[1,128], index: 2, kind: input, shape index: {}]
  %s3 = inlined_call_operand.vmem [shape: f32[1,128], index: 3, kind: input, shape index: {}]
  %s4 = inlined_call_operand.vmem [shape: f32[4,32,128], index: 4, kind: output, shape index: {}]
  %s5 = sld [smem:[#allocation0]]
  $region34: #{_lambda_.5} parent=0
    _
  %s7 = ssub.s32 1, %s5
  %s8 = scalar_select 0, %s7, %s5
  // Predicated region
  $region2: #{_lambda_.5} parent=0 // pred_check
    _
  $region3: #{_lambda_.5} parent=0 // pred_check_branch
    %10 = sbr.rel (0) target = $region5
  $region4: #{_lambda_.5} parent=0 // pred_region
    _
  $region5: #{_lambda_.5} parent=0 // pred_fallthru
    _
  // Predicated region
  $region6: #{_lambda_.5} parent=0 // pred_check
    _
  $region7: #{_lambda_.5} parent=0 // pred_check_branch
    %12 = sbr.rel (0) target = $region9
  $region8: #{_lambda_.5} parent=0 // pred_region
    _
  $region9: #{_lambda_.5} parent=0 // pred_fallthru
    _
  // Predicated region
  $region10: #{_lambda_.5} parent=0 // pred_check
    _
  $region11: #{_lambda_.5} parent=0 // pred_check_branch
    %14 = sbr.rel (0) target = $region13
  $region12: #{_lambda_.5} parent=0 // pred_region
    _
  $region13: #{_lambda_.5} parent=0 // pred_fallthru
    _
  // Predicated region
  $region14: #{_lambda_.5} parent=0 // pred_check
    _
  $region15: #{_lambda_.5} parent=0 // pred_check_branch
    %16 = sbr.rel (0) target = $region17
  $region16: #{_lambda_.5} parent=0 // pred_region
    _
  $region17: #{_lambda_.5} parent=0 // pred_fallthru
    _
  %p17 = scmp.eq.s32.totalorder 0, 0
  // Predicated region
  $region18: #{_lambda_.5} parent=0 // pred_check
    %p18 = pneg %p17
  $region19: #{_lambda_.5} parent=0 // pred_check_branch
    %20 = sbr.rel (%p18) target = $region21
  $region20: #{_lambda_.5} parent=0 // pred_region
    %21 = vst [vmem:[%s4] sm:$0xff] 0.0
    %22 = vst [vmem:[%s4 + $0x8] sm:$0xff] 0.0
    %23 = vst [vmem:[%s4 + $0x10] sm:$0xff] 0.0
    %24 = vst [vmem:[%s4 + $0x18] sm:$0xff] 0.0
    %25 = vst [vmem:[%s4 + $0x20] sm:$0xff] 0.0
    %26 = vst [vmem:[%s4 + $0x28] sm:$0xff] 0.0
    %27 = vst [vmem:[%s4 + $0x30] sm:$0xff] 0.0
    %28 = vst [vmem:[%s4 + $0x38] sm:$0xff] 0.0
    %29 = vst [vmem:[%s4 + $0x40] sm:$0xff] 0.0
    %30 = vst [vmem:[%s4 + $0x48] sm:$0xff] 0.0
    %31 = vst [vmem:[%s4 + $0x50] sm:$0xff] 0.0
    %32 = vst [vmem:[%s4 + $0x58] sm:$0xff] 0.0
    %33 = vst [vmem:[%s4 + $0x60] sm:$0xff] 0.0
    %34 = vst [vmem:[%s4 + $0x68] sm:$0xff] 0.0
    %35 = vst [vmem:[%s4 + $0x70] sm:$0xff] 0.0
    %36 = vst [vmem:[%s4 + $0x78] sm:$0xff] 0.0
  $region21: #{_lambda_.5} parent=0 // pred_fallthru
    _
  %v37 = vld [vmem:[%s4] sm:$0xff]
  %v38 = vld [vmem:[%s4 + $0x8] sm:$0xff]
  %v39 = vld [vmem:[%s4 + $0x10] sm:$0xff]
  %v40 = vld [vmem:[%s4 + $0x18] sm:$0xff]
  %v41 = vld [vmem:[%s0] sm:$0xff]
  %v42 = vld [vmem:[%s0 + $0x8] sm:$0xff]
  %v43 = vld [vmem:[%s0 + $0x10] sm:$0xff]
  %v44 = vld [vmem:[%s0 + $0x18] sm:$0xff]
  %v45 = vld [vmem:[%s1] sm:$0xf]
  %v46 = vld [vmem:[%s1 + $0x4] sm:$0xf]
  %v47 = vld [vmem:[%s1 + $0x8] sm:$0xf]
  %v48 = vld [vmem:[%s1 + $0xc] sm:$0xf]
  %v49 = vld [vmem:[%s1 + $0x10] sm:$0xf]
  %v50 = vld [vmem:[%s1 + $0x14] sm:$0xf]
  %v51 = vld [vmem:[%s1 + $0x18] sm:$0xf]
  %v52 = vld [vmem:[%s1 + $0x1c] sm:$0xf]
  %v53 = vld [vmem:[%s1 + $0x20] sm:$0xf]
  %v54 = vld [vmem:[%s1 + $0x24] sm:$0xf]
  %v55 = vld [vmem:[%s1 + $0x28] sm:$0xf]
  %v56 = vld [vmem:[%s1 + $0x2c] sm:$0xf]
  %v57 = vld [vmem:[%s1 + $0x30] sm:$0xf]
  %v58 = vld [vmem:[%s1 + $0x34] sm:$0xf]
  %v59 = vld [vmem:[%s1 + $0x38] sm:$0xf]
  %v60 = vld [vmem:[%s1 + $0x3c] sm:$0xf]
  %v61 = vld [vmem:[%s1 + $0x40] sm:$0xf]
  %v62 = vld [vmem:[%s1 + $0x44] sm:$0xf]
  %v63 = vld [vmem:[%s1 + $0x48] sm:$0xf]
  %v64 = vld [vmem:[%s1 + $0x4c] sm:$0xf]
  %v65 = vld [vmem:[%s1 + $0x50] sm:$0xf]
  %v66 = vld [vmem:[%s1 + $0x54] sm:$0xf]
  %v67 = vld [vmem:[%s1 + $0x58] sm:$0xf]
  %v68 = vld [vmem:[%s1 + $0x5c] sm:$0xf]
  %v69 = vld [vmem:[%s1 + $0x60] sm:$0xf]
  %v70 = vld [vmem:[%s1 + $0x64] sm:$0xf]
  %v71 = vld [vmem:[%s1 + $0x68] sm:$0xf]
  %v72 = vld [vmem:[%s1 + $0x6c] sm:$0xf]
  %v73 = vld [vmem:[%s1 + $0x70] sm:$0xf]
  %v74 = vld [vmem:[%s1 + $0x74] sm:$0xf]
  %v75 = vld [vmem:[%s1 + $0x78] sm:$0xf]
  %v76 = vld [vmem:[%s1 + $0x7c] sm:$0xf]
  %v81 = vunpack.c.l.b16 %v41
  %v82 = vunpack.c.h.b16 %v41
  %v83 = vunpack.c.l.b16 %v42
  %v84 = vunpack.c.h.b16 %v42
  %v85 = vunpack.c.l.b16 %v43
  %v86 = vunpack.c.h.b16 %v43
  %v87 = vunpack.c.l.b16 %v44
  %v88 = vunpack.c.h.b16 %v44
  %v89 = vpack.c.b16 %v83, %v81
  %v90 = vpack.c.b16 %v84, %v82
  %v91 = vpack.c.b16 %v87, %v85
  %v92 = vpack.c.b16 %v88, %v86
  %v129 = vunpack.c.l.b16 %v45
  %v130 = vunpack.c.l.b16 %v46
  %v131 = vunpack.c.l.b16 %v47
  %v132 = vunpack.c.l.b16 %v48
  %v133 = vunpack.c.l.b16 %v49
  %v134 = vunpack.c.l.b16 %v50
  %v135 = vunpack.c.l.b16 %v51
  %v136 = vunpack.c.l.b16 %v52
  %v137 = vunpack.c.l.b16 %v53
  %v138 = vunpack.c.l.b16 %v54
  %v139 = vunpack.c.l.b16 %v55
  %v140 = vunpack.c.l.b16 %v56
  %v141 = vunpack.c.l.b16 %v57
  %v142 = vunpack.c.l.b16 %v58
  %v143 = vunpack.c.l.b16 %v59
  %v144 = vunpack.c.l.b16 %v60
  %v145 = vunpack.c.l.b16 %v61
  %v146 = vunpack.c.l.b16 %v62
  %v147 = vunpack.c.l.b16 %v63
  %v148 = vunpack.c.l.b16 %v64
  %v149 = vunpack.c.l.b16 %v65
  %v150 = vunpack.c.l.b16 %v66
  %v151 = vunpack.c.l.b16 %v67
  %v152 = vunpack.c.l.b16 %v68
  %v153 = vunpack.c.l.b16 %v69
  %v154 = vunpack.c.l.b16 %v70
  %v155 = vunpack.c.l.b16 %v71
  %v156 = vunpack.c.l.b16 %v72
  %v157 = vunpack.c.l.b16 %v73
  %v158 = vunpack.c.l.b16 %v74
  %v159 = vunpack.c.l.b16 %v75
  %v160 = vunpack.c.l.b16 %v76
  %v161 = vpack.c.b16 %v130, %v129
  %v162 = vpack.c.b16 %v132, %v131
  %v163 = vpack.c.b16 %v134, %v133
  %v164 = vpack.c.b16 %v136, %v135
  %v165 = vpack.c.b16 %v138, %v137
  %v166 = vpack.c.b16 %v140, %v139
  %v167 = vpack.c.b16 %v142, %v141
  %v168 = vpack.c.b16 %v144, %v143
  %v169 = vpack.c.b16 %v146, %v145
  %v170 = vpack.c.b16 %v148, %v147
  %v171 = vpack.c.b16 %v150, %v149
  %v172 = vpack.c.b16 %v152, %v151
  %v173 = vpack.c.b16 %v154, %v153
  %v174 = vpack.c.b16 %v156, %v155
  %v175 = vpack.c.b16 %v158, %v157
  %v176 = vpack.c.b16 %v160, %v159
  %193 = vmatpush.bf16.msra.mxu0 %v168
  %194 = vmatpush.bf16.msra.mxu0 %v167
  %195 = vmatpush.bf16.msra.mxu0 %v166
  %196 = vmatpush.bf16.msra.mxu0 %v165
  %197 = vmatpush.bf16.msra.mxu0 %v164
  %198 = vmatpush.bf16.msra.mxu0 %v163
  %199 = vmatpush.bf16.msra.mxu0 %v162
  %200 = vmatpush.bf16.msra.mxu0 %v161
  %201 = vmatmul.bf16.gmra.mxu0 %v89
  %v202 = vpop.f32.mrf.mxu0
  %v203 = vadd.f32 0.0, %v202
  %v204 = vpop.f32.mrf.mxu0
  %v205 = vadd.f32 0.0, %v204
  %206 = vmatmul.bf16.gmra.mxu0 %v91
  %v207 = vpop.f32.mrf.mxu0
  %v208 = vadd.f32 0.0, %v207
  %v209 = vpop.f32.mrf.mxu0
  %v210 = vadd.f32 0.0, %v209
  %211 = vdwg.mxu0
  %212 = vmatpush.bf16.msra.mxu0 %v176
  %213 = vmatpush.bf16.msra.mxu0 %v175
  %214 = vmatpush.bf16.msra.mxu0 %v174
  %215 = vmatpush.bf16.msra.mxu0 %v173
  %216 = vmatpush.bf16.msra.mxu0 %v172
  %217 = vmatpush.bf16.msra.mxu0 %v171
  %218 = vmatpush.bf16.msra.mxu0 %v170
  %219 = vmatpush.bf16.msra.mxu0 %v169
  %220 = vmatmul.bf16.gmra.mxu0 %v90
  %v221 = vpop.f32.mrf.mxu0
  %v222 = vadd.f32 %v203, %v221
  %v223 = vpop.f32.mrf.mxu0
  %v224 = vadd.f32 %v205, %v223
  %225 = vmatmul.bf16.gmra.mxu0 %v92
  %v226 = vpop.f32.mrf.mxu0
  %v227 = vadd.f32 %v208, %v226
  %v228 = vpop.f32.mrf.mxu0
  %v229 = vadd.f32 %v210, %v228
  %230 = vdwg.mxu0
  %v231 = vadd.f32 %v37, %v222
  %v232 = vadd.f32 %v38, %v224
  %v233 = vadd.f32 %v39, %v227
  %v234 = vadd.f32 %v40, %v229
  %235 = vst [vmem:[%s4] sm:$0xff] %v231
  %236 = vst [vmem:[%s4 + $0x8] sm:$0xff] %v232
  %237 = vst [vmem:[%s4 + $0x10] sm:$0xff] %v233
  %238 = vst [vmem:[%s4 + $0x18] sm:$0xff] %v234
  %s239 = scalar_lea.vmem %s4, 32
  %v240 = vld [vmem:[%s239] sm:$0xff]
  %v241 = vld [vmem:[%s239 + $0x8] sm:$0xff]
  %v242 = vld [vmem:[%s239 + $0x10] sm:$0xff]
  %v243 = vld [vmem:[%s239 + $0x18] sm:$0xff]
  %s244 = scalar_lea.vmem %s0, 32
  %v245 = vld [vmem:[%s244] sm:$0xff]
  %v246 = vld [vmem:[%s244 + $0x8] sm:$0xff]
  %v247 = vld [vmem:[%s244 + $0x10] sm:$0xff]
  %v248 = vld [vmem:[%s244 + $0x18] sm:$0xff]
  %s249 = scalar_lea.vmem %s1, 128
  %v250 = vld [vmem:[%s249] sm:$0xf]
  %v251 = vld [vmem:[%s249 + $0x4] sm:$0xf]
  %v252 = vld [vmem:[%s249 + $0x8] sm:$0xf]
  %v253 = vld [vmem:[%s249 + $0xc] sm:$0xf]
  %v254 = vld [vmem:[%s249 + $0x10] sm:$0xf]
  %v255 = vld [vmem:[%s249 + $0x14] sm:$0xf]
  %v256 = vld [vmem:[%s249 + $0x18] sm:$0xf]
  %v257 = vld [vmem:[%s249 + $0x1c] sm:$0xf]
  %v258 = vld [vmem:[%s249 + $0x20] sm:$0xf]
  %v259 = vld [vmem:[%s249 + $0x24] sm:$0xf]
  %v260 = vld [vmem:[%s249 + $0x28] sm:$0xf]
  %v261 = vld [vmem:[%s249 + $0x2c] sm:$0xf]
  %v262 = vld [vmem:[%s249 + $0x30] sm:$0xf]
  %v263 = vld [vmem:[%s249 + $0x34] sm:$0xf]
  %v264 = vld [vmem:[%s249 + $0x38] sm:$0xf]
  %v265 = vld [vmem:[%s249 + $0x3c] sm:$0xf]
  %v266 = vld [vmem:[%s249 + $0x40] sm:$0xf]
  %v267 = vld [vmem:[%s249 + $0x44] sm:$0xf]
  %v268 = vld [vmem:[%s249 + $0x48] sm:$0xf]
  %v269 = vld [vmem:[%s249 + $0x4c] sm:$0xf]
  %v270 = vld [vmem:[%s249 + $0x50] sm:$0xf]
  %v271 = vld [vmem:[%s249 + $0x54] sm:$0xf]
  %v272 = vld [vmem:[%s249 + $0x58] sm:$0xf]
  %v273 = vld [vmem:[%s249 + $0x5c] sm:$0xf]
  %v274 = vld [vmem:[%s249 + $0x60] sm:$0xf]
  %v275 = vld [vmem:[%s249 + $0x64] sm:$0xf]
  %v276 = vld [vmem:[%s249 + $0x68] sm:$0xf]
  %v277 = vld [vmem:[%s249 + $0x6c] sm:$0xf]
  %v278 = vld [vmem:[%s249 + $0x70] sm:$0xf]
  %v279 = vld [vmem:[%s249 + $0x74] sm:$0xf]
  %v280 = vld [vmem:[%s249 + $0x78] sm:$0xf]
  %v281 = vld [vmem:[%s249 + $0x7c] sm:$0xf]
  %v286 = vunpack.c.l.b16 %v245
  %v287 = vunpack.c.h.b16 %v245
  %v288 = vunpack.c.l.b16 %v246
  %v289 = vunpack.c.h.b16 %v246
  %v290 = vunpack.c.l.b16 %v247
  %v291 = vunpack.c.h.b16 %v247
  %v292 = vunpack.c.l.b16 %v248
  %v293 = vunpack.c.h.b16 %v248
  %v294 = vpack.c.b16 %v288, %v286
  %v295 = vpack.c.b16 %v289, %v287
  %v296 = vpack.c.b16 %v292, %v290
  %v297 = vpack.c.b16 %v293, %v291
  %v334 = vunpack.c.l.b16 %v250
  %v335 = vunpack.c.l.b16 %v251
  %v336 = vunpack.c.l.b16 %v252
  %v337 = vunpack.c.l.b16 %v253
  %v338 = vunpack.c.l.b16 %v254
  %v339 = vunpack.c.l.b16 %v255
  %v340 = vunpack.c.l.b16 %v256
  %v341 = vunpack.c.l.b16 %v257
  %v342 = vunpack.c.l.b16 %v258
  %v343 = vunpack.c.l.b16 %v259
  %v344 = vunpack.c.l.b16 %v260
  %v345 = vunpack.c.l.b16 %v261
  %v346 = vunpack.c.l.b16 %v262
  %v347 = vunpack.c.l.b16 %v263
  %v348 = vunpack.c.l.b16 %v264
  %v349 = vunpack.c.l.b16 %v265
  %v350 = vunpack.c.l.b16 %v266
  %v351 = vunpack.c.l.b16 %v267
  %v352 = vunpack.c.l.b16 %v268
  %v353 = vunpack.c.l.b16 %v269
  %v354 = vunpack.c.l.b16 %v270
  %v355 = vunpack.c.l.b16 %v271
  %v356 = vunpack.c.l.b16 %v272
  %v357 = vunpack.c.l.b16 %v273
  %v358 = vunpack.c.l.b16 %v274
  %v359 = vunpack.c.l.b16 %v275
  %v360 = vunpack.c.l.b16 %v276
  %v361 = vunpack.c.l.b16 %v277
  %v362 = vunpack.c.l.b16 %v278
  %v363 = vunpack.c.l.b16 %v279
  %v364 = vunpack.c.l.b16 %v280
  %v365 = vunpack.c.l.b16 %v281
  %v366 = vpack.c.b16 %v335, %v334
  %v367 = vpack.c.b16 %v337, %v336
  %v368 = vpack.c.b16 %v339, %v338
  %v369 = vpack.c.b16 %v341, %v340
  %v370 = vpack.c.b16 %v343, %v342
  %v371 = vpack.c.b16 %v345, %v344
  %v372 = vpack.c.b16 %v347, %v346
  %v373 = vpack.c.b16 %v349, %v348
  %v374 = vpack.c.b16 %v351, %v350
  %v375 = vpack.c.b16 %v353, %v352
  %v376 = vpack.c.b16 %v355, %v354
  %v377 = vpack.c.b16 %v357, %v356
  %v378 = vpack.c.b16 %v359, %v358
  %v379 = vpack.c.b16 %v361, %v360
  %v380 = vpack.c.b16 %v363, %v362
  %v381 = vpack.c.b16 %v365, %v364
  %398 = vmatpush.bf16.msra.mxu0 %v373
  %399 = vmatpush.bf16.msra.mxu0 %v372
  %400 = vmatpush.bf16.msra.mxu0 %v371
  %401 = vmatpush.bf16.msra.mxu0 %v370
  %402 = vmatpush.bf16.msra.mxu0 %v369
  %403 = vmatpush.bf16.msra.mxu0 %v368
  %404 = vmatpush.bf16.msra.mxu0 %v367
  %405 = vmatpush.bf16.msra.mxu0 %v366
  %406 = vmatmul.bf16.gmra.mxu0 %v294
  %v407 = vpop.f32.mrf.mxu0
  %v408 = vadd.f32 0.0, %v407
  %v409 = vpop.f32.mrf.mxu0
  %v410 = vadd.f32 0.0, %v409
  %411 = vmatmul.bf16.gmra.mxu0 %v296
  %v412 = vpop.f32.mrf.mxu0
  %v413 = vadd.f32 0.0, %v412
  %v414 = vpop.f32.mrf.mxu0
  %v415 = vadd.f32 0.0, %v414
  %416 = vdwg.mxu0
  %417 = vmatpush.bf16.msra.mxu0 %v381
  %418 = vmatpush.bf16.msra.mxu0 %v380
  %419 = vmatpush.bf16.msra.mxu0 %v379
  %420 = vmatpush.bf16.msra.mxu0 %v378
  %421 = vmatpush.bf16.msra.mxu0 %v377
  %422 = vmatpush.bf16.msra.mxu0 %v376
  %423 = vmatpush.bf16.msra.mxu0 %v375
  %424 = vmatpush.bf16.msra.mxu0 %v374
  %425 = vmatmul.bf16.gmra.mxu0 %v295
  %v426 = vpop.f32.mrf.mxu0
  %v427 = vadd.f32 %v408, %v426
  %v428 = vpop.f32.mrf.mxu0
  %v429 = vadd.f32 %v410, %v428
  %430 = vmatmul.bf16.gmra.mxu0 %v297
  %v431 = vpop.f32.mrf.mxu0
  %v432 = vadd.f32 %v413, %v431
  %v433 = vpop.f32.mrf.mxu0
  %v434 = vadd.f32 %v415, %v433
  %435 = vdwg.mxu0
  %v436 = vadd.f32 %v240, %v427
  %v437 = vadd.f32 %v241, %v429
  %v438 = vadd.f32 %v242, %v432
  %v439 = vadd.f32 %v243, %v434
  %440 = vst [vmem:[%s239] sm:$0xff] %v436
  %441 = vst [vmem:[%s239 + $0x8] sm:$0xff] %v437
  %442 = vst [vmem:[%s239 + $0x10] sm:$0xff] %v438
  %443 = vst [vmem:[%s239 + $0x18] sm:$0xff] %v439
  %s444 = scalar_lea.vmem %s4, 64
  %v445 = vld [vmem:[%s444] sm:$0xff]
  %v446 = vld [vmem:[%s444 + $0x8] sm:$0xff]
  %v447 = vld [vmem:[%s444 + $0x10] sm:$0xff]
  %v448 = vld [vmem:[%s444 + $0x18] sm:$0xff]
  %s449 = scalar_lea.vmem %s0, 64
  %v450 = vld [vmem:[%s449] sm:$0xff]
  %v451 = vld [vmem:[%s449 + $0x8] sm:$0xff]
  %v452 = vld [vmem:[%s449 + $0x10] sm:$0xff]
  %v453 = vld [vmem:[%s449 + $0x18] sm:$0xff]
  %s454 = scalar_lea.vmem %s1, 256
  %v455 = vld [vmem:[%s454] sm:$0xf]
  %v456 = vld [vmem:[%s454 + $0x4] sm:$0xf]
  %v457 = vld [vmem:[%s454 + $0x8] sm:$0xf]
  %v458 = vld [vmem:[%s454 + $0xc] sm:$0xf]
  %v459 = vld [vmem:[%s454 + $0x10] sm:$0xf]
  %v460 = vld [vmem:[%s454 + $0x14] sm:$0xf]
  %v461 = vld [vmem:[%s454 + $0x18] sm:$0xf]
  %v462 = vld [vmem:[%s454 + $0x1c] sm:$0xf]
  %v463 = vld [vmem:[%s454 + $0x20] sm:$0xf]
  %v464 = vld [vmem:[%s454 + $0x24] sm:$0xf]
  %v465 = vld [vmem:[%s454 + $0x28] sm:$0xf]
  %v466 = vld [vmem:[%s454 + $0x2c] sm:$0xf]
  %v467 = vld [vmem:[%s454 + $0x30] sm:$0xf]
  %v468 = vld [vmem:[%s454 + $0x34] sm:$0xf]
  %v469 = vld [vmem:[%s454 + $0x38] sm:$0xf]
  %v470 = vld [vmem:[%s454 + $0x3c] sm:$0xf]
  %v471 = vld [vmem:[%s454 + $0x40] sm:$0xf]
  %v472 = vld [vmem:[%s454 + $0x44] sm:$0xf]
  %v473 = vld [vmem:[%s454 + $0x48] sm:$0xf]
  %v474 = vld [vmem:[%s454 + $0x4c] sm:$0xf]
  %v475 = vld [vmem:[%s454 + $0x50] sm:$0xf]
  %v476 = vld [vmem:[%s454 + $0x54] sm:$0xf]
  %v477 = vld [vmem:[%s454 + $0x58] sm:$0xf]
  %v478 = vld [vmem:[%s454 + $0x5c] sm:$0xf]
  %v479 = vld [vmem:[%s454 + $0x60] sm:$0xf]
  %v480 = vld [vmem:[%s454 + $0x64] sm:$0xf]
  %v481 = vld [vmem:[%s454 + $0x68] sm:$0xf]
  %v482 = vld [vmem:[%s454 + $0x6c] sm:$0xf]
  %v483 = vld [vmem:[%s454 + $0x70] sm:$0xf]
  %v484 = vld [vmem:[%s454 + $0x74] sm:$0xf]
  %v485 = vld [vmem:[%s454 + $0x78] sm:$0xf]
  %v486 = vld [vmem:[%s454 + $0x7c] sm:$0xf]
  %v491 = vunpack.c.l.b16 %v450
  %v492 = vunpack.c.h.b16 %v450
  %v493 = vunpack.c.l.b16 %v451
  %v494 = vunpack.c.h.b16 %v451
  %v495 = vunpack.c.l.b16 %v452
  %v496 = vunpack.c.h.b16 %v452
  %v497 = vunpack.c.l.b16 %v453
  %v498 = vunpack.c.h.b16 %v453
  %v499 = vpack.c.b16 %v493, %v491
  %v500 = vpack.c.b16 %v494, %v492
  %v501 = vpack.c.b16 %v497, %v495
  %v502 = vpack.c.b16 %v498, %v496
  %v539 = vunpack.c.l.b16 %v455
  %v540 = vunpack.c.l.b16 %v456
  %v541 = vunpack.c.l.b16 %v457
  %v542 = vunpack.c.l.b16 %v458
  %v543 = vunpack.c.l.b16 %v459
  %v544 = vunpack.c.l.b16 %v460
  %v545 = vunpack.c.l.b16 %v461
  %v546 = vunpack.c.l.b16 %v462
  %v547 = vunpack.c.l.b16 %v463
  %v548 = vunpack.c.l.b16 %v464
  %v549 = vunpack.c.l.b16 %v465
  %v550 = vunpack.c.l.b16 %v466
  %v551 = vunpack.c.l.b16 %v467
  %v552 = vunpack.c.l.b16 %v468
  %v553 = vunpack.c.l.b16 %v469
  %v554 = vunpack.c.l.b16 %v470
  %v555 = vunpack.c.l.b16 %v471
  %v556 = vunpack.c.l.b16 %v472
  %v557 = vunpack.c.l.b16 %v473
  %v558 = vunpack.c.l.b16 %v474
  %v559 = vunpack.c.l.b16 %v475
  %v560 = vunpack.c.l.b16 %v476
  %v561 = vunpack.c.l.b16 %v477
  %v562 = vunpack.c.l.b16 %v478
  %v563 = vunpack.c.l.b16 %v479
  %v564 = vunpack.c.l.b16 %v480
  %v565 = vunpack.c.l.b16 %v481
  %v566 = vunpack.c.l.b16 %v482
  %v567 = vunpack.c.l.b16 %v483
  %v568 = vunpack.c.l.b16 %v484
  %v569 = vunpack.c.l.b16 %v485
  %v570 = vunpack.c.l.b16 %v486
  %v571 = vpack.c.b16 %v540, %v539
  %v572 = vpack.c.b16 %v542, %v541
  %v573 = vpack.c.b16 %v544, %v543
  %v574 = vpack.c.b16 %v546, %v545
  %v575 = vpack.c.b16 %v548, %v547
  %v576 = vpack.c.b16 %v550, %v549
  %v577 = vpack.c.b16 %v552, %v551
  %v578 = vpack.c.b16 %v554, %v553
  %v579 = vpack.c.b16 %v556, %v555
  %v580 = vpack.c.b16 %v558, %v557
  %v581 = vpack.c.b16 %v560, %v559
  %v582 = vpack.c.b16 %v562, %v561
  %v583 = vpack.c.b16 %v564, %v563
  %v584 = vpack.c.b16 %v566, %v565
  %v585 = vpack.c.b16 %v568, %v567
  %v586 = vpack.c.b16 %v570, %v569
  %603 = vmatpush.bf16.msra.mxu0 %v578
  %604 = vmatpush.bf16.msra.mxu0 %v577
  %605 = vmatpush.bf16.msra.mxu0 %v576
  %606 = vmatpush.bf16.msra.mxu0 %v575
  %607 = vmatpush.bf16.msra.mxu0 %v574
  %608 = vmatpush.bf16.msra.mxu0 %v573
  %609 = vmatpush.bf16.msra.mxu0 %v572
  %610 = vmatpush.bf16.msra.mxu0 %v571
  %611 = vmatmul.bf16.gmra.mxu0 %v499
  %v612 = vpop.f32.mrf.mxu0
  %v613 = vadd.f32 0.0, %v612
  %v614 = vpop.f32.mrf.mxu0
  %v615 = vadd.f32 0.0, %v614
  %616 = vmatmul.bf16.gmra.mxu0 %v501
  %v617 = vpop.f32.mrf.mxu0
  %v618 = vadd.f32 0.0, %v617
  %v619 = vpop.f32.mrf.mxu0
  %v620 = vadd.f32 0.0, %v619
  %621 = vdwg.mxu0
  %622 = vmatpush.bf16.msra.mxu0 %v586
  %623 = vmatpush.bf16.msra.mxu0 %v585
  %624 = vmatpush.bf16.msra.mxu0 %v584
  %625 = vmatpush.bf16.msra.mxu0 %v583
  %626 = vmatpush.bf16.msra.mxu0 %v582
  %627 = vmatpush.bf16.msra.mxu0 %v581
  %628 = vmatpush.bf16.msra.mxu0 %v580
  %629 = vmatpush.bf16.msra.mxu0 %v579
  %630 = vmatmul.bf16.gmra.mxu0 %v500
  %v631 = vpop.f32.mrf.mxu0
  %v632 = vadd.f32 %v613, %v631
  %v633 = vpop.f32.mrf.mxu0
  %v634 = vadd.f32 %v615, %v633
  %635 = vmatmul.bf16.gmra.mxu0 %v502
  %v636 = vpop.f32.mrf.mxu0
  %v637 = vadd.f32 %v618, %v636
  %v638 = vpop.f32.mrf.mxu0
  %v639 = vadd.f32 %v620, %v638
  %640 = vdwg.mxu0
  %v641 = vadd.f32 %v445, %v632
  %v642 = vadd.f32 %v446, %v634
  %v643 = vadd.f32 %v447, %v637
  %v644 = vadd.f32 %v448, %v639
  %645 = vst [vmem:[%s444] sm:$0xff] %v641
  %646 = vst [vmem:[%s444 + $0x8] sm:$0xff] %v642
  %647 = vst [vmem:[%s444 + $0x10] sm:$0xff] %v643
  %648 = vst [vmem:[%s444 + $0x18] sm:$0xff] %v644
  %s649 = scalar_lea.vmem %s4, 96
  %v650 = vld [vmem:[%s649] sm:$0xff]
  %v651 = vld [vmem:[%s649 + $0x8] sm:$0xff]
  %v652 = vld [vmem:[%s649 + $0x10] sm:$0xff]
  %v653 = vld [vmem:[%s649 + $0x18] sm:$0xff]
  %s654 = scalar_lea.vmem %s0, 96
  %v655 = vld [vmem:[%s654] sm:$0xff]
  %v656 = vld [vmem:[%s654 + $0x8] sm:$0xff]
  %v657 = vld [vmem:[%s654 + $0x10] sm:$0xff]
  %v658 = vld [vmem:[%s654 + $0x18] sm:$0xff]
  %s659 = scalar_lea.vmem %s1, 384
  %v660 = vld [vmem:[%s659] sm:$0xf]
  %v661 = vld [vmem:[%s659 + $0x4] sm:$0xf]
  %v662 = vld [vmem:[%s659 + $0x8] sm:$0xf]
  %v663 = vld [vmem:[%s659 + $0xc] sm:$0xf]
  %v664 = vld [vmem:[%s659 + $0x10] sm:$0xf]
  %v665 = vld [vmem:[%s659 + $0x14] sm:$0xf]
  %v666 = vld [vmem:[%s659 + $0x18] sm:$0xf]
  %v667 = vld [vmem:[%s659 + $0x1c] sm:$0xf]
  %v668 = vld [vmem:[%s659 + $0x20] sm:$0xf]
  %v669 = vld [vmem:[%s659 + $0x24] sm:$0xf]
  %v670 = vld [vmem:[%s659 + $0x28] sm:$0xf]
  %v671 = vld [vmem:[%s659 + $0x2c] sm:$0xf]
  %v672 = vld [vmem:[%s659 + $0x30] sm:$0xf]
  %v673 = vld [vmem:[%s659 + $0x34] sm:$0xf]
  %v674 = vld [vmem:[%s659 + $0x38] sm:$0xf]
  %v675 = vld [vmem:[%s659 + $0x3c] sm:$0xf]
  %v676 = vld [vmem:[%s659 + $0x40] sm:$0xf]
  %v677 = vld [vmem:[%s659 + $0x44] sm:$0xf]
  %v678 = vld [vmem:[%s659 + $0x48] sm:$0xf]
  %v679 = vld [vmem:[%s659 + $0x4c] sm:$0xf]
  %v680 = vld [vmem:[%s659 + $0x50] sm:$0xf]
  %v681 = vld [vmem:[%s659 + $0x54] sm:$0xf]
  %v682 = vld [vmem:[%s659 + $0x58] sm:$0xf]
  %v683 = vld [vmem:[%s659 + $0x5c] sm:$0xf]
  %v684 = vld [vmem:[%s659 + $0x60] sm:$0xf]
  %v685 = vld [vmem:[%s659 + $0x64] sm:$0xf]
  %v686 = vld [vmem:[%s659 + $0x68] sm:$0xf]
  %v687 = vld [vmem:[%s659 + $0x6c] sm:$0xf]
  %v688 = vld [vmem:[%s659 + $0x70] sm:$0xf]
  %v689 = vld [vmem:[%s659 + $0x74] sm:$0xf]
  %v690 = vld [vmem:[%s659 + $0x78] sm:$0xf]
  %v691 = vld [vmem:[%s659 + $0x7c] sm:$0xf]
  %v696 = vunpack.c.l.b16 %v655
  %v697 = vunpack.c.h.b16 %v655
  %v698 = vunpack.c.l.b16 %v656
  %v699 = vunpack.c.h.b16 %v656
  %v700 = vunpack.c.l.b16 %v657
  %v701 = vunpack.c.h.b16 %v657
  %v702 = vunpack.c.l.b16 %v658
  %v703 = vunpack.c.h.b16 %v658
  %v704 = vpack.c.b16 %v698, %v696
  %v705 = vpack.c.b16 %v699, %v697
  %v706 = vpack.c.b16 %v702, %v700
  %v707 = vpack.c.b16 %v703, %v701
  %v744 = vunpack.c.l.b16 %v660
  %v745 = vunpack.c.l.b16 %v661
  %v746 = vunpack.c.l.b16 %v662
  %v747 = vunpack.c.l.b16 %v663
  %v748 = vunpack.c.l.b16 %v664
  %v749 = vunpack.c.l.b16 %v665
  %v750 = vunpack.c.l.b16 %v666
  %v751 = vunpack.c.l.b16 %v667
  %v752 = vunpack.c.l.b16 %v668
  %v753 = vunpack.c.l.b16 %v669
  %v754 = vunpack.c.l.b16 %v670
  %v755 = vunpack.c.l.b16 %v671
  %v756 = vunpack.c.l.b16 %v672
  %v757 = vunpack.c.l.b16 %v673
  %v758 = vunpack.c.l.b16 %v674
  %v759 = vunpack.c.l.b16 %v675
  %v760 = vunpack.c.l.b16 %v676
  %v761 = vunpack.c.l.b16 %v677
  %v762 = vunpack.c.l.b16 %v678
  %v763 = vunpack.c.l.b16 %v679
  %v764 = vunpack.c.l.b16 %v680
  %v765 = vunpack.c.l.b16 %v681
  %v766 = vunpack.c.l.b16 %v682
  %v767 = vunpack.c.l.b16 %v683
  %v768 = vunpack.c.l.b16 %v684
  %v769 = vunpack.c.l.b16 %v685
  %v770 = vunpack.c.l.b16 %v686
  %v771 = vunpack.c.l.b16 %v687
  %v772 = vunpack.c.l.b16 %v688
  %v773 = vunpack.c.l.b16 %v689
  %v774 = vunpack.c.l.b16 %v690
  %v775 = vunpack.c.l.b16 %v691
  %v776 = vpack.c.b16 %v745, %v744
  %v777 = vpack.c.b16 %v747, %v746
  %v778 = vpack.c.b16 %v749, %v748
  %v779 = vpack.c.b16 %v751, %v750
  %v780 = vpack.c.b16 %v753, %v752
  %v781 = vpack.c.b16 %v755, %v754
  %v782 = vpack.c.b16 %v757, %v756
  %v783 = vpack.c.b16 %v759, %v758
  %v784 = vpack.c.b16 %v761, %v760
  %v785 = vpack.c.b16 %v763, %v762
  %v786 = vpack.c.b16 %v765, %v764
  %v787 = vpack.c.b16 %v767, %v766
  %v788 = vpack.c.b16 %v769, %v768
  %v789 = vpack.c.b16 %v771, %v770
  %v790 = vpack.c.b16 %v773, %v772
  %v791 = vpack.c.b16 %v775, %v774
  %808 = vmatpush.bf16.msra.mxu0 %v783
  %809 = vmatpush.bf16.msra.mxu0 %v782
  %810 = vmatpush.bf16.msra.mxu0 %v781
  %811 = vmatpush.bf16.msra.mxu0 %v780
  %812 = vmatpush.bf16.msra.mxu0 %v779
  %813 = vmatpush.bf16.msra.mxu0 %v778
  %814 = vmatpush.bf16.msra.mxu0 %v777
  %815 = vmatpush.bf16.msra.mxu0 %v776
  %816 = vmatmul.bf16.gmra.mxu0 %v704
  %v817 = vpop.f32.mrf.mxu0
  %v818 = vadd.f32 0.0, %v817
  %v819 = vpop.f32.mrf.mxu0
  %v820 = vadd.f32 0.0, %v819
  %821 = vmatmul.bf16.gmra.mxu0 %v706
  %v822 = vpop.f32.mrf.mxu0
  %v823 = vadd.f32 0.0, %v822
  %v824 = vpop.f32.mrf.mxu0
  %v825 = vadd.f32 0.0, %v824
  %826 = vdwg.mxu0
  %827 = vmatpush.bf16.msra.mxu0 %v791
  %828 = vmatpush.bf16.msra.mxu0 %v790
  %829 = vmatpush.bf16.msra.mxu0 %v789
  %830 = vmatpush.bf16.msra.mxu0 %v788
  %831 = vmatpush.bf16.msra.mxu0 %v787
  %832 = vmatpush.bf16.msra.mxu0 %v786
  %833 = vmatpush.bf16.msra.mxu0 %v785
  %834 = vmatpush.bf16.msra.mxu0 %v784
  %835 = vmatmul.bf16.gmra.mxu0 %v705
  %v836 = vpop.f32.mrf.mxu0
  %v837 = vadd.f32 %v818, %v836
  %v838 = vpop.f32.mrf.mxu0
  %v839 = vadd.f32 %v820, %v838
  %840 = vmatmul.bf16.gmra.mxu0 %v707
  %v841 = vpop.f32.mrf.mxu0
  %v842 = vadd.f32 %v823, %v841
  %v843 = vpop.f32.mrf.mxu0
  %v844 = vadd.f32 %v825, %v843
  %845 = vdwg.mxu0
  %v846 = vadd.f32 %v650, %v837
  %v847 = vadd.f32 %v651, %v839
  %v848 = vadd.f32 %v652, %v842
  %v849 = vadd.f32 %v653, %v844
  %850 = vst [vmem:[%s649] sm:$0xff] %v846
  %851 = vst [vmem:[%s649 + $0x8] sm:$0xff] %v847
  %852 = vst [vmem:[%s649 + $0x10] sm:$0xff] %v848
  %853 = vst [vmem:[%s649 + $0x18] sm:$0xff] %v849
  // Predicated region
  $region22: #{_lambda_.5} parent=0 // pred_check
    %p854 = pneg %p17
  $region23: #{_lambda_.5} parent=0 // pred_check_branch
    %856 = sbr.rel (%p854) target = $region25
  $region24: #{_lambda_.5} parent=0 // pred_region
    %v857 = vld [vmem:[%s4] sm:$0xff]
    %v858 = vld [vmem:[%s4 + $0x8] sm:$0xff]
    %v859 = vld [vmem:[%s4 + $0x10] sm:$0xff]
    %v860 = vld [vmem:[%s4 + $0x18] sm:$0xff]
    %v861 = vld [vmem:[%s4 + $0x20] sm:$0xff]
    %v862 = vld [vmem:[%s4 + $0x28] sm:$0xff]
    %v863 = vld [vmem:[%s4 + $0x30] sm:$0xff]
    %v864 = vld [vmem:[%s4 + $0x38] sm:$0xff]
    %v865 = vld [vmem:[%s4 + $0x40] sm:$0xff]
    %v866 = vld [vmem:[%s4 + $0x48] sm:$0xff]
    %v867 = vld [vmem:[%s4 + $0x50] sm:$0xff]
    %v868 = vld [vmem:[%s4 + $0x58] sm:$0xff]
    %v869 = vld [vmem:[%s4 + $0x60] sm:$0xff]
    %v870 = vld [vmem:[%s4 + $0x68] sm:$0xff]
    %v871 = vld [vmem:[%s4 + $0x70] sm:$0xff]
    %v872 = vld [vmem:[%s4 + $0x78] sm:$0xff]
    %v873 = vadd.f32 %v857, %v858
    %v874 = vadd.f32 %v873, %v859
    %v875 = vadd.f32 %v874, %v860
    %v876 = vrot.slane %v875, 4
    %v877 = vadd.f32 %v875, %v876
    %v878 = vrot.slane %v877, 2
    %v879 = vadd.f32 %v877, %v878
    %v880 = vrot.slane %v879, 1
    %v881 = vadd.f32 %v879, %v880
    %v882 = vadd.f32 %v861, %v862
    %v883 = vadd.f32 %v882, %v863
    %v884 = vadd.f32 %v883, %v864
    %v885 = vrot.slane %v884, 4
    %v886 = vadd.f32 %v884, %v885
    %v887 = vrot.slane %v886, 2
    %v888 = vadd.f32 %v886, %v887
    %v889 = vrot.slane %v888, 1
    %v890 = vadd.f32 %v888, %v889
    %v891 = vadd.f32 %v865, %v866
    %v892 = vadd.f32 %v891, %v867
    %v893 = vadd.f32 %v892, %v868
    %v894 = vrot.slane %v893, 4
    %v895 = vadd.f32 %v893, %v894
    %v896 = vrot.slane %v895, 2
    %v897 = vadd.f32 %v895, %v896
    %v898 = vrot.slane %v897, 1
    %v899 = vadd.f32 %v897, %v898
    %v900 = vadd.f32 %v869, %v870
    %v901 = vadd.f32 %v900, %v871
    %v902 = vadd.f32 %v901, %v872
    %v903 = vrot.slane %v902, 4
    %v904 = vadd.f32 %v902, %v903
    %v905 = vrot.slane %v904, 2
    %v906 = vadd.f32 %v904, %v905
    %v907 = vrot.slane %v906, 1
    %v908 = vadd.f32 %v906, %v907
    %v909 = vadd.f32 %v881, %v890
    %v910 = vadd.f32 %v909, %v899
    %v911 = vadd.f32 %v910, %v908
    %v912 = vmul.f32 %v857, %v857
    %v913 = vmul.f32 %v858, %v858
    %v914 = vmul.f32 %v859, %v859
    %v915 = vmul.f32 %v860, %v860
    %v916 = vmul.f32 %v861, %v861
    %v917 = vmul.f32 %v862, %v862
    %v918 = vmul.f32 %v863, %v863
    %v919 = vmul.f32 %v864, %v864
    %v920 = vmul.f32 %v865, %v865
    %v921 = vmul.f32 %v866, %v866
    %v922 = vmul.f32 %v867, %v867
    %v923 = vmul.f32 %v868, %v868
    %v924 = vmul.f32 %v869, %v869
    %v925 = vmul.f32 %v870, %v870
    %v926 = vmul.f32 %v871, %v871
    %v927 = vmul.f32 %v872, %v872
    %v928 = vadd.f32 %v912, %v913
    %v929 = vadd.f32 %v928, %v914
    %v930 = vadd.f32 %v929, %v915
    %v931 = vrot.slane %v930, 4
    %v932 = vadd.f32 %v930, %v931
    %v933 = vrot.slane %v932, 2
    %v934 = vadd.f32 %v932, %v933
    %v935 = vrot.slane %v934, 1
    %v936 = vadd.f32 %v934, %v935
    %v937 = vadd.f32 %v916, %v917
    %v938 = vadd.f32 %v937, %v918
    %v939 = vadd.f32 %v938, %v919
    %v940 = vrot.slane %v939, 4
    %v941 = vadd.f32 %v939, %v940
    %v942 = vrot.slane %v941, 2
    %v943 = vadd.f32 %v941, %v942
    %v944 = vrot.slane %v943, 1
    %v945 = vadd.f32 %v943, %v944
    %v946 = vadd.f32 %v920, %v921
    %v947 = vadd.f32 %v946, %v922
    %v948 = vadd.f32 %v947, %v923
    %v949 = vrot.slane %v948, 4
    %v950 = vadd.f32 %v948, %v949
    %v951 = vrot.slane %v950, 2
    %v952 = vadd.f32 %v950, %v951
    %v953 = vrot.slane %v952, 1
    %v954 = vadd.f32 %v952, %v953
    %v955 = vadd.f32 %v924, %v925
    %v956 = vadd.f32 %v955, %v926
    %v957 = vadd.f32 %v956, %v927
    %v958 = vrot.slane %v957, 4
    %v959 = vadd.f32 %v957, %v958
    %v960 = vrot.slane %v959, 2
    %v961 = vadd.f32 %v959, %v960
    %v962 = vrot.slane %v961, 1
    %v963 = vadd.f32 %v961, %v962
    %v964 = vadd.f32 %v936, %v945
    %v965 = vadd.f32 %v964, %v954
    %v966 = vadd.f32 %v965, %v963
    %v967 = vrcp.pop 128.0
    %v968 = vmul.f32 128.0, %v967
    %v969 = vsub.f32 1.0, %v968
    %v970 = vmul.f32 %v967, %v969
    %v971 = vadd.f32 %v967, %v970
    %vm972 = vweird.f32 %v967
    %v973 = vsel %vm972, %v967, %v971
    %v974 = vmul.f32 %v911, %v973
    %v975 = vmul.f32 %v966, %v973
    %v976 = vmul.f32 %v974, %v974
    %v977 = vsub.f32 %v975, %v976
    %v978 = vsub.f32 %v857, %v974
    %v979 = vsub.f32 %v858, %v974
    %v980 = vsub.f32 %v859, %v974
    %v981 = vsub.f32 %v860, %v974
    %v982 = vsub.f32 %v861, %v974
    %v983 = vsub.f32 %v862, %v974
    %v984 = vsub.f32 %v863, %v974
    %v985 = vsub.f32 %v864, %v974
    %v986 = vsub.f32 %v865, %v974
    %v987 = vsub.f32 %v866, %v974
    %v988 = vsub.f32 %v867, %v974
    %v989 = vsub.f32 %v868, %v974
    %v990 = vsub.f32 %v869, %v974
    %v991 = vsub.f32 %v870, %v974
    %v992 = vsub.f32 %v871, %v974
    %v993 = vsub.f32 %v872, %v974
    %v994 = vadd.f32 %v977, 1e-05
    %v995 = vrsqrt.pop %v994
    %v996 = vmul.f32 %v995, %v994
    %v997 = vmul.f32 %v996, %v995
    %v998 = vmul.f32 0.5, %v997
    %v999 = vsub.f32 1.5, %v998
    %v1000 = vmul.f32 %v995, %v999
    %vm1001 = vweird.f32 %v994
    %vm1002 = vweird.f32 %v995
    %vm1003 = vmor %vm1001, %vm1002
    %v1004 = vsel %vm1003, %v995, %v1000
    %v1005 = vmul.f32 %v978, %v1004
    %v1006 = vmul.f32 %v979, %v1004
    %v1007 = vmul.f32 %v980, %v1004
    %v1008 = vmul.f32 %v981, %v1004
    %v1009 = vmul.f32 %v982, %v1004
    %v1010 = vmul.f32 %v983, %v1004
    %v1011 = vmul.f32 %v984, %v1004
    %v1012 = vmul.f32 %v985, %v1004
    %v1013 = vmul.f32 %v986, %v1004
    %v1014 = vmul.f32 %v987, %v1004
    %v1015 = vmul.f32 %v988, %v1004
    %v1016 = vmul.f32 %v989, %v1004
    %v1017 = vmul.f32 %v990, %v1004
    %v1018 = vmul.f32 %v991, %v1004
    %v1019 = vmul.f32 %v992, %v1004
    %v1020 = vmul.f32 %v993, %v1004
    %v1021 = vld [vmem:[%s2] sm:$0x1]
    %v1023 = vperm.slane %v1021, 0
    %v1025 = vmul.f32 %v1005, %v1023
    %v1026 = vmul.f32 %v1006, %v1023
    %v1027 = vmul.f32 %v1007, %v1023
    %v1028 = vmul.f32 %v1008, %v1023
    %v1029 = vmul.f32 %v1009, %v1023
    %v1030 = vmul.f32 %v1010, %v1023
    %v1031 = vmul.f32 %v1011, %v1023
    %v1032 = vmul.f32 %v1012, %v1023
    %v1033 = vmul.f32 %v1013, %v1023
    %v1034 = vmul.f32 %v1014, %v1023
    %v1035 = vmul.f32 %v1015, %v1023
    %v1036 = vmul.f32 %v1016, %v1023
    %v1037 = vmul.f32 %v1017, %v1023
    %v1038 = vmul.f32 %v1018, %v1023
    %v1039 = vmul.f32 %v1019, %v1023
    %v1040 = vmul.f32 %v1020, %v1023
    %v1041 = vld [vmem:[%s3] sm:$0x1]
    %v1043 = vperm.slane %v1041, 0
    %v1045 = vadd.f32 %v1025, %v1043
    %v1046 = vadd.f32 %v1026, %v1043
    %v1047 = vadd.f32 %v1027, %v1043
    %v1048 = vadd.f32 %v1028, %v1043
    %v1049 = vadd.f32 %v1029, %v1043
    %v1050 = vadd.f32 %v1030, %v1043
    %v1051 = vadd.f32 %v1031, %v1043
    %v1052 = vadd.f32 %v1032, %v1043
    %v1053 = vadd.f32 %v1033, %v1043
    %v1054 = vadd.f32 %v1034, %v1043
    %v1055 = vadd.f32 %v1035, %v1043
    %v1056 = vadd.f32 %v1036, %v1043
    %v1057 = vadd.f32 %v1037, %v1043
    %v1058 = vadd.f32 %v1038, %v1043
    %v1059 = vadd.f32 %v1039, %v1043
    %v1060 = vadd.f32 %v1040, %v1043
    %v1061 = vmax.f32 %v1045, 0.0
    %v1062 = vmax.f32 %v1046, 0.0
    %v1063 = vmax.f32 %v1047, 0.0
    %v1064 = vmax.f32 %v1048, 0.0
    %v1065 = vmax.f32 %v1049, 0.0
    %v1066 = vmax.f32 %v1050, 0.0
    %v1067 = vmax.f32 %v1051, 0.0
    %v1068 = vmax.f32 %v1052, 0.0
    %v1069 = vmax.f32 %v1053, 0.0
    %v1070 = vmax.f32 %v1054, 0.0
    %v1071 = vmax.f32 %v1055, 0.0
    %v1072 = vmax.f32 %v1056, 0.0
    %v1073 = vmax.f32 %v1057, 0.0
    %v1074 = vmax.f32 %v1058, 0.0
    %v1075 = vmax.f32 %v1059, 0.0
    %v1076 = vmax.f32 %v1060, 0.0
    %1077 = vst [vmem:[%s4] sm:$0xff] %v1061
    %1078 = vst [vmem:[%s4 + $0x8] sm:$0xff] %v1062
    %1079 = vst [vmem:[%s4 + $0x10] sm:$0xff] %v1063
    %1080 = vst [vmem:[%s4 + $0x18] sm:$0xff] %v1064
    %1081 = vst [vmem:[%s4 + $0x20] sm:$0xff] %v1065
    %1082 = vst [vmem:[%s4 + $0x28] sm:$0xff] %v1066
    %1083 = vst [vmem:[%s4 + $0x30] sm:$0xff] %v1067
    %1084 = vst [vmem:[%s4 + $0x38] sm:$0xff] %v1068
    %1085 = vst [vmem:[%s4 + $0x40] sm:$0xff] %v1069
    %1086 = vst [vmem:[%s4 + $0x48] sm:$0xff] %v1070
    %1087 = vst [vmem:[%s4 + $0x50] sm:$0xff] %v1071
    %1088 = vst [vmem:[%s4 + $0x58] sm:$0xff] %v1072
    %1089 = vst [vmem:[%s4 + $0x60] sm:$0xff] %v1073
    %1090 = vst [vmem:[%s4 + $0x68] sm:$0xff] %v1074
    %1091 = vst [vmem:[%s4 + $0x70] sm:$0xff] %v1075
    %1092 = vst [vmem:[%s4 + $0x78] sm:$0xff] %v1076
  $region25: #{_lambda_.5} parent=0 // pred_fallthru
    _
  // Predicated region
  $region26: #{_lambda_.5} parent=0 // pred_check
    _
  $region27: #{_lambda_.5} parent=0 // pred_check_branch
    %1094 = sbr.rel (0) target = $region29
  $region28: #{_lambda_.5} parent=0 // pred_region
    _
  $region29: #{_lambda_.5} parent=0 // pred_fallthru
    _
  // Predicated region
  $region30: #{_lambda_.5} parent=0 // pred_check
    _
  $region31: #{_lambda_.5} parent=0 // pred_check_branch
    %1096 = sbr.rel (0) target = $region33
  $region32: #{_lambda_.5} parent=0 // pred_region
    _
  $region33: #{_lambda_.5} parent=0 // pred_fallthru
    _

// kernel: _lambda_.4
$region0: #{_lambda_.4}
  #allocation0 [shape = 'u32[]', space=smem, size = 0x4, offset = 0x4, fixed_abs, tag = 'smem constant byte address 0x4 - core index']
  #allocation1 [shape = 'u32[72,128]{1,0:T(1,128)}', space=vmem, size = 0x9000, scoped, tag = 'internal scratch']
  %s0 = inlined_call_operand.vmem [shape: bf16[16,2,128], index: 0, kind: input, shape index: {}]
  %s1 = inlined_call_operand.hbm [shape: bf16[16,128,128], index: 1, kind: input, shape index: {}]
  %s2 = inlined_call_operand.vmem [shape: f32[1,128], index: 2, kind: input, shape index: {}]
  %s3 = inlined_call_operand.vmem [shape: f32[1,128], index: 3, kind: input, shape index: {}]
  %s4 = inlined_call_operand.vmem [shape: f32[16,2,128], index: 4, kind: output, shape index: {}]
  %s5 = sld [smem:[#allocation0]]
  $region38: #{_lambda_.4} parent=0
    _
  %s7 = ssub.s32 1, %s5
  %s8 = scalar_select 0, %s7, %s5
  $region1: #{_lambda_.4} parent=0
    #allocation2 [shape = 'u8[524288]{0}', space=vmem, size = 0x80000, scoped, tag = 'input window, operand 1, single buffered']
    #allocation3 [shape = 's32[1]{0}', space=sflag, size = 0x4, scoped, tag = 'scoped memory for _lambda_.4']
    %9 = vsyncpa [#allocation3], 0
    // Predicated region
    $region2: #{_lambda_.4} parent=1 // pred_check
      _
    $region3: #{_lambda_.4} parent=1 // pred_check_branch
      %11 = sbr.rel (0) target = $region5
    $region4: #{_lambda_.4} parent=1 // pred_region
      _
    $region5: #{_lambda_.4} parent=1 // pred_fallthru
      _
    // Predicated region
    $region6: #{_lambda_.4} parent=1 // pred_check
      _
    $region7: #{_lambda_.4} parent=1 // pred_check_branch
      %13 = sbr.rel (0) target = $region9
    $region8: #{_lambda_.4} parent=1 // pred_region
      %15 = vsyncadd [#allocation3], 0
      %s16 = sshll.u32 %s1, 4
      %s17 = int_to_ptr.hbm [resolvable:$true] %s16
      %s18 = sshll.u32 [#allocation2], 4
      %s19 = int_to_ptr.vmem [resolvable:$true] %s18
      %24 = dma.hbm_to_vmem [thread:$0]  %s17, 16384, %s19, [#allocation3], 64, 64, 4
    $region9: #{_lambda_.4} parent=1 // pred_fallthru
      _
    // Predicated region
    $region10: #{_lambda_.4} parent=1 // pred_check
      _
    $region11: #{_lambda_.4} parent=1 // pred_check_branch
      %26 = sbr.rel (0) target = $region13
    $region12: #{_lambda_.4} parent=1 // pred_region
      _
    $region13: #{_lambda_.4} parent=1 // pred_fallthru
      _
    // Predicated region
    $region14: #{_lambda_.4} parent=1 // pred_check
      _
    $region15: #{_lambda_.4} parent=1 // pred_check_branch
      %28 = sbr.rel (0) target = $region17
    $region16: #{_lambda_.4} parent=1 // pred_region
      _
    $region17: #{_lambda_.4} parent=1 // pred_fallthru
      _
    // Predicated region
    $region18: #{_lambda_.4} parent=1 // pred_check
      _
    $region19: #{_lambda_.4} parent=1 // pred_check_branch
      %30 = sbr.rel (0) target = $region21
    $region20: #{_lambda_.4} parent=1 // pred_region
      %32 = dma.done [#allocation3], 16384
    $region21: #{_lambda_.4} parent=1 // pred_fallthru
      _
    %p33 = scmp.eq.s32.totalorder 0, 0
    // Predicated region
    $region22: #{_lambda_.4} parent=1 // pred_check
      %p34 = pneg %p33
    $region23: #{_lambda_.4} parent=1 // pred_check_branch
      %36 = sbr.rel (%p34) target = $region25
    $region24: #{_lambda_.4} parent=1 // pred_region
      %37 = vst [vmem:[%s4] sm:$0x3] 0.0
      %38 = vst [vmem:[%s4 + $0x2] sm:$0x3] 0.0
      %39 = vst [vmem:[%s4 + $0x4] sm:$0x3] 0.0
      %40 = vst [vmem:[%s4 + $0x6] sm:$0x3] 0.0
      %41 = vst [vmem:[%s4 + $0x8] sm:$0x3] 0.0
      %42 = vst [vmem:[%s4 + $0xa] sm:$0x3] 0.0
      %43 = vst [vmem:[%s4 + $0xc] sm:$0x3] 0.0
      %44 = vst [vmem:[%s4 + $0xe] sm:$0x3] 0.0
      %45 = vst [vmem:[%s4 + $0x10] sm:$0x3] 0.0
      %46 = vst [vmem:[%s4 + $0x12] sm:$0x3] 0.0
      %47 = vst [vmem:[%s4 + $0x14] sm:$0x3] 0.0
      %48 = vst [vmem:[%s4 + $0x16] sm:$0x3] 0.0
      %49 = vst [vmem:[%s4 + $0x18] sm:$0x3] 0.0
      %50 = vst [vmem:[%s4 + $0x1a] sm:$0x3] 0.0
      %51 = vst [vmem:[%s4 + $0x1c] sm:$0x3] 0.0
      %52 = vst [vmem:[%s4 + $0x1e] sm:$0x3] 0.0
    $region25: #{_lambda_.4} parent=1 // pred_fallthru
      _
    %v53 = vld [vmem:[%s4] sm:$0x3]
    %v54 = vld [vmem:[%s0] sm:$0x1]
    %v55 = vld [vmem:[#allocation2] sm:$0xf]
    %v56 = vld [vmem:[#allocation2 + $0x4] sm:$0xf]
    %v57 = vld [vmem:[#allocation2 + $0x8] sm:$0xf]
    %v58 = vld [vmem:[#allocation2 + $0xc] sm:$0xf]
    %v59 = vld [vmem:[#allocation2 + $0x10] sm:$0xf]
    %v60 = vld [vmem:[#allocation2 + $0x14] sm:$0xf]
    %v61 = vld [vmem:[#allocation2 + $0x18] sm:$0xf]
    %v62 = vld [vmem:[#allocation2 + $0x1c] sm:$0xf]
    %v63 = vld [vmem:[#allocation2 + $0x20] sm:$0xf]
    %v64 = vld [vmem:[#allocation2 + $0x24] sm:$0xf]
    %v65 = vld [vmem:[#allocation2 + $0x28] sm:$0xf]
    %v66 = vld [vmem:[#allocation2 + $0x2c] sm:$0xf]
    %v67 = vld [vmem:[#allocation2 + $0x30] sm:$0xf]
    %v68 = vld [vmem:[#allocation2 + $0x34] sm:$0xf]
    %v69 = vld [vmem:[#allocation2 + $0x38] sm:$0xf]
    %v70 = vld [vmem:[#allocation2 + $0x3c] sm:$0xf]
    %v87 = vunpack.c.l.b16 %v55
    %v88 = vunpack.c.l.b16 %v56
    %v89 = vunpack.c.l.b16 %v57
    %v90 = vunpack.c.l.b16 %v58
    %v91 = vunpack.c.l.b16 %v59
    %v92 = vunpack.c.l.b16 %v60
    %v93 = vunpack.c.l.b16 %v61
    %v94 = vunpack.c.l.b16 %v62
    %v95 = vunpack.c.l.b16 %v63
    %v96 = vunpack.c.l.b16 %v64
    %v97 = vunpack.c.l.b16 %v65
    %v98 = vunpack.c.l.b16 %v66
    %v99 = vunpack.c.l.b16 %v67
    %v100 = vunpack.c.l.b16 %v68
    %v101 = vunpack.c.l.b16 %v69
    %v102 = vunpack.c.l.b16 %v70
    %v103 = vpack.c.b16 %v88, %v87
    %v104 = vpack.c.b16 %v90, %v89
    %v105 = vpack.c.b16 %v92, %v91
    %v106 = vpack.c.b16 %v94, %v93
    %v107 = vpack.c.b16 %v96, %v95
    %v108 = vpack.c.b16 %v98, %v97
    %v109 = vpack.c.b16 %v100, %v99
    %v110 = vpack.c.b16 %v102, %v101
    %119 = vmatpush.bf16.msra.mxu0 %v110
    %120 = vmatpush.bf16.msra.mxu0 %v109
    %121 = vmatpush.bf16.msra.mxu0 %v108
    %122 = vmatpush.bf16.msra.mxu0 %v107
    %123 = vmatpush.bf16.msra.mxu0 %v106
    %124 = vmatpush.bf16.msra.mxu0 %v105
    %125 = vmatpush.bf16.msra.mxu0 %v104
    %126 = vmatpush.bf16.msra.mxu0 %v103
    %127 = vmatmul.bf16.gmra.mxu0 %v54
    %v128 = vpop.f32.mrf.mxu0
    %v129 = vadd.f32 0.0, %v128
    %v130 = vpop.f32.mrf.mxu0
    %131 = vdwg.mxu0
    %v132 = vadd.f32 %v53, %v129
    %133 = vst [vmem:[%s4] sm:$0x3] %v132
    %s134 = scalar_lea.vmem %s4, 2
    %v135 = vld [vmem:[%s134] sm:$0x3]
    %s136 = scalar_lea.vmem %s0, 1
    %v137 = vld [vmem:[%s136] sm:$0x1]
    %s138 = scalar_lea.vmem [#allocation2], 64
    %v139 = vld [vmem:[%s138] sm:$0xf]
    %v140 = vld [vmem:[%s138 + $0x4] sm:$0xf]
    %v141 = vld [vmem:[%s138 + $0x8] sm:$0xf]
    %v142 = vld [vmem:[%s138 + $0xc] sm:$0xf]
    %v143 = vld [vmem:[%s138 + $0x10] sm:$0xf]
    %v144 = vld [vmem:[%s138 + $0x14] sm:$0xf]
    %v145 = vld [vmem:[%s138 + $0x18] sm:$0xf]
    %v146 = vld [vmem:[%s138 + $0x1c] sm:$0xf]
    %v147 = vld [vmem:[%s138 + $0x20] sm:$0xf]
    %v148 = vld [vmem:[%s138 + $0x24] sm:$0xf]
    %v149 = vld [vmem:[%s138 + $0x28] sm:$0xf]
    %v150 = vld [vmem:[%s138 + $0x2c] sm:$0xf]
    %v151 = vld [vmem:[%s138 + $0x30] sm:$0xf]
    %v152 = vld [vmem:[%s138 + $0x34] sm:$0xf]
    %v153 = vld [vmem:[%s138 + $0x38] sm:$0xf]
    %v154 = vld [vmem:[%s138 + $0x3c] sm:$0xf]
    %v171 = vunpack.c.l.b16 %v139
    %v172 = vunpack.c.l.b16 %v140
    %v173 = vunpack.c.l.b16 %v141
    %v174 = vunpack.c.l.b16 %v142
    %v175 = vunpack.c.l.b16 %v143
    %v176 = vunpack.c.l.b16 %v144
    %v177 = vunpack.c.l.b16 %v145
    %v178 = vunpack.c.l.b16 %v146
    %v179 = vunpack.c.l.b16 %v147
    %v180 = vunpack.c.l.b16 %v148
    %v181 = vunpack.c.l.b16 %v149
    %v182 = vunpack.c.l.b16 %v150
    %v183 = vunpack.c.l.b16 %v151
    %v184 = vunpack.c.l.b16 %v152
    %v185 = vunpack.c.l.b16 %v153
    %v186 = vunpack.c.l.b16 %v154
    %v187 = vpack.c.b16 %v172, %v171
    %v188 = vpack.c.b16 %v174, %v173
    %v189 = vpack.c.b16 %v176, %v175
    %v190 = vpack.c.b16 %v178, %v177
    %v191 = vpack.c.b16 %v180, %v179
    %v192 = vpack.c.b16 %v182, %v181
    %v193 = vpack.c.b16 %v184, %v183
    %v194 = vpack.c.b16 %v186, %v185
    %203 = vmatpush.bf16.msra.mxu0 %v194
    %204 = vmatpush.bf16.msra.mxu0 %v193
    %205 = vmatpush.bf16.msra.mxu0 %v192
    %206 = vmatpush.bf16.msra.mxu0 %v191
    %207 = vmatpush.bf16.msra.mxu0 %v190
    %208 = vmatpush.bf16.msra.mxu0 %v189
    %209 = vmatpush.bf16.msra.mxu0 %v188
    %210 = vmatpush.bf16.msra.mxu0 %v187
    %211 = vmatmul.bf16.gmra.mxu0 %v137
    %v212 = vpop.f32.mrf.mxu0
    %v213 = vadd.f32 0.0, %v212
    %v214 = vpop.f32.mrf.mxu0
    %215 = vdwg.mxu0
    %v216 = vadd.f32 %v135, %v213
    %217 = vst [vmem:[%s134] sm:$0x3] %v216
    %s218 = scalar_lea.vmem %s4, 4
    %v219 = vld [vmem:[%s218] sm:$0x3]
    %s220 = scalar_lea.vmem %s0, 2
    %v221 = vld [vmem:[%s220] sm:$0x1]
    %s222 = scalar_lea.vmem [#allocation2], 128
    %v223 = vld [vmem:[%s222] sm:$0xf]
    %v224 = vld [vmem:[%s222 + $0x4] sm:$0xf]
    %v225 = vld [vmem:[%s222 + $0x8] sm:$0xf]
    %v226 = vld [vmem:[%s222 + $0xc] sm:$0xf]
    %v227 = vld [vmem:[%s222 + $0x10] sm:$0xf]
    %v228 = vld [vmem:[%s222 + $0x14] sm:$0xf]
    %v229 = vld [vmem:[%s222 + $0x18] sm:$0xf]
    %v230 = vld [vmem:[%s222 + $0x1c] sm:$0xf]
    %v231 = vld [vmem:[%s222 + $0x20] sm:$0xf]
    %v232 = vld [vmem:[%s222 + $0x24] sm:$0xf]
    %v233 = vld [vmem:[%s222 + $0x28] sm:$0xf]
    %v234 = vld [vmem:[%s222 + $0x2c] sm:$0xf]
    %v235 = vld [vmem:[%s222 + $0x30] sm:$0xf]
    %v236 = vld [vmem:[%s222 + $0x34] sm:$0xf]
    %v237 = vld [vmem:[%s222 + $0x38] sm:$0xf]
    %v238 = vld [vmem:[%s222 + $0x3c] sm:$0xf]
    %v255 = vunpack.c.l.b16 %v223
    %v256 = vunpack.c.l.b16 %v224
    %v257 = vunpack.c.l.b16 %v225
    %v258 = vunpack.c.l.b16 %v226
    %v259 = vunpack.c.l.b16 %v227
    %v260 = vunpack.c.l.b16 %v228
    %v261 = vunpack.c.l.b16 %v229
    %v262 = vunpack.c.l.b16 %v230
    %v263 = vunpack.c.l.b16 %v231
    %v264 = vunpack.c.l.b16 %v232
    %v265 = vunpack.c.l.b16 %v233
    %v266 = vunpack.c.l.b16 %v234
    %v267 = vunpack.c.l.b16 %v235
    %v268 = vunpack.c.l.b16 %v236
    %v269 = vunpack.c.l.b16 %v237
    %v270 = vunpack.c.l.b16 %v238
    %v271 = vpack.c.b16 %v256, %v255
    %v272 = vpack.c.b16 %v258, %v257
    %v273 = vpack.c.b16 %v260, %v259
    %v274 = vpack.c.b16 %v262, %v261
    %v275 = vpack.c.b16 %v264, %v263
    %v276 = vpack.c.b16 %v266, %v265
    %v277 = vpack.c.b16 %v268, %v267
    %v278 = vpack.c.b16 %v270, %v269
    %287 = vmatpush.bf16.msra.mxu0 %v278
    %288 = vmatpush.bf16.msra.mxu0 %v277
    %289 = vmatpush.bf16.msra.mxu0 %v276
    %290 = vmatpush.bf16.msra.mxu0 %v275
    %291 = vmatpush.bf16.msra.mxu0 %v274
    %292 = vmatpush.bf16.msra.mxu0 %v273
    %293 = vmatpush.bf16.msra.mxu0 %v272
    %294 = vmatpush.bf16.msra.mxu0 %v271
    %295 = vmatmul.bf16.gmra.mxu0 %v221
    %v296 = vpop.f32.mrf.mxu0
    %v297 = vadd.f32 0.0, %v296
    %v298 = vpop.f32.mrf.mxu0
    %299 = vdwg.mxu0
    %v300 = vadd.f32 %v219, %v297
    %301 = vst [vmem:[%s218] sm:$0x3] %v300
    %s302 = scalar_lea.vmem %s4, 6
    %v303 = vld [vmem:[%s302] sm:$0x3]
    %s304 = scalar_lea.vmem %s0, 3
    %v305 = vld [vmem:[%s304] sm:$0x1]
    %s306 = scalar_lea.vmem [#allocation2], 192
    %v307 = vld [vmem:[%s306] sm:$0xf]
    %v308 = vld [vmem:[%s306 + $0x4] sm:$0xf]
    %v309 = vld [vmem:[%s306 + $0x8] sm:$0xf]
    %v310 = vld [vmem:[%s306 + $0xc] sm:$0xf]
    %v311 = vld [vmem:[%s306 + $0x10] sm:$0xf]
    %v312 = vld [vmem:[%s306 + $0x14] sm:$0xf]
    %v313 = vld [vmem:[%s306 + $0x18] sm:$0xf]
    %v314 = vld [vmem:[%s306 + $0x1c] sm:$0xf]
    %v315 = vld [vmem:[%s306 + $0x20] sm:$0xf]
    %v316 = vld [vmem:[%s306 + $0x24] sm:$0xf]
    %v317 = vld [vmem:[%s306 + $0x28] sm:$0xf]
    %v318 = vld [vmem:[%s306 + $0x2c] sm:$0xf]
    %v319 = vld [vmem:[%s306 + $0x30] sm:$0xf]
    %v320 = vld [vmem:[%s306 + $0x34] sm:$0xf]
    %v321 = vld [vmem:[%s306 + $0x38] sm:$0xf]
    %v322 = vld [vmem:[%s306 + $0x3c] sm:$0xf]
    %v339 = vunpack.c.l.b16 %v307
    %v340 = vunpack.c.l.b16 %v308
    %v341 = vunpack.c.l.b16 %v309
    %v342 = vunpack.c.l.b16 %v310
    %v343 = vunpack.c.l.b16 %v311
    %v344 = vunpack.c.l.b16 %v312
    %v345 = vunpack.c.l.b16 %v313
    %v346 = vunpack.c.l.b16 %v314
    %v347 = vunpack.c.l.b16 %v315
    %v348 = vunpack.c.l.b16 %v316
    %v349 = vunpack.c.l.b16 %v317
    %v350 = vunpack.c.l.b16 %v318
    %v351 = vunpack.c.l.b16 %v319
    %v352 = vunpack.c.l.b16 %v320
    %v353 = vunpack.c.l.b16 %v321
    %v354 = vunpack.c.l.b16 %v322
    %v355 = vpack.c.b16 %v340, %v339
    %v356 = vpack.c.b16 %v342, %v341
    %v357 = vpack.c.b16 %v344, %v343
    %v358 = vpack.c.b16 %v346, %v345
    %v359 = vpack.c.b16 %v348, %v347
    %v360 = vpack.c.b16 %v350, %v349
    %v361 = vpack.c.b16 %v352, %v351
    %v362 = vpack.c.b16 %v354, %v353
    %371 = vmatpush.bf16.msra.mxu0 %v362
    %372 = vmatpush.bf16.msra.mxu0 %v361
    %373 = vmatpush.bf16.msra.mxu0 %v360
    %374 = vmatpush.bf16.msra.mxu0 %v359
    %375 = vmatpush.bf16.msra.mxu0 %v358
    %376 = vmatpush.bf16.msra.mxu0 %v357
    %377 = vmatpush.bf16.msra.mxu0 %v356
    %378 = vmatpush.bf16.msra.mxu0 %v355
    %379 = vmatmul.bf16.gmra.mxu0 %v305
    %v380 = vpop.f32.mrf.mxu0
    %v381 = vadd.f32 0.0, %v380
    %v382 = vpop.f32.mrf.mxu0
    %383 = vdwg.mxu0
    %v384 = vadd.f32 %v303, %v381
    %385 = vst [vmem:[%s302] sm:$0x3] %v384
    %s386 = scalar_lea.vmem %s4, 8
    %v387 = vld [vmem:[%s386] sm:$0x3]
    %s388 = scalar_lea.vmem %s0, 4
    %v389 = vld [vmem:[%s388] sm:$0x1]
    %s390 = scalar_lea.vmem [#allocation2], 256
    %v391 = vld [vmem:[%s390] sm:$0xf]
    %v392 = vld [vmem:[%s390 + $0x4] sm:$0xf]
    %v393 = vld [vmem:[%s390 + $0x8] sm:$0xf]
    %v394 = vld [vmem:[%s390 + $0xc] sm:$0xf]
    %v395 = vld [vmem:[%s390 + $0x10] sm:$0xf]
    %v396 = vld [vmem:[%s390 + $0x14] sm:$0xf]
    %v397 = vld [vmem:[%s390 + $0x18] sm:$0xf]
    %v398 = vld [vmem:[%s390 + $0x1c] sm:$0xf]
    %v399 = vld [vmem:[%s390 + $0x20] sm:$0xf]
    %v400 = vld [vmem:[%s390 + $0x24] sm:$0xf]
    %v401 = vld [vmem:[%s390 + $0x28] sm:$0xf]
    %v402 = vld [vmem:[%s390 + $0x2c] sm:$0xf]
    %v403 = vld [vmem:[%s390 + $0x30] sm:$0xf]
    %v404 = vld [vmem:[%s390 + $0x34] sm:$0xf]
    %v405 = vld [vmem:[%s390 + $0x38] sm:$0xf]
    %v406 = vld [vmem:[%s390 + $0x3c] sm:$0xf]
    %v423 = vunpack.c.l.b16 %v391
    %v424 = vunpack.c.l.b16 %v392
    %v425 = vunpack.c.l.b16 %v393
    %v426 = vunpack.c.l.b16 %v394
    %v427 = vunpack.c.l.b16 %v395
    %v428 = vunpack.c.l.b16 %v396
    %v429 = vunpack.c.l.b16 %v397
    %v430 = vunpack.c.l.b16 %v398
    %v431 = vunpack.c.l.b16 %v399
    %v432 = vunpack.c.l.b16 %v400
    %v433 = vunpack.c.l.b16 %v401
    %v434 = vunpack.c.l.b16 %v402
    %v435 = vunpack.c.l.b16 %v403
    %v436 = vunpack.c.l.b16 %v404
    %v437 = vunpack.c.l.b16 %v405
    %v438 = vunpack.c.l.b16 %v406
    %v439 = vpack.c.b16 %v424, %v423
    %v440 = vpack.c.b16 %v426, %v425
    %v441 = vpack.c.b16 %v428, %v427
    %v442 = vpack.c.b16 %v430, %v429
    %v443 = vpack.c.b16 %v432, %v431
    %v444 = vpack.c.b16 %v434, %v433
    %v445 = vpack.c.b16 %v436, %v435
    %v446 = vpack.c.b16 %v438, %v437
    %455 = vmatpush.bf16.msra.mxu0 %v446
    %456 = vmatpush.bf16.msra.mxu0 %v445
    %457 = vmatpush.bf16.msra.mxu0 %v444
    %458 = vmatpush.bf16.msra.mxu0 %v443
    %459 = vmatpush.bf16.msra.mxu0 %v442
    %460 = vmatpush.bf16.msra.mxu0 %v441
    %461 = vmatpush.bf16.msra.mxu0 %v440
    %462 = vmatpush.bf16.msra.mxu0 %v439
    %463 = vmatmul.bf16.gmra.mxu0 %v389
    %v464 = vpop.f32.mrf.mxu0
    %v465 = vadd.f32 0.0, %v464
    %v466 = vpop.f32.mrf.mxu0
    %467 = vdwg.mxu0
    %v468 = vadd.f32 %v387, %v465
    %469 = vst [vmem:[%s386] sm:$0x3] %v468
    %s470 = scalar_lea.vmem %s4, 10
    %v471 = vld [vmem:[%s470] sm:$0x3]
    %s472 = scalar_lea.vmem %s0, 5
    %v473 = vld [vmem:[%s472] sm:$0x1]
    %s474 = scalar_lea.vmem [#allocation2], 320
    %v475 = vld [vmem:[%s474] sm:$0xf]
    %v476 = vld [vmem:[%s474 + $0x4] sm:$0xf]
    %v477 = vld [vmem:[%s474 + $0x8] sm:$0xf]
    %v478 = vld [vmem:[%s474 + $0xc] sm:$0xf]
    %v479 = vld [vmem:[%s474 + $0x10] sm:$0xf]
    %v480 = vld [vmem:[%s474 + $0x14] sm:$0xf]
    %v481 = vld [vmem:[%s474 + $0x18] sm:$0xf]
    %v482 = vld [vmem:[%s474 + $0x1c] sm:$0xf]
    %v483 = vld [vmem:[%s474 + $0x20] sm:$0xf]
    %v484 = vld [vmem:[%s474 + $0x24] sm:$0xf]
    %v485 = vld [vmem:[%s474 + $0x28] sm:$0xf]
    %v486 = vld [vmem:[%s474 + $0x2c] sm:$0xf]
    %v487 = vld [vmem:[%s474 + $0x30] sm:$0xf]
    %v488 = vld [vmem:[%s474 + $0x34] sm:$0xf]
    %v489 = vld [vmem:[%s474 + $0x38] sm:$0xf]
    %v490 = vld [vmem:[%s474 + $0x3c] sm:$0xf]
    %v507 = vunpack.c.l.b16 %v475
    %v508 = vunpack.c.l.b16 %v476
    %v509 = vunpack.c.l.b16 %v477
    %v510 = vunpack.c.l.b16 %v478
    %v511 = vunpack.c.l.b16 %v479
    %v512 = vunpack.c.l.b16 %v480
    %v513 = vunpack.c.l.b16 %v481
    %v514 = vunpack.c.l.b16 %v482
    %v515 = vunpack.c.l.b16 %v483
    %v516 = vunpack.c.l.b16 %v484
    %v517 = vunpack.c.l.b16 %v485
    %v518 = vunpack.c.l.b16 %v486
    %v519 = vunpack.c.l.b16 %v487
    %v520 = vunpack.c.l.b16 %v488
    %v521 = vunpack.c.l.b16 %v489
    %v522 = vunpack.c.l.b16 %v490
    %v523 = vpack.c.b16 %v508, %v507
    %v524 = vpack.c.b16 %v510, %v509
    %v525 = vpack.c.b16 %v512, %v511
    %v526 = vpack.c.b16 %v514, %v513
    %v527 = vpack.c.b16 %v516, %v515
    %v528 = vpack.c.b16 %v518, %v517
    %v529 = vpack.c.b16 %v520, %v519
    %v530 = vpack.c.b16 %v522, %v521
    %539 = vmatpush.bf16.msra.mxu0 %v530
    %540 = vmatpush.bf16.msra.mxu0 %v529
    %541 = vmatpush.bf16.msra.mxu0 %v528
    %542 = vmatpush.bf16.msra.mxu0 %v527
    %543 = vmatpush.bf16.msra.mxu0 %v526
    %544 = vmatpush.bf16.msra.mxu0 %v525
    %545 = vmatpush.bf16.msra.mxu0 %v524
    %546 = vmatpush.bf16.msra.mxu0 %v523
    %547 = vmatmul.bf16.gmra.mxu0 %v473
    %v548 = vpop.f32.mrf.mxu0
    %v549 = vadd.f32 0.0, %v548
    %v550 = vpop.f32.mrf.mxu0
    %551 = vdwg.mxu0
    %v552 = vadd.f32 %v471, %v549
    %553 = vst [vmem:[%s470] sm:$0x3] %v552
    %s554 = scalar_lea.vmem %s4, 12
    %v555 = vld [vmem:[%s554] sm:$0x3]
    %s556 = scalar_lea.vmem %s0, 6
    %v557 = vld [vmem:[%s556] sm:$0x1]
    %s558 = scalar_lea.vmem [#allocation2], 384
    %v559 = vld [vmem:[%s558] sm:$0xf]
    %v560 = vld [vmem:[%s558 + $0x4] sm:$0xf]
    %v561 = vld [vmem:[%s558 + $0x8] sm:$0xf]
    %v562 = vld [vmem:[%s558 + $0xc] sm:$0xf]
    %v563 = vld [vmem:[%s558 + $0x10] sm:$0xf]
    %v564 = vld [vmem:[%s558 + $0x14] sm:$0xf]
    %v565 = vld [vmem:[%s558 + $0x18] sm:$0xf]
    %v566 = vld [vmem:[%s558 + $0x1c] sm:$0xf]
    %v567 = vld [vmem:[%s558 + $0x20] sm:$0xf]
    %v568 = vld [vmem:[%s558 + $0x24] sm:$0xf]
    %v569 = vld [vmem:[%s558 + $0x28] sm:$0xf]
    %v570 = vld [vmem:[%s558 + $0x2c] sm:$0xf]
    %v571 = vld [vmem:[%s558 + $0x30] sm:$0xf]
    %v572 = vld [vmem:[%s558 + $0x34] sm:$0xf]
    %v573 = vld [vmem:[%s558 + $0x38] sm:$0xf]
    %v574 = vld [vmem:[%s558 + $0x3c] sm:$0xf]
    %v591 = vunpack.c.l.b16 %v559
    %v592 = vunpack.c.l.b16 %v560
    %v593 = vunpack.c.l.b16 %v561
    %v594 = vunpack.c.l.b16 %v562
    %v595 = vunpack.c.l.b16 %v563
    %v596 = vunpack.c.l.b16 %v564
    %v597 = vunpack.c.l.b16 %v565
    %v598 = vunpack.c.l.b16 %v566
    %v599 = vunpack.c.l.b16 %v567
    %v600 = vunpack.c.l.b16 %v568
    %v601 = vunpack.c.l.b16 %v569
    %v602 = vunpack.c.l.b16 %v570
    %v603 = vunpack.c.l.b16 %v571
    %v604 = vunpack.c.l.b16 %v572
    %v605 = vunpack.c.l.b16 %v573
    %v606 = vunpack.c.l.b16 %v574
    %v607 = vpack.c.b16 %v592, %v591
    %v608 = vpack.c.b16 %v594, %v593
    %v609 = vpack.c.b16 %v596, %v595
    %v610 = vpack.c.b16 %v598, %v597
    %v611 = vpack.c.b16 %v600, %v599
    %v612 = vpack.c.b16 %v602, %v601
    %v613 = vpack.c.b16 %v604, %v603
    %v614 = vpack.c.b16 %v606, %v605
    %623 = vmatpush.bf16.msra.mxu0 %v614
    %624 = vmatpush.bf16.msra.mxu0 %v613
    %625 = vmatpush.bf16.msra.mxu0 %v612
    %626 = vmatpush.bf16.msra.mxu0 %v611
    %627 = vmatpush.bf16.msra.mxu0 %v610
    %628 = vmatpush.bf16.msra.mxu0 %v609
    %629 = vmatpush.bf16.msra.mxu0 %v608
    %630 = vmatpush.bf16.msra.mxu0 %v607
    %631 = vmatmul.bf16.gmra.mxu0 %v557
    %v632 = vpop.f32.mrf.mxu0
    %v633 = vadd.f32 0.0, %v632
    %v634 = vpop.f32.mrf.mxu0
    %635 = vdwg.mxu0
    %v636 = vadd.f32 %v555, %v633
    %637 = vst [vmem:[%s554] sm:$0x3] %v636
    %s638 = scalar_lea.vmem %s4, 14
    %v639 = vld [vmem:[%s638] sm:$0x3]
    %s640 = scalar_lea.vmem %s0, 7
    %v641 = vld [vmem:[%s640] sm:$0x1]
    %s642 = scalar_lea.vmem [#allocation2], 448
    %v643 = vld [vmem:[%s642] sm:$0xf]
    %v644 = vld [vmem:[%s642 + $0x4] sm:$0xf]
    %v645 = vld [vmem:[%s642 + $0x8] sm:$0xf]
    %v646 = vld [vmem:[%s642 + $0xc] sm:$0xf]
    %v647 = vld [vmem:[%s642 + $0x10] sm:$0xf]
    %v648 = vld [vmem:[%s642 + $0x14] sm:$0xf]
    %v649 = vld [vmem:[%s642 + $0x18] sm:$0xf]
    %v650 = vld [vmem:[%s642 + $0x1c] sm:$0xf]
    %v651 = vld [vmem:[%s642 + $0x20] sm:$0xf]
    %v652 = vld [vmem:[%s642 + $0x24] sm:$0xf]
    %v653 = vld [vmem:[%s642 + $0x28] sm:$0xf]
    %v654 = vld [vmem:[%s642 + $0x2c] sm:$0xf]
    %v655 = vld [vmem:[%s642 + $0x30] sm:$0xf]
    %v656 = vld [vmem:[%s642 + $0x34] sm:$0xf]
    %v657 = vld [vmem:[%s642 + $0x38] sm:$0xf]
    %v658 = vld [vmem:[%s642 + $0x3c] sm:$0xf]
    %v675 = vunpack.c.l.b16 %v643
    %v676 = vunpack.c.l.b16 %v644
    %v677 = vunpack.c.l.b16 %v645
    %v678 = vunpack.c.l.b16 %v646
    %v679 = vunpack.c.l.b16 %v647
    %v680 = vunpack.c.l.b16 %v648
    %v681 = vunpack.c.l.b16 %v649
    %v682 = vunpack.c.l.b16 %v650
    %v683 = vunpack.c.l.b16 %v651
    %v684 = vunpack.c.l.b16 %v652
    %v685 = vunpack.c.l.b16 %v653
    %v686 = vunpack.c.l.b16 %v654
    %v687 = vunpack.c.l.b16 %v655
    %v688 = vunpack.c.l.b16 %v656
    %v689 = vunpack.c.l.b16 %v657
    %v690 = vunpack.c.l.b16 %v658
    %v691 = vpack.c.b16 %v676, %v675
    %v692 = vpack.c.b16 %v678, %v677
    %v693 = vpack.c.b16 %v680, %v679
    %v694 = vpack.c.b16 %v682, %v681
    %v695 = vpack.c.b16 %v684, %v683
    %v696 = vpack.c.b16 %v686, %v685
    %v697 = vpack.c.b16 %v688, %v687
    %v698 = vpack.c.b16 %v690, %v689
    %707 = vmatpush.bf16.msra.mxu0 %v698
    %708 = vmatpush.bf16.msra.mxu0 %v697
    %709 = vmatpush.bf16.msra.mxu0 %v696
    %710 = vmatpush.bf16.msra.mxu0 %v695
    %711 = vmatpush.bf16.msra.mxu0 %v694
    %712 = vmatpush.bf16.msra.mxu0 %v693
    %713 = vmatpush.bf16.msra.mxu0 %v692
    %714 = vmatpush.bf16.msra.mxu0 %v691
    %715 = vmatmul.bf16.gmra.mxu0 %v641
    %v716 = vpop.f32.mrf.mxu0
    %v717 = vadd.f32 0.0, %v716
    %v718 = vpop.f32.mrf.mxu0
    %719 = vdwg.mxu0
    %v720 = vadd.f32 %v639, %v717
    %721 = vst [vmem:[%s638] sm:$0x3] %v720
    %s722 = scalar_lea.vmem %s4, 16
    %v723 = vld [vmem:[%s722] sm:$0x3]
    %s724 = scalar_lea.vmem %s0, 8
    %v725 = vld [vmem:[%s724] sm:$0x1]
    %s726 = scalar_lea.vmem [#allocation2], 512
    %v727 = vld [vmem:[%s726] sm:$0xf]
    %v728 = vld [vmem:[%s726 + $0x4] sm:$0xf]
    %v729 = vld [vmem:[%s726 + $0x8] sm:$0xf]
    %v730 = vld [vmem:[%s726 + $0xc] sm:$0xf]
    %v731 = vld [vmem:[%s726 + $0x10] sm:$0xf]
    %v732 = vld [vmem:[%s726 + $0x14] sm:$0xf]
    %v733 = vld [vmem:[%s726 + $0x18] sm:$0xf]
    %v734 = vld [vmem:[%s726 + $0x1c] sm:$0xf]
    %v735 = vld [vmem:[%s726 + $0x20] sm:$0xf]
    %v736 = vld [vmem:[%s726 + $0x24] sm:$0xf]
    %v737 = vld [vmem:[%s726 + $0x28] sm:$0xf]
    %v738 = vld [vmem:[%s726 + $0x2c] sm:$0xf]
    %v739 = vld [vmem:[%s726 + $0x30] sm:$0xf]
    %v740 = vld [vmem:[%s726 + $0x34] sm:$0xf]
    %v741 = vld [vmem:[%s726 + $0x38] sm:$0xf]
    %v742 = vld [vmem:[%s726 + $0x3c] sm:$0xf]
    %v759 = vunpack.c.l.b16 %v727
    %v760 = vunpack.c.l.b16 %v728
    %v761 = vunpack.c.l.b16 %v729
    %v762 = vunpack.c.l.b16 %v730
    %v763 = vunpack.c.l.b16 %v731
    %v764 = vunpack.c.l.b16 %v732
    %v765 = vunpack.c.l.b16 %v733
    %v766 = vunpack.c.l.b16 %v734
    %v767 = vunpack.c.l.b16 %v735
    %v768 = vunpack.c.l.b16 %v736
    %v769 = vunpack.c.l.b16 %v737
    %v770 = vunpack.c.l.b16 %v738
    %v771 = vunpack.c.l.b16 %v739
    %v772 = vunpack.c.l.b16 %v740
    %v773 = vunpack.c.l.b16 %v741
    %v774 = vunpack.c.l.b16 %v742
    %v775 = vpack.c.b16 %v760, %v759
    %v776 = vpack.c.b16 %v762, %v761
    %v777 = vpack.c.b16 %v764, %v763
    %v778 = vpack.c.b16 %v766, %v765
    %v779 = vpack.c.b16 %v768, %v767
    %v780 = vpack.c.b16 %v770, %v769
    %v781 = vpack.c.b16 %v772, %v771
    %v782 = vpack.c.b16 %v774, %v773
    %791 = vmatpush.bf16.msra.mxu0 %v782
    %792 = vmatpush.bf16.msra.mxu0 %v781
    %793 = vmatpush.bf16.msra.mxu0 %v780
    %794 = vmatpush.bf16.msra.mxu0 %v779
    %795 = vmatpush.bf16.msra.mxu0 %v778
    %796 = vmatpush.bf16.msra.mxu0 %v777
    %797 = vmatpush.bf16.msra.mxu0 %v776
    %798 = vmatpush.bf16.msra.mxu0 %v775
    %799 = vmatmul.bf16.gmra.mxu0 %v725
    %v800 = vpop.f32.mrf.mxu0
    %v801 = vadd.f32 0.0, %v800
    %v802 = vpop.f32.mrf.mxu0
    %803 = vdwg.mxu0
    %v804 = vadd.f32 %v723, %v801
    %805 = vst [vmem:[%s722] sm:$0x3] %v804
    %s806 = scalar_lea.vmem %s4, 18
    %v807 = vld [vmem:[%s806] sm:$0x3]
    %s808 = scalar_lea.vmem %s0, 9
    %v809 = vld [vmem:[%s808] sm:$0x1]
    %s810 = scalar_lea.vmem [#allocation2], 576
    %v811 = vld [vmem:[%s810] sm:$0xf]
    %v812 = vld [vmem:[%s810 + $0x4] sm:$0xf]
    %v813 = vld [vmem:[%s810 + $0x8] sm:$0xf]
    %v814 = vld [vmem:[%s810 + $0xc] sm:$0xf]
    %v815 = vld [vmem:[%s810 + $0x10] sm:$0xf]
    %v816 = vld [vmem:[%s810 + $0x14] sm:$0xf]
    %v817 = vld [vmem:[%s810 + $0x18] sm:$0xf]
    %v818 = vld [vmem:[%s810 + $0x1c] sm:$0xf]
    %v819 = vld [vmem:[%s810 + $0x20] sm:$0xf]
    %v820 = vld [vmem:[%s810 + $0x24] sm:$0xf]
    %v821 = vld [vmem:[%s810 + $0x28] sm:$0xf]
    %v822 = vld [vmem:[%s810 + $0x2c] sm:$0xf]
    %v823 = vld [vmem:[%s810 + $0x30] sm:$0xf]
    %v824 = vld [vmem:[%s810 + $0x34] sm:$0xf]
    %v825 = vld [vmem:[%s810 + $0x38] sm:$0xf]
    %v826 = vld [vmem:[%s810 + $0x3c] sm:$0xf]
    %v843 = vunpack.c.l.b16 %v811
    %v844 = vunpack.c.l.b16 %v812
    %v845 = vunpack.c.l.b16 %v813
    %v846 = vunpack.c.l.b16 %v814
    %v847 = vunpack.c.l.b16 %v815
    %v848 = vunpack.c.l.b16 %v816
    %v849 = vunpack.c.l.b16 %v817
    %v850 = vunpack.c.l.b16 %v818
    %v851 = vunpack.c.l.b16 %v819
    %v852 = vunpack.c.l.b16 %v820
    %v853 = vunpack.c.l.b16 %v821
    %v854 = vunpack.c.l.b16 %v822
    %v855 = vunpack.c.l.b16 %v823
    %v856 = vunpack.c.l.b16 %v824
    %v857 = vunpack.c.l.b16 %v825
    %v858 = vunpack.c.l.b16 %v826
    %v859 = vpack.c.b16 %v844, %v843
    %v860 = vpack.c.b16 %v846, %v845
    %v861 = vpack.c.b16 %v848, %v847
    %v862 = vpack.c.b16 %v850, %v849
    %v863 = vpack.c.b16 %v852, %v851
    %v864 = vpack.c.b16 %v854, %v853
    %v865 = vpack.c.b16 %v856, %v855
    %v866 = vpack.c.b16 %v858, %v857
    %875 = vmatpush.bf16.msra.mxu0 %v866
    %876 = vmatpush.bf16.msra.mxu0 %v865
    %877 = vmatpush.bf16.msra.mxu0 %v864
    %878 = vmatpush.bf16.msra.mxu0 %v863
    %879 = vmatpush.bf16.msra.mxu0 %v862
    %880 = vmatpush.bf16.msra.mxu0 %v861
    %881 = vmatpush.bf16.msra.mxu0 %v860
    %882 = vmatpush.bf16.msra.mxu0 %v859
    %883 = vmatmul.bf16.gmra.mxu0 %v809
    %v884 = vpop.f32.mrf.mxu0
    %v885 = vadd.f32 0.0, %v884
    %v886 = vpop.f32.mrf.mxu0
    %887 = vdwg.mxu0
    %v888 = vadd.f32 %v807, %v885
    %889 = vst [vmem:[%s806] sm:$0x3] %v888
    %s890 = scalar_lea.vmem %s4, 20
    %v891 = vld [vmem:[%s890] sm:$0x3]
    %s892 = scalar_lea.vmem %s0, 10
    %v893 = vld [vmem:[%s892] sm:$0x1]
    %s894 = scalar_lea.vmem [#allocation2], 640
    %v895 = vld [vmem:[%s894] sm:$0xf]
    %v896 = vld [vmem:[%s894 + $0x4] sm:$0xf]
    %v897 = vld [vmem:[%s894 + $0x8] sm:$0xf]
    %v898 = vld [vmem:[%s894 + $0xc] sm:$0xf]
    %v899 = vld [vmem:[%s894 + $0x10] sm:$0xf]
    %v900 = vld [vmem:[%s894 + $0x14] sm:$0xf]
    %v901 = vld [vmem:[%s894 + $0x18] sm:$0xf]
    %v902 = vld [vmem:[%s894 + $0x1c] sm:$0xf]
    %v903 = vld [vmem:[%s894 + $0x20] sm:$0xf]
    %v904 = vld [vmem:[%s894 + $0x24] sm:$0xf]
    %v905 = vld [vmem:[%s894 + $0x28] sm:$0xf]
    %v906 = vld [vmem:[%s894 + $0x2c] sm:$0xf]
    %v907 = vld [vmem:[%s894 + $0x30] sm:$0xf]
    %v908 = vld [vmem:[%s894 + $0x34] sm:$0xf]
    %v909 = vld [vmem:[%s894 + $0x38] sm:$0xf]
    %v910 = vld [vmem:[%s894 + $0x3c] sm:$0xf]
    %v927 = vunpack.c.l.b16 %v895
    %v928 = vunpack.c.l.b16 %v896
    %v929 = vunpack.c.l.b16 %v897
    %v930 = vunpack.c.l.b16 %v898
    %v931 = vunpack.c.l.b16 %v899
    %v932 = vunpack.c.l.b16 %v900
    %v933 = vunpack.c.l.b16 %v901
    %v934 = vunpack.c.l.b16 %v902
    %v935 = vunpack.c.l.b16 %v903
    %v936 = vunpack.c.l.b16 %v904
    %v937 = vunpack.c.l.b16 %v905
    %v938 = vunpack.c.l.b16 %v906
    %v939 = vunpack.c.l.b16 %v907
    %v940 = vunpack.c.l.b16 %v908
    %v941 = vunpack.c.l.b16 %v909
    %v942 = vunpack.c.l.b16 %v910
    %v943 = vpack.c.b16 %v928, %v927
    %v944 = vpack.c.b16 %v930, %v929
    %v945 = vpack.c.b16 %v932, %v931
    %v946 = vpack.c.b16 %v934, %v933
    %v947 = vpack.c.b16 %v936, %v935
    %v948 = vpack.c.b16 %v938, %v937
    %v949 = vpack.c.b16 %v940, %v939
    %v950 = vpack.c.b16 %v942, %v941
    %959 = vmatpush.bf16.msra.mxu0 %v950
    %960 = vmatpush.bf16.msra.mxu0 %v949
    %961 = vmatpush.bf16.msra.mxu0 %v948
    %962 = vmatpush.bf16.msra.mxu0 %v947
    %963 = vmatpush.bf16.msra.mxu0 %v946
    %964 = vmatpush.bf16.msra.mxu0 %v945
    %965 = vmatpush.bf16.msra.mxu0 %v944
    %966 = vmatpush.bf16.msra.mxu0 %v943
    %967 = vmatmul.bf16.gmra.mxu0 %v893
    %v968 = vpop.f32.mrf.mxu0
    %v969 = vadd.f32 0.0, %v968
    %v970 = vpop.f32.mrf.mxu0
    %971 = vdwg.mxu0
    %v972 = vadd.f32 %v891, %v969
    %973 = vst [vmem:[%s890] sm:$0x3] %v972
    %s974 = scalar_lea.vmem %s4, 22
    %v975 = vld [vmem:[%s974] sm:$0x3]
    %s976 = scalar_lea.vmem %s0, 11
    %v977 = vld [vmem:[%s976] sm:$0x1]
    %s978 = scalar_lea.vmem [#allocation2], 704
    %v979 = vld [vmem:[%s978] sm:$0xf]
    %v980 = vld [vmem:[%s978 + $0x4] sm:$0xf]
    %v981 = vld [vmem:[%s978 + $0x8] sm:$0xf]
    %v982 = vld [vmem:[%s978 + $0xc] sm:$0xf]
    %v983 = vld [vmem:[%s978 + $0x10] sm:$0xf]
    %v984 = vld [vmem:[%s978 + $0x14] sm:$0xf]
    %v985 = vld [vmem:[%s978 + $0x18] sm:$0xf]
    %v986 = vld [vmem:[%s978 + $0x1c] sm:$0xf]
    %v987 = vld [vmem:[%s978 + $0x20] sm:$0xf]
    %v988 = vld [vmem:[%s978 + $0x24] sm:$0xf]
    %v989 = vld [vmem:[%s978 + $0x28] sm:$0xf]
    %v990 = vld [vmem:[%s978 + $0x2c] sm:$0xf]
    %v991 = vld [vmem:[%s978 + $0x30] sm:$0xf]
    %v992 = vld [vmem:[%s978 + $0x34] sm:$0xf]
    %v993 = vld [vmem:[%s978 + $0x38] sm:$0xf]
    %v994 = vld [vmem:[%s978 + $0x3c] sm:$0xf]
    %v1011 = vunpack.c.l.b16 %v979
    %v1012 = vunpack.c.l.b16 %v980
    %v1013 = vunpack.c.l.b16 %v981
    %v1014 = vunpack.c.l.b16 %v982
    %v1015 = vunpack.c.l.b16 %v983
    %v1016 = vunpack.c.l.b16 %v984
    %v1017 = vunpack.c.l.b16 %v985
    %v1018 = vunpack.c.l.b16 %v986
    %v1019 = vunpack.c.l.b16 %v987
    %v1020 = vunpack.c.l.b16 %v988
    %v1021 = vunpack.c.l.b16 %v989
    %v1022 = vunpack.c.l.b16 %v990
    %v1023 = vunpack.c.l.b16 %v991
    %v1024 = vunpack.c.l.b16 %v992
    %v1025 = vunpack.c.l.b16 %v993
    %v1026 = vunpack.c.l.b16 %v994
    %v1027 = vpack.c.b16 %v1012, %v1011
    %v1028 = vpack.c.b16 %v1014, %v1013
    %v1029 = vpack.c.b16 %v1016, %v1015
    %v1030 = vpack.c.b16 %v1018, %v1017
    %v1031 = vpack.c.b16 %v1020, %v1019
    %v1032 = vpack.c.b16 %v1022, %v1021
    %v1033 = vpack.c.b16 %v1024, %v1023
    %v1034 = vpack.c.b16 %v1026, %v1025
    %1043 = vmatpush.bf16.msra.mxu0 %v1034
    %1044 = vmatpush.bf16.msra.mxu0 %v1033
    %1045 = vmatpush.bf16.msra.mxu0 %v1032
    %1046 = vmatpush.bf16.msra.mxu0 %v1031
    %1047 = vmatpush.bf16.msra.mxu0 %v1030
    %1048 = vmatpush.bf16.msra.mxu0 %v1029
    %1049 = vmatpush.bf16.msra.mxu0 %v1028
    %1050 = vmatpush.bf16.msra.mxu0 %v1027
    %1051 = vmatmul.bf16.gmra.mxu0 %v977
    %v1052 = vpop.f32.mrf.mxu0
    %v1053 = vadd.f32 0.0, %v1052
    %v1054 = vpop.f32.mrf.mxu0
    %1055 = vdwg.mxu0
    %v1056 = vadd.f32 %v975, %v1053
    %1057 = vst [vmem:[%s974] sm:$0x3] %v1056
    %s1058 = scalar_lea.vmem %s4, 24
    %v1059 = vld [vmem:[%s1058] sm:$0x3]
    %s1060 = scalar_lea.vmem %s0, 12
    %v1061 = vld [vmem:[%s1060] sm:$0x1]
    %s1062 = scalar_lea.vmem [#allocation2], 768
    %v1063 = vld [vmem:[%s1062] sm:$0xf]
    %v1064 = vld [vmem:[%s1062 + $0x4] sm:$0xf]
    %v1065 = vld [vmem:[%s1062 + $0x8] sm:$0xf]
    %v1066 = vld [vmem:[%s1062 + $0xc] sm:$0xf]
    %v1067 = vld [vmem:[%s1062 + $0x10] sm:$0xf]
    %v1068 = vld [vmem:[%s1062 + $0x14] sm:$0xf]
    %v1069 = vld [vmem:[%s1062 + $0x18] sm:$0xf]
    %v1070 = vld [vmem:[%s1062 + $0x1c] sm:$0xf]
    %v1071 = vld [vmem:[%s1062 + $0x20] sm:$0xf]
    %v1072 = vld [vmem:[%s1062 + $0x24] sm:$0xf]
    %v1073 = vld [vmem:[%s1062 + $0x28] sm:$0xf]
    %v1074 = vld [vmem:[%s1062 + $0x2c] sm:$0xf]
    %v1075 = vld [vmem:[%s1062 + $0x30] sm:$0xf]
    %v1076 = vld [vmem:[%s1062 + $0x34] sm:$0xf]
    %v1077 = vld [vmem:[%s1062 + $0x38] sm:$0xf]
    %v1078 = vld [vmem:[%s1062 + $0x3c] sm:$0xf]
    %v1095 = vunpack.c.l.b16 %v1063
    %v1096 = vunpack.c.l.b16 %v1064
    %v1097 = vunpack.c.l.b16 %v1065
    %v1098 = vunpack.c.l.b16 %v1066
    %v1099 = vunpack.c.l.b16 %v1067
    %v1100 = vunpack.c.l.b16 %v1068
    %v1101 = vunpack.c.l.b16 %v1069
    %v1102 = vunpack.c.l.b16 %v1070
    %v1103 = vunpack.c.l.b16 %v1071
    %v1104 = vunpack.c.l.b16 %v1072
    %v1105 = vunpack.c.l.b16 %v1073
    %v1106 = vunpack.c.l.b16 %v1074
    %v1107 = vunpack.c.l.b16 %v1075
    %v1108 = vunpack.c.l.b16 %v1076
    %v1109 = vunpack.c.l.b16 %v1077
    %v1110 = vunpack.c.l.b16 %v1078
    %v1111 = vpack.c.b16 %v1096, %v1095
    %v1112 = vpack.c.b16 %v1098, %v1097
    %v1113 = vpack.c.b16 %v1100, %v1099
    %v1114 = vpack.c.b16 %v1102, %v1101
    %v1115 = vpack.c.b16 %v1104, %v1103
    %v1116 = vpack.c.b16 %v1106, %v1105
    %v1117 = vpack.c.b16 %v1108, %v1107
    %v1118 = vpack.c.b16 %v1110, %v1109
    %1127 = vmatpush.bf16.msra.mxu0 %v1118
    %1128 = vmatpush.bf16.msra.mxu0 %v1117
    %1129 = vmatpush.bf16.msra.mxu0 %v1116
    %1130 = vmatpush.bf16.msra.mxu0 %v1115
    %1131 = vmatpush.bf16.msra.mxu0 %v1114
    %1132 = vmatpush.bf16.msra.mxu0 %v1113
    %1133 = vmatpush.bf16.msra.mxu0 %v1112
    %1134 = vmatpush.bf16.msra.mxu0 %v1111
    %1135 = vmatmul.bf16.gmra.mxu0 %v1061
    %v1136 = vpop.f32.mrf.mxu0
    %v1137 = vadd.f32 0.0, %v1136
    %v1138 = vpop.f32.mrf.mxu0
    %1139 = vdwg.mxu0
    %v1140 = vadd.f32 %v1059, %v1137
    %1141 = vst [vmem:[%s1058] sm:$0x3] %v1140
    %s1142 = scalar_lea.vmem %s4, 26
    %v1143 = vld [vmem:[%s1142] sm:$0x3]
    %s1144 = scalar_lea.vmem %s0, 13
    %v1145 = vld [vmem:[%s1144] sm:$0x1]
    %s1146 = scalar_lea.vmem [#allocation2], 832
    %v1147 = vld [vmem:[%s1146] sm:$0xf]
    %v1148 = vld [vmem:[%s1146 + $0x4] sm:$0xf]
    %v1149 = vld [vmem:[%s1146 + $0x8] sm:$0xf]
    %v1150 = vld [vmem:[%s1146 + $0xc] sm:$0xf]
    %v1151 = vld [vmem:[%s1146 + $0x10] sm:$0xf]
    %v1152 = vld [vmem:[%s1146 + $0x14] sm:$0xf]
    %v1153 = vld [vmem:[%s1146 + $0x18] sm:$0xf]
    %v1154 = vld [vmem:[%s1146 + $0x1c] sm:$0xf]
    %v1155 = vld [vmem:[%s1146 + $0x20] sm:$0xf]
    %v1156 = vld [vmem:[%s1146 + $0x24] sm:$0xf]
    %v1157 = vld [vmem:[%s1146 + $0x28] sm:$0xf]
    %v1158 = vld [vmem:[%s1146 + $0x2c] sm:$0xf]
    %v1159 = vld [vmem:[%s1146 + $0x30] sm:$0xf]
    %v1160 = vld [vmem:[%s1146 + $0x34] sm:$0xf]
    %v1161 = vld [vmem:[%s1146 + $0x38] sm:$0xf]
    %v1162 = vld [vmem:[%s1146 + $0x3c] sm:$0xf]
    %v1179 = vunpack.c.l.b16 %v1147
    %v1180 = vunpack.c.l.b16 %v1148
    %v1181 = vunpack.c.l.b16 %v1149
    %v1182 = vunpack.c.l.b16 %v1150
    %v1183 = vunpack.c.l.b16 %v1151
    %v1184 = vunpack.c.l.b16 %v1152
    %v1185 = vunpack.c.l.b16 %v1153
    %v1186 = vunpack.c.l.b16 %v1154
    %v1187 = vunpack.c.l.b16 %v1155
    %v1188 = vunpack.c.l.b16 %v1156
    %v1189 = vunpack.c.l.b16 %v1157
    %v1190 = vunpack.c.l.b16 %v1158
    %v1191 = vunpack.c.l.b16 %v1159
    %v1192 = vunpack.c.l.b16 %v1160
    %v1193 = vunpack.c.l.b16 %v1161
    %v1194 = vunpack.c.l.b16 %v1162
    %v1195 = vpack.c.b16 %v1180, %v1179
    %v1196 = vpack.c.b16 %v1182, %v1181
    %v1197 = vpack.c.b16 %v1184, %v1183
    %v1198 = vpack.c.b16 %v1186, %v1185
    %v1199 = vpack.c.b16 %v1188, %v1187
    %v1200 = vpack.c.b16 %v1190, %v1189
    %v1201 = vpack.c.b16 %v1192, %v1191
    %v1202 = vpack.c.b16 %v1194, %v1193
    %1211 = vmatpush.bf16.msra.mxu0 %v1202
    %1212 = vmatpush.bf16.msra.mxu0 %v1201
    %1213 = vmatpush.bf16.msra.mxu0 %v1200
    %1214 = vmatpush.bf16.msra.mxu0 %v1199
    %1215 = vmatpush.bf16.msra.mxu0 %v1198
    %1216 = vmatpush.bf16.msra.mxu0 %v1197
    %1217 = vmatpush.bf16.msra.mxu0 %v1196
    %1218 = vmatpush.bf16.msra.mxu0 %v1195
    %1219 = vmatmul.bf16.gmra.mxu0 %v1145
    %v1220 = vpop.f32.mrf.mxu0
    %v1221 = vadd.f32 0.0, %v1220
    %v1222 = vpop.f32.mrf.mxu0
    %1223 = vdwg.mxu0
    %v1224 = vadd.f32 %v1143, %v1221
    %1225 = vst [vmem:[%s1142] sm:$0x3] %v1224
    %s1226 = scalar_lea.vmem %s4, 28
    %v1227 = vld [vmem:[%s1226] sm:$0x3]
    %s1228 = scalar_lea.vmem %s0, 14
    %v1229 = vld [vmem:[%s1228] sm:$0x1]
    %s1230 = scalar_lea.vmem [#allocation2], 896
    %v1231 = vld [vmem:[%s1230] sm:$0xf]
    %v1232 = vld [vmem:[%s1230 + $0x4] sm:$0xf]
    %v1233 = vld [vmem:[%s1230 + $0x8] sm:$0xf]
    %v1234 = vld [vmem:[%s1230 + $0xc] sm:$0xf]
    %v1235 = vld [vmem:[%s1230 + $0x10] sm:$0xf]
    %v1236 = vld [vmem:[%s1230 + $0x14] sm:$0xf]
    %v1237 = vld [vmem:[%s1230 + $0x18] sm:$0xf]
    %v1238 = vld [vmem:[%s1230 + $0x1c] sm:$0xf]
    %v1239 = vld [vmem:[%s1230 + $0x20] sm:$0xf]
    %v1240 = vld [vmem:[%s1230 + $0x24] sm:$0xf]
    %v1241 = vld [vmem:[%s1230 + $0x28] sm:$0xf]
    %v1242 = vld [vmem:[%s1230 + $0x2c] sm:$0xf]
    %v1243 = vld [vmem:[%s1230 + $0x30] sm:$0xf]
    %v1244 = vld [vmem:[%s1230 + $0x34] sm:$0xf]
    %v1245 = vld [vmem:[%s1230 + $0x38] sm:$0xf]
    %v1246 = vld [vmem:[%s1230 + $0x3c] sm:$0xf]
    %v1263 = vunpack.c.l.b16 %v1231
    %v1264 = vunpack.c.l.b16 %v1232
    %v1265 = vunpack.c.l.b16 %v1233
    %v1266 = vunpack.c.l.b16 %v1234
    %v1267 = vunpack.c.l.b16 %v1235
    %v1268 = vunpack.c.l.b16 %v1236
    %v1269 = vunpack.c.l.b16 %v1237
    %v1270 = vunpack.c.l.b16 %v1238
    %v1271 = vunpack.c.l.b16 %v1239
    %v1272 = vunpack.c.l.b16 %v1240
    %v1273 = vunpack.c.l.b16 %v1241
    %v1274 = vunpack.c.l.b16 %v1242
    %v1275 = vunpack.c.l.b16 %v1243
    %v1276 = vunpack.c.l.b16 %v1244
    %v1277 = vunpack.c.l.b16 %v1245
    %v1278 = vunpack.c.l.b16 %v1246
    %v1279 = vpack.c.b16 %v1264, %v1263
    %v1280 = vpack.c.b16 %v1266, %v1265
    %v1281 = vpack.c.b16 %v1268, %v1267
    %v1282 = vpack.c.b16 %v1270, %v1269
    %v1283 = vpack.c.b16 %v1272, %v1271
    %v1284 = vpack.c.b16 %v1274, %v1273
    %v1285 = vpack.c.b16 %v1276, %v1275
    %v1286 = vpack.c.b16 %v1278, %v1277
    %1295 = vmatpush.bf16.msra.mxu0 %v1286
    %1296 = vmatpush.bf16.msra.mxu0 %v1285
    %1297 = vmatpush.bf16.msra.mxu0 %v1284
    %1298 = vmatpush.bf16.msra.mxu0 %v1283
    %1299 = vmatpush.bf16.msra.mxu0 %v1282
    %1300 = vmatpush.bf16.msra.mxu0 %v1281
    %1301 = vmatpush.bf16.msra.mxu0 %v1280
    %1302 = vmatpush.bf16.msra.mxu0 %v1279
    %1303 = vmatmul.bf16.gmra.mxu0 %v1229
    %v1304 = vpop.f32.mrf.mxu0
    %v1305 = vadd.f32 0.0, %v1304
    %v1306 = vpop.f32.mrf.mxu0
    %1307 = vdwg.mxu0
    %v1308 = vadd.f32 %v1227, %v1305
    %1309 = vst [vmem:[%s1226] sm:$0x3] %v1308
    %s1310 = scalar_lea.vmem %s4, 30
    %v1311 = vld [vmem:[%s1310] sm:$0x3]
    %s1312 = scalar_lea.vmem %s0, 15
    %v1313 = vld [vmem:[%s1312] sm:$0x1]
    %s1314 = scalar_lea.vmem [#allocation2], 960
    %v1315 = vld [vmem:[%s1314] sm:$0xf]
    %v1316 = vld [vmem:[%s1314 + $0x4] sm:$0xf]
    %v1317 = vld [vmem:[%s1314 + $0x8] sm:$0xf]
    %v1318 = vld [vmem:[%s1314 + $0xc] sm:$0xf]
    %v1319 = vld [vmem:[%s1314 + $0x10] sm:$0xf]
    %v1320 = vld [vmem:[%s1314 + $0x14] sm:$0xf]
    %v1321 = vld [vmem:[%s1314 + $0x18] sm:$0xf]
    %v1322 = vld [vmem:[%s1314 + $0x1c] sm:$0xf]
    %v1323 = vld [vmem:[%s1314 + $0x20] sm:$0xf]
    %v1324 = vld [vmem:[%s1314 + $0x24] sm:$0xf]
    %v1325 = vld [vmem:[%s1314 + $0x28] sm:$0xf]
    %v1326 = vld [vmem:[%s1314 + $0x2c] sm:$0xf]
    %v1327 = vld [vmem:[%s1314 + $0x30] sm:$0xf]
    %v1328 = vld [vmem:[%s1314 + $0x34] sm:$0xf]
    %v1329 = vld [vmem:[%s1314 + $0x38] sm:$0xf]
    %v1330 = vld [vmem:[%s1314 + $0x3c] sm:$0xf]
    %v1347 = vunpack.c.l.b16 %v1315
    %v1348 = vunpack.c.l.b16 %v1316
    %v1349 = vunpack.c.l.b16 %v1317
    %v1350 = vunpack.c.l.b16 %v1318
    %v1351 = vunpack.c.l.b16 %v1319
    %v1352 = vunpack.c.l.b16 %v1320
    %v1353 = vunpack.c.l.b16 %v1321
    %v1354 = vunpack.c.l.b16 %v1322
    %v1355 = vunpack.c.l.b16 %v1323
    %v1356 = vunpack.c.l.b16 %v1324
    %v1357 = vunpack.c.l.b16 %v1325
    %v1358 = vunpack.c.l.b16 %v1326
    %v1359 = vunpack.c.l.b16 %v1327
    %v1360 = vunpack.c.l.b16 %v1328
    %v1361 = vunpack.c.l.b16 %v1329
    %v1362 = vunpack.c.l.b16 %v1330
    %v1363 = vpack.c.b16 %v1348, %v1347
    %v1364 = vpack.c.b16 %v1350, %v1349
    %v1365 = vpack.c.b16 %v1352, %v1351
    %v1366 = vpack.c.b16 %v1354, %v1353
    %v1367 = vpack.c.b16 %v1356, %v1355
    %v1368 = vpack.c.b16 %v1358, %v1357
    %v1369 = vpack.c.b16 %v1360, %v1359
    %v1370 = vpack.c.b16 %v1362, %v1361
    %1379 = vmatpush.bf16.msra.mxu0 %v1370
    %1380 = vmatpush.bf16.msra.mxu0 %v1369
    %1381 = vmatpush.bf16.msra.mxu0 %v1368
    %1382 = vmatpush.bf16.msra.mxu0 %v1367
    %1383 = vmatpush.bf16.msra.mxu0 %v1366
    %1384 = vmatpush.bf16.msra.mxu0 %v1365
    %1385 = vmatpush.bf16.msra.mxu0 %v1364
    %1386 = vmatpush.bf16.msra.mxu0 %v1363
    %1387 = vmatmul.bf16.gmra.mxu0 %v1313
    %v1388 = vpop.f32.mrf.mxu0
    %v1389 = vadd.f32 0.0, %v1388
    %v1390 = vpop.f32.mrf.mxu0
    %1391 = vdwg.mxu0
    %v1392 = vadd.f32 %v1311, %v1389
    %1393 = vst [vmem:[%s1310] sm:$0x3] %v1392
    // Predicated region
    $region26: #{_lambda_.4} parent=1 // pred_check
      %p1394 = pneg %p33
    $region27: #{_lambda_.4} parent=1 // pred_check_branch
      %1396 = sbr.rel (%p1394) target = $region29
    $region28: #{_lambda_.4} parent=1 // pred_region
      %v1397 = vld [vmem:[%s4] sm:$0x3]
      %v1398 = vld [vmem:[%s4 + $0x2] sm:$0x3]
      %v1399 = vld [vmem:[%s4 + $0x4] sm:$0x3]
      %v1400 = vld [vmem:[%s4 + $0x6] sm:$0x3]
      %v1401 = vld [vmem:[%s4 + $0x8] sm:$0x3]
      %v1402 = vld [vmem:[%s4 + $0xa] sm:$0x3]
      %v1403 = vld [vmem:[%s4 + $0xc] sm:$0x3]
      %v1404 = vld [vmem:[%s4 + $0xe] sm:$0x3]
      %v1405 = vld [vmem:[%s4 + $0x10] sm:$0x3]
      %v1406 = vld [vmem:[%s4 + $0x12] sm:$0x3]
      %v1407 = vld [vmem:[%s4 + $0x14] sm:$0x3]
      %v1408 = vld [vmem:[%s4 + $0x16] sm:$0x3]
      %v1409 = vld [vmem:[%s4 + $0x18] sm:$0x3]
      %v1410 = vld [vmem:[%s4 + $0x1a] sm:$0x3]
      %v1411 = vld [vmem:[%s4 + $0x1c] sm:$0x3]
      %v1412 = vld [vmem:[%s4 + $0x1e] sm:$0x3]
      %vm1413 = vcmask 1041408
      %v1414 = vsel %vm1413, %v1397, 0.0
      %v1415 = vrot.slane %v1414, 4
      %v1416 = vadd.f32 %v1414, %v1415
      %v1417 = vrot.slane %v1416, 2
      %v1418 = vadd.f32 %v1416, %v1417
      %v1419 = vrot.slane %v1418, 1
      %v1420 = vadd.f32 %v1418, %v1419
      %v1421 = vsel %vm1413, %v1398, 0.0
      %v1422 = vrot.slane %v1421, 4
      %v1423 = vadd.f32 %v1421, %v1422
      %v1424 = vrot.slane %v1423, 2
      %v1425 = vadd.f32 %v1423, %v1424
      %v1426 = vrot.slane %v1425, 1
      %v1427 = vadd.f32 %v1425, %v1426
      %v1428 = vsel %vm1413, %v1399, 0.0
      %v1429 = vrot.slane %v1428, 4
      %v1430 = vadd.f32 %v1428, %v1429
      %v1431 = vrot.slane %v1430, 2
      %v1432 = vadd.f32 %v1430, %v1431
      %v1433 = vrot.slane %v1432, 1
      %v1434 = vadd.f32 %v1432, %v1433
      %v1435 = vsel %vm1413, %v1400, 0.0
      %v1436 = vrot.slane %v1435, 4
      %v1437 = vadd.f32 %v1435, %v1436
      %v1438 = vrot.slane %v1437, 2
      %v1439 = vadd.f32 %v1437, %v1438
      %v1440 = vrot.slane %v1439, 1
      %v1441 = vadd.f32 %v1439, %v1440
      %v1442 = vsel %vm1413, %v1401, 0.0
      %v1443 = vrot.slane %v1442, 4
      %v1444 = vadd.f32 %v1442, %v1443
      %v1445 = vrot.slane %v1444, 2
      %v1446 = vadd.f32 %v1444, %v1445
      %v1447 = vrot.slane %v1446, 1
      %v1448 = vadd.f32 %v1446, %v1447
      %v1449 = vsel %vm1413, %v1402, 0.0
      %v1450 = vrot.slane %v1449, 4
      %v1451 = vadd.f32 %v1449, %v1450
      %v1452 = vrot.slane %v1451, 2
      %v1453 = vadd.f32 %v1451, %v1452
      %v1454 = vrot.slane %v1453, 1
      %v1455 = vadd.f32 %v1453, %v1454
      %v1456 = vsel %vm1413, %v1403, 0.0
      %v1457 = vrot.slane %v1456, 4
      %v1458 = vadd.f32 %v1456, %v1457
      %v1459 = vrot.slane %v1458, 2
      %v1460 = vadd.f32 %v1458, %v1459
      %v1461 = vrot.slane %v1460, 1
      %v1462 = vadd.f32 %v1460, %v1461
      %v1463 = vsel %vm1413, %v1404, 0.0
      %v1464 = vrot.slane %v1463, 4
      %v1465 = vadd.f32 %v1463, %v1464
      %v1466 = vrot.slane %v1465, 2
      %v1467 = vadd.f32 %v1465, %v1466
      %v1468 = vrot.slane %v1467, 1
      %v1469 = vadd.f32 %v1467, %v1468
      %v1470 = vsel %vm1413, %v1405, 0.0
      %v1471 = vrot.slane %v1470, 4
      %v1472 = vadd.f32 %v1470, %v1471
      %v1473 = vrot.slane %v1472, 2
      %v1474 = vadd.f32 %v1472, %v1473
      %v1475 = vrot.slane %v1474, 1
      %v1476 = vadd.f32 %v1474, %v1475
      %v1477 = vsel %vm1413, %v1406, 0.0
      %v1478 = vrot.slane %v1477, 4
      %v1479 = vadd.f32 %v1477, %v1478
      %v1480 = vrot.slane %v1479, 2
      %v1481 = vadd.f32 %v1479, %v1480
      %v1482 = vrot.slane %v1481, 1
      %v1483 = vadd.f32 %v1481, %v1482
      %v1484 = vsel %vm1413, %v1407, 0.0
      %v1485 = vrot.slane %v1484, 4
      %v1486 = vadd.f32 %v1484, %v1485
      %v1487 = vrot.slane %v1486, 2
      %v1488 = vadd.f32 %v1486, %v1487
      %v1489 = vrot.slane %v1488, 1
      %v1490 = vadd.f32 %v1488, %v1489
      %v1491 = vsel %vm1413, %v1408, 0.0
      %v1492 = vrot.slane %v1491, 4
      %v1493 = vadd.f32 %v1491, %v1492
      %v1494 = vrot.slane %v1493, 2
      %v1495 = vadd.f32 %v1493, %v1494
      %v1496 = vrot.slane %v1495, 1
      %v1497 = vadd.f32 %v1495, %v1496
      %v1498 = vsel %vm1413, %v1409, 0.0
      %v1499 = vrot.slane %v1498, 4
      %v1500 = vadd.f32 %v1498, %v1499
      %v1501 = vrot.slane %v1500, 2
      %v1502 = vadd.f32 %v1500, %v1501
      %v1503 = vrot.slane %v1502, 1
      %v1504 = vadd.f32 %v1502, %v1503
      %v1505 = vsel %vm1413, %v1410, 0.0
      %v1506 = vrot.slane %v1505, 4
      %v1507 = vadd.f32 %v1505, %v1506
      %v1508 = vrot.slane %v1507, 2
      %v1509 = vadd.f32 %v1507, %v1508
      %v1510 = vrot.slane %v1509, 1
      %v1511 = vadd.f32 %v1509, %v1510
      %v1512 = vsel %vm1413, %v1411, 0.0
      %v1513 = vrot.slane %v1512, 4
      %v1514 = vadd.f32 %v1512, %v1513
      %v1515 = vrot.slane %v1514, 2
      %v1516 = vadd.f32 %v1514, %v1515
      %v1517 = vrot.slane %v1516, 1
      %v1518 = vadd.f32 %v1516, %v1517
      %v1519 = vsel %vm1413, %v1412, 0.0
      %v1520 = vrot.slane %v1519, 4
      %v1521 = vadd.f32 %v1519, %v1520
      %v1522 = vrot.slane %v1521, 2
      %v1523 = vadd.f32 %v1521, %v1522
      %v1524 = vrot.slane %v1523, 1
      %v1525 = vadd.f32 %v1523, %v1524
      %v1526 = vadd.f32 %v1420, %v1427
      %v1527 = vadd.f32 %v1526, %v1434
      %v1528 = vadd.f32 %v1527, %v1441
      %v1529 = vadd.f32 %v1528, %v1448
      %v1530 = vadd.f32 %v1529, %v1455
      %v1531 = vadd.f32 %v1530, %v1462
      %v1532 = vadd.f32 %v1531, %v1469
      %v1533 = vadd.f32 %v1532, %v1476
      %v1534 = vadd.f32 %v1533, %v1483
      %v1535 = vadd.f32 %v1534, %v1490
      %v1536 = vadd.f32 %v1535, %v1497
      %v1537 = vadd.f32 %v1536, %v1504
      %v1538 = vadd.f32 %v1537, %v1511
      %v1539 = vadd.f32 %v1538, %v1518
      %v1540 = vadd.f32 %v1539, %v1525
      %v1541 = vmul.f32 %v1397, %v1397
      %v1542 = vmul.f32 %v1398, %v1398
      %v1543 = vmul.f32 %v1399, %v1399
      %v1544 = vmul.f32 %v1400, %v1400
      %v1545 = vmul.f32 %v1401, %v1401
      %v1546 = vmul.f32 %v1402, %v1402
      %v1547 = vmul.f32 %v1403, %v1403
      %v1548 = vmul.f32 %v1404, %v1404
      %v1549 = vmul.f32 %v1405, %v1405
      %v1550 = vmul.f32 %v1406, %v1406
      %v1551 = vmul.f32 %v1407, %v1407
      %v1552 = vmul.f32 %v1408, %v1408
      %v1553 = vmul.f32 %v1409, %v1409
      %v1554 = vmul.f32 %v1410, %v1410
      %v1555 = vmul.f32 %v1411, %v1411
      %v1556 = vmul.f32 %v1412, %v1412
      %v1557 = vsel %vm1413, %v1541, 0.0
      %v1558 = vrot.slane %v1557, 4
      %v1559 = vadd.f32 %v1557, %v1558
      %v1560 = vrot.slane %v1559, 2
      %v1561 = vadd.f32 %v1559, %v1560
      %v1562 = vrot.slane %v1561, 1
      %v1563 = vadd.f32 %v1561, %v1562
      %v1564 = vsel %vm1413, %v1542, 0.0
      %v1565 = vrot.slane %v1564, 4
      %v1566 = vadd.f32 %v1564, %v1565
      %v1567 = vrot.slane %v1566, 2
      %v1568 = vadd.f32 %v1566, %v1567
      %v1569 = vrot.slane %v1568, 1
      %v1570 = vadd.f32 %v1568, %v1569
      %v1571 = vsel %vm1413, %v1543, 0.0
      %v1572 = vrot.slane %v1571, 4
      %v1573 = vadd.f32 %v1571, %v1572
      %v1574 = vrot.slane %v1573, 2
      %v1575 = vadd.f32 %v1573, %v1574
      %v1576 = vrot.slane %v1575, 1
      %v1577 = vadd.f32 %v1575, %v1576
      %v1578 = vsel %vm1413, %v1544, 0.0
      %v1579 = vrot.slane %v1578, 4
      %v1580 = vadd.f32 %v1578, %v1579
      %v1581 = vrot.slane %v1580, 2
      %v1582 = vadd.f32 %v1580, %v1581
      %v1583 = vrot.slane %v1582, 1
      %v1584 = vadd.f32 %v1582, %v1583
      %v1585 = vsel %vm1413, %v1545, 0.0
      %v1586 = vrot.slane %v1585, 4
      %v1587 = vadd.f32 %v1585, %v1586
      %v1588 = vrot.slane %v1587, 2
      %v1589 = vadd.f32 %v1587, %v1588
      %v1590 = vrot.slane %v1589, 1
      %v1591 = vadd.f32 %v1589, %v1590
      %v1592 = vsel %vm1413, %v1546, 0.0
      %v1593 = vrot.slane %v1592, 4
      %v1594 = vadd.f32 %v1592, %v1593
      %v1595 = vrot.slane %v1594, 2
      %v1596 = vadd.f32 %v1594, %v1595
      %v1597 = vrot.slane %v1596, 1
      %v1598 = vadd.f32 %v1596, %v1597
      %v1599 = vsel %vm1413, %v1547, 0.0
      %v1600 = vrot.slane %v1599, 4
      %v1601 = vadd.f32 %v1599, %v1600
      %v1602 = vrot.slane %v1601, 2
      %v1603 = vadd.f32 %v1601, %v1602
      %v1604 = vrot.slane %v1603, 1
      %v1605 = vadd.f32 %v1603, %v1604
      %v1606 = vsel %vm1413, %v1548, 0.0
      %v1607 = vrot.slane %v1606, 4
      %v1608 = vadd.f32 %v1606, %v1607
      %v1609 = vrot.slane %v1608, 2
      %v1610 = vadd.f32 %v1608, %v1609
      %v1611 = vrot.slane %v1610, 1
      %v1612 = vadd.f32 %v1610, %v1611
      %v1613 = vsel %vm1413, %v1549, 0.0
      %v1614 = vrot.slane %v1613, 4
      %v1615 = vadd.f32 %v1613, %v1614
      %v1616 = vrot.slane %v1615, 2
      %v1617 = vadd.f32 %v1615, %v1616
      %v1618 = vrot.slane %v1617, 1
      %v1619 = vadd.f32 %v1617, %v1618
      %v1620 = vsel %vm1413, %v1550, 0.0
      %v1621 = vrot.slane %v1620, 4
      %v1622 = vadd.f32 %v1620, %v1621
      %v1623 = vrot.slane %v1622, 2
      %v1624 = vadd.f32 %v1622, %v1623
      %v1625 = vrot.slane %v1624, 1
      %v1626 = vadd.f32 %v1624, %v1625
      %v1627 = vsel %vm1413, %v1551, 0.0
      %v1628 = vrot.slane %v1627, 4
      %v1629 = vadd.f32 %v1627, %v1628
      %v1630 = vrot.slane %v1629, 2
      %v1631 = vadd.f32 %v1629, %v1630
      %v1632 = vrot.slane %v1631, 1
      %v1633 = vadd.f32 %v1631, %v1632
      %v1634 = vsel %vm1413, %v1552, 0.0
      %v1635 = vrot.slane %v1634, 4
      %v1636 = vadd.f32 %v1634, %v1635
      %v1637 = vrot.slane %v1636, 2
      %v1638 = vadd.f32 %v1636, %v1637
      %v1639 = vrot.slane %v1638, 1
      %v1640 = vadd.f32 %v1638, %v1639
      %v1641 = vsel %vm1413, %v1553, 0.0
      %v1642 = vrot.slane %v1641, 4
      %v1643 = vadd.f32 %v1641, %v1642
      %v1644 = vrot.slane %v1643, 2
      %v1645 = vadd.f32 %v1643, %v1644
      %v1646 = vrot.slane %v1645, 1
      %v1647 = vadd.f32 %v1645, %v1646
      %v1648 = vsel %vm1413, %v1554, 0.0
      %v1649 = vrot.slane %v1648, 4
      %v1650 = vadd.f32 %v1648, %v1649
      %v1651 = vrot.slane %v1650, 2
      %v1652 = vadd.f32 %v1650, %v1651
      %v1653 = vrot.slane %v1652, 1
      %v1654 = vadd.f32 %v1652, %v1653
      %v1655 = vsel %vm1413, %v1555, 0.0
      %v1656 = vrot.slane %v1655, 4
      %v1657 = vadd.f32 %v1655, %v1656
      %v1658 = vrot.slane %v1657, 2
      %v1659 = vadd.f32 %v1657, %v1658
      %v1660 = vrot.slane %v1659, 1
      %v1661 = vadd.f32 %v1659, %v1660
      %v1662 = vsel %vm1413, %v1556, 0.0
      %v1663 = vrot.slane %v1662, 4
      %v1664 = vadd.f32 %v1662, %v1663
      %v1665 = vrot.slane %v1664, 2
      %v1666 = vadd.f32 %v1664, %v1665
      %v1667 = vrot.slane %v1666, 1
      %v1668 = vadd.f32 %v1666, %v1667
      %v1669 = vadd.f32 %v1563, %v1570
      %v1670 = vadd.f32 %v1669, %v1577
      %v1671 = vadd.f32 %v1670, %v1584
      %v1672 = vadd.f32 %v1671, %v1591
      %v1673 = vadd.f32 %v1672, %v1598
      %v1674 = vadd.f32 %v1673, %v1605
      %v1675 = vadd.f32 %v1674, %v1612
      %v1676 = vadd.f32 %v1675, %v1619
      %v1677 = vadd.f32 %v1676, %v1626
      %v1678 = vadd.f32 %v1677, %v1633
      %v1679 = vadd.f32 %v1678, %v1640
      %v1680 = vadd.f32 %v1679, %v1647
      %v1681 = vadd.f32 %v1680, %v1654
      %v1682 = vadd.f32 %v1681, %v1661
      %v1683 = vadd.f32 %v1682, %v1668
      %v1684 = vrcp.pop 32.0
      %v1685 = vmul.f32 32.0, %v1684
      %v1686 = vsub.f32 1.0, %v1685
      %v1687 = vmul.f32 %v1684, %v1686
      %v1688 = vadd.f32 %v1684, %v1687
      %vm1689 = vweird.f32 %v1684
      %v1690 = vsel %vm1689, %v1684, %v1688
      %v1691 = vmul.f32 %v1540, %v1690
      %v1692 = vmul.f32 %v1683, %v1690
      %v1693 = vmul.f32 %v1691, %v1691
      %v1694 = vsub.f32 %v1692, %v1693
      %v1695 = vsub.f32 %v1397, %v1691
      %v1696 = vsub.f32 %v1398, %v1691
      %v1697 = vsub.f32 %v1399, %v1691
      %v1698 = vsub.f32 %v1400, %v1691
      %v1699 = vsub.f32 %v1401, %v1691
      %v1700 = vsub.f32 %v1402, %v1691
      %v1701 = vsub.f32 %v1403, %v1691
      %v1702 = vsub.f32 %v1404, %v1691
      %v1703 = vsub.f32 %v1405, %v1691
      %v1704 = vsub.f32 %v1406, %v1691
      %v1705 = vsub.f32 %v1407, %v1691
      %v1706 = vsub.f32 %v1408, %v1691
      %v1707 = vsub.f32 %v1409, %v1691
      %v1708 = vsub.f32 %v1410, %v1691
      %v1709 = vsub.f32 %v1411, %v1691
      %v1710 = vsub.f32 %v1412, %v1691
      %v1711 = vadd.f32 %v1694, 1e-05
      %v1712 = vrsqrt.pop %v1711
      %v1713 = vmul.f32 %v1712, %v1711
      %v1714 = vmul.f32 %v1713, %v1712
      %v1715 = vmul.f32 0.5, %v1714
      %v1716 = vsub.f32 1.5, %v1715
      %v1717 = vmul.f32 %v1712, %v1716
      %vm1718 = vweird.f32 %v1711
      %vm1719 = vweird.f32 %v1712
      %vm1720 = vmor %vm1718, %vm1719
      %v1721 = vsel %vm1720, %v1712, %v1717
      %v1722 = vmul.f32 %v1695, %v1721
      %v1723 = vmul.f32 %v1696, %v1721
      %v1724 = vmul.f32 %v1697, %v1721
      %v1725 = vmul.f32 %v1698, %v1721
      %v1726 = vmul.f32 %v1699, %v1721
      %v1727 = vmul.f32 %v1700, %v1721
      %v1728 = vmul.f32 %v1701, %v1721
      %v1729 = vmul.f32 %v1702, %v1721
      %v1730 = vmul.f32 %v1703, %v1721
      %v1731 = vmul.f32 %v1704, %v1721
      %v1732 = vmul.f32 %v1705, %v1721
      %v1733 = vmul.f32 %v1706, %v1721
      %v1734 = vmul.f32 %v1707, %v1721
      %v1735 = vmul.f32 %v1708, %v1721
      %v1736 = vmul.f32 %v1709, %v1721
      %v1737 = vmul.f32 %v1710, %v1721
      %v1738 = vld [vmem:[%s2] sm:$0x1]
      %v1740 = vperm.slane %v1738, 0
      %v1742 = vmul.f32 %v1722, %v1740
      %v1743 = vmul.f32 %v1723, %v1740
      %v1744 = vmul.f32 %v1724, %v1740
      %v1745 = vmul.f32 %v1725, %v1740
      %v1746 = vmul.f32 %v1726, %v1740
      %v1747 = vmul.f32 %v1727, %v1740
      %v1748 = vmul.f32 %v1728, %v1740
      %v1749 = vmul.f32 %v1729, %v1740
      %v1750 = vmul.f32 %v1730, %v1740
      %v1751 = vmul.f32 %v1731, %v1740
      %v1752 = vmul.f32 %v1732, %v1740
      %v1753 = vmul.f32 %v1733, %v1740
      %v1754 = vmul.f32 %v1734, %v1740
      %v1755 = vmul.f32 %v1735, %v1740
      %v1756 = vmul.f32 %v1736, %v1740
      %v1757 = vmul.f32 %v1737, %v1740
      %v1758 = vld [vmem:[%s3] sm:$0x1]
      %v1760 = vperm.slane %v1758, 0
      %v1762 = vadd.f32 %v1742, %v1760
      %v1763 = vadd.f32 %v1743, %v1760
      %v1764 = vadd.f32 %v1744, %v1760
      %v1765 = vadd.f32 %v1745, %v1760
      %v1766 = vadd.f32 %v1746, %v1760
      %v1767 = vadd.f32 %v1747, %v1760
      %v1768 = vadd.f32 %v1748, %v1760
      %v1769 = vadd.f32 %v1749, %v1760
      %v1770 = vadd.f32 %v1750, %v1760
      %v1771 = vadd.f32 %v1751, %v1760
      %v1772 = vadd.f32 %v1752, %v1760
      %v1773 = vadd.f32 %v1753, %v1760
      %v1774 = vadd.f32 %v1754, %v1760
      %v1775 = vadd.f32 %v1755, %v1760
      %v1776 = vadd.f32 %v1756, %v1760
      %v1777 = vadd.f32 %v1757, %v1760
      %v1778 = vmax.f32 %v1762, 0.0
      %v1779 = vmax.f32 %v1763, 0.0
      %v1780 = vmax.f32 %v1764, 0.0
      %v1781 = vmax.f32 %v1765, 0.0
      %v1782 = vmax.f32 %v1766, 0.0
      %v1783 = vmax.f32 %v1767, 0.0
      %v1784 = vmax.f32 %v1768, 0.0
      %v1785 = vmax.f32 %v1769, 0.0
      %v1786 = vmax.f32 %v1770, 0.0
      %v1787 = vmax.f32 %v1771, 0.0
      %v1788 = vmax.f32 %v1772, 0.0
      %v1789 = vmax.f32 %v1773, 0.0
      %v1790 = vmax.f32 %v1774, 0.0
      %v1791 = vmax.f32 %v1775, 0.0
      %v1792 = vmax.f32 %v1776, 0.0
      %v1793 = vmax.f32 %v1777, 0.0
      %1794 = vst [vmem:[%s4] sm:$0x3] %v1778
      %1795 = vst [vmem:[%s4 + $0x2] sm:$0x3] %v1779
      %1796 = vst [vmem:[%s4 + $0x4] sm:$0x3] %v1780
      %1797 = vst [vmem:[%s4 + $0x6] sm:$0x3] %v1781
      %1798 = vst [vmem:[%s4 + $0x8] sm:$0x3] %v1782
      %1799 = vst [vmem:[%s4 + $0xa] sm:$0x3] %v1783
      %1800 = vst [vmem:[%s4 + $0xc] sm:$0x3] %v1784
      %1801 = vst [vmem:[%s4 + $0xe] sm:$0x3] %v1785
      %1802 = vst [vmem:[%s4 + $0x10] sm:$0x3] %v1786
      %1803 = vst [vmem:[%s4 + $0x12] sm:$0x3] %v1787
      %1804 = vst [vmem:[%s4 + $0x14] sm:$0x3] %v1788
      %1805 = vst [vmem:[%s4 + $0x16] sm:$0x3] %v1789
      %1806 = vst [vmem:[%s4 + $0x18] sm:$0x3] %v1790
      %1807 = vst [vmem:[%s4 + $0x1a] sm:$0x3] %v1791
      %1808 = vst [vmem:[%s4 + $0x1c] sm:$0x3] %v1792
      %1809 = vst [vmem:[%s4 + $0x1e] sm:$0x3] %v1793
    $region29: #{_lambda_.4} parent=1 // pred_fallthru
      _
    // Predicated region
    $region30: #{_lambda_.4} parent=1 // pred_check
      _
    $region31: #{_lambda_.4} parent=1 // pred_check_branch
      %1811 = sbr.rel (0) target = $region33
    $region32: #{_lambda_.4} parent=1 // pred_region
      _
    $region33: #{_lambda_.4} parent=1 // pred_fallthru
      _
    // Predicated region
    $region34: #{_lambda_.4} parent=1 // pred_check
      _
    $region35: #{_lambda_.4} parent=1 // pred_check_branch
      %1813 = sbr.rel (0) target = $region37
    $region36: #{_lambda_.4} parent=1 // pred_region
      _
    $region37: #{_lambda_.4} parent=1 // pred_fallthru
      _
    %1814 = vsyncpa [#allocation3], 1

// kernel: _lambda_.6
$region0: #{_lambda_.6}
  #allocation0 [shape = 'u32[]', space=smem, size = 0x4, offset = 0x4, fixed_abs, tag = 'smem constant byte address 0x4 - core index']
  #allocation1 [shape = 'u32[72,128]{1,0:T(1,128)}', space=vmem, size = 0x9000, scoped, tag = 'internal scratch']
  %s0 = inlined_call_operand.vmem [shape: bf16[4,128,128], index: 0, kind: input, shape index: {}]
  %s1 = inlined_call_operand.vmem [shape: bf16[4,128,128], index: 1, kind: input, shape index: {}]
  %s2 = inlined_call_operand.vmem [shape: f32[1,128], index: 2, kind: input, shape index: {}]
  %s3 = inlined_call_operand.vmem [shape: f32[1,128], index: 3, kind: input, shape index: {}]
  %s4 = inlined_call_operand.vmem [shape: f32[4,128,128], index: 4, kind: output, shape index: {}]
  %s5 = sld [smem:[#allocation0]]
  $region34: #{_lambda_.6} parent=0
    _
  %s7 = ssub.s32 1, %s5
  %s8 = scalar_select 0, %s7, %s5
  // Predicated region
  $region2: #{_lambda_.6} parent=0 // pred_check
    _
  $region3: #{_lambda_.6} parent=0 // pred_check_branch
    %10 = sbr.rel (0) target = $region5
  $region4: #{_lambda_.6} parent=0 // pred_region
    _
  $region5: #{_lambda_.6} parent=0 // pred_fallthru
    _
  // Predicated region
  $region6: #{_lambda_.6} parent=0 // pred_check
    _
  $region7: #{_lambda_.6} parent=0 // pred_check_branch
    %12 = sbr.rel (0) target = $region9
  $region8: #{_lambda_.6} parent=0 // pred_region
    _
  $region9: #{_lambda_.6} parent=0 // pred_fallthru
    _
  // Predicated region
  $region10: #{_lambda_.6} parent=0 // pred_check
    _
  $region11: #{_lambda_.6} parent=0 // pred_check_branch
    %14 = sbr.rel (0) target = $region13
  $region12: #{_lambda_.6} parent=0 // pred_region
    _
  $region13: #{_lambda_.6} parent=0 // pred_fallthru
    _
  // Predicated region
  $region14: #{_lambda_.6} parent=0 // pred_check
    _
  $region15: #{_lambda_.6} parent=0 // pred_check_branch
    %16 = sbr.rel (0) target = $region17
  $region16: #{_lambda_.6} parent=0 // pred_region
    _
  $region17: #{_lambda_.6} parent=0 // pred_fallthru
    _
  %p17 = scmp.eq.s32.totalorder 0, 0
  // Predicated region
  $region18: #{_lambda_.6} parent=0 // pred_check
    %p18 = pneg %p17
  $region19: #{_lambda_.6} parent=0 // pred_check_branch
    %20 = sbr.rel (%p18) target = $region21
  $region20: #{_lambda_.6} parent=0 // pred_region
    %21 = vst [vmem:[%s4] sm:$0xff] 0.0
    %22 = vst [vmem:[%s4 + $0x8] sm:$0xff] 0.0
    %23 = vst [vmem:[%s4 + $0x10] sm:$0xff] 0.0
    %24 = vst [vmem:[%s4 + $0x18] sm:$0xff] 0.0
    %25 = vst [vmem:[%s4 + $0x20] sm:$0xff] 0.0
    %26 = vst [vmem:[%s4 + $0x28] sm:$0xff] 0.0
    %27 = vst [vmem:[%s4 + $0x30] sm:$0xff] 0.0
    %28 = vst [vmem:[%s4 + $0x38] sm:$0xff] 0.0
    %29 = vst [vmem:[%s4 + $0x40] sm:$0xff] 0.0
    %30 = vst [vmem:[%s4 + $0x48] sm:$0xff] 0.0
    %31 = vst [vmem:[%s4 + $0x50] sm:$0xff] 0.0
    %32 = vst [vmem:[%s4 + $0x58] sm:$0xff] 0.0
    %33 = vst [vmem:[%s4 + $0x60] sm:$0xff] 0.0
    %34 = vst [vmem:[%s4 + $0x68] sm:$0xff] 0.0
    %35 = vst [vmem:[%s4 + $0x70] sm:$0xff] 0.0
    %36 = vst [vmem:[%s4 + $0x78] sm:$0xff] 0.0
    %37 = vst [vmem:[%s4 + $0x80] sm:$0xff] 0.0
    %38 = vst [vmem:[%s4 + $0x88] sm:$0xff] 0.0
    %39 = vst [vmem:[%s4 + $0x90] sm:$0xff] 0.0
    %40 = vst [vmem:[%s4 + $0x98] sm:$0xff] 0.0
    %41 = vst [vmem:[%s4 + $0xa0] sm:$0xff] 0.0
    %42 = vst [vmem:[%s4 + $0xa8] sm:$0xff] 0.0
    %43 = vst [vmem:[%s4 + $0xb0] sm:$0xff] 0.0
    %44 = vst [vmem:[%s4 + $0xb8] sm:$0xff] 0.0
    %45 = vst [vmem:[%s4 + $0xc0] sm:$0xff] 0.0
    %46 = vst [vmem:[%s4 + $0xc8] sm:$0xff] 0.0
    %47 = vst [vmem:[%s4 + $0xd0] sm:$0xff] 0.0
    %48 = vst [vmem:[%s4 + $0xd8] sm:$0xff] 0.0
    %49 = vst [vmem:[%s4 + $0xe0] sm:$0xff] 0.0
    %50 = vst [vmem:[%s4 + $0xe8] sm:$0xff] 0.0
    %51 = vst [vmem:[%s4 + $0xf0] sm:$0xff] 0.0
    %52 = vst [vmem:[%s4 + $0xf8] sm:$0xff] 0.0
    %53 = vst [vmem:[%s4 + $0x100] sm:$0xff] 0.0
    %54 = vst [vmem:[%s4 + $0x108] sm:$0xff] 0.0
    %55 = vst [vmem:[%s4 + $0x110] sm:$0xff] 0.0
    %56 = vst [vmem:[%s4 + $0x118] sm:$0xff] 0.0
    %57 = vst [vmem:[%s4 + $0x120] sm:$0xff] 0.0
    %58 = vst [vmem:[%s4 + $0x128] sm:$0xff] 0.0
    %59 = vst [vmem:[%s4 + $0x130] sm:$0xff] 0.0
    %60 = vst [vmem:[%s4 + $0x138] sm:$0xff] 0.0
    %61 = vst [vmem:[%s4 + $0x140] sm:$0xff] 0.0
    %62 = vst [vmem:[%s4 + $0x148] sm:$0xff] 0.0
    %63 = vst [vmem:[%s4 + $0x150] sm:$0xff] 0.0
    %64 = vst [vmem:[%s4 + $0x158] sm:$0xff] 0.0
    %65 = vst [vmem:[%s4 + $0x160] sm:$0xff] 0.0
    %66 = vst [vmem:[%s4 + $0x168] sm:$0xff] 0.0
    %67 = vst [vmem:[%s4 + $0x170] sm:$0xff] 0.0
    %68 = vst [vmem:[%s4 + $0x178] sm:$0xff] 0.0
    %69 = vst [vmem:[%s4 + $0x180] sm:$0xff] 0.0
    %70 = vst [vmem:[%s4 + $0x188] sm:$0xff] 0.0
    %71 = vst [vmem:[%s4 + $0x190] sm:$0xff] 0.0
    %72 = vst [vmem:[%s4 + $0x198] sm:$0xff] 0.0
    %73 = vst [vmem:[%s4 + $0x1a0] sm:$0xff] 0.0
    %74 = vst [vmem:[%s4 + $0x1a8] sm:$0xff] 0.0
    %75 = vst [vmem:[%s4 + $0x1b0] sm:$0xff] 0.0
    %76 = vst [vmem:[%s4 + $0x1b8] sm:$0xff] 0.0
    %77 = vst [vmem:[%s4 + $0x1c0] sm:$0xff] 0.0
    %78 = vst [vmem:[%s4 + $0x1c8] sm:$0xff] 0.0
    %79 = vst [vmem:[%s4 + $0x1d0] sm:$0xff] 0.0
    %80 = vst [vmem:[%s4 + $0x1d8] sm:$0xff] 0.0
    %81 = vst [vmem:[%s4 + $0x1e0] sm:$0xff] 0.0
    %82 = vst [vmem:[%s4 + $0x1e8] sm:$0xff] 0.0
    %83 = vst [vmem:[%s4 + $0x1f0] sm:$0xff] 0.0
    %84 = vst [vmem:[%s4 + $0x1f8] sm:$0xff] 0.0
  $region21: #{_lambda_.6} parent=0 // pred_fallthru
    _
  %v85 = vld [vmem:[%s4] sm:$0xff]
  %v86 = vld [vmem:[%s4 + $0x8] sm:$0xff]
  %v87 = vld [vmem:[%s4 + $0x10] sm:$0xff]
  %v88 = vld [vmem:[%s4 + $0x18] sm:$0xff]
  %v89 = vld [vmem:[%s4 + $0x20] sm:$0xff]
  %v90 = vld [vmem:[%s4 + $0x28] sm:$0xff]
  %v91 = vld [vmem:[%s4 + $0x30] sm:$0xff]
  %v92 = vld [vmem:[%s4 + $0x38] sm:$0xff]
  %v93 = vld [vmem:[%s4 + $0x40] sm:$0xff]
  %v94 = vld [vmem:[%s4 + $0x48] sm:$0xff]
  %v95 = vld [vmem:[%s4 + $0x50] sm:$0xff]
  %v96 = vld [vmem:[%s4 + $0x58] sm:$0xff]
  %v97 = vld [vmem:[%s4 + $0x60] sm:$0xff]
  %v98 = vld [vmem:[%s4 + $0x68] sm:$0xff]
  %v99 = vld [vmem:[%s4 + $0x70] sm:$0xff]
  %v100 = vld [vmem:[%s4 + $0x78] sm:$0xff]
  %v101 = vld [vmem:[%s0] sm:$0xf]
  %v102 = vld [vmem:[%s0 + $0x4] sm:$0xf]
  %v103 = vld [vmem:[%s0 + $0x8] sm:$0xf]
  %v104 = vld [vmem:[%s0 + $0xc] sm:$0xf]
  %v105 = vld [vmem:[%s0 + $0x10] sm:$0xf]
  %v106 = vld [vmem:[%s0 + $0x14] sm:$0xf]
  %v107 = vld [vmem:[%s0 + $0x18] sm:$0xf]
  %v108 = vld [vmem:[%s0 + $0x1c] sm:$0xf]
  %v109 = vld [vmem:[%s0 + $0x20] sm:$0xf]
  %v110 = vld [vmem:[%s0 + $0x24] sm:$0xf]
  %v111 = vld [vmem:[%s0 + $0x28] sm:$0xf]
  %v112 = vld [vmem:[%s0 + $0x2c] sm:$0xf]
  %v113 = vld [vmem:[%s0 + $0x30] sm:$0xf]
  %v114 = vld [vmem:[%s0 + $0x34] sm:$0xf]
  %v115 = vld [vmem:[%s0 + $0x38] sm:$0xf]
  %v116 = vld [vmem:[%s0 + $0x3c] sm:$0xf]
  %v117 = vld [vmem:[%s1] sm:$0xf]
  %v118 = vld [vmem:[%s1 + $0x4] sm:$0xf]
  %v119 = vld [vmem:[%s1 + $0x8] sm:$0xf]
  %v120 = vld [vmem:[%s1 + $0xc] sm:$0xf]
  %v121 = vld [vmem:[%s1 + $0x10] sm:$0xf]
  %v122 = vld [vmem:[%s1 + $0x14] sm:$0xf]
  %v123 = vld [vmem:[%s1 + $0x18] sm:$0xf]
  %v124 = vld [vmem:[%s1 + $0x1c] sm:$0xf]
  %v125 = vld [vmem:[%s1 + $0x20] sm:$0xf]
  %v126 = vld [vmem:[%s1 + $0x24] sm:$0xf]
  %v127 = vld [vmem:[%s1 + $0x28] sm:$0xf]
  %v128 = vld [vmem:[%s1 + $0x2c] sm:$0xf]
  %v129 = vld [vmem:[%s1 + $0x30] sm:$0xf]
  %v130 = vld [vmem:[%s1 + $0x34] sm:$0xf]
  %v131 = vld [vmem:[%s1 + $0x38] sm:$0xf]
  %v132 = vld [vmem:[%s1 + $0x3c] sm:$0xf]
  %v149 = vunpack.c.l.b16 %v101
  %v150 = vunpack.c.l.b16 %v102
  %v151 = vunpack.c.l.b16 %v103
  %v152 = vunpack.c.l.b16 %v104
  %v153 = vunpack.c.l.b16 %v105
  %v154 = vunpack.c.l.b16 %v106
  %v155 = vunpack.c.l.b16 %v107
  %v156 = vunpack.c.l.b16 %v108
  %v157 = vunpack.c.l.b16 %v109
  %v158 = vunpack.c.l.b16 %v110
  %v159 = vunpack.c.l.b16 %v111
  %v160 = vunpack.c.l.b16 %v112
  %v161 = vunpack.c.l.b16 %v113
  %v162 = vunpack.c.l.b16 %v114
  %v163 = vunpack.c.l.b16 %v115
  %v164 = vunpack.c.l.b16 %v116
  %v165 = vpack.c.b16 %v150, %v149
  %v166 = vpack.c.b16 %v152, %v151
  %v167 = vpack.c.b16 %v154, %v153
  %v168 = vpack.c.b16 %v156, %v155
  %v169 = vpack.c.b16 %v158, %v157
  %v170 = vpack.c.b16 %v160, %v159
  %v171 = vpack.c.b16 %v162, %v161
  %v172 = vpack.c.b16 %v164, %v163
  %v197 = vunpack.c.l.b16 %v117
  %v198 = vunpack.c.l.b16 %v118
  %v199 = vunpack.c.l.b16 %v119
  %v200 = vunpack.c.l.b16 %v120
  %v201 = vunpack.c.l.b16 %v121
  %v202 = vunpack.c.l.b16 %v122
  %v203 = vunpack.c.l.b16 %v123
  %v204 = vunpack.c.l.b16 %v124
  %v205 = vunpack.c.l.b16 %v125
  %v206 = vunpack.c.l.b16 %v126
  %v207 = vunpack.c.l.b16 %v127
  %v208 = vunpack.c.l.b16 %v128
  %v209 = vunpack.c.l.b16 %v129
  %v210 = vunpack.c.l.b16 %v130
  %v211 = vunpack.c.l.b16 %v131
  %v212 = vunpack.c.l.b16 %v132
  %v213 = vpack.c.b16 %v198, %v197
  %v214 = vpack.c.b16 %v200, %v199
  %v215 = vpack.c.b16 %v202, %v201
  %v216 = vpack.c.b16 %v204, %v203
  %v217 = vpack.c.b16 %v206, %v205
  %v218 = vpack.c.b16 %v208, %v207
  %v219 = vpack.c.b16 %v210, %v209
  %v220 = vpack.c.b16 %v212, %v211
  %229 = vmatpush.bf16.msra.mxu0 %v220
  %230 = vmatpush.bf16.msra.mxu0 %v219
  %231 = vmatpush.bf16.msra.mxu0 %v218
  %232 = vmatpush.bf16.msra.mxu0 %v217
  %233 = vmatpush.bf16.msra.mxu0 %v216
  %234 = vmatpush.bf16.msra.mxu0 %v215
  %235 = vmatpush.bf16.msra.mxu0 %v214
  %236 = vmatpush.bf16.msra.mxu0 %v213
  %237 = vmatmul.bf16.gmra.mxu0 %v165
  %v238 = vpop.f32.mrf.mxu0
  %v239 = vadd.f32 0.0, %v238
  %v240 = vpop.f32.mrf.mxu0
  %v241 = vadd.f32 0.0, %v240
  %242 = vmatmul.bf16.gmra.mxu0 %v166
  %v243 = vpop.f32.mrf.mxu0
  %v244 = vadd.f32 0.0, %v243
  %v245 = vpop.f32.mrf.mxu0
  %v246 = vadd.f32 0.0, %v245
  %247 = vmatmul.bf16.gmra.mxu0 %v167
  %v248 = vpop.f32.mrf.mxu0
  %v249 = vadd.f32 0.0, %v248
  %v250 = vpop.f32.mrf.mxu0
  %v251 = vadd.f32 0.0, %v250
  %252 = vmatmul.bf16.gmra.mxu0 %v168
  %v253 = vpop.f32.mrf.mxu0
  %v254 = vadd.f32 0.0, %v253
  %v255 = vpop.f32.mrf.mxu0
  %v256 = vadd.f32 0.0, %v255
  %257 = vmatmul.bf16.gmra.mxu0 %v169
  %v258 = vpop.f32.mrf.mxu0
  %v259 = vadd.f32 0.0, %v258
  %v260 = vpop.f32.mrf.mxu0
  %v261 = vadd.f32 0.0, %v260
  %262 = vmatmul.bf16.gmra.mxu0 %v170
  %v263 = vpop.f32.mrf.mxu0
  %v264 = vadd.f32 0.0, %v263
  %v265 = vpop.f32.mrf.mxu0
  %v266 = vadd.f32 0.0, %v265
  %267 = vmatmul.bf16.gmra.mxu0 %v171
  %v268 = vpop.f32.mrf.mxu0
  %v269 = vadd.f32 0.0, %v268
  %v270 = vpop.f32.mrf.mxu0
  %v271 = vadd.f32 0.0, %v270
  %272 = vmatmul.bf16.gmra.mxu0 %v172
  %v273 = vpop.f32.mrf.mxu0
  %v274 = vadd.f32 0.0, %v273
  %v275 = vpop.f32.mrf.mxu0
  %v276 = vadd.f32 0.0, %v275
  %277 = vdwg.mxu0
  %v278 = vadd.f32 %v85, %v239
  %v279 = vadd.f32 %v86, %v241
  %v280 = vadd.f32 %v87, %v244
  %v281 = vadd.f32 %v88, %v246
  %v282 = vadd.f32 %v89, %v249
  %v283 = vadd.f32 %v90, %v251
  %v284 = vadd.f32 %v91, %v254
  %v285 = vadd.f32 %v92, %v256
  %v286 = vadd.f32 %v93, %v259
  %v287 = vadd.f32 %v94, %v261
  %v288 = vadd.f32 %v95, %v264
  %v289 = vadd.f32 %v96, %v266
  %v290 = vadd.f32 %v97, %v269
  %v291 = vadd.f32 %v98, %v271
  %v292 = vadd.f32 %v99, %v274
  %v293 = vadd.f32 %v100, %v276
  %294 = vst [vmem:[%s4] sm:$0xff] %v278
  %295 = vst [vmem:[%s4 + $0x8] sm:$0xff] %v279
  %296 = vst [vmem:[%s4 + $0x10] sm:$0xff] %v280
  %297 = vst [vmem:[%s4 + $0x18] sm:$0xff] %v281
  %298 = vst [vmem:[%s4 + $0x20] sm:$0xff] %v282
  %299 = vst [vmem:[%s4 + $0x28] sm:$0xff] %v283
  %300 = vst [vmem:[%s4 + $0x30] sm:$0xff] %v284
  %301 = vst [vmem:[%s4 + $0x38] sm:$0xff] %v285
  %302 = vst [vmem:[%s4 + $0x40] sm:$0xff] %v286
  %303 = vst [vmem:[%s4 + $0x48] sm:$0xff] %v287
  %304 = vst [vmem:[%s4 + $0x50] sm:$0xff] %v288
  %305 = vst [vmem:[%s4 + $0x58] sm:$0xff] %v289
  %306 = vst [vmem:[%s4 + $0x60] sm:$0xff] %v290
  %307 = vst [vmem:[%s4 + $0x68] sm:$0xff] %v291
  %308 = vst [vmem:[%s4 + $0x70] sm:$0xff] %v292
  %309 = vst [vmem:[%s4 + $0x78] sm:$0xff] %v293
  %s310 = scalar_lea.vmem %s4, 128
  %v311 = vld [vmem:[%s310] sm:$0xff]
  %v312 = vld [vmem:[%s310 + $0x8] sm:$0xff]
  %v313 = vld [vmem:[%s310 + $0x10] sm:$0xff]
  %v314 = vld [vmem:[%s310 + $0x18] sm:$0xff]
  %v315 = vld [vmem:[%s310 + $0x20] sm:$0xff]
  %v316 = vld [vmem:[%s310 + $0x28] sm:$0xff]
  %v317 = vld [vmem:[%s310 + $0x30] sm:$0xff]
  %v318 = vld [vmem:[%s310 + $0x38] sm:$0xff]
  %v319 = vld [vmem:[%s310 + $0x40] sm:$0xff]
  %v320 = vld [vmem:[%s310 + $0x48] sm:$0xff]
  %v321 = vld [vmem:[%s310 + $0x50] sm:$0xff]
  %v322 = vld [vmem:[%s310 + $0x58] sm:$0xff]
  %v323 = vld [vmem:[%s310 + $0x60] sm:$0xff]
  %v324 = vld [vmem:[%s310 + $0x68] sm:$0xff]
  %v325 = vld [vmem:[%s310 + $0x70] sm:$0xff]
  %v326 = vld [vmem:[%s310 + $0x78] sm:$0xff]
  %s327 = scalar_lea.vmem %s0, 64
  %v328 = vld [vmem:[%s327] sm:$0xf]
  %v329 = vld [vmem:[%s327 + $0x4] sm:$0xf]
  %v330 = vld [vmem:[%s327 + $0x8] sm:$0xf]
  %v331 = vld [vmem:[%s327 + $0xc] sm:$0xf]
  %v332 = vld [vmem:[%s327 + $0x10] sm:$0xf]
  %v333 = vld [vmem:[%s327 + $0x14] sm:$0xf]
  %v334 = vld [vmem:[%s327 + $0x18] sm:$0xf]
  %v335 = vld [vmem:[%s327 + $0x1c] sm:$0xf]
  %v336 = vld [vmem:[%s327 + $0x20] sm:$0xf]
  %v337 = vld [vmem:[%s327 + $0x24] sm:$0xf]
  %v338 = vld [vmem:[%s327 + $0x28] sm:$0xf]
  %v339 = vld [vmem:[%s327 + $0x2c] sm:$0xf]
  %v340 = vld [vmem:[%s327 + $0x30] sm:$0xf]
  %v341 = vld [vmem:[%s327 + $0x34] sm:$0xf]
  %v342 = vld [vmem:[%s327 + $0x38] sm:$0xf]
  %v343 = vld [vmem:[%s327 + $0x3c] sm:$0xf]
  %s344 = scalar_lea.vmem %s1, 64
  %v345 = vld [vmem:[%s344] sm:$0xf]
  %v346 = vld [vmem:[%s344 + $0x4] sm:$0xf]
  %v347 = vld [vmem:[%s344 + $0x8] sm:$0xf]
  %v348 = vld [vmem:[%s344 + $0xc] sm:$0xf]
  %v349 = vld [vmem:[%s344 + $0x10] sm:$0xf]
  %v350 = vld [vmem:[%s344 + $0x14] sm:$0xf]
  %v351 = vld [vmem:[%s344 + $0x18] sm:$0xf]
  %v352 = vld [vmem:[%s344 + $0x1c] sm:$0xf]
  %v353 = vld [vmem:[%s344 + $0x20] sm:$0xf]
  %v354 = vld [vmem:[%s344 + $0x24] sm:$0xf]
  %v355 = vld [vmem:[%s344 + $0x28] sm:$0xf]
  %v356 = vld [vmem:[%s344 + $0x2c] sm:$0xf]
  %v357 = vld [vmem:[%s344 + $0x30] sm:$0xf]
  %v358 = vld [vmem:[%s344 + $0x34] sm:$0xf]
  %v359 = vld [vmem:[%s344 + $0x38] sm:$0xf]
  %v360 = vld [vmem:[%s344 + $0x3c] sm:$0xf]
  %v377 = vunpack.c.l.b16 %v328
  %v378 = vunpack.c.l.b16 %v329
  %v379 = vunpack.c.l.b16 %v330
  %v380 = vunpack.c.l.b16 %v331
  %v381 = vunpack.c.l.b16 %v332
  %v382 = vunpack.c.l.b16 %v333
  %v383 = vunpack.c.l.b16 %v334
  %v384 = vunpack.c.l.b16 %v335
  %v385 = vunpack.c.l.b16 %v336
  %v386 = vunpack.c.l.b16 %v337
  %v387 = vunpack.c.l.b16 %v338
  %v388 = vunpack.c.l.b16 %v339
  %v389 = vunpack.c.l.b16 %v340
  %v390 = vunpack.c.l.b16 %v341
  %v391 = vunpack.c.l.b16 %v342
  %v392 = vunpack.c.l.b16 %v343
  %v393 = vpack.c.b16 %v378, %v377
  %v394 = vpack.c.b16 %v380, %v379
  %v395 = vpack.c.b16 %v382, %v381
  %v396 = vpack.c.b16 %v384, %v383
  %v397 = vpack.c.b16 %v386, %v385
  %v398 = vpack.c.b16 %v388, %v387
  %v399 = vpack.c.b16 %v390, %v389
  %v400 = vpack.c.b16 %v392, %v391
  %v425 = vunpack.c.l.b16 %v345
  %v426 = vunpack.c.l.b16 %v346
  %v427 = vunpack.c.l.b16 %v347
  %v428 = vunpack.c.l.b16 %v348
  %v429 = vunpack.c.l.b16 %v349
  %v430 = vunpack.c.l.b16 %v350
  %v431 = vunpack.c.l.b16 %v351
  %v432 = vunpack.c.l.b16 %v352
  %v433 = vunpack.c.l.b16 %v353
  %v434 = vunpack.c.l.b16 %v354
  %v435 = vunpack.c.l.b16 %v355
  %v436 = vunpack.c.l.b16 %v356
  %v437 = vunpack.c.l.b16 %v357
  %v438 = vunpack.c.l.b16 %v358
  %v439 = vunpack.c.l.b16 %v359
  %v440 = vunpack.c.l.b16 %v360
  %v441 = vpack.c.b16 %v426, %v425
  %v442 = vpack.c.b16 %v428, %v427
  %v443 = vpack.c.b16 %v430, %v429
  %v444 = vpack.c.b16 %v432, %v431
  %v445 = vpack.c.b16 %v434, %v433
  %v446 = vpack.c.b16 %v436, %v435
  %v447 = vpack.c.b16 %v438, %v437
  %v448 = vpack.c.b16 %v440, %v439
  %457 = vmatpush.bf16.msra.mxu0 %v448
  %458 = vmatpush.bf16.msra.mxu0 %v447
  %459 = vmatpush.bf16.msra.mxu0 %v446
  %460 = vmatpush.bf16.msra.mxu0 %v445
  %461 = vmatpush.bf16.msra.mxu0 %v444
  %462 = vmatpush.bf16.msra.mxu0 %v443
  %463 = vmatpush.bf16.msra.mxu0 %v442
  %464 = vmatpush.bf16.msra.mxu0 %v441
  %465 = vmatmul.bf16.gmra.mxu0 %v393
  %v466 = vpop.f32.mrf.mxu0
  %v467 = vadd.f32 0.0, %v466
  %v468 = vpop.f32.mrf.mxu0
  %v469 = vadd.f32 0.0, %v468
  %470 = vmatmul.bf16.gmra.mxu0 %v394
  %v471 = vpop.f32.mrf.mxu0
  %v472 = vadd.f32 0.0, %v471
  %v473 = vpop.f32.mrf.mxu0
  %v474 = vadd.f32 0.0, %v473
  %475 = vmatmul.bf16.gmra.mxu0 %v395
  %v476 = vpop.f32.mrf.mxu0
  %v477 = vadd.f32 0.0, %v476
  %v478 = vpop.f32.mrf.mxu0
  %v479 = vadd.f32 0.0, %v478
  %480 = vmatmul.bf16.gmra.mxu0 %v396
  %v481 = vpop.f32.mrf.mxu0
  %v482 = vadd.f32 0.0, %v481
  %v483 = vpop.f32.mrf.mxu0
  %v484 = vadd.f32 0.0, %v483
  %485 = vmatmul.bf16.gmra.mxu0 %v397
  %v486 = vpop.f32.mrf.mxu0
  %v487 = vadd.f32 0.0, %v486
  %v488 = vpop.f32.mrf.mxu0
  %v489 = vadd.f32 0.0, %v488
  %490 = vmatmul.bf16.gmra.mxu0 %v398
  %v491 = vpop.f32.mrf.mxu0
  %v492 = vadd.f32 0.0, %v491
  %v493 = vpop.f32.mrf.mxu0
  %v494 = vadd.f32 0.0, %v493
  %495 = vmatmul.bf16.gmra.mxu0 %v399
  %v496 = vpop.f32.mrf.mxu0
  %v497 = vadd.f32 0.0, %v496
  %v498 = vpop.f32.mrf.mxu0
  %v499 = vadd.f32 0.0, %v498
  %500 = vmatmul.bf16.gmra.mxu0 %v400
  %v501 = vpop.f32.mrf.mxu0
  %v502 = vadd.f32 0.0, %v501
  %v503 = vpop.f32.mrf.mxu0
  %v504 = vadd.f32 0.0, %v503
  %505 = vdwg.mxu0
  %v506 = vadd.f32 %v311, %v467
  %v507 = vadd.f32 %v312, %v469
  %v508 = vadd.f32 %v313, %v472
  %v509 = vadd.f32 %v314, %v474
  %v510 = vadd.f32 %v315, %v477
  %v511 = vadd.f32 %v316, %v479
  %v512 = vadd.f32 %v317, %v482
  %v513 = vadd.f32 %v318, %v484
  %v514 = vadd.f32 %v319, %v487
  %v515 = vadd.f32 %v320, %v489
  %v516 = vadd.f32 %v321, %v492
  %v517 = vadd.f32 %v322, %v494
  %v518 = vadd.f32 %v323, %v497
  %v519 = vadd.f32 %v324, %v499
  %v520 = vadd.f32 %v325, %v502
  %v521 = vadd.f32 %v326, %v504
  %522 = vst [vmem:[%s310] sm:$0xff] %v506
  %523 = vst [vmem:[%s310 + $0x8] sm:$0xff] %v507
  %524 = vst [vmem:[%s310 + $0x10] sm:$0xff] %v508
  %525 = vst [vmem:[%s310 + $0x18] sm:$0xff] %v509
  %526 = vst [vmem:[%s310 + $0x20] sm:$0xff] %v510
  %527 = vst [vmem:[%s310 + $0x28] sm:$0xff] %v511
  %528 = vst [vmem:[%s310 + $0x30] sm:$0xff] %v512
  %529 = vst [vmem:[%s310 + $0x38] sm:$0xff] %v513
  %530 = vst [vmem:[%s310 + $0x40] sm:$0xff] %v514
  %531 = vst [vmem:[%s310 + $0x48] sm:$0xff] %v515
  %532 = vst [vmem:[%s310 + $0x50] sm:$0xff] %v516
  %533 = vst [vmem:[%s310 + $0x58] sm:$0xff] %v517
  %534 = vst [vmem:[%s310 + $0x60] sm:$0xff] %v518
  %535 = vst [vmem:[%s310 + $0x68] sm:$0xff] %v519
  %536 = vst [vmem:[%s310 + $0x70] sm:$0xff] %v520
  %537 = vst [vmem:[%s310 + $0x78] sm:$0xff] %v521
  %s538 = scalar_lea.vmem %s4, 256
  %v539 = vld [vmem:[%s538] sm:$0xff]
  %v540 = vld [vmem:[%s538 + $0x8] sm:$0xff]
  %v541 = vld [vmem:[%s538 + $0x10] sm:$0xff]
  %v542 = vld [vmem:[%s538 + $0x18] sm:$0xff]
  %v543 = vld [vmem:[%s538 + $0x20] sm:$0xff]
  %v544 = vld [vmem:[%s538 + $0x28] sm:$0xff]
  %v545 = vld [vmem:[%s538 + $0x30] sm:$0xff]
  %v546 = vld [vmem:[%s538 + $0x38] sm:$0xff]
  %v547 = vld [vmem:[%s538 + $0x40] sm:$0xff]
  %v548 = vld [vmem:[%s538 + $0x48] sm:$0xff]
  %v549 = vld [vmem:[%s538 + $0x50] sm:$0xff]
  %v550 = vld [vmem:[%s538 + $0x58] sm:$0xff]
  %v551 = vld [vmem:[%s538 + $0x60] sm:$0xff]
  %v552 = vld [vmem:[%s538 + $0x68] sm:$0xff]
  %v553 = vld [vmem:[%s538 + $0x70] sm:$0xff]
  %v554 = vld [vmem:[%s538 + $0x78] sm:$0xff]
  %s555 = scalar_lea.vmem %s0, 128
  %v556 = vld [vmem:[%s555] sm:$0xf]
  %v557 = vld [vmem:[%s555 + $0x4] sm:$0xf]
  %v558 = vld [vmem:[%s555 + $0x8] sm:$0xf]
  %v559 = vld [vmem:[%s555 + $0xc] sm:$0xf]
  %v560 = vld [vmem:[%s555 + $0x10] sm:$0xf]
  %v561 = vld [vmem:[%s555 + $0x14] sm:$0xf]
  %v562 = vld [vmem:[%s555 + $0x18] sm:$0xf]
  %v563 = vld [vmem:[%s555 + $0x1c] sm:$0xf]
  %v564 = vld [vmem:[%s555 + $0x20] sm:$0xf]
  %v565 = vld [vmem:[%s555 + $0x24] sm:$0xf]
  %v566 = vld [vmem:[%s555 + $0x28] sm:$0xf]
  %v567 = vld [vmem:[%s555 + $0x2c] sm:$0xf]
  %v568 = vld [vmem:[%s555 + $0x30] sm:$0xf]
  %v569 = vld [vmem:[%s555 + $0x34] sm:$0xf]
  %v570 = vld [vmem:[%s555 + $0x38] sm:$0xf]
  %v571 = vld [vmem:[%s555 + $0x3c] sm:$0xf]
  %s572 = scalar_lea.vmem %s1, 128
  %v573 = vld [vmem:[%s572] sm:$0xf]
  %v574 = vld [vmem:[%s572 + $0x4] sm:$0xf]
  %v575 = vld [vmem:[%s572 + $0x8] sm:$0xf]
  %v576 = vld [vmem:[%s572 + $0xc] sm:$0xf]
  %v577 = vld [vmem:[%s572 + $0x10] sm:$0xf]
  %v578 = vld [vmem:[%s572 + $0x14] sm:$0xf]
  %v579 = vld [vmem:[%s572 + $0x18] sm:$0xf]
  %v580 = vld [vmem:[%s572 + $0x1c] sm:$0xf]
  %v581 = vld [vmem:[%s572 + $0x20] sm:$0xf]
  %v582 = vld [vmem:[%s572 + $0x24] sm:$0xf]
  %v583 = vld [vmem:[%s572 + $0x28] sm:$0xf]
  %v584 = vld [vmem:[%s572 + $0x2c] sm:$0xf]
  %v585 = vld [vmem:[%s572 + $0x30] sm:$0xf]
  %v586 = vld [vmem:[%s572 + $0x34] sm:$0xf]
  %v587 = vld [vmem:[%s572 + $0x38] sm:$0xf]
  %v588 = vld [vmem:[%s572 + $0x3c] sm:$0xf]
  %v605 = vunpack.c.l.b16 %v556
  %v606 = vunpack.c.l.b16 %v557
  %v607 = vunpack.c.l.b16 %v558
  %v608 = vunpack.c.l.b16 %v559
  %v609 = vunpack.c.l.b16 %v560
  %v610 = vunpack.c.l.b16 %v561
  %v611 = vunpack.c.l.b16 %v562
  %v612 = vunpack.c.l.b16 %v563
  %v613 = vunpack.c.l.b16 %v564
  %v614 = vunpack.c.l.b16 %v565
  %v615 = vunpack.c.l.b16 %v566
  %v616 = vunpack.c.l.b16 %v567
  %v617 = vunpack.c.l.b16 %v568
  %v618 = vunpack.c.l.b16 %v569
  %v619 = vunpack.c.l.b16 %v570
  %v620 = vunpack.c.l.b16 %v571
  %v621 = vpack.c.b16 %v606, %v605
  %v622 = vpack.c.b16 %v608, %v607
  %v623 = vpack.c.b16 %v610, %v609
  %v624 = vpack.c.b16 %v612, %v611
  %v625 = vpack.c.b16 %v614, %v613
  %v626 = vpack.c.b16 %v616, %v615
  %v627 = vpack.c.b16 %v618, %v617
  %v628 = vpack.c.b16 %v620, %v619
  %v653 = vunpack.c.l.b16 %v573
  %v654 = vunpack.c.l.b16 %v574
  %v655 = vunpack.c.l.b16 %v575
  %v656 = vunpack.c.l.b16 %v576
  %v657 = vunpack.c.l.b16 %v577
  %v658 = vunpack.c.l.b16 %v578
  %v659 = vunpack.c.l.b16 %v579
  %v660 = vunpack.c.l.b16 %v580
  %v661 = vunpack.c.l.b16 %v581
  %v662 = vunpack.c.l.b16 %v582
  %v663 = vunpack.c.l.b16 %v583
  %v664 = vunpack.c.l.b16 %v584
  %v665 = vunpack.c.l.b16 %v585
  %v666 = vunpack.c.l.b16 %v586
  %v667 = vunpack.c.l.b16 %v587
  %v668 = vunpack.c.l.b16 %v588
  %v669 = vpack.c.b16 %v654, %v653
  %v670 = vpack.c.b16 %v656, %v655
  %v671 = vpack.c.b16 %v658, %v657
  %v672 = vpack.c.b16 %v660, %v659
  %v673 = vpack.c.b16 %v662, %v661
  %v674 = vpack.c.b16 %v664, %v663
  %v675 = vpack.c.b16 %v666, %v665
  %v676 = vpack.c.b16 %v668, %v667
  %685 = vmatpush.bf16.msra.mxu0 %v676
  %686 = vmatpush.bf16.msra.mxu0 %v675
  %687 = vmatpush.bf16.msra.mxu0 %v674
  %688 = vmatpush.bf16.msra.mxu0 %v673
  %689 = vmatpush.bf16.msra.mxu0 %v672
  %690 = vmatpush.bf16.msra.mxu0 %v671
  %691 = vmatpush.bf16.msra.mxu0 %v670
  %692 = vmatpush.bf16.msra.mxu0 %v669
  %693 = vmatmul.bf16.gmra.mxu0 %v621
  %v694 = vpop.f32.mrf.mxu0
  %v695 = vadd.f32 0.0, %v694
  %v696 = vpop.f32.mrf.mxu0
  %v697 = vadd.f32 0.0, %v696
  %698 = vmatmul.bf16.gmra.mxu0 %v622
  %v699 = vpop.f32.mrf.mxu0
  %v700 = vadd.f32 0.0, %v699
  %v701 = vpop.f32.mrf.mxu0
  %v702 = vadd.f32 0.0, %v701
  %703 = vmatmul.bf16.gmra.mxu0 %v623
  %v704 = vpop.f32.mrf.mxu0
  %v705 = vadd.f32 0.0, %v704
  %v706 = vpop.f32.mrf.mxu0
  %v707 = vadd.f32 0.0, %v706
  %708 = vmatmul.bf16.gmra.mxu0 %v624
  %v709 = vpop.f32.mrf.mxu0
  %v710 = vadd.f32 0.0, %v709
  %v711 = vpop.f32.mrf.mxu0
  %v712 = vadd.f32 0.0, %v711
  %713 = vmatmul.bf16.gmra.mxu0 %v625
  %v714 = vpop.f32.mrf.mxu0
  %v715 = vadd.f32 0.0, %v714
  %v716 = vpop.f32.mrf.mxu0
  %v717 = vadd.f32 0.0, %v716
  %718 = vmatmul.bf16.gmra.mxu0 %v626
  %v719 = vpop.f32.mrf.mxu0
  %v720 = vadd.f32 0.0, %v719
  %v721 = vpop.f32.mrf.mxu0
  %v722 = vadd.f32 0.0, %v721
  %723 = vmatmul.bf16.gmra.mxu0 %v627
  %v724 = vpop.f32.mrf.mxu0
  %v725 = vadd.f32 0.0, %v724
  %v726 = vpop.f32.mrf.mxu0
  %v727 = vadd.f32 0.0, %v726
  %728 = vmatmul.bf16.gmra.mxu0 %v628
  %v729 = vpop.f32.mrf.mxu0
  %v730 = vadd.f32 0.0, %v729
  %v731 = vpop.f32.mrf.mxu0
  %v732 = vadd.f32 0.0, %v731
  %733 = vdwg.mxu0
  %v734 = vadd.f32 %v539, %v695
  %v735 = vadd.f32 %v540, %v697
  %v736 = vadd.f32 %v541, %v700
  %v737 = vadd.f32 %v542, %v702
  %v738 = vadd.f32 %v543, %v705
  %v739 = vadd.f32 %v544, %v707
  %v740 = vadd.f32 %v545, %v710
  %v741 = vadd.f32 %v546, %v712
  %v742 = vadd.f32 %v547, %v715
  %v743 = vadd.f32 %v548, %v717
  %v744 = vadd.f32 %v549, %v720
  %v745 = vadd.f32 %v550, %v722
  %v746 = vadd.f32 %v551, %v725
  %v747 = vadd.f32 %v552, %v727
  %v748 = vadd.f32 %v553, %v730
  %v749 = vadd.f32 %v554, %v732
  %750 = vst [vmem:[%s538] sm:$0xff] %v734
  %751 = vst [vmem:[%s538 + $0x8] sm:$0xff] %v735
  %752 = vst [vmem:[%s538 + $0x10] sm:$0xff] %v736
  %753 = vst [vmem:[%s538 + $0x18] sm:$0xff] %v737
  %754 = vst [vmem:[%s538 + $0x20] sm:$0xff] %v738
  %755 = vst [vmem:[%s538 + $0x28] sm:$0xff] %v739
  %756 = vst [vmem:[%s538 + $0x30] sm:$0xff] %v740
  %757 = vst [vmem:[%s538 + $0x38] sm:$0xff] %v741
  %758 = vst [vmem:[%s538 + $0x40] sm:$0xff] %v742
  %759 = vst [vmem:[%s538 + $0x48] sm:$0xff] %v743
  %760 = vst [vmem:[%s538 + $0x50] sm:$0xff] %v744
  %761 = vst [vmem:[%s538 + $0x58] sm:$0xff] %v745
  %762 = vst [vmem:[%s538 + $0x60] sm:$0xff] %v746
  %763 = vst [vmem:[%s538 + $0x68] sm:$0xff] %v747
  %764 = vst [vmem:[%s538 + $0x70] sm:$0xff] %v748
  %765 = vst [vmem:[%s538 + $0x78] sm:$0xff] %v749
  %s766 = scalar_lea.vmem %s4, 384
  %v767 = vld [vmem:[%s766] sm:$0xff]
  %v768 = vld [vmem:[%s766 + $0x8] sm:$0xff]
  %v769 = vld [vmem:[%s766 + $0x10] sm:$0xff]
  %v770 = vld [vmem:[%s766 + $0x18] sm:$0xff]
  %v771 = vld [vmem:[%s766 + $0x20] sm:$0xff]
  %v772 = vld [vmem:[%s766 + $0x28] sm:$0xff]
  %v773 = vld [vmem:[%s766 + $0x30] sm:$0xff]
  %v774 = vld [vmem:[%s766 + $0x38] sm:$0xff]
  %v775 = vld [vmem:[%s766 + $0x40] sm:$0xff]
  %v776 = vld [vmem:[%s766 + $0x48] sm:$0xff]
  %v777 = vld [vmem:[%s766 + $0x50] sm:$0xff]
  %v778 = vld [vmem:[%s766 + $0x58] sm:$0xff]
  %v779 = vld [vmem:[%s766 + $0x60] sm:$0xff]
  %v780 = vld [vmem:[%s766 + $0x68] sm:$0xff]
  %v781 = vld [vmem:[%s766 + $0x70] sm:$0xff]
  %v782 = vld [vmem:[%s766 + $0x78] sm:$0xff]
  %s783 = scalar_lea.vmem %s0, 192
  %v784 = vld [vmem:[%s783] sm:$0xf]
  %v785 = vld [vmem:[%s783 + $0x4] sm:$0xf]
  %v786 = vld [vmem:[%s783 + $0x8] sm:$0xf]
  %v787 = vld [vmem:[%s783 + $0xc] sm:$0xf]
  %v788 = vld [vmem:[%s783 + $0x10] sm:$0xf]
  %v789 = vld [vmem:[%s783 + $0x14] sm:$0xf]
  %v790 = vld [vmem:[%s783 + $0x18] sm:$0xf]
  %v791 = vld [vmem:[%s783 + $0x1c] sm:$0xf]
  %v792 = vld [vmem:[%s783 + $0x20] sm:$0xf]
  %v793 = vld [vmem:[%s783 + $0x24] sm:$0xf]
  %v794 = vld [vmem:[%s783 + $0x28] sm:$0xf]
  %v795 = vld [vmem:[%s783 + $0x2c] sm:$0xf]
  %v796 = vld [vmem:[%s783 + $0x30] sm:$0xf]
  %v797 = vld [vmem:[%s783 + $0x34] sm:$0xf]
  %v798 = vld [vmem:[%s783 + $0x38] sm:$0xf]
  %v799 = vld [vmem:[%s783 + $0x3c] sm:$0xf]
  %s800 = scalar_lea.vmem %s1, 192
  %v801 = vld [vmem:[%s800] sm:$0xf]
  %v802 = vld [vmem:[%s800 + $0x4] sm:$0xf]
  %v803 = vld [vmem:[%s800 + $0x8] sm:$0xf]
  %v804 = vld [vmem:[%s800 + $0xc] sm:$0xf]
  %v805 = vld [vmem:[%s800 + $0x10] sm:$0xf]
  %v806 = vld [vmem:[%s800 + $0x14] sm:$0xf]
  %v807 = vld [vmem:[%s800 + $0x18] sm:$0xf]
  %v808 = vld [vmem:[%s800 + $0x1c] sm:$0xf]
  %v809 = vld [vmem:[%s800 + $0x20] sm:$0xf]
  %v810 = vld [vmem:[%s800 + $0x24] sm:$0xf]
  %v811 = vld [vmem:[%s800 + $0x28] sm:$0xf]
  %v812 = vld [vmem:[%s800 + $0x2c] sm:$0xf]
  %v813 = vld [vmem:[%s800 + $0x30] sm:$0xf]
  %v814 = vld [vmem:[%s800 + $0x34] sm:$0xf]
  %v815 = vld [vmem:[%s800 + $0x38] sm:$0xf]
  %v816 = vld [vmem:[%s800 + $0x3c] sm:$0xf]
  %v833 = vunpack.c.l.b16 %v784
  %v834 = vunpack.c.l.b16 %v785
  %v835 = vunpack.c.l.b16 %v786
  %v836 = vunpack.c.l.b16 %v787
  %v837 = vunpack.c.l.b16 %v788
  %v838 = vunpack.c.l.b16 %v789
  %v839 = vunpack.c.l.b16 %v790
  %v840 = vunpack.c.l.b16 %v791
  %v841 = vunpack.c.l.b16 %v792
  %v842 = vunpack.c.l.b16 %v793
  %v843 = vunpack.c.l.b16 %v794
  %v844 = vunpack.c.l.b16 %v795
  %v845 = vunpack.c.l.b16 %v796
  %v846 = vunpack.c.l.b16 %v797
  %v847 = vunpack.c.l.b16 %v798
  %v848 = vunpack.c.l.b16 %v799
  %v849 = vpack.c.b16 %v834, %v833
  %v850 = vpack.c.b16 %v836, %v835
  %v851 = vpack.c.b16 %v838, %v837
  %v852 = vpack.c.b16 %v840, %v839
  %v853 = vpack.c.b16 %v842, %v841
  %v854 = vpack.c.b16 %v844, %v843
  %v855 = vpack.c.b16 %v846, %v845
  %v856 = vpack.c.b16 %v848, %v847
  %v881 = vunpack.c.l.b16 %v801
  %v882 = vunpack.c.l.b16 %v802
  %v883 = vunpack.c.l.b16 %v803
  %v884 = vunpack.c.l.b16 %v804
  %v885 = vunpack.c.l.b16 %v805
  %v886 = vunpack.c.l.b16 %v806
  %v887 = vunpack.c.l.b16 %v807
  %v888 = vunpack.c.l.b16 %v808
  %v889 = vunpack.c.l.b16 %v809
  %v890 = vunpack.c.l.b16 %v810
  %v891 = vunpack.c.l.b16 %v811
  %v892 = vunpack.c.l.b16 %v812
  %v893 = vunpack.c.l.b16 %v813
  %v894 = vunpack.c.l.b16 %v814
  %v895 = vunpack.c.l.b16 %v815
  %v896 = vunpack.c.l.b16 %v816
  %v897 = vpack.c.b16 %v882, %v881
  %v898 = vpack.c.b16 %v884, %v883
  %v899 = vpack.c.b16 %v886, %v885
  %v900 = vpack.c.b16 %v888, %v887
  %v901 = vpack.c.b16 %v890, %v889
  %v902 = vpack.c.b16 %v892, %v891
  %v903 = vpack.c.b16 %v894, %v893
  %v904 = vpack.c.b16 %v896, %v895
  %913 = vmatpush.bf16.msra.mxu0 %v904
  %914 = vmatpush.bf16.msra.mxu0 %v903
  %915 = vmatpush.bf16.msra.mxu0 %v902
  %916 = vmatpush.bf16.msra.mxu0 %v901
  %917 = vmatpush.bf16.msra.mxu0 %v900
  %918 = vmatpush.bf16.msra.mxu0 %v899
  %919 = vmatpush.bf16.msra.mxu0 %v898
  %920 = vmatpush.bf16.msra.mxu0 %v897
  %921 = vmatmul.bf16.gmra.mxu0 %v849
  %v922 = vpop.f32.mrf.mxu0
  %v923 = vadd.f32 0.0, %v922
  %v924 = vpop.f32.mrf.mxu0
  %v925 = vadd.f32 0.0, %v924
  %926 = vmatmul.bf16.gmra.mxu0 %v850
  %v927 = vpop.f32.mrf.mxu0
  %v928 = vadd.f32 0.0, %v927
  %v929 = vpop.f32.mrf.mxu0
  %v930 = vadd.f32 0.0, %v929
  %931 = vmatmul.bf16.gmra.mxu0 %v851
  %v932 = vpop.f32.mrf.mxu0
  %v933 = vadd.f32 0.0, %v932
  %v934 = vpop.f32.mrf.mxu0
  %v935 = vadd.f32 0.0, %v934
  %936 = vmatmul.bf16.gmra.mxu0 %v852
  %v937 = vpop.f32.mrf.mxu0
  %v938 = vadd.f32 0.0, %v937
  %v939 = vpop.f32.mrf.mxu0
  %v940 = vadd.f32 0.0, %v939
  %941 = vmatmul.bf16.gmra.mxu0 %v853
  %v942 = vpop.f32.mrf.mxu0
  %v943 = vadd.f32 0.0, %v942
  %v944 = vpop.f32.mrf.mxu0
  %v945 = vadd.f32 0.0, %v944
  %946 = vmatmul.bf16.gmra.mxu0 %v854
  %v947 = vpop.f32.mrf.mxu0
  %v948 = vadd.f32 0.0, %v947
  %v949 = vpop.f32.mrf.mxu0
  %v950 = vadd.f32 0.0, %v949
  %951 = vmatmul.bf16.gmra.mxu0 %v855
  %v952 = vpop.f32.mrf.mxu0
  %v953 = vadd.f32 0.0, %v952
  %v954 = vpop.f32.mrf.mxu0
  %v955 = vadd.f32 0.0, %v954
  %956 = vmatmul.bf16.gmra.mxu0 %v856
  %v957 = vpop.f32.mrf.mxu0
  %v958 = vadd.f32 0.0, %v957
  %v959 = vpop.f32.mrf.mxu0
  %v960 = vadd.f32 0.0, %v959
  %961 = vdwg.mxu0
  %v962 = vadd.f32 %v767, %v923
  %v963 = vadd.f32 %v768, %v925
  %v964 = vadd.f32 %v769, %v928
  %v965 = vadd.f32 %v770, %v930
  %v966 = vadd.f32 %v771, %v933
  %v967 = vadd.f32 %v772, %v935
  %v968 = vadd.f32 %v773, %v938
  %v969 = vadd.f32 %v774, %v940
  %v970 = vadd.f32 %v775, %v943
  %v971 = vadd.f32 %v776, %v945
  %v972 = vadd.f32 %v777, %v948
  %v973 = vadd.f32 %v778, %v950
  %v974 = vadd.f32 %v779, %v953
  %v975 = vadd.f32 %v780, %v955
  %v976 = vadd.f32 %v781, %v958
  %v977 = vadd.f32 %v782, %v960
  %978 = vst [vmem:[%s766] sm:$0xff] %v962
  %979 = vst [vmem:[%s766 + $0x8] sm:$0xff] %v963
  %980 = vst [vmem:[%s766 + $0x10] sm:$0xff] %v964
  %981 = vst [vmem:[%s766 + $0x18] sm:$0xff] %v965
  %982 = vst [vmem:[%s766 + $0x20] sm:$0xff] %v966
  %983 = vst [vmem:[%s766 + $0x28] sm:$0xff] %v967
  %984 = vst [vmem:[%s766 + $0x30] sm:$0xff] %v968
  %985 = vst [vmem:[%s766 + $0x38] sm:$0xff] %v969
  %986 = vst [vmem:[%s766 + $0x40] sm:$0xff] %v970
  %987 = vst [vmem:[%s766 + $0x48] sm:$0xff] %v971
  %988 = vst [vmem:[%s766 + $0x50] sm:$0xff] %v972
  %989 = vst [vmem:[%s766 + $0x58] sm:$0xff] %v973
  %990 = vst [vmem:[%s766 + $0x60] sm:$0xff] %v974
  %991 = vst [vmem:[%s766 + $0x68] sm:$0xff] %v975
  %992 = vst [vmem:[%s766 + $0x70] sm:$0xff] %v976
  %993 = vst [vmem:[%s766 + $0x78] sm:$0xff] %v977
  // Predicated region
  $region22: #{_lambda_.6} parent=0 // pred_check
    %p994 = pneg %p17
  $region23: #{_lambda_.6} parent=0 // pred_check_branch
    %996 = sbr.rel (%p994) target = $region25
  $region24: #{_lambda_.6} parent=0 // pred_region
    %v997 = vld [vmem:[%s4] sm:$0xff]
    %v998 = vld [vmem:[%s4 + $0x8] sm:$0xff]
    %v999 = vld [vmem:[%s4 + $0x10] sm:$0xff]
    %v1000 = vld [vmem:[%s4 + $0x18] sm:$0xff]
    %v1001 = vld [vmem:[%s4 + $0x20] sm:$0xff]
    %v1002 = vld [vmem:[%s4 + $0x28] sm:$0xff]
    %v1003 = vld [vmem:[%s4 + $0x30] sm:$0xff]
    %v1004 = vld [vmem:[%s4 + $0x38] sm:$0xff]
    %v1005 = vld [vmem:[%s4 + $0x40] sm:$0xff]
    %v1006 = vld [vmem:[%s4 + $0x48] sm:$0xff]
    %v1007 = vld [vmem:[%s4 + $0x50] sm:$0xff]
    %v1008 = vld [vmem:[%s4 + $0x58] sm:$0xff]
    %v1009 = vld [vmem:[%s4 + $0x60] sm:$0xff]
    %v1010 = vld [vmem:[%s4 + $0x68] sm:$0xff]
    %v1011 = vld [vmem:[%s4 + $0x70] sm:$0xff]
    %v1012 = vld [vmem:[%s4 + $0x78] sm:$0xff]
    %v1013 = vld [vmem:[%s4 + $0x80] sm:$0xff]
    %v1014 = vld [vmem:[%s4 + $0x88] sm:$0xff]
    %v1015 = vld [vmem:[%s4 + $0x90] sm:$0xff]
    %v1016 = vld [vmem:[%s4 + $0x98] sm:$0xff]
    %v1017 = vld [vmem:[%s4 + $0xa0] sm:$0xff]
    %v1018 = vld [vmem:[%s4 + $0xa8] sm:$0xff]
    %v1019 = vld [vmem:[%s4 + $0xb0] sm:$0xff]
    %v1020 = vld [vmem:[%s4 + $0xb8] sm:$0xff]
    %v1021 = vld [vmem:[%s4 + $0xc0] sm:$0xff]
    %v1022 = vld [vmem:[%s4 + $0xc8] sm:$0xff]
    %v1023 = vld [vmem:[%s4 + $0xd0] sm:$0xff]
    %v1024 = vld [vmem:[%s4 + $0xd8] sm:$0xff]
    %v1025 = vld [vmem:[%s4 + $0xe0] sm:$0xff]
    %v1026 = vld [vmem:[%s4 + $0xe8] sm:$0xff]
    %v1027 = vld [vmem:[%s4 + $0xf0] sm:$0xff]
    %v1028 = vld [vmem:[%s4 + $0xf8] sm:$0xff]
    %v1029 = vld [vmem:[%s4 + $0x100] sm:$0xff]
    %v1030 = vld [vmem:[%s4 + $0x108] sm:$0xff]
    %v1031 = vld [vmem:[%s4 + $0x110] sm:$0xff]
    %v1032 = vld [vmem:[%s4 + $0x118] sm:$0xff]
    %v1033 = vld [vmem:[%s4 + $0x120] sm:$0xff]
    %v1034 = vld [vmem:[%s4 + $0x128] sm:$0xff]
    %v1035 = vld [vmem:[%s4 + $0x130] sm:$0xff]
    %v1036 = vld [vmem:[%s4 + $0x138] sm:$0xff]
    %v1037 = vld [vmem:[%s4 + $0x140] sm:$0xff]
    %v1038 = vld [vmem:[%s4 + $0x148] sm:$0xff]
    %v1039 = vld [vmem:[%s4 + $0x150] sm:$0xff]
    %v1040 = vld [vmem:[%s4 + $0x158] sm:$0xff]
    %v1041 = vld [vmem:[%s4 + $0x160] sm:$0xff]
    %v1042 = vld [vmem:[%s4 + $0x168] sm:$0xff]
    %v1043 = vld [vmem:[%s4 + $0x170] sm:$0xff]
    %v1044 = vld [vmem:[%s4 + $0x178] sm:$0xff]
    %v1045 = vld [vmem:[%s4 + $0x180] sm:$0xff]
    %v1046 = vld [vmem:[%s4 + $0x188] sm:$0xff]
    %v1047 = vld [vmem:[%s4 + $0x190] sm:$0xff]
    %v1048 = vld [vmem:[%s4 + $0x198] sm:$0xff]
    %v1049 = vld [vmem:[%s4 + $0x1a0] sm:$0xff]
    %v1050 = vld [vmem:[%s4 + $0x1a8] sm:$0xff]
    %v1051 = vld [vmem:[%s4 + $0x1b0] sm:$0xff]
    %v1052 = vld [vmem:[%s4 + $0x1b8] sm:$0xff]
    %v1053 = vld [vmem:[%s4 + $0x1c0] sm:$0xff]
    %v1054 = vld [vmem:[%s4 + $0x1c8] sm:$0xff]
    %v1055 = vld [vmem:[%s4 + $0x1d0] sm:$0xff]
    %v1056 = vld [vmem:[%s4 + $0x1d8] sm:$0xff]
    %v1057 = vld [vmem:[%s4 + $0x1e0] sm:$0xff]
    %v1058 = vld [vmem:[%s4 + $0x1e8] sm:$0xff]
    %v1059 = vld [vmem:[%s4 + $0x1f0] sm:$0xff]
    %v1060 = vld [vmem:[%s4 + $0x1f8] sm:$0xff]
    %v1061 = vadd.f32 %v997, %v998
    %v1062 = vadd.f32 %v1061, %v999
    %v1063 = vadd.f32 %v1062, %v1000
    %v1064 = vadd.f32 %v1063, %v1001
    %v1065 = vadd.f32 %v1064, %v1002
    %v1066 = vadd.f32 %v1065, %v1003
    %v1067 = vadd.f32 %v1066, %v1004
    %v1068 = vadd.f32 %v1067, %v1005
    %v1069 = vadd.f32 %v1068, %v1006
    %v1070 = vadd.f32 %v1069, %v1007
    %v1071 = vadd.f32 %v1070, %v1008
    %v1072 = vadd.f32 %v1071, %v1009
    %v1073 = vadd.f32 %v1072, %v1010
    %v1074 = vadd.f32 %v1073, %v1011
    %v1075 = vadd.f32 %v1074, %v1012
    %v1076 = vrot.slane %v1075, 4
    %v1077 = vadd.f32 %v1075, %v1076
    %v1078 = vrot.slane %v1077, 2
    %v1079 = vadd.f32 %v1077, %v1078
    %v1080 = vrot.slane %v1079, 1
    %v1081 = vadd.f32 %v1079, %v1080
    %v1082 = vadd.f32 %v1013, %v1014
    %v1083 = vadd.f32 %v1082, %v1015
    %v1084 = vadd.f32 %v1083, %v1016
    %v1085 = vadd.f32 %v1084, %v1017
    %v1086 = vadd.f32 %v1085, %v1018
    %v1087 = vadd.f32 %v1086, %v1019
    %v1088 = vadd.f32 %v1087, %v1020
    %v1089 = vadd.f32 %v1088, %v1021
    %v1090 = vadd.f32 %v1089, %v1022
    %v1091 = vadd.f32 %v1090, %v1023
    %v1092 = vadd.f32 %v1091, %v1024
    %v1093 = vadd.f32 %v1092, %v1025
    %v1094 = vadd.f32 %v1093, %v1026
    %v1095 = vadd.f32 %v1094, %v1027
    %v1096 = vadd.f32 %v1095, %v1028
    %v1097 = vrot.slane %v1096, 4
    %v1098 = vadd.f32 %v1096, %v1097
    %v1099 = vrot.slane %v1098, 2
    %v1100 = vadd.f32 %v1098, %v1099
    %v1101 = vrot.slane %v1100, 1
    %v1102 = vadd.f32 %v1100, %v1101
    %v1103 = vadd.f32 %v1029, %v1030
    %v1104 = vadd.f32 %v1103, %v1031
    %v1105 = vadd.f32 %v1104, %v1032
    %v1106 = vadd.f32 %v1105, %v1033
    %v1107 = vadd.f32 %v1106, %v1034
    %v1108 = vadd.f32 %v1107, %v1035
    %v1109 = vadd.f32 %v1108, %v1036
    %v1110 = vadd.f32 %v1109, %v1037
    %v1111 = vadd.f32 %v1110, %v1038
    %v1112 = vadd.f32 %v1111, %v1039
    %v1113 = vadd.f32 %v1112, %v1040
    %v1114 = vadd.f32 %v1113, %v1041
    %v1115 = vadd.f32 %v1114, %v1042
    %v1116 = vadd.f32 %v1115, %v1043
    %v1117 = vadd.f32 %v1116, %v1044
    %v1118 = vrot.slane %v1117, 4
    %v1119 = vadd.f32 %v1117, %v1118
    %v1120 = vrot.slane %v1119, 2
    %v1121 = vadd.f32 %v1119, %v1120
    %v1122 = vrot.slane %v1121, 1
    %v1123 = vadd.f32 %v1121, %v1122
    %v1124 = vadd.f32 %v1045, %v1046
    %v1125 = vadd.f32 %v1124, %v1047
    %v1126 = vadd.f32 %v1125, %v1048
    %v1127 = vadd.f32 %v1126, %v1049
    %v1128 = vadd.f32 %v1127, %v1050
    %v1129 = vadd.f32 %v1128, %v1051
    %v1130 = vadd.f32 %v1129, %v1052
    %v1131 = vadd.f32 %v1130, %v1053
    %v1132 = vadd.f32 %v1131, %v1054
    %v1133 = vadd.f32 %v1132, %v1055
    %v1134 = vadd.f32 %v1133, %v1056
    %v1135 = vadd.f32 %v1134, %v1057
    %v1136 = vadd.f32 %v1135, %v1058
    %v1137 = vadd.f32 %v1136, %v1059
    %v1138 = vadd.f32 %v1137, %v1060
    %v1139 = vrot.slane %v1138, 4
    %v1140 = vadd.f32 %v1138, %v1139
    %v1141 = vrot.slane %v1140, 2
    %v1142 = vadd.f32 %v1140, %v1141
    %v1143 = vrot.slane %v1142, 1
    %v1144 = vadd.f32 %v1142, %v1143
    %v1145 = vadd.f32 %v1081, %v1102
    %v1146 = vadd.f32 %v1145, %v1123
    %v1147 = vadd.f32 %v1146, %v1144
    %v1148 = vmul.f32 %v997, %v997
    %v1149 = vmul.f32 %v998, %v998
    %v1150 = vmul.f32 %v999, %v999
    %v1151 = vmul.f32 %v1000, %v1000
    %v1152 = vmul.f32 %v1001, %v1001
    %v1153 = vmul.f32 %v1002, %v1002
    %v1154 = vmul.f32 %v1003, %v1003
    %v1155 = vmul.f32 %v1004, %v1004
    %v1156 = vmul.f32 %v1005, %v1005
    %v1157 = vmul.f32 %v1006, %v1006
    %v1158 = vmul.f32 %v1007, %v1007
    %v1159 = vmul.f32 %v1008, %v1008
    %v1160 = vmul.f32 %v1009, %v1009
    %v1161 = vmul.f32 %v1010, %v1010
    %v1162 = vmul.f32 %v1011, %v1011
    %v1163 = vmul.f32 %v1012, %v1012
    %v1164 = vmul.f32 %v1013, %v1013
    %v1165 = vmul.f32 %v1014, %v1014
    %v1166 = vmul.f32 %v1015, %v1015
    %v1167 = vmul.f32 %v1016, %v1016
    %v1168 = vmul.f32 %v1017, %v1017
    %v1169 = vmul.f32 %v1018, %v1018
    %v1170 = vmul.f32 %v1019, %v1019
    %v1171 = vmul.f32 %v1020, %v1020
    %v1172 = vmul.f32 %v1021, %v1021
    %v1173 = vmul.f32 %v1022, %v1022
    %v1174 = vmul.f32 %v1023, %v1023
    %v1175 = vmul.f32 %v1024, %v1024
    %v1176 = vmul.f32 %v1025, %v1025
    %v1177 = vmul.f32 %v1026, %v1026
    %v1178 = vmul.f32 %v1027, %v1027
    %v1179 = vmul.f32 %v1028, %v1028
    %v1180 = vmul.f32 %v1029, %v1029
    %v1181 = vmul.f32 %v1030, %v1030
    %v1182 = vmul.f32 %v1031, %v1031
    %v1183 = vmul.f32 %v1032, %v1032
    %v1184 = vmul.f32 %v1033, %v1033
    %v1185 = vmul.f32 %v1034, %v1034
    %v1186 = vmul.f32 %v1035, %v1035
    %v1187 = vmul.f32 %v1036, %v1036
    %v1188 = vmul.f32 %v1037, %v1037
    %v1189 = vmul.f32 %v1038, %v1038
    %v1190 = vmul.f32 %v1039, %v1039
    %v1191 = vmul.f32 %v1040, %v1040
    %v1192 = vmul.f32 %v1041, %v1041
    %v1193 = vmul.f32 %v1042, %v1042
    %v1194 = vmul.f32 %v1043, %v1043
    %v1195 = vmul.f32 %v1044, %v1044
    %v1196 = vmul.f32 %v1045, %v1045
    %v1197 = vmul.f32 %v1046, %v1046
    %v1198 = vmul.f32 %v1047, %v1047
    %v1199 = vmul.f32 %v1048, %v1048
    %v1200 = vmul.f32 %v1049, %v1049
    %v1201 = vmul.f32 %v1050, %v1050
    %v1202 = vmul.f32 %v1051, %v1051
    %v1203 = vmul.f32 %v1052, %v1052
    %v1204 = vmul.f32 %v1053, %v1053
    %v1205 = vmul.f32 %v1054, %v1054
    %v1206 = vmul.f32 %v1055, %v1055
    %v1207 = vmul.f32 %v1056, %v1056
    %v1208 = vmul.f32 %v1057, %v1057
    %v1209 = vmul.f32 %v1058, %v1058
    %v1210 = vmul.f32 %v1059, %v1059
    %v1211 = vmul.f32 %v1060, %v1060
    %v1212 = vadd.f32 %v1148, %v1149
    %v1213 = vadd.f32 %v1212, %v1150
    %v1214 = vadd.f32 %v1213, %v1151
    %v1215 = vadd.f32 %v1214, %v1152
    %v1216 = vadd.f32 %v1215, %v1153
    %v1217 = vadd.f32 %v1216, %v1154
    %v1218 = vadd.f32 %v1217, %v1155
    %v1219 = vadd.f32 %v1218, %v1156
    %v1220 = vadd.f32 %v1219, %v1157
    %v1221 = vadd.f32 %v1220, %v1158
    %v1222 = vadd.f32 %v1221, %v1159
    %v1223 = vadd.f32 %v1222, %v1160
    %v1224 = vadd.f32 %v1223, %v1161
    %v1225 = vadd.f32 %v1224, %v1162
    %v1226 = vadd.f32 %v1225, %v1163
    %v1227 = vrot.slane %v1226, 4
    %v1228 = vadd.f32 %v1226, %v1227
    %v1229 = vrot.slane %v1228, 2
    %v1230 = vadd.f32 %v1228, %v1229
    %v1231 = vrot.slane %v1230, 1
    %v1232 = vadd.f32 %v1230, %v1231
    %v1233 = vadd.f32 %v1164, %v1165
    %v1234 = vadd.f32 %v1233, %v1166
    %v1235 = vadd.f32 %v1234, %v1167
    %v1236 = vadd.f32 %v1235, %v1168
    %v1237 = vadd.f32 %v1236, %v1169
    %v1238 = vadd.f32 %v1237, %v1170
    %v1239 = vadd.f32 %v1238, %v1171
    %v1240 = vadd.f32 %v1239, %v1172
    %v1241 = vadd.f32 %v1240, %v1173
    %v1242 = vadd.f32 %v1241, %v1174
    %v1243 = vadd.f32 %v1242, %v1175
    %v1244 = vadd.f32 %v1243, %v1176
    %v1245 = vadd.f32 %v1244, %v1177
    %v1246 = vadd.f32 %v1245, %v1178
    %v1247 = vadd.f32 %v1246, %v1179
    %v1248 = vrot.slane %v1247, 4
    %v1249 = vadd.f32 %v1247, %v1248
    %v1250 = vrot.slane %v1249, 2
    %v1251 = vadd.f32 %v1249, %v1250
    %v1252 = vrot.slane %v1251, 1
    %v1253 = vadd.f32 %v1251, %v1252
    %v1254 = vadd.f32 %v1180, %v1181
    %v1255 = vadd.f32 %v1254, %v1182
    %v1256 = vadd.f32 %v1255, %v1183
    %v1257 = vadd.f32 %v1256, %v1184
    %v1258 = vadd.f32 %v1257, %v1185
    %v1259 = vadd.f32 %v1258, %v1186
    %v1260 = vadd.f32 %v1259, %v1187
    %v1261 = vadd.f32 %v1260, %v1188
    %v1262 = vadd.f32 %v1261, %v1189
    %v1263 = vadd.f32 %v1262, %v1190
    %v1264 = vadd.f32 %v1263, %v1191
    %v1265 = vadd.f32 %v1264, %v1192
    %v1266 = vadd.f32 %v1265, %v1193
    %v1267 = vadd.f32 %v1266, %v1194
    %v1268 = vadd.f32 %v1267, %v1195
    %v1269 = vrot.slane %v1268, 4
    %v1270 = vadd.f32 %v1268, %v1269
    %v1271 = vrot.slane %v1270, 2
    %v1272 = vadd.f32 %v1270, %v1271
    %v1273 = vrot.slane %v1272, 1
    %v1274 = vadd.f32 %v1272, %v1273
    %v1275 = vadd.f32 %v1196, %v1197
    %v1276 = vadd.f32 %v1275, %v1198
    %v1277 = vadd.f32 %v1276, %v1199
    %v1278 = vadd.f32 %v1277, %v1200
    %v1279 = vadd.f32 %v1278, %v1201
    %v1280 = vadd.f32 %v1279, %v1202
    %v1281 = vadd.f32 %v1280, %v1203
    %v1282 = vadd.f32 %v1281, %v1204
    %v1283 = vadd.f32 %v1282, %v1205
    %v1284 = vadd.f32 %v1283, %v1206
    %v1285 = vadd.f32 %v1284, %v1207
    %v1286 = vadd.f32 %v1285, %v1208
    %v1287 = vadd.f32 %v1286, %v1209
    %v1288 = vadd.f32 %v1287, %v1210
    %v1289 = vadd.f32 %v1288, %v1211
    %v1290 = vrot.slane %v1289, 4
    %v1291 = vadd.f32 %v1289, %v1290
    %v1292 = vrot.slane %v1291, 2
    %v1293 = vadd.f32 %v1291, %v1292
    %v1294 = vrot.slane %v1293, 1
    %v1295 = vadd.f32 %v1293, %v1294
    %v1296 = vadd.f32 %v1232, %v1253
    %v1297 = vadd.f32 %v1296, %v1274
    %v1298 = vadd.f32 %v1297, %v1295
    %v1299 = vrcp.pop 512.0
    %v1300 = vmul.f32 512.0, %v1299
    %v1301 = vsub.f32 1.0, %v1300
    %v1302 = vmul.f32 %v1299, %v1301
    %v1303 = vadd.f32 %v1299, %v1302
    %vm1304 = vweird.f32 %v1299
    %v1305 = vsel %vm1304, %v1299, %v1303
    %v1306 = vmul.f32 %v1147, %v1305
    %v1307 = vmul.f32 %v1298, %v1305
    %v1308 = vmul.f32 %v1306, %v1306
    %v1309 = vsub.f32 %v1307, %v1308
    %v1310 = vsub.f32 %v997, %v1306
    %v1311 = vsub.f32 %v998, %v1306
    %v1312 = vsub.f32 %v999, %v1306
    %v1313 = vsub.f32 %v1000, %v1306
    %v1314 = vsub.f32 %v1001, %v1306
    %v1315 = vsub.f32 %v1002, %v1306
    %v1316 = vsub.f32 %v1003, %v1306
    %v1317 = vsub.f32 %v1004, %v1306
    %v1318 = vsub.f32 %v1005, %v1306
    %v1319 = vsub.f32 %v1006, %v1306
    %v1320 = vsub.f32 %v1007, %v1306
    %v1321 = vsub.f32 %v1008, %v1306
    %v1322 = vsub.f32 %v1009, %v1306
    %v1323 = vsub.f32 %v1010, %v1306
    %v1324 = vsub.f32 %v1011, %v1306
    %v1325 = vsub.f32 %v1012, %v1306
    %v1326 = vsub.f32 %v1013, %v1306
    %v1327 = vsub.f32 %v1014, %v1306
    %v1328 = vsub.f32 %v1015, %v1306
    %v1329 = vsub.f32 %v1016, %v1306
    %v1330 = vsub.f32 %v1017, %v1306
    %v1331 = vsub.f32 %v1018, %v1306
    %v1332 = vsub.f32 %v1019, %v1306
    %v1333 = vsub.f32 %v1020, %v1306
    %v1334 = vsub.f32 %v1021, %v1306
    %v1335 = vsub.f32 %v1022, %v1306
    %v1336 = vsub.f32 %v1023, %v1306
    %v1337 = vsub.f32 %v1024, %v1306
    %v1338 = vsub.f32 %v1025, %v1306
    %v1339 = vsub.f32 %v1026, %v1306
    %v1340 = vsub.f32 %v1027, %v1306
    %v1341 = vsub.f32 %v1028, %v1306
    %v1342 = vsub.f32 %v1029, %v1306
    %v1343 = vsub.f32 %v1030, %v1306
    %v1344 = vsub.f32 %v1031, %v1306
    %v1345 = vsub.f32 %v1032, %v1306
    %v1346 = vsub.f32 %v1033, %v1306
    %v1347 = vsub.f32 %v1034, %v1306
    %v1348 = vsub.f32 %v1035, %v1306
    %v1349 = vsub.f32 %v1036, %v1306
    %v1350 = vsub.f32 %v1037, %v1306
    %v1351 = vsub.f32 %v1038, %v1306
    %v1352 = vsub.f32 %v1039, %v1306
    %v1353 = vsub.f32 %v1040, %v1306
    %v1354 = vsub.f32 %v1041, %v1306
    %v1355 = vsub.f32 %v1042, %v1306
    %v1356 = vsub.f32 %v1043, %v1306
    %v1357 = vsub.f32 %v1044, %v1306
    %v1358 = vsub.f32 %v1045, %v1306
    %v1359 = vsub.f32 %v1046, %v1306
    %v1360 = vsub.f32 %v1047, %v1306
    %v1361 = vsub.f32 %v1048, %v1306
    %v1362 = vsub.f32 %v1049, %v1306
    %v1363 = vsub.f32 %v1050, %v1306
    %v1364 = vsub.f32 %v1051, %v1306
    %v1365 = vsub.f32 %v1052, %v1306
    %v1366 = vsub.f32 %v1053, %v1306
    %v1367 = vsub.f32 %v1054, %v1306
    %v1368 = vsub.f32 %v1055, %v1306
    %v1369 = vsub.f32 %v1056, %v1306
    %v1370 = vsub.f32 %v1057, %v1306
    %v1371 = vsub.f32 %v1058, %v1306
    %v1372 = vsub.f32 %v1059, %v1306
    %v1373 = vsub.f32 %v1060, %v1306
    %v1374 = vadd.f32 %v1309, 1e-05
    %v1375 = vrsqrt.pop %v1374
    %v1376 = vmul.f32 %v1375, %v1374
    %v1377 = vmul.f32 %v1376, %v1375
    %v1378 = vmul.f32 0.5, %v1377
    %v1379 = vsub.f32 1.5, %v1378
    %v1380 = vmul.f32 %v1375, %v1379
    %vm1381 = vweird.f32 %v1374
    %vm1382 = vweird.f32 %v1375
    %vm1383 = vmor %vm1381, %vm1382
    %v1384 = vsel %vm1383, %v1375, %v1380
    %v1385 = vmul.f32 %v1310, %v1384
    %v1386 = vmul.f32 %v1311, %v1384
    %v1387 = vmul.f32 %v1312, %v1384
    %v1388 = vmul.f32 %v1313, %v1384
    %v1389 = vmul.f32 %v1314, %v1384
    %v1390 = vmul.f32 %v1315, %v1384
    %v1391 = vmul.f32 %v1316, %v1384
    %v1392 = vmul.f32 %v1317, %v1384
    %v1393 = vmul.f32 %v1318, %v1384
    %v1394 = vmul.f32 %v1319, %v1384
    %v1395 = vmul.f32 %v1320, %v1384
    %v1396 = vmul.f32 %v1321, %v1384
    %v1397 = vmul.f32 %v1322, %v1384
    %v1398 = vmul.f32 %v1323, %v1384
    %v1399 = vmul.f32 %v1324, %v1384
    %v1400 = vmul.f32 %v1325, %v1384
    %v1401 = vmul.f32 %v1326, %v1384
    %v1402 = vmul.f32 %v1327, %v1384
    %v1403 = vmul.f32 %v1328, %v1384
    %v1404 = vmul.f32 %v1329, %v1384
    %v1405 = vmul.f32 %v1330, %v1384
    %v1406 = vmul.f32 %v1331, %v1384
    %v1407 = vmul.f32 %v1332, %v1384
    %v1408 = vmul.f32 %v1333, %v1384
    %v1409 = vmul.f32 %v1334, %v1384
    %v1410 = vmul.f32 %v1335, %v1384
    %v1411 = vmul.f32 %v1336, %v1384
    %v1412 = vmul.f32 %v1337, %v1384
    %v1413 = vmul.f32 %v1338, %v1384
    %v1414 = vmul.f32 %v1339, %v1384
    %v1415 = vmul.f32 %v1340, %v1384
    %v1416 = vmul.f32 %v1341, %v1384
    %v1417 = vmul.f32 %v1342, %v1384
    %v1418 = vmul.f32 %v1343, %v1384
    %v1419 = vmul.f32 %v1344, %v1384
    %v1420 = vmul.f32 %v1345, %v1384
    %v1421 = vmul.f32 %v1346, %v1384
    %v1422 = vmul.f32 %v1347, %v1384
    %v1423 = vmul.f32 %v1348, %v1384
    %v1424 = vmul.f32 %v1349, %v1384
    %v1425 = vmul.f32 %v1350, %v1384
    %v1426 = vmul.f32 %v1351, %v1384
    %v1427 = vmul.f32 %v1352, %v1384
    %v1428 = vmul.f32 %v1353, %v1384
    %v1429 = vmul.f32 %v1354, %v1384
    %v1430 = vmul.f32 %v1355, %v1384
    %v1431 = vmul.f32 %v1356, %v1384
    %v1432 = vmul.f32 %v1357, %v1384
    %v1433 = vmul.f32 %v1358, %v1384
    %v1434 = vmul.f32 %v1359, %v1384
    %v1435 = vmul.f32 %v1360, %v1384
    %v1436 = vmul.f32 %v1361, %v1384
    %v1437 = vmul.f32 %v1362, %v1384
    %v1438 = vmul.f32 %v1363, %v1384
    %v1439 = vmul.f32 %v1364, %v1384
    %v1440 = vmul.f32 %v1365, %v1384
    %v1441 = vmul.f32 %v1366, %v1384
    %v1442 = vmul.f32 %v1367, %v1384
    %v1443 = vmul.f32 %v1368, %v1384
    %v1444 = vmul.f32 %v1369, %v1384
    %v1445 = vmul.f32 %v1370, %v1384
    %v1446 = vmul.f32 %v1371, %v1384
    %v1447 = vmul.f32 %v1372, %v1384
    %v1448 = vmul.f32 %v1373, %v1384
    %v1449 = vld [vmem:[%s2] sm:$0x1]
    %v1451 = vperm.slane %v1449, 0
    %v1453 = vmul.f32 %v1385, %v1451
    %v1454 = vmul.f32 %v1386, %v1451
    %v1455 = vmul.f32 %v1387, %v1451
    %v1456 = vmul.f32 %v1388, %v1451
    %v1457 = vmul.f32 %v1389, %v1451
    %v1458 = vmul.f32 %v1390, %v1451
    %v1459 = vmul.f32 %v1391, %v1451
    %v1460 = vmul.f32 %v1392, %v1451
    %v1461 = vmul.f32 %v1393, %v1451
    %v1462 = vmul.f32 %v1394, %v1451
    %v1463 = vmul.f32 %v1395, %v1451
    %v1464 = vmul.f32 %v1396, %v1451
    %v1465 = vmul.f32 %v1397, %v1451
    %v1466 = vmul.f32 %v1398, %v1451
    %v1467 = vmul.f32 %v1399, %v1451
    %v1468 = vmul.f32 %v1400, %v1451
    %v1469 = vmul.f32 %v1401, %v1451
    %v1470 = vmul.f32 %v1402, %v1451
    %v1471 = vmul.f32 %v1403, %v1451
    %v1472 = vmul.f32 %v1404, %v1451
    %v1473 = vmul.f32 %v1405, %v1451
    %v1474 = vmul.f32 %v1406, %v1451
    %v1475 = vmul.f32 %v1407, %v1451
    %v1476 = vmul.f32 %v1408, %v1451
    %v1477 = vmul.f32 %v1409, %v1451
    %v1478 = vmul.f32 %v1410, %v1451
    %v1479 = vmul.f32 %v1411, %v1451
    %v1480 = vmul.f32 %v1412, %v1451
    %v1481 = vmul.f32 %v1413, %v1451
    %v1482 = vmul.f32 %v1414, %v1451
    %v1483 = vmul.f32 %v1415, %v1451
    %v1484 = vmul.f32 %v1416, %v1451
    %v1485 = vmul.f32 %v1417, %v1451
    %v1486 = vmul.f32 %v1418, %v1451
    %v1487 = vmul.f32 %v1419, %v1451
    %v1488 = vmul.f32 %v1420, %v1451
    %v1489 = vmul.f32 %v1421, %v1451
    %v1490 = vmul.f32 %v1422, %v1451
    %v1491 = vmul.f32 %v1423, %v1451
    %v1492 = vmul.f32 %v1424, %v1451
    %v1493 = vmul.f32 %v1425, %v1451
    %v1494 = vmul.f32 %v1426, %v1451
    %v1495 = vmul.f32 %v1427, %v1451
    %v1496 = vmul.f32 %v1428, %v1451
    %v1497 = vmul.f32 %v1429, %v1451
    %v1498 = vmul.f32 %v1430, %v1451
    %v1499 = vmul.f32 %v1431, %v1451
    %v1500 = vmul.f32 %v1432, %v1451
    %v1501 = vmul.f32 %v1433, %v1451
    %v1502 = vmul.f32 %v1434, %v1451
    %v1503 = vmul.f32 %v1435, %v1451
    %v1504 = vmul.f32 %v1436, %v1451
    %v1505 = vmul.f32 %v1437, %v1451
    %v1506 = vmul.f32 %v1438, %v1451
    %v1507 = vmul.f32 %v1439, %v1451
    %v1508 = vmul.f32 %v1440, %v1451
    %v1509 = vmul.f32 %v1441, %v1451
    %v1510 = vmul.f32 %v1442, %v1451
    %v1511 = vmul.f32 %v1443, %v1451
    %v1512 = vmul.f32 %v1444, %v1451
    %v1513 = vmul.f32 %v1445, %v1451
    %v1514 = vmul.f32 %v1446, %v1451
    %v1515 = vmul.f32 %v1447, %v1451
    %v1516 = vmul.f32 %v1448, %v1451
    %v1517 = vld [vmem:[%s3] sm:$0x1]
    %v1519 = vperm.slane %v1517, 0
    %v1521 = vadd.f32 %v1453, %v1519
    %v1522 = vadd.f32 %v1454, %v1519
    %v1523 = vadd.f32 %v1455, %v1519
    %v1524 = vadd.f32 %v1456, %v1519
    %v1525 = vadd.f32 %v1457, %v1519
    %v1526 = vadd.f32 %v1458, %v1519
    %v1527 = vadd.f32 %v1459, %v1519
    %v1528 = vadd.f32 %v1460, %v1519
    %v1529 = vadd.f32 %v1461, %v1519
    %v1530 = vadd.f32 %v1462, %v1519
    %v1531 = vadd.f32 %v1463, %v1519
    %v1532 = vadd.f32 %v1464, %v1519
    %v1533 = vadd.f32 %v1465, %v1519
    %v1534 = vadd.f32 %v1466, %v1519
    %v1535 = vadd.f32 %v1467, %v1519
    %v1536 = vadd.f32 %v1468, %v1519
    %v1537 = vadd.f32 %v1469, %v1519
    %v1538 = vadd.f32 %v1470, %v1519
    %v1539 = vadd.f32 %v1471, %v1519
    %v1540 = vadd.f32 %v1472, %v1519
    %v1541 = vadd.f32 %v1473, %v1519
    %v1542 = vadd.f32 %v1474, %v1519
    %v1543 = vadd.f32 %v1475, %v1519
    %v1544 = vadd.f32 %v1476, %v1519
    %v1545 = vadd.f32 %v1477, %v1519
    %v1546 = vadd.f32 %v1478, %v1519
    %v1547 = vadd.f32 %v1479, %v1519
    %v1548 = vadd.f32 %v1480, %v1519
    %v1549 = vadd.f32 %v1481, %v1519
    %v1550 = vadd.f32 %v1482, %v1519
    %v1551 = vadd.f32 %v1483, %v1519
    %v1552 = vadd.f32 %v1484, %v1519
    %v1553 = vadd.f32 %v1485, %v1519
    %v1554 = vadd.f32 %v1486, %v1519
    %v1555 = vadd.f32 %v1487, %v1519
    %v1556 = vadd.f32 %v1488, %v1519
    %v1557 = vadd.f32 %v1489, %v1519
    %v1558 = vadd.f32 %v1490, %v1519
    %v1559 = vadd.f32 %v1491, %v1519
    %v1560 = vadd.f32 %v1492, %v1519
    %v1561 = vadd.f32 %v1493, %v1519
    %v1562 = vadd.f32 %v1494, %v1519
    %v1563 = vadd.f32 %v1495, %v1519
    %v1564 = vadd.f32 %v1496, %v1519
    %v1565 = vadd.f32 %v1497, %v1519
    %v1566 = vadd.f32 %v1498, %v1519
    %v1567 = vadd.f32 %v1499, %v1519
    %v1568 = vadd.f32 %v1500, %v1519
    %v1569 = vadd.f32 %v1501, %v1519
    %v1570 = vadd.f32 %v1502, %v1519
    %v1571 = vadd.f32 %v1503, %v1519
    %v1572 = vadd.f32 %v1504, %v1519
    %v1573 = vadd.f32 %v1505, %v1519
    %v1574 = vadd.f32 %v1506, %v1519
    %v1575 = vadd.f32 %v1507, %v1519
    %v1576 = vadd.f32 %v1508, %v1519
    %v1577 = vadd.f32 %v1509, %v1519
    %v1578 = vadd.f32 %v1510, %v1519
    %v1579 = vadd.f32 %v1511, %v1519
    %v1580 = vadd.f32 %v1512, %v1519
    %v1581 = vadd.f32 %v1513, %v1519
    %v1582 = vadd.f32 %v1514, %v1519
    %v1583 = vadd.f32 %v1515, %v1519
    %v1584 = vadd.f32 %v1516, %v1519
    %v1585 = vmax.f32 %v1521, 0.0
    %v1586 = vmax.f32 %v1522, 0.0
    %v1587 = vmax.f32 %v1523, 0.0
    %v1588 = vmax.f32 %v1524, 0.0
    %v1589 = vmax.f32 %v1525, 0.0
    %v1590 = vmax.f32 %v1526, 0.0
    %v1591 = vmax.f32 %v1527, 0.0
    %v1592 = vmax.f32 %v1528, 0.0
    %v1593 = vmax.f32 %v1529, 0.0
    %v1594 = vmax.f32 %v1530, 0.0
    %v1595 = vmax.f32 %v1531, 0.0
    %v1596 = vmax.f32 %v1532, 0.0
    %v1597 = vmax.f32 %v1533, 0.0
    %v1598 = vmax.f32 %v1534, 0.0
    %v1599 = vmax.f32 %v1535, 0.0
    %v1600 = vmax.f32 %v1536, 0.0
    %v1601 = vmax.f32 %v1537, 0.0
    %v1602 = vmax.f32 %v1538, 0.0
    %v1603 = vmax.f32 %v1539, 0.0
    %v1604 = vmax.f32 %v1540, 0.0
    %v1605 = vmax.f32 %v1541, 0.0
    %v1606 = vmax.f32 %v1542, 0.0
    %v1607 = vmax.f32 %v1543, 0.0
    %v1608 = vmax.f32 %v1544, 0.0
    %v1609 = vmax.f32 %v1545, 0.0
    %v1610 = vmax.f32 %v1546, 0.0
    %v1611 = vmax.f32 %v1547, 0.0
    %v1612 = vmax.f32 %v1548, 0.0
    %v1613 = vmax.f32 %v1549, 0.0
    %v1614 = vmax.f32 %v1550, 0.0
    %v1615 = vmax.f32 %v1551, 0.0
    %v1616 = vmax.f32 %v1552, 0.0
    %v1617 = vmax.f32 %v1553, 0.0
    %v1618 = vmax.f32 %v1554, 0.0
    %v1619 = vmax.f32 %v1555, 0.0
    %v1620 = vmax.f32 %v1556, 0.0
    %v1621 = vmax.f32 %v1557, 0.0
    %v1622 = vmax.f32 %v1558, 0.0
    %v1623 = vmax.f32 %v1559, 0.0
    %v1624 = vmax.f32 %v1560, 0.0
    %v1625 = vmax.f32 %v1561, 0.0
    %v1626 = vmax.f32 %v1562, 0.0
    %v1627 = vmax.f32 %v1563, 0.0
    %v1628 = vmax.f32 %v1564, 0.0
    %v1629 = vmax.f32 %v1565, 0.0
    %v1630 = vmax.f32 %v1566, 0.0
    %v1631 = vmax.f32 %v1567, 0.0
    %v1632 = vmax.f32 %v1568, 0.0
    %v1633 = vmax.f32 %v1569, 0.0
    %v1634 = vmax.f32 %v1570, 0.0
    %v1635 = vmax.f32 %v1571, 0.0
    %v1636 = vmax.f32 %v1572, 0.0
    %v1637 = vmax.f32 %v1573, 0.0
    %v1638 = vmax.f32 %v1574, 0.0
    %v1639 = vmax.f32 %v1575, 0.0
    %v1640 = vmax.f32 %v1576, 0.0
    %v1641 = vmax.f32 %v1577, 0.0
    %v1642 = vmax.f32 %v1578, 0.0
    %v1643 = vmax.f32 %v1579, 0.0
    %v1644 = vmax.f32 %v1580, 0.0
    %v1645 = vmax.f32 %v1581, 0.0
    %v1646 = vmax.f32 %v1582, 0.0
    %v1647 = vmax.f32 %v1583, 0.0
    %v1648 = vmax.f32 %v1584, 0.0
    %1649 = vst [vmem:[%s4] sm:$0xff] %v1585
    %1650 = vst [vmem:[%s4 + $0x8] sm:$0xff] %v1586
    %1651 = vst [vmem:[%s4 + $0x10] sm:$0xff] %v1587
    %1652 = vst [vmem:[%s4 + $0x18] sm:$0xff] %v1588
    %1653 = vst [vmem:[%s4 + $0x20] sm:$0xff] %v1589
    %1654 = vst [vmem:[%s4 + $0x28] sm:$0xff] %v1590
    %1655 = vst [vmem:[%s4 + $0x30] sm:$0xff] %v1591
    %1656 = vst [vmem:[%s4 + $0x38] sm:$0xff] %v1592
    %1657 = vst [vmem:[%s4 + $0x40] sm:$0xff] %v1593
    %1658 = vst [vmem:[%s4 + $0x48] sm:$0xff] %v1594
    %1659 = vst [vmem:[%s4 + $0x50] sm:$0xff] %v1595
    %1660 = vst [vmem:[%s4 + $0x58] sm:$0xff] %v1596
    %1661 = vst [vmem:[%s4 + $0x60] sm:$0xff] %v1597
    %1662 = vst [vmem:[%s4 + $0x68] sm:$0xff] %v1598
    %1663 = vst [vmem:[%s4 + $0x70] sm:$0xff] %v1599
    %1664 = vst [vmem:[%s4 + $0x78] sm:$0xff] %v1600
    %1665 = vst [vmem:[%s4 + $0x80] sm:$0xff] %v1601
    %1666 = vst [vmem:[%s4 + $0x88] sm:$0xff] %v1602
    %1667 = vst [vmem:[%s4 + $0x90] sm:$0xff] %v1603
    %1668 = vst [vmem:[%s4 + $0x98] sm:$0xff] %v1604
    %1669 = vst [vmem:[%s4 + $0xa0] sm:$0xff] %v1605
    %1670 = vst [vmem:[%s4 + $0xa8] sm:$0xff] %v1606
    %1671 = vst [vmem:[%s4 + $0xb0] sm:$0xff] %v1607
    %1672 = vst [vmem:[%s4 + $0xb8] sm:$0xff] %v1608
    %1673 = vst [vmem:[%s4 + $0xc0] sm:$0xff] %v1609
    %1674 = vst [vmem:[%s4 + $0xc8] sm:$0xff] %v1610
    %1675 = vst [vmem:[%s4 + $0xd0] sm:$0xff] %v1611
    %1676 = vst [vmem:[%s4 + $0xd8] sm:$0xff] %v1612
    %1677 = vst [vmem:[%s4 + $0xe0] sm:$0xff] %v1613
    %1678 = vst [vmem:[%s4 + $0xe8] sm:$0xff] %v1614
    %1679 = vst [vmem:[%s4 + $0xf0] sm:$0xff] %v1615
    %1680 = vst [vmem:[%s4 + $0xf8] sm:$0xff] %v1616
    %1681 = vst [vmem:[%s4 + $0x100] sm:$0xff] %v1617
    %1682 = vst [vmem:[%s4 + $0x108] sm:$0xff] %v1618
    %1683 = vst [vmem:[%s4 + $0x110] sm:$0xff] %v1619
    %1684 = vst [vmem:[%s4 + $0x118] sm:$0xff] %v1620
    %1685 = vst [vmem:[%s4 + $0x120] sm:$0xff] %v1621
    %1686 = vst [vmem:[%s4 + $0x128] sm:$0xff] %v1622
    %1687 = vst [vmem:[%s4 + $0x130] sm:$0xff] %v1623
    %1688 = vst [vmem:[%s4 + $0x138] sm:$0xff] %v1624
    %1689 = vst [vmem:[%s4 + $0x140] sm:$0xff] %v1625
    %1690 = vst [vmem:[%s4 + $0x148] sm:$0xff] %v1626
    %1691 = vst [vmem:[%s4 + $0x150] sm:$0xff] %v1627
    %1692 = vst [vmem:[%s4 + $0x158] sm:$0xff] %v1628
    %1693 = vst [vmem:[%s4 + $0x160] sm:$0xff] %v1629
    %1694 = vst [vmem:[%s4 + $0x168] sm:$0xff] %v1630
    %1695 = vst [vmem:[%s4 + $0x170] sm:$0xff] %v1631
    %1696 = vst [vmem:[%s4 + $0x178] sm:$0xff] %v1632
    %1697 = vst [vmem:[%s4 + $0x180] sm:$0xff] %v1633
    %1698 = vst [vmem:[%s4 + $0x188] sm:$0xff] %v1634
    %1699 = vst [vmem:[%s4 + $0x190] sm:$0xff] %v1635
    %1700 = vst [vmem:[%s4 + $0x198] sm:$0xff] %v1636
    %1701 = vst [vmem:[%s4 + $0x1a0] sm:$0xff] %v1637
    %1702 = vst [vmem:[%s4 + $0x1a8] sm:$0xff] %v1638
    %1703 = vst [vmem:[%s4 + $0x1b0] sm:$0xff] %v1639
    %1704 = vst [vmem:[%s4 + $0x1b8] sm:$0xff] %v1640
    %1705 = vst [vmem:[%s4 + $0x1c0] sm:$0xff] %v1641
    %1706 = vst [vmem:[%s4 + $0x1c8] sm:$0xff] %v1642
    %1707 = vst [vmem:[%s4 + $0x1d0] sm:$0xff] %v1643
    %1708 = vst [vmem:[%s4 + $0x1d8] sm:$0xff] %v1644
    %1709 = vst [vmem:[%s4 + $0x1e0] sm:$0xff] %v1645
    %1710 = vst [vmem:[%s4 + $0x1e8] sm:$0xff] %v1646
    %1711 = vst [vmem:[%s4 + $0x1f0] sm:$0xff] %v1647
    %1712 = vst [vmem:[%s4 + $0x1f8] sm:$0xff] %v1648
  $region25: #{_lambda_.6} parent=0 // pred_fallthru
    _
  // Predicated region
  $region26: #{_lambda_.6} parent=0 // pred_check
    _
  $region27: #{_lambda_.6} parent=0 // pred_check_branch
    %1714 = sbr.rel (0) target = $region29
  $region28: #{_lambda_.6} parent=0 // pred_region
    _
  $region29: #{_lambda_.6} parent=0 // pred_fallthru
    _
  // Predicated region
  $region30: #{_lambda_.6} parent=0 // pred_check
    _
  $region31: #{_lambda_.6} parent=0 // pred_check_branch
    %1716 = sbr.rel (0) target = $region33
  $region32: #{_lambda_.6} parent=0 // pred_region
    _
  $region33: #{_lambda_.6} parent=0 // pred_fallthru
    _

// kernel: _lambda_.7
$region0: #{_lambda_.7}
  #allocation0 [shape = 'u32[]', space=smem, size = 0x4, offset = 0x4, fixed_abs, tag = 'smem constant byte address 0x4 - core index']
  #allocation1 [shape = 'u32[72,128]{1,0:T(1,128)}', space=vmem, size = 0x9000, scoped, tag = 'internal scratch']
  %s0 = inlined_call_operand.vmem [shape: bf16[4,512,128], index: 0, kind: input, shape index: {}]
  %s1 = inlined_call_operand.vmem [shape: bf16[4,128,128], index: 1, kind: input, shape index: {}]
  %s2 = inlined_call_operand.vmem [shape: f32[4,512,128], index: 2, kind: output, shape index: {}]
  %s3 = sld [smem:[#allocation0]]
  $region49: #{_lambda_.7} parent=0
    _
  %s5 = ssub.s32 1, %s3
  %s6 = scalar_select 0, %s5, %s3
  loop: start=0, step=1, limit=6
  $region2: #{_lambda_.7} parent=0 // loop_pre_header
    _
  $region3: #{_lambda_.7} parent=0 // loop_header
    %s8 = sphi 0, %s12
    %p9 = scmp.ge.s32.totalorder %s8, 6
    %s15 = sphi 0, %s34
    %s16 = sphi 0, %s30
    %s17 = sphi 0, %s26
    %s18 = sphi 0, %s15
    %s19 = sphi 0, %s16
    %s20 = sphi 0, %s17
    %s21 = sphi 0, %s18
    %s22 = sphi 0, %s19
    %s23 = sphi 0, %s20
    %s41 = sphi 0, %s43
    %s44 = sphi 0, %s41
    %s45 = sphi 0, %s44
    %s61 = sphi 0, %s45
    %s69 = sphi 0, %s71
    %s72 = sphi 0, %s69
    %s73 = sphi 0, %s72
    %s89 = sphi 0, %s73
    %s97 = sphi 0, %s99
    %s100 = sphi 0, %s97
    %s101 = sphi 0, %s100
    %s117 = sphi 0, %s101
  $region4: #{_lambda_.7} parent=0 // loop_header_branch
    %11 = sbr.rel (%p9) target = $region8
  $region5: #{_lambda_.7} parent=0 // loop_body
    %s13 = ssub.s32 %s8, 1
    %s14 = ssub.s32 %s8, 2
    %s24 = sadd.s32 1, %s17
    %p25 = scmp.ge.s32.totalorder %s24, 1
    %s26 = scalar_select %p25, 0, %s24
    %s27 = sadd.s32 1, %s16
    %s28 = scalar_select %p25, %s27, %s16
    %p29 = scmp.ge.s32.totalorder %s28, 1
    %s30 = scalar_select %p29, 0, %s28
    %s31 = sadd.s32 1, %s15
    %s32 = scalar_select %p29, %s31, %s15
    %p33 = scmp.ge.s32.totalorder %s32, 4
    %s34 = scalar_select %p33, 0, %s32
    %s35 = ssub.s32 %s15, %s34
    %s36 = ssub.s32 %s16, %s30
    %s37 = sor.u32 %s35, %s36
    %s38 = ssub.s32 %s17, %s26
    %s39 = sor.u32 %s37, %s38
    %p40 = scmp.eq.s32.totalorder %s39, 0
    %s42 = sadd.s32 %s41, 1
    %s43 = scalar_select %p40, %s41, %s42
    %p46 = pneg %p40
    %p47 = scmp.eq.s32.totalorder %s8, 3
    %p48 = por %p46, %p47
    %p49 = scmp.ne.s32.totalorder %s41, %s44
    %p50 = scmp.eq.s32.totalorder %s8, 0
    %p51 = por %p49, %p50
    %p52 = scmp.ne.s32.totalorder %s41, %s44
    %p53 = scmp.eq.s32.totalorder %s13, 3
    %p54 = por %p52, %p53
    %p55 = scmp.ne.s32.totalorder %s44, %s45
    %p56 = scmp.eq.s32.totalorder %s13, 0
    %p57 = por %p55, %p56
    %p58 = scmp.ne.s32.totalorder %s44, %s45
    %p59 = scmp.eq.s32.totalorder %s14, 3
    %p60 = por %p58, %p59
    %p62 = scmp.ne.s32.totalorder %s45, %s61
    %p63 = scmp.eq.s32.totalorder %s14, 0
    %p64 = por %p62, %p63
    %s65 = ssub.s32 %s15, %s34
    %s66 = ssub.s32 %s17, %s26
    %s67 = sor.u32 %s65, %s66
    %p68 = scmp.eq.s32.totalorder %s67, 0
    %s70 = sadd.s32 %s69, 1
    %s71 = scalar_select %p68, %s69, %s70
    %p74 = pneg %p68
    %p75 = scmp.eq.s32.totalorder %s8, 3
    %p76 = por %p74, %p75
    %p77 = scmp.ne.s32.totalorder %s69, %s72
    %p78 = scmp.eq.s32.totalorder %s8, 0
    %p79 = por %p77, %p78
    %p80 = scmp.ne.s32.totalorder %s69, %s72
    %p81 = scmp.eq.s32.totalorder %s13, 3
    %p82 = por %p80, %p81
    %p83 = scmp.ne.s32.totalorder %s72, %s73
    %p84 = scmp.eq.s32.totalorder %s13, 0
    %p85 = por %p83, %p84
    %p86 = scmp.ne.s32.totalorder %s72, %s73
    %p87 = scmp.eq.s32.totalorder %s14, 3
    %p88 = por %p86, %p87
    %p90 = scmp.ne.s32.totalorder %s73, %s89
    %p91 = scmp.eq.s32.totalorder %s14, 0
    %p92 = por %p90, %p91
    %s93 = ssub.s32 %s15, %s34
    %s94 = ssub.s32 %s16, %s30
    %s95 = sor.u32 %s93, %s94
    %p96 = scmp.eq.s32.totalorder %s95, 0
    %s98 = sadd.s32 %s97, 1
    %s99 = scalar_select %p96, %s97, %s98
    %p102 = pneg %p96
    %p103 = scmp.eq.s32.totalorder %s8, 3
    %p104 = por %p102, %p103
    %p105 = scmp.ne.s32.totalorder %s97, %s100
    %p106 = scmp.eq.s32.totalorder %s8, 0
    %p107 = por %p105, %p106
    %p108 = scmp.ne.s32.totalorder %s97, %s100
    %p109 = scmp.eq.s32.totalorder %s13, 3
    %p110 = por %p108, %p109
    %p111 = scmp.ne.s32.totalorder %s100, %s101
    %p112 = scmp.eq.s32.totalorder %s13, 0
    %p113 = por %p111, %p112
    %p114 = scmp.ne.s32.totalorder %s100, %s101
    %p115 = scmp.eq.s32.totalorder %s14, 3
    %p116 = por %p114, %p115
    %p118 = scmp.ne.s32.totalorder %s101, %s117
    %p119 = scmp.eq.s32.totalorder %s14, 0
    %p120 = por %p118, %p119
    %p121 = scmp.le.s32.totalorder 1, %s8
    %p122 = scmp.lt.s32.totalorder %s8, 5
    %p123 = pnand %p121, %p122
    %p124 = pneg %p123
    // Predicated region
    $region9: #{_lambda_.7} parent=5 // pred_check
      _
    $region10: #{_lambda_.7} parent=5 // pred_check_branch
      %126 = sbr.rel (%p123) target = $region12
    $region11: #{_lambda_.7} parent=5 // pred_region
      %s127 = ssub.s32 %s8, 1
    $region12: #{_lambda_.7} parent=5 // pred_fallthru
      _
    %p128 = scmp.lt.s32.totalorder %s8, 4
    // Predicated region
    $region13: #{_lambda_.7} parent=5 // pred_check
      %p129 = pneg %p128
    $region14: #{_lambda_.7} parent=5 // pred_check_branch
      %131 = sbr.rel (%p129) target = $region16
    $region15: #{_lambda_.7} parent=5 // pred_region
      // Predicated region
      $region17: #{_lambda_.7} parent=15 // pred_check
        %p132 = pneg %p51
      $region18: #{_lambda_.7} parent=15 // pred_check_branch
        %134 = sbr.rel (%p132) target = $region20
      $region19: #{_lambda_.7} parent=15 // pred_region
        %s135 = smul.u32 64, %s16
        %p136 = scmp.lt.s32.totalorder %s15, 3
        %s137 = scalar_select %p136, %s15, 3
        %p138 = scmp.lt.s32.totalorder %s135, 63
        %s139 = scalar_select %p138, %s135, 63
        %p140 = scmp.lt.s32.totalorder %s17, 0
        %s141 = scalar_select %p140, %s17, 0
        %s142 = sadd.s32 %s141, %s139
        %s143 = smul.addr %s137, 64
        %s144 = sadd.s32 %s142, %s143
        %s145 = smul.addr %s144, 4
        %s146 = scalar_lea.vmem %s0, %s145
        %s147 = smul.u32 64, %s16
      $region20: #{_lambda_.7} parent=15 // pred_fallthru
        _
      // Predicated region
      $region21: #{_lambda_.7} parent=15 // pred_check
        %p148 = pneg %p79
      $region22: #{_lambda_.7} parent=15 // pred_check_branch
        %150 = sbr.rel (%p148) target = $region24
      $region23: #{_lambda_.7} parent=15 // pred_region
        %s151 = smul.u32 16, %s17
        %p152 = scmp.lt.s32.totalorder %s15, 3
        %s153 = scalar_select %p152, %s15, 3
        %p154 = scmp.lt.s32.totalorder %s151, 15
        %s155 = scalar_select %p154, %s151, 15
        %s156 = smul.addr %s153, 16
        %s157 = sadd.s32 %s155, %s156
        %s158 = smul.addr %s157, 4
        %s159 = scalar_lea.vmem %s1, %s158
        %s160 = smul.u32 16, %s17
      $region24: #{_lambda_.7} parent=15 // pred_fallthru
        _
    $region16: #{_lambda_.7} parent=5 // pred_fallthru
      _
    %p161 = scmp.le.s32.totalorder 1, %s8
    %p162 = scmp.lt.s32.totalorder %s8, 5
    %p163 = pnand %p161, %p162
    %p164 = pneg %p163
    // Predicated region
    $region25: #{_lambda_.7} parent=5 // pred_check
      _
    $region26: #{_lambda_.7} parent=5 // pred_check_branch
      %166 = sbr.rel (%p163) target = $region28
    $region27: #{_lambda_.7} parent=5 // pred_region
      %s167 = ssub.s32 %s8, 1
      %s168 = smul.u32 64, %s19
      %p169 = scmp.lt.s32.totalorder %s18, 3
      %s170 = scalar_select %p169, %s18, 3
      %p171 = scmp.lt.s32.totalorder %s168, 63
      %s172 = scalar_select %p171, %s168, 63
      %p173 = scmp.lt.s32.totalorder %s20, 0
      %s174 = scalar_select %p173, %s20, 0
      %s175 = sadd.s32 %s174, %s172
      %s176 = smul.addr %s170, 64
      %s177 = sadd.s32 %s175, %s176
      %s178 = smul.addr %s177, 4
      %s179 = scalar_lea.vmem %s0, %s178
      %p180 = pneg %p57
      %p181 = pneg %p54
      %s182 = smul.u32 16, %s20
      %p183 = scmp.lt.s32.totalorder %s18, 3
      %s184 = scalar_select %p183, %s18, 3
      %p185 = scmp.lt.s32.totalorder %s182, 15
      %s186 = scalar_select %p185, %s182, 15
      %s187 = smul.addr %s184, 16
      %s188 = sadd.s32 %s186, %s187
      %s189 = smul.addr %s188, 4
      %s190 = scalar_lea.vmem %s1, %s189
      %p191 = pneg %p85
      %p192 = pneg %p82
      %p193 = pneg %p113
      %p194 = pneg %p110
      %s195 = smul.u32 64, %s19
      %p196 = scmp.lt.s32.totalorder %s18, 3
      %s197 = scalar_select %p196, %s18, 3
      %p198 = scmp.lt.s32.totalorder %s195, 63
      %s199 = scalar_select %p198, %s195, 63
      %s200 = smul.addr %s197, 64
      %s201 = sadd.s32 %s199, %s200
      %s202 = smul.addr %s201, 8
      %s203 = scalar_lea.vmem %s2, %s202
      %s204 = smul.u32 64, %s19
      %p205 = scmp.lt.s32.totalorder %s18, 3
      %s206 = scalar_select %p205, %s18, 3
      %p207 = scmp.lt.s32.totalorder %s204, 63
      %s208 = scalar_select %p207, %s204, 63
      %p209 = scmp.lt.s32.totalorder %s20, 0
      %s210 = scalar_select %p209, %s20, 0
      %s211 = sadd.s32 %s210, %s208
      %s212 = smul.addr %s206, 64
      %s213 = sadd.s32 %s211, %s212
      %s214 = smul.addr %s213, 4
      %s215 = scalar_lea.vmem %s0, %s214
      %s216 = smul.u32 64, %s19
      %s217 = smul.u32 16, %s20
      %p218 = scmp.lt.s32.totalorder %s18, 3
      %s219 = scalar_select %p218, %s18, 3
      %p220 = scmp.lt.s32.totalorder %s217, 15
      %s221 = scalar_select %p220, %s217, 15
      %s222 = smul.addr %s219, 16
      %s223 = sadd.s32 %s221, %s222
      %s224 = smul.addr %s223, 4
      %s225 = scalar_lea.vmem %s1, %s224
      %s226 = smul.u32 16, %s20
      %s227 = smul.u32 64, %s19
      %p228 = scmp.lt.s32.totalorder %s18, 3
      %s229 = scalar_select %p228, %s18, 3
      %p230 = scmp.lt.s32.totalorder %s227, 63
      %s231 = scalar_select %p230, %s227, 63
      %s232 = smul.addr %s229, 64
      %s233 = sadd.s32 %s231, %s232
      %s234 = smul.addr %s233, 8
      %s235 = scalar_lea.vmem %s2, %s234
      %s236 = smul.u32 64, %s19
      %p237 = scmp.eq.s32.totalorder %s20, 0
      // Predicated region
      $region29: #{_lambda_.7} parent=27 // pred_check
        %p238 = pneg %p237
      $region30: #{_lambda_.7} parent=27 // pred_check_branch
        %240 = sbr.rel (%p238) target = $region32
      $region31: #{_lambda_.7} parent=27 // pred_region
        %241 = vst [vmem:[%s235] sm:$0xff] 0.0
        %242 = vst [vmem:[%s235 + $0x8] sm:$0xff] 0.0
        %243 = vst [vmem:[%s235 + $0x10] sm:$0xff] 0.0
        %244 = vst [vmem:[%s235 + $0x18] sm:$0xff] 0.0
        %245 = vst [vmem:[%s235 + $0x20] sm:$0xff] 0.0
        %246 = vst [vmem:[%s235 + $0x28] sm:$0xff] 0.0
        %247 = vst [vmem:[%s235 + $0x30] sm:$0xff] 0.0
        %248 = vst [vmem:[%s235 + $0x38] sm:$0xff] 0.0
        %249 = vst [vmem:[%s235 + $0x40] sm:$0xff] 0.0
        %250 = vst [vmem:[%s235 + $0x48] sm:$0xff] 0.0
        %251 = vst [vmem:[%s235 + $0x50] sm:$0xff] 0.0
        %252 = vst [vmem:[%s235 + $0x58] sm:$0xff] 0.0
        %253 = vst [vmem:[%s235 + $0x60] sm:$0xff] 0.0
        %254 = vst [vmem:[%s235 + $0x68] sm:$0xff] 0.0
        %255 = vst [vmem:[%s235 + $0x70] sm:$0xff] 0.0
        %256 = vst [vmem:[%s235 + $0x78] sm:$0xff] 0.0
        %257 = vst [vmem:[%s235 + $0x80] sm:$0xff] 0.0
        %258 = vst [vmem:[%s235 + $0x88] sm:$0xff] 0.0
        %259 = vst [vmem:[%s235 + $0x90] sm:$0xff] 0.0
        %260 = vst [vmem:[%s235 + $0x98] sm:$0xff] 0.0
        %261 = vst [vmem:[%s235 + $0xa0] sm:$0xff] 0.0
        %262 = vst [vmem:[%s235 + $0xa8] sm:$0xff] 0.0
        %263 = vst [vmem:[%s235 + $0xb0] sm:$0xff] 0.0
        %264 = vst [vmem:[%s235 + $0xb8] sm:$0xff] 0.0
        %265 = vst [vmem:[%s235 + $0xc0] sm:$0xff] 0.0
        %266 = vst [vmem:[%s235 + $0xc8] sm:$0xff] 0.0
        %267 = vst [vmem:[%s235 + $0xd0] sm:$0xff] 0.0
        %268 = vst [vmem:[%s235 + $0xd8] sm:$0xff] 0.0
        %269 = vst [vmem:[%s235 + $0xe0] sm:$0xff] 0.0
        %270 = vst [vmem:[%s235 + $0xe8] sm:$0xff] 0.0
        %271 = vst [vmem:[%s235 + $0xf0] sm:$0xff] 0.0
        %272 = vst [vmem:[%s235 + $0xf8] sm:$0xff] 0.0
        %273 = vst [vmem:[%s235 + $0x100] sm:$0xff] 0.0
        %274 = vst [vmem:[%s235 + $0x108] sm:$0xff] 0.0
        %275 = vst [vmem:[%s235 + $0x110] sm:$0xff] 0.0
        %276 = vst [vmem:[%s235 + $0x118] sm:$0xff] 0.0
        %277 = vst [vmem:[%s235 + $0x120] sm:$0xff] 0.0
        %278 = vst [vmem:[%s235 + $0x128] sm:$0xff] 0.0
        %279 = vst [vmem:[%s235 + $0x130] sm:$0xff] 0.0
        %280 = vst [vmem:[%s235 + $0x138] sm:$0xff] 0.0
        %281 = vst [vmem:[%s235 + $0x140] sm:$0xff] 0.0
        %282 = vst [vmem:[%s235 + $0x148] sm:$0xff] 0.0
        %283 = vst [vmem:[%s235 + $0x150] sm:$0xff] 0.0
        %284 = vst [vmem:[%s235 + $0x158] sm:$0xff] 0.0
        %285 = vst [vmem:[%s235 + $0x160] sm:$0xff] 0.0
        %286 = vst [vmem:[%s235 + $0x168] sm:$0xff] 0.0
        %287 = vst [vmem:[%s235 + $0x170] sm:$0xff] 0.0
        %288 = vst [vmem:[%s235 + $0x178] sm:$0xff] 0.0
        %289 = vst [vmem:[%s235 + $0x180] sm:$0xff] 0.0
        %290 = vst [vmem:[%s235 + $0x188] sm:$0xff] 0.0
        %291 = vst [vmem:[%s235 + $0x190] sm:$0xff] 0.0
        %292 = vst [vmem:[%s235 + $0x198] sm:$0xff] 0.0
        %293 = vst [vmem:[%s235 + $0x1a0] sm:$0xff] 0.0
        %294 = vst [vmem:[%s235 + $0x1a8] sm:$0xff] 0.0
        %295 = vst [vmem:[%s235 + $0x1b0] sm:$0xff] 0.0
        %296 = vst [vmem:[%s235 + $0x1b8] sm:$0xff] 0.0
        %297 = vst [vmem:[%s235 + $0x1c0] sm:$0xff] 0.0
        %298 = vst [vmem:[%s235 + $0x1c8] sm:$0xff] 0.0
        %299 = vst [vmem:[%s235 + $0x1d0] sm:$0xff] 0.0
        %300 = vst [vmem:[%s235 + $0x1d8] sm:$0xff] 0.0
        %301 = vst [vmem:[%s235 + $0x1e0] sm:$0xff] 0.0
        %302 = vst [vmem:[%s235 + $0x1e8] sm:$0xff] 0.0
        %303 = vst [vmem:[%s235 + $0x1f0] sm:$0xff] 0.0
        %304 = vst [vmem:[%s235 + $0x1f8] sm:$0xff] 0.0
      $region32: #{_lambda_.7} parent=27 // pred_fallthru
        _
      %v305 = vld [vmem:[%s235] sm:$0xff]
      %v306 = vld [vmem:[%s235 + $0x8] sm:$0xff]
      %v307 = vld [vmem:[%s235 + $0x10] sm:$0xff]
      %v308 = vld [vmem:[%s235 + $0x18] sm:$0xff]
      %v309 = vld [vmem:[%s235 + $0x20] sm:$0xff]
      %v310 = vld [vmem:[%s235 + $0x28] sm:$0xff]
      %v311 = vld [vmem:[%s235 + $0x30] sm:$0xff]
      %v312 = vld [vmem:[%s235 + $0x38] sm:$0xff]
      %v313 = vld [vmem:[%s235 + $0x40] sm:$0xff]
      %v314 = vld [vmem:[%s235 + $0x48] sm:$0xff]
      %v315 = vld [vmem:[%s235 + $0x50] sm:$0xff]
      %v316 = vld [vmem:[%s235 + $0x58] sm:$0xff]
      %v317 = vld [vmem:[%s235 + $0x60] sm:$0xff]
      %v318 = vld [vmem:[%s235 + $0x68] sm:$0xff]
      %v319 = vld [vmem:[%s235 + $0x70] sm:$0xff]
      %v320 = vld [vmem:[%s235 + $0x78] sm:$0xff]
      %v321 = vld [vmem:[%s235 + $0x80] sm:$0xff]
      %v322 = vld [vmem:[%s235 + $0x88] sm:$0xff]
      %v323 = vld [vmem:[%s235 + $0x90] sm:$0xff]
      %v324 = vld [vmem:[%s235 + $0x98] sm:$0xff]
      %v325 = vld [vmem:[%s235 + $0xa0] sm:$0xff]
      %v326 = vld [vmem:[%s235 + $0xa8] sm:$0xff]
      %v327 = vld [vmem:[%s235 + $0xb0] sm:$0xff]
      %v328 = vld [vmem:[%s235 + $0xb8] sm:$0xff]
      %v329 = vld [vmem:[%s235 + $0xc0] sm:$0xff]
      %v330 = vld [vmem:[%s235 + $0xc8] sm:$0xff]
      %v331 = vld [vmem:[%s235 + $0xd0] sm:$0xff]
      %v332 = vld [vmem:[%s235 + $0xd8] sm:$0xff]
      %v333 = vld [vmem:[%s235 + $0xe0] sm:$0xff]
      %v334 = vld [vmem:[%s235 + $0xe8] sm:$0xff]
      %v335 = vld [vmem:[%s235 + $0xf0] sm:$0xff]
      %v336 = vld [vmem:[%s235 + $0xf8] sm:$0xff]
      %v337 = vld [vmem:[%s235 + $0x100] sm:$0xff]
      %v338 = vld [vmem:[%s235 + $0x108] sm:$0xff]
      %v339 = vld [vmem:[%s235 + $0x110] sm:$0xff]
      %v340 = vld [vmem:[%s235 + $0x118] sm:$0xff]
      %v341 = vld [vmem:[%s235 + $0x120] sm:$0xff]
      %v342 = vld [vmem:[%s235 + $0x128] sm:$0xff]
      %v343 = vld [vmem:[%s235 + $0x130] sm:$0xff]
      %v344 = vld [vmem:[%s235 + $0x138] sm:$0xff]
      %v345 = vld [vmem:[%s235 + $0x140] sm:$0xff]
      %v346 = vld [vmem:[%s235 + $0x148] sm:$0xff]
      %v347 = vld [vmem:[%s235 + $0x150] sm:$0xff]
      %v348 = vld [vmem:[%s235 + $0x158] sm:$0xff]
      %v349 = vld [vmem:[%s235 + $0x160] sm:$0xff]
      %v350 = vld [vmem:[%s235 + $0x168] sm:$0xff]
      %v351 = vld [vmem:[%s235 + $0x170] sm:$0xff]
      %v352 = vld [vmem:[%s235 + $0x178] sm:$0xff]
      %v353 = vld [vmem:[%s235 + $0x180] sm:$0xff]
      %v354 = vld [vmem:[%s235 + $0x188] sm:$0xff]
      %v355 = vld [vmem:[%s235 + $0x190] sm:$0xff]
      %v356 = vld [vmem:[%s235 + $0x198] sm:$0xff]
      %v357 = vld [vmem:[%s235 + $0x1a0] sm:$0xff]
      %v358 = vld [vmem:[%s235 + $0x1a8] sm:$0xff]
      %v359 = vld [vmem:[%s235 + $0x1b0] sm:$0xff]
      %v360 = vld [vmem:[%s235 + $0x1b8] sm:$0xff]
      %v361 = vld [vmem:[%s235 + $0x1c0] sm:$0xff]
      %v362 = vld [vmem:[%s235 + $0x1c8] sm:$0xff]
      %v363 = vld [vmem:[%s235 + $0x1d0] sm:$0xff]
      %v364 = vld [vmem:[%s235 + $0x1d8] sm:$0xff]
      %v365 = vld [vmem:[%s235 + $0x1e0] sm:$0xff]
      %v366 = vld [vmem:[%s235 + $0x1e8] sm:$0xff]
      %v367 = vld [vmem:[%s235 + $0x1f0] sm:$0xff]
      %v368 = vld [vmem:[%s235 + $0x1f8] sm:$0xff]
      %v369 = vld [vmem:[%s215] sm:$0xf]
      %v370 = vld [vmem:[%s215 + $0x4] sm:$0xf]
      %v371 = vld [vmem:[%s215 + $0x8] sm:$0xf]
      %v372 = vld [vmem:[%s215 + $0xc] sm:$0xf]
      %v373 = vld [vmem:[%s215 + $0x10] sm:$0xf]
      %v374 = vld [vmem:[%s215 + $0x14] sm:$0xf]
      %v375 = vld [vmem:[%s215 + $0x18] sm:$0xf]
      %v376 = vld [vmem:[%s215 + $0x1c] sm:$0xf]
      %v377 = vld [vmem:[%s215 + $0x20] sm:$0xf]
      %v378 = vld [vmem:[%s215 + $0x24] sm:$0xf]
      %v379 = vld [vmem:[%s215 + $0x28] sm:$0xf]
      %v380 = vld [vmem:[%s215 + $0x2c] sm:$0xf]
      %v381 = vld [vmem:[%s215 + $0x30] sm:$0xf]
      %v382 = vld [vmem:[%s215 + $0x34] sm:$0xf]
      %v383 = vld [vmem:[%s215 + $0x38] sm:$0xf]
      %v384 = vld [vmem:[%s215 + $0x3c] sm:$0xf]
      %v385 = vld [vmem:[%s215 + $0x40] sm:$0xf]
      %v386 = vld [vmem:[%s215 + $0x44] sm:$0xf]
      %v387 = vld [vmem:[%s215 + $0x48] sm:$0xf]
      %v388 = vld [vmem:[%s215 + $0x4c] sm:$0xf]
      %v389 = vld [vmem:[%s215 + $0x50] sm:$0xf]
      %v390 = vld [vmem:[%s215 + $0x54] sm:$0xf]
      %v391 = vld [vmem:[%s215 + $0x58] sm:$0xf]
      %v392 = vld [vmem:[%s215 + $0x5c] sm:$0xf]
      %v393 = vld [vmem:[%s215 + $0x60] sm:$0xf]
      %v394 = vld [vmem:[%s215 + $0x64] sm:$0xf]
      %v395 = vld [vmem:[%s215 + $0x68] sm:$0xf]
      %v396 = vld [vmem:[%s215 + $0x6c] sm:$0xf]
      %v397 = vld [vmem:[%s215 + $0x70] sm:$0xf]
      %v398 = vld [vmem:[%s215 + $0x74] sm:$0xf]
      %v399 = vld [vmem:[%s215 + $0x78] sm:$0xf]
      %v400 = vld [vmem:[%s215 + $0x7c] sm:$0xf]
      %v401 = vld [vmem:[%s215 + $0x80] sm:$0xf]
      %v402 = vld [vmem:[%s215 + $0x84] sm:$0xf]
      %v403 = vld [vmem:[%s215 + $0x88] sm:$0xf]
      %v404 = vld [vmem:[%s215 + $0x8c] sm:$0xf]
      %v405 = vld [vmem:[%s215 + $0x90] sm:$0xf]
      %v406 = vld [vmem:[%s215 + $0x94] sm:$0xf]
      %v407 = vld [vmem:[%s215 + $0x98] sm:$0xf]
      %v408 = vld [vmem:[%s215 + $0x9c] sm:$0xf]
      %v409 = vld [vmem:[%s215 + $0xa0] sm:$0xf]
      %v410 = vld [vmem:[%s215 + $0xa4] sm:$0xf]
      %v411 = vld [vmem:[%s215 + $0xa8] sm:$0xf]
      %v412 = vld [vmem:[%s215 + $0xac] sm:$0xf]
      %v413 = vld [vmem:[%s215 + $0xb0] sm:$0xf]
      %v414 = vld [vmem:[%s215 + $0xb4] sm:$0xf]
      %v415 = vld [vmem:[%s215 + $0xb8] sm:$0xf]
      %v416 = vld [vmem:[%s215 + $0xbc] sm:$0xf]
      %v417 = vld [vmem:[%s215 + $0xc0] sm:$0xf]
      %v418 = vld [vmem:[%s215 + $0xc4] sm:$0xf]
      %v419 = vld [vmem:[%s215 + $0xc8] sm:$0xf]
      %v420 = vld [vmem:[%s215 + $0xcc] sm:$0xf]
      %v421 = vld [vmem:[%s215 + $0xd0] sm:$0xf]
      %v422 = vld [vmem:[%s215 + $0xd4] sm:$0xf]
      %v423 = vld [vmem:[%s215 + $0xd8] sm:$0xf]
      %v424 = vld [vmem:[%s215 + $0xdc] sm:$0xf]
      %v425 = vld [vmem:[%s215 + $0xe0] sm:$0xf]
      %v426 = vld [vmem:[%s215 + $0xe4] sm:$0xf]
      %v427 = vld [vmem:[%s215 + $0xe8] sm:$0xf]
      %v428 = vld [vmem:[%s215 + $0xec] sm:$0xf]
      %v429 = vld [vmem:[%s215 + $0xf0] sm:$0xf]
      %v430 = vld [vmem:[%s215 + $0xf4] sm:$0xf]
      %v431 = vld [vmem:[%s215 + $0xf8] sm:$0xf]
      %v432 = vld [vmem:[%s215 + $0xfc] sm:$0xf]
      %v433 = vld [vmem:[%s225] sm:$0xf]
      %v434 = vld [vmem:[%s225 + $0x4] sm:$0xf]
      %v435 = vld [vmem:[%s225 + $0x8] sm:$0xf]
      %v436 = vld [vmem:[%s225 + $0xc] sm:$0xf]
      %v437 = vld [vmem:[%s225 + $0x10] sm:$0xf]
      %v438 = vld [vmem:[%s225 + $0x14] sm:$0xf]
      %v439 = vld [vmem:[%s225 + $0x18] sm:$0xf]
      %v440 = vld [vmem:[%s225 + $0x1c] sm:$0xf]
      %v441 = vld [vmem:[%s225 + $0x20] sm:$0xf]
      %v442 = vld [vmem:[%s225 + $0x24] sm:$0xf]
      %v443 = vld [vmem:[%s225 + $0x28] sm:$0xf]
      %v444 = vld [vmem:[%s225 + $0x2c] sm:$0xf]
      %v445 = vld [vmem:[%s225 + $0x30] sm:$0xf]
      %v446 = vld [vmem:[%s225 + $0x34] sm:$0xf]
      %v447 = vld [vmem:[%s225 + $0x38] sm:$0xf]
      %v448 = vld [vmem:[%s225 + $0x3c] sm:$0xf]
      %v513 = vunpack.c.l.b16 %v369
      %v514 = vunpack.c.l.b16 %v370
      %v515 = vunpack.c.l.b16 %v371
      %v516 = vunpack.c.l.b16 %v372
      %v517 = vunpack.c.l.b16 %v373
      %v518 = vunpack.c.l.b16 %v374
      %v519 = vunpack.c.l.b16 %v375
      %v520 = vunpack.c.l.b16 %v376
      %v521 = vunpack.c.l.b16 %v377
      %v522 = vunpack.c.l.b16 %v378
      %v523 = vunpack.c.l.b16 %v379
      %v524 = vunpack.c.l.b16 %v380
      %v525 = vunpack.c.l.b16 %v381
      %v526 = vunpack.c.l.b16 %v382
      %v527 = vunpack.c.l.b16 %v383
      %v528 = vunpack.c.l.b16 %v384
      %v529 = vunpack.c.l.b16 %v385
      %v530 = vunpack.c.l.b16 %v386
      %v531 = vunpack.c.l.b16 %v387
      %v532 = vunpack.c.l.b16 %v388
      %v533 = vunpack.c.l.b16 %v389
      %v534 = vunpack.c.l.b16 %v390
      %v535 = vunpack.c.l.b16 %v391
      %v536 = vunpack.c.l.b16 %v392
      %v537 = vunpack.c.l.b16 %v393
      %v538 = vunpack.c.l.b16 %v394
      %v539 = vunpack.c.l.b16 %v395
      %v540 = vunpack.c.l.b16 %v396
      %v541 = vunpack.c.l.b16 %v397
      %v542 = vunpack.c.l.b16 %v398
      %v543 = vunpack.c.l.b16 %v399
      %v544 = vunpack.c.l.b16 %v400
      %v545 = vunpack.c.l.b16 %v401
      %v546 = vunpack.c.l.b16 %v402
      %v547 = vunpack.c.l.b16 %v403
      %v548 = vunpack.c.l.b16 %v404
      %v549 = vunpack.c.l.b16 %v405
      %v550 = vunpack.c.l.b16 %v406
      %v551 = vunpack.c.l.b16 %v407
      %v552 = vunpack.c.l.b16 %v408
      %v553 = vunpack.c.l.b16 %v409
      %v554 = vunpack.c.l.b16 %v410
      %v555 = vunpack.c.l.b16 %v411
      %v556 = vunpack.c.l.b16 %v412
      %v557 = vunpack.c.l.b16 %v413
      %v558 = vunpack.c.l.b16 %v414
      %v559 = vunpack.c.l.b16 %v415
      %v560 = vunpack.c.l.b16 %v416
      %v561 = vunpack.c.l.b16 %v417
      %v562 = vunpack.c.l.b16 %v418
      %v563 = vunpack.c.l.b16 %v419
      %v564 = vunpack.c.l.b16 %v420
      %v565 = vunpack.c.l.b16 %v421
      %v566 = vunpack.c.l.b16 %v422
      %v567 = vunpack.c.l.b16 %v423
      %v568 = vunpack.c.l.b16 %v424
      %v569 = vunpack.c.l.b16 %v425
      %v570 = vunpack.c.l.b16 %v426
      %v571 = vunpack.c.l.b16 %v427
      %v572 = vunpack.c.l.b16 %v428
      %v573 = vunpack.c.l.b16 %v429
      %v574 = vunpack.c.l.b16 %v430
      %v575 = vunpack.c.l.b16 %v431
      %v576 = vunpack.c.l.b16 %v432
      %v577 = vpack.c.b16 %v514, %v513
      %v578 = vpack.c.b16 %v516, %v515
      %v579 = vpack.c.b16 %v518, %v517
      %v580 = vpack.c.b16 %v520, %v519
      %v581 = vpack.c.b16 %v522, %v521
      %v582 = vpack.c.b16 %v524, %v523
      %v583 = vpack.c.b16 %v526, %v525
      %v584 = vpack.c.b16 %v528, %v527
      %v585 = vpack.c.b16 %v530, %v529
      %v586 = vpack.c.b16 %v532, %v531
      %v587 = vpack.c.b16 %v534, %v533
      %v588 = vpack.c.b16 %v536, %v535
      %v589 = vpack.c.b16 %v538, %v537
      %v590 = vpack.c.b16 %v540, %v539
      %v591 = vpack.c.b16 %v542, %v541
      %v592 = vpack.c.b16 %v544, %v543
      %v593 = vpack.c.b16 %v546, %v545
      %v594 = vpack.c.b16 %v548, %v547
      %v595 = vpack.c.b16 %v550, %v549
      %v596 = vpack.c.b16 %v552, %v551
      %v597 = vpack.c.b16 %v554, %v553
      %v598 = vpack.c.b16 %v556, %v555
      %v599 = vpack.c.b16 %v558, %v557
      %v600 = vpack.c.b16 %v560, %v559
      %v601 = vpack.c.b16 %v562, %v561
      %v602 = vpack.c.b16 %v564, %v563
      %v603 = vpack.c.b16 %v566, %v565
      %v604 = vpack.c.b16 %v568, %v567
      %v605 = vpack.c.b16 %v570, %v569
      %v606 = vpack.c.b16 %v572, %v571
      %v607 = vpack.c.b16 %v574, %v573
      %v608 = vpack.c.b16 %v576, %v575
      %v657 = vunpack.c.l.b16 %v433
      %v658 = vunpack.c.l.b16 %v434
      %v659 = vunpack.c.l.b16 %v435
      %v660 = vunpack.c.l.b16 %v436
      %v661 = vunpack.c.l.b16 %v437
      %v662 = vunpack.c.l.b16 %v438
      %v663 = vunpack.c.l.b16 %v439
      %v664 = vunpack.c.l.b16 %v440
      %v665 = vunpack.c.l.b16 %v441
      %v666 = vunpack.c.l.b16 %v442
      %v667 = vunpack.c.l.b16 %v443
      %v668 = vunpack.c.l.b16 %v444
      %v669 = vunpack.c.l.b16 %v445
      %v670 = vunpack.c.l.b16 %v446
      %v671 = vunpack.c.l.b16 %v447
      %v672 = vunpack.c.l.b16 %v448
      %v673 = vpack.c.b16 %v658, %v657
      %v674 = vpack.c.b16 %v660, %v659
      %v675 = vpack.c.b16 %v662, %v661
      %v676 = vpack.c.b16 %v664, %v663
      %v677 = vpack.c.b16 %v666, %v665
      %v678 = vpack.c.b16 %v668, %v667
      %v679 = vpack.c.b16 %v670, %v669
      %v680 = vpack.c.b16 %v672, %v671
      %689 = vmatpush.bf16.msra.mxu0 %v680
      %690 = vmatpush.bf16.msra.mxu0 %v679
      %691 = vmatpush.bf16.msra.mxu0 %v678
      %692 = vmatpush.bf16.msra.mxu0 %v677
      %693 = vmatpush.bf16.msra.mxu0 %v676
      %694 = vmatpush.bf16.msra.mxu0 %v675
      %695 = vmatpush.bf16.msra.mxu0 %v674
      %696 = vmatpush.bf16.msra.mxu0 %v673
      %697 = vmatmul.bf16.gmra.mxu0 %v577
      %v698 = vpop.f32.mrf.mxu0
      %v699 = vadd.f32 0.0, %v698
      %v700 = vpop.f32.mrf.mxu0
      %v701 = vadd.f32 0.0, %v700
      %702 = vmatmul.bf16.gmra.mxu0 %v578
      %v703 = vpop.f32.mrf.mxu0
      %v704 = vadd.f32 0.0, %v703
      %v705 = vpop.f32.mrf.mxu0
      %v706 = vadd.f32 0.0, %v705
      %707 = vmatmul.bf16.gmra.mxu0 %v579
      %v708 = vpop.f32.mrf.mxu0
      %v709 = vadd.f32 0.0, %v708
      %v710 = vpop.f32.mrf.mxu0
      %v711 = vadd.f32 0.0, %v710
      %712 = vmatmul.bf16.gmra.mxu0 %v580
      %v713 = vpop.f32.mrf.mxu0
      %v714 = vadd.f32 0.0, %v713
      %v715 = vpop.f32.mrf.mxu0
      %v716 = vadd.f32 0.0, %v715
      %717 = vmatmul.bf16.gmra.mxu0 %v581
      %v718 = vpop.f32.mrf.mxu0
      %v719 = vadd.f32 0.0, %v718
      %v720 = vpop.f32.mrf.mxu0
      %v721 = vadd.f32 0.0, %v720
      %722 = vmatmul.bf16.gmra.mxu0 %v582
      %v723 = vpop.f32.mrf.mxu0
      %v724 = vadd.f32 0.0, %v723
      %v725 = vpop.f32.mrf.mxu0
      %v726 = vadd.f32 0.0, %v725
      %727 = vmatmul.bf16.gmra.mxu0 %v583
      %v728 = vpop.f32.mrf.mxu0
      %v729 = vadd.f32 0.0, %v728
      %v730 = vpop.f32.mrf.mxu0
      %v731 = vadd.f32 0.0, %v730
      %732 = vmatmul.bf16.gmra.mxu0 %v584
      %v733 = vpop.f32.mrf.mxu0
      %v734 = vadd.f32 0.0, %v733
      %v735 = vpop.f32.mrf.mxu0
      %v736 = vadd.f32 0.0, %v735
      %737 = vmatmul.bf16.gmra.mxu0 %v585
      %v738 = vpop.f32.mrf.mxu0
      %v739 = vadd.f32 0.0, %v738
      %v740 = vpop.f32.mrf.mxu0
      %v741 = vadd.f32 0.0, %v740
      %742 = vmatmul.bf16.gmra.mxu0 %v586
      %v743 = vpop.f32.mrf.mxu0
      %v744 = vadd.f32 0.0, %v743
      %v745 = vpop.f32.mrf.mxu0
      %v746 = vadd.f32 0.0, %v745
      %747 = vmatmul.bf16.gmra.mxu0 %v587
      %v748 = vpop.f32.mrf.mxu0
      %v749 = vadd.f32 0.0, %v748
      %v750 = vpop.f32.mrf.mxu0
      %v751 = vadd.f32 0.0, %v750
      %752 = vmatmul.bf16.gmra.mxu0 %v588
      %v753 = vpop.f32.mrf.mxu0
      %v754 = vadd.f32 0.0, %v753
      %v755 = vpop.f32.mrf.mxu0
      %v756 = vadd.f32 0.0, %v755
      %757 = vmatmul.bf16.gmra.mxu0 %v589
      %v758 = vpop.f32.mrf.mxu0
      %v759 = vadd.f32 0.0, %v758
      %v760 = vpop.f32.mrf.mxu0
      %v761 = vadd.f32 0.0, %v760
      %762 = vmatmul.bf16.gmra.mxu0 %v590
      %v763 = vpop.f32.mrf.mxu0
      %v764 = vadd.f32 0.0, %v763
      %v765 = vpop.f32.mrf.mxu0
      %v766 = vadd.f32 0.0, %v765
      %767 = vmatmul.bf16.gmra.mxu0 %v591
      %v768 = vpop.f32.mrf.mxu0
      %v769 = vadd.f32 0.0, %v768
      %v770 = vpop.f32.mrf.mxu0
      %v771 = vadd.f32 0.0, %v770
      %772 = vmatmul.bf16.gmra.mxu0 %v592
      %v773 = vpop.f32.mrf.mxu0
      %v774 = vadd.f32 0.0, %v773
      %v775 = vpop.f32.mrf.mxu0
      %v776 = vadd.f32 0.0, %v775
      %777 = vmatmul.bf16.gmra.mxu0 %v593
      %v778 = vpop.f32.mrf.mxu0
      %v779 = vadd.f32 0.0, %v778
      %v780 = vpop.f32.mrf.mxu0
      %v781 = vadd.f32 0.0, %v780
      %782 = vmatmul.bf16.gmra.mxu0 %v594
      %v783 = vpop.f32.mrf.mxu0
      %v784 = vadd.f32 0.0, %v783
      %v785 = vpop.f32.mrf.mxu0
      %v786 = vadd.f32 0.0, %v785
      %787 = vmatmul.bf16.gmra.mxu0 %v595
      %v788 = vpop.f32.mrf.mxu0
      %v789 = vadd.f32 0.0, %v788
      %v790 = vpop.f32.mrf.mxu0
      %v791 = vadd.f32 0.0, %v790
      %792 = vmatmul.bf16.gmra.mxu0 %v596
      %v793 = vpop.f32.mrf.mxu0
      %v794 = vadd.f32 0.0, %v793
      %v795 = vpop.f32.mrf.mxu0
      %v796 = vadd.f32 0.0, %v795
      %797 = vmatmul.bf16.gmra.mxu0 %v597
      %v798 = vpop.f32.mrf.mxu0
      %v799 = vadd.f32 0.0, %v798
      %v800 = vpop.f32.mrf.mxu0
      %v801 = vadd.f32 0.0, %v800
      %802 = vmatmul.bf16.gmra.mxu0 %v598
      %v803 = vpop.f32.mrf.mxu0
      %v804 = vadd.f32 0.0, %v803
      %v805 = vpop.f32.mrf.mxu0
      %v806 = vadd.f32 0.0, %v805
      %807 = vmatmul.bf16.gmra.mxu0 %v599
      %v808 = vpop.f32.mrf.mxu0
      %v809 = vadd.f32 0.0, %v808
      %v810 = vpop.f32.mrf.mxu0
      %v811 = vadd.f32 0.0, %v810
      %812 = vmatmul.bf16.gmra.mxu0 %v600
      %v813 = vpop.f32.mrf.mxu0
      %v814 = vadd.f32 0.0, %v813
      %v815 = vpop.f32.mrf.mxu0
      %v816 = vadd.f32 0.0, %v815
      %817 = vmatmul.bf16.gmra.mxu0 %v601
      %v818 = vpop.f32.mrf.mxu0
      %v819 = vadd.f32 0.0, %v818
      %v820 = vpop.f32.mrf.mxu0
      %v821 = vadd.f32 0.0, %v820
      %822 = vmatmul.bf16.gmra.mxu0 %v602
      %v823 = vpop.f32.mrf.mxu0
      %v824 = vadd.f32 0.0, %v823
      %v825 = vpop.f32.mrf.mxu0
      %v826 = vadd.f32 0.0, %v825
      %827 = vmatmul.bf16.gmra.mxu0 %v603
      %v828 = vpop.f32.mrf.mxu0
      %v829 = vadd.f32 0.0, %v828
      %v830 = vpop.f32.mrf.mxu0
      %v831 = vadd.f32 0.0, %v830
      %832 = vmatmul.bf16.gmra.mxu0 %v604
      %v833 = vpop.f32.mrf.mxu0
      %v834 = vadd.f32 0.0, %v833
      %v835 = vpop.f32.mrf.mxu0
      %v836 = vadd.f32 0.0, %v835
      %837 = vmatmul.bf16.gmra.mxu0 %v605
      %v838 = vpop.f32.mrf.mxu0
      %v839 = vadd.f32 0.0, %v838
      %v840 = vpop.f32.mrf.mxu0
      %v841 = vadd.f32 0.0, %v840
      %842 = vmatmul.bf16.gmra.mxu0 %v606
      %v843 = vpop.f32.mrf.mxu0
      %v844 = vadd.f32 0.0, %v843
      %v845 = vpop.f32.mrf.mxu0
      %v846 = vadd.f32 0.0, %v845
      %847 = vmatmul.bf16.gmra.mxu0 %v607
      %v848 = vpop.f32.mrf.mxu0
      %v849 = vadd.f32 0.0, %v848
      %v850 = vpop.f32.mrf.mxu0
      %v851 = vadd.f32 0.0, %v850
      %852 = vmatmul.bf16.gmra.mxu0 %v608
      %v853 = vpop.f32.mrf.mxu0
      %v854 = vadd.f32 0.0, %v853
      %v855 = vpop.f32.mrf.mxu0
      %v856 = vadd.f32 0.0, %v855
      %857 = vdwg.mxu0
      %v858 = vadd.f32 %v305, %v699
      %v859 = vadd.f32 %v306, %v701
      %v860 = vadd.f32 %v307, %v704
      %v861 = vadd.f32 %v308, %v706
      %v862 = vadd.f32 %v309, %v709
      %v863 = vadd.f32 %v310, %v711
      %v864 = vadd.f32 %v311, %v714
      %v865 = vadd.f32 %v312, %v716
      %v866 = vadd.f32 %v313, %v719
      %v867 = vadd.f32 %v314, %v721
      %v868 = vadd.f32 %v315, %v724
      %v869 = vadd.f32 %v316, %v726
      %v870 = vadd.f32 %v317, %v729
      %v871 = vadd.f32 %v318, %v731
      %v872 = vadd.f32 %v319, %v734
      %v873 = vadd.f32 %v320, %v736
      %v874 = vadd.f32 %v321, %v739
      %v875 = vadd.f32 %v322, %v741
      %v876 = vadd.f32 %v323, %v744
      %v877 = vadd.f32 %v324, %v746
      %v878 = vadd.f32 %v325, %v749
      %v879 = vadd.f32 %v326, %v751
      %v880 = vadd.f32 %v327, %v754
      %v881 = vadd.f32 %v328, %v756
      %v882 = vadd.f32 %v329, %v759
      %v883 = vadd.f32 %v330, %v761
      %v884 = vadd.f32 %v331, %v764
      %v885 = vadd.f32 %v332, %v766
      %v886 = vadd.f32 %v333, %v769
      %v887 = vadd.f32 %v334, %v771
      %v888 = vadd.f32 %v335, %v774
      %v889 = vadd.f32 %v336, %v776
      %v890 = vadd.f32 %v337, %v779
      %v891 = vadd.f32 %v338, %v781
      %v892 = vadd.f32 %v339, %v784
      %v893 = vadd.f32 %v340, %v786
      %v894 = vadd.f32 %v341, %v789
      %v895 = vadd.f32 %v342, %v791
      %v896 = vadd.f32 %v343, %v794
      %v897 = vadd.f32 %v344, %v796
      %v898 = vadd.f32 %v345, %v799
      %v899 = vadd.f32 %v346, %v801
      %v900 = vadd.f32 %v347, %v804
      %v901 = vadd.f32 %v348, %v806
      %v902 = vadd.f32 %v349, %v809
      %v903 = vadd.f32 %v350, %v811
      %v904 = vadd.f32 %v351, %v814
      %v905 = vadd.f32 %v352, %v816
      %v906 = vadd.f32 %v353, %v819
      %v907 = vadd.f32 %v354, %v821
      %v908 = vadd.f32 %v355, %v824
      %v909 = vadd.f32 %v356, %v826
      %v910 = vadd.f32 %v357, %v829
      %v911 = vadd.f32 %v358, %v831
      %v912 = vadd.f32 %v359, %v834
      %v913 = vadd.f32 %v360, %v836
      %v914 = vadd.f32 %v361, %v839
      %v915 = vadd.f32 %v362, %v841
      %v916 = vadd.f32 %v363, %v844
      %v917 = vadd.f32 %v364, %v846
      %v918 = vadd.f32 %v365, %v849
      %v919 = vadd.f32 %v366, %v851
      %v920 = vadd.f32 %v367, %v854
      %v921 = vadd.f32 %v368, %v856
      %922 = vst [vmem:[%s235] sm:$0xff] %v858
      %923 = vst [vmem:[%s235 + $0x8] sm:$0xff] %v859
      %924 = vst [vmem:[%s235 + $0x10] sm:$0xff] %v860
      %925 = vst [vmem:[%s235 + $0x18] sm:$0xff] %v861
      %926 = vst [vmem:[%s235 + $0x20] sm:$0xff] %v862
      %927 = vst [vmem:[%s235 + $0x28] sm:$0xff] %v863
      %928 = vst [vmem:[%s235 + $0x30] sm:$0xff] %v864
      %929 = vst [vmem:[%s235 + $0x38] sm:$0xff] %v865
      %930 = vst [vmem:[%s235 + $0x40] sm:$0xff] %v866
      %931 = vst [vmem:[%s235 + $0x48] sm:$0xff] %v867
      %932 = vst [vmem:[%s235 + $0x50] sm:$0xff] %v868
      %933 = vst [vmem:[%s235 + $0x58] sm:$0xff] %v869
      %934 = vst [vmem:[%s235 + $0x60] sm:$0xff] %v870
      %935 = vst [vmem:[%s235 + $0x68] sm:$0xff] %v871
      %936 = vst [vmem:[%s235 + $0x70] sm:$0xff] %v872
      %937 = vst [vmem:[%s235 + $0x78] sm:$0xff] %v873
      %938 = vst [vmem:[%s235 + $0x80] sm:$0xff] %v874
      %939 = vst [vmem:[%s235 + $0x88] sm:$0xff] %v875
      %940 = vst [vmem:[%s235 + $0x90] sm:$0xff] %v876
      %941 = vst [vmem:[%s235 + $0x98] sm:$0xff] %v877
      %942 = vst [vmem:[%s235 + $0xa0] sm:$0xff] %v878
      %943 = vst [vmem:[%s235 + $0xa8] sm:$0xff] %v879
      %944 = vst [vmem:[%s235 + $0xb0] sm:$0xff] %v880
      %945 = vst [vmem:[%s235 + $0xb8] sm:$0xff] %v881
      %946 = vst [vmem:[%s235 + $0xc0] sm:$0xff] %v882
      %947 = vst [vmem:[%s235 + $0xc8] sm:$0xff] %v883
      %948 = vst [vmem:[%s235 + $0xd0] sm:$0xff] %v884
      %949 = vst [vmem:[%s235 + $0xd8] sm:$0xff] %v885
      %950 = vst [vmem:[%s235 + $0xe0] sm:$0xff] %v886
      %951 = vst [vmem:[%s235 + $0xe8] sm:$0xff] %v887
      %952 = vst [vmem:[%s235 + $0xf0] sm:$0xff] %v888
      %953 = vst [vmem:[%s235 + $0xf8] sm:$0xff] %v889
      %954 = vst [vmem:[%s235 + $0x100] sm:$0xff] %v890
      %955 = vst [vmem:[%s235 + $0x108] sm:$0xff] %v891
      %956 = vst [vmem:[%s235 + $0x110] sm:$0xff] %v892
      %957 = vst [vmem:[%s235 + $0x118] sm:$0xff] %v893
      %958 = vst [vmem:[%s235 + $0x120] sm:$0xff] %v894
      %959 = vst [vmem:[%s235 + $0x128] sm:$0xff] %v895
      %960 = vst [vmem:[%s235 + $0x130] sm:$0xff] %v896
      %961 = vst [vmem:[%s235 + $0x138] sm:$0xff] %v897
      %962 = vst [vmem:[%s235 + $0x140] sm:$0xff] %v898
      %963 = vst [vmem:[%s235 + $0x148] sm:$0xff] %v899
      %964 = vst [vmem:[%s235 + $0x150] sm:$0xff] %v900
      %965 = vst [vmem:[%s235 + $0x158] sm:$0xff] %v901
      %966 = vst [vmem:[%s235 + $0x160] sm:$0xff] %v902
      %967 = vst [vmem:[%s235 + $0x168] sm:$0xff] %v903
      %968 = vst [vmem:[%s235 + $0x170] sm:$0xff] %v904
      %969 = vst [vmem:[%s235 + $0x178] sm:$0xff] %v905
      %970 = vst [vmem:[%s235 + $0x180] sm:$0xff] %v906
      %971 = vst [vmem:[%s235 + $0x188] sm:$0xff] %v907
      %972 = vst [vmem:[%s235 + $0x190] sm:$0xff] %v908
      %973 = vst [vmem:[%s235 + $0x198] sm:$0xff] %v909
      %974 = vst [vmem:[%s235 + $0x1a0] sm:$0xff] %v910
      %975 = vst [vmem:[%s235 + $0x1a8] sm:$0xff] %v911
      %976 = vst [vmem:[%s235 + $0x1b0] sm:$0xff] %v912
      %977 = vst [vmem:[%s235 + $0x1b8] sm:$0xff] %v913
      %978 = vst [vmem:[%s235 + $0x1c0] sm:$0xff] %v914
      %979 = vst [vmem:[%s235 + $0x1c8] sm:$0xff] %v915
      %980 = vst [vmem:[%s235 + $0x1d0] sm:$0xff] %v916
      %981 = vst [vmem:[%s235 + $0x1d8] sm:$0xff] %v917
      %982 = vst [vmem:[%s235 + $0x1e0] sm:$0xff] %v918
      %983 = vst [vmem:[%s235 + $0x1e8] sm:$0xff] %v919
      %984 = vst [vmem:[%s235 + $0x1f0] sm:$0xff] %v920
      %985 = vst [vmem:[%s235 + $0x1f8] sm:$0xff] %v921
      // Predicated region
      $region33: #{_lambda_.7} parent=27 // pred_check
        %p986 = pneg %p237
      $region34: #{_lambda_.7} parent=27 // pred_check_branch
        %988 = sbr.rel (%p986) target = $region36
      $region35: #{_lambda_.7} parent=27 // pred_region
        %v989 = vld [vmem:[%s235] sm:$0xff]
        %v990 = vld [vmem:[%s235 + $0x8] sm:$0xff]
        %v991 = vld [vmem:[%s235 + $0x10] sm:$0xff]
        %v992 = vld [vmem:[%s235 + $0x18] sm:$0xff]
        %v993 = vld [vmem:[%s235 + $0x20] sm:$0xff]
        %v994 = vld [vmem:[%s235 + $0x28] sm:$0xff]
        %v995 = vld [vmem:[%s235 + $0x30] sm:$0xff]
        %v996 = vld [vmem:[%s235 + $0x38] sm:$0xff]
        %v997 = vld [vmem:[%s235 + $0x40] sm:$0xff]
        %v998 = vld [vmem:[%s235 + $0x48] sm:$0xff]
        %v999 = vld [vmem:[%s235 + $0x50] sm:$0xff]
        %v1000 = vld [vmem:[%s235 + $0x58] sm:$0xff]
        %v1001 = vld [vmem:[%s235 + $0x60] sm:$0xff]
        %v1002 = vld [vmem:[%s235 + $0x68] sm:$0xff]
        %v1003 = vld [vmem:[%s235 + $0x70] sm:$0xff]
        %v1004 = vld [vmem:[%s235 + $0x78] sm:$0xff]
        %v1005 = vld [vmem:[%s235 + $0x80] sm:$0xff]
        %v1006 = vld [vmem:[%s235 + $0x88] sm:$0xff]
        %v1007 = vld [vmem:[%s235 + $0x90] sm:$0xff]
        %v1008 = vld [vmem:[%s235 + $0x98] sm:$0xff]
        %v1009 = vld [vmem:[%s235 + $0xa0] sm:$0xff]
        %v1010 = vld [vmem:[%s235 + $0xa8] sm:$0xff]
        %v1011 = vld [vmem:[%s235 + $0xb0] sm:$0xff]
        %v1012 = vld [vmem:[%s235 + $0xb8] sm:$0xff]
        %v1013 = vld [vmem:[%s235 + $0xc0] sm:$0xff]
        %v1014 = vld [vmem:[%s235 + $0xc8] sm:$0xff]
        %v1015 = vld [vmem:[%s235 + $0xd0] sm:$0xff]
        %v1016 = vld [vmem:[%s235 + $0xd8] sm:$0xff]
        %v1017 = vld [vmem:[%s235 + $0xe0] sm:$0xff]
        %v1018 = vld [vmem:[%s235 + $0xe8] sm:$0xff]
        %v1019 = vld [vmem:[%s235 + $0xf0] sm:$0xff]
        %v1020 = vld [vmem:[%s235 + $0xf8] sm:$0xff]
        %v1021 = vld [vmem:[%s235 + $0x100] sm:$0xff]
        %v1022 = vld [vmem:[%s235 + $0x108] sm:$0xff]
        %v1023 = vld [vmem:[%s235 + $0x110] sm:$0xff]
        %v1024 = vld [vmem:[%s235 + $0x118] sm:$0xff]
        %v1025 = vld [vmem:[%s235 + $0x120] sm:$0xff]
        %v1026 = vld [vmem:[%s235 + $0x128] sm:$0xff]
        %v1027 = vld [vmem:[%s235 + $0x130] sm:$0xff]
        %v1028 = vld [vmem:[%s235 + $0x138] sm:$0xff]
        %v1029 = vld [vmem:[%s235 + $0x140] sm:$0xff]
        %v1030 = vld [vmem:[%s235 + $0x148] sm:$0xff]
        %v1031 = vld [vmem:[%s235 + $0x150] sm:$0xff]
        %v1032 = vld [vmem:[%s235 + $0x158] sm:$0xff]
        %v1033 = vld [vmem:[%s235 + $0x160] sm:$0xff]
        %v1034 = vld [vmem:[%s235 + $0x168] sm:$0xff]
        %v1035 = vld [vmem:[%s235 + $0x170] sm:$0xff]
        %v1036 = vld [vmem:[%s235 + $0x178] sm:$0xff]
        %v1037 = vld [vmem:[%s235 + $0x180] sm:$0xff]
        %v1038 = vld [vmem:[%s235 + $0x188] sm:$0xff]
        %v1039 = vld [vmem:[%s235 + $0x190] sm:$0xff]
        %v1040 = vld [vmem:[%s235 + $0x198] sm:$0xff]
        %v1041 = vld [vmem:[%s235 + $0x1a0] sm:$0xff]
        %v1042 = vld [vmem:[%s235 + $0x1a8] sm:$0xff]
        %v1043 = vld [vmem:[%s235 + $0x1b0] sm:$0xff]
        %v1044 = vld [vmem:[%s235 + $0x1b8] sm:$0xff]
        %v1045 = vld [vmem:[%s235 + $0x1c0] sm:$0xff]
        %v1046 = vld [vmem:[%s235 + $0x1c8] sm:$0xff]
        %v1047 = vld [vmem:[%s235 + $0x1d0] sm:$0xff]
        %v1048 = vld [vmem:[%s235 + $0x1d8] sm:$0xff]
        %v1049 = vld [vmem:[%s235 + $0x1e0] sm:$0xff]
        %v1050 = vld [vmem:[%s235 + $0x1e8] sm:$0xff]
        %v1051 = vld [vmem:[%s235 + $0x1f0] sm:$0xff]
        %v1052 = vld [vmem:[%s235 + $0x1f8] sm:$0xff]
        %v1053 = vtanh.pop %v989
        %v1054 = vtanh.pop %v990
        %v1055 = vtanh.pop %v991
        %v1056 = vtanh.pop %v992
        %v1057 = vtanh.pop %v993
        %v1058 = vtanh.pop %v994
        %v1059 = vtanh.pop %v995
        %v1060 = vtanh.pop %v996
        %v1061 = vtanh.pop %v997
        %v1062 = vtanh.pop %v998
        %v1063 = vtanh.pop %v999
        %v1064 = vtanh.pop %v1000
        %v1065 = vtanh.pop %v1001
        %v1066 = vtanh.pop %v1002
        %v1067 = vtanh.pop %v1003
        %v1068 = vtanh.pop %v1004
        %v1069 = vtanh.pop %v1005
        %v1070 = vtanh.pop %v1006
        %v1071 = vtanh.pop %v1007
        %v1072 = vtanh.pop %v1008
        %v1073 = vtanh.pop %v1009
        %v1074 = vtanh.pop %v1010
        %v1075 = vtanh.pop %v1011
        %v1076 = vtanh.pop %v1012
        %v1077 = vtanh.pop %v1013
        %v1078 = vtanh.pop %v1014
        %v1079 = vtanh.pop %v1015
        %v1080 = vtanh.pop %v1016
        %v1081 = vtanh.pop %v1017
        %v1082 = vtanh.pop %v1018
        %v1083 = vtanh.pop %v1019
        %v1084 = vtanh.pop %v1020
        %v1085 = vtanh.pop %v1021
        %v1086 = vtanh.pop %v1022
        %v1087 = vtanh.pop %v1023
        %v1088 = vtanh.pop %v1024
        %v1089 = vtanh.pop %v1025
        %v1090 = vtanh.pop %v1026
        %v1091 = vtanh.pop %v1027
        %v1092 = vtanh.pop %v1028
        %v1093 = vtanh.pop %v1029
        %v1094 = vtanh.pop %v1030
        %v1095 = vtanh.pop %v1031
        %v1096 = vtanh.pop %v1032
        %v1097 = vtanh.pop %v1033
        %v1098 = vtanh.pop %v1034
        %v1099 = vtanh.pop %v1035
        %v1100 = vtanh.pop %v1036
        %v1101 = vtanh.pop %v1037
        %v1102 = vtanh.pop %v1038
        %v1103 = vtanh.pop %v1039
        %v1104 = vtanh.pop %v1040
        %v1105 = vtanh.pop %v1041
        %v1106 = vtanh.pop %v1042
        %v1107 = vtanh.pop %v1043
        %v1108 = vtanh.pop %v1044
        %v1109 = vtanh.pop %v1045
        %v1110 = vtanh.pop %v1046
        %v1111 = vtanh.pop %v1047
        %v1112 = vtanh.pop %v1048
        %v1113 = vtanh.pop %v1049
        %v1114 = vtanh.pop %v1050
        %v1115 = vtanh.pop %v1051
        %v1116 = vtanh.pop %v1052
        %1117 = vst [vmem:[%s235] sm:$0xff] %v1053
        %1118 = vst [vmem:[%s235 + $0x8] sm:$0xff] %v1054
        %1119 = vst [vmem:[%s235 + $0x10] sm:$0xff] %v1055
        %1120 = vst [vmem:[%s235 + $0x18] sm:$0xff] %v1056
        %1121 = vst [vmem:[%s235 + $0x20] sm:$0xff] %v1057
        %1122 = vst [vmem:[%s235 + $0x28] sm:$0xff] %v1058
        %1123 = vst [vmem:[%s235 + $0x30] sm:$0xff] %v1059
        %1124 = vst [vmem:[%s235 + $0x38] sm:$0xff] %v1060
        %1125 = vst [vmem:[%s235 + $0x40] sm:$0xff] %v1061
        %1126 = vst [vmem:[%s235 + $0x48] sm:$0xff] %v1062
        %1127 = vst [vmem:[%s235 + $0x50] sm:$0xff] %v1063
        %1128 = vst [vmem:[%s235 + $0x58] sm:$0xff] %v1064
        %1129 = vst [vmem:[%s235 + $0x60] sm:$0xff] %v1065
        %1130 = vst [vmem:[%s235 + $0x68] sm:$0xff] %v1066
        %1131 = vst [vmem:[%s235 + $0x70] sm:$0xff] %v1067
        %1132 = vst [vmem:[%s235 + $0x78] sm:$0xff] %v1068
        %1133 = vst [vmem:[%s235 + $0x80] sm:$0xff] %v1069
        %1134 = vst [vmem:[%s235 + $0x88] sm:$0xff] %v1070
        %1135 = vst [vmem:[%s235 + $0x90] sm:$0xff] %v1071
        %1136 = vst [vmem:[%s235 + $0x98] sm:$0xff] %v1072
        %1137 = vst [vmem:[%s235 + $0xa0] sm:$0xff] %v1073
        %1138 = vst [vmem:[%s235 + $0xa8] sm:$0xff] %v1074
        %1139 = vst [vmem:[%s235 + $0xb0] sm:$0xff] %v1075
        %1140 = vst [vmem:[%s235 + $0xb8] sm:$0xff] %v1076
        %1141 = vst [vmem:[%s235 + $0xc0] sm:$0xff] %v1077
        %1142 = vst [vmem:[%s235 + $0xc8] sm:$0xff] %v1078
        %1143 = vst [vmem:[%s235 + $0xd0] sm:$0xff] %v1079
        %1144 = vst [vmem:[%s235 + $0xd8] sm:$0xff] %v1080
        %1145 = vst [vmem:[%s235 + $0xe0] sm:$0xff] %v1081
        %1146 = vst [vmem:[%s235 + $0xe8] sm:$0xff] %v1082
        %1147 = vst [vmem:[%s235 + $0xf0] sm:$0xff] %v1083
        %1148 = vst [vmem:[%s235 + $0xf8] sm:$0xff] %v1084
        %1149 = vst [vmem:[%s235 + $0x100] sm:$0xff] %v1085
        %1150 = vst [vmem:[%s235 + $0x108] sm:$0xff] %v1086
        %1151 = vst [vmem:[%s235 + $0x110] sm:$0xff] %v1087
        %1152 = vst [vmem:[%s235 + $0x118] sm:$0xff] %v1088
        %1153 = vst [vmem:[%s235 + $0x120] sm:$0xff] %v1089
        %1154 = vst [vmem:[%s235 + $0x128] sm:$0xff] %v1090
        %1155 = vst [vmem:[%s235 + $0x130] sm:$0xff] %v1091
        %1156 = vst [vmem:[%s235 + $0x138] sm:$0xff] %v1092
        %1157 = vst [vmem:[%s235 + $0x140] sm:$0xff] %v1093
        %1158 = vst [vmem:[%s235 + $0x148] sm:$0xff] %v1094
        %1159 = vst [vmem:[%s235 + $0x150] sm:$0xff] %v1095
        %1160 = vst [vmem:[%s235 + $0x158] sm:$0xff] %v1096
        %1161 = vst [vmem:[%s235 + $0x160] sm:$0xff] %v1097
        %1162 = vst [vmem:[%s235 + $0x168] sm:$0xff] %v1098
        %1163 = vst [vmem:[%s235 + $0x170] sm:$0xff] %v1099
        %1164 = vst [vmem:[%s235 + $0x178] sm:$0xff] %v1100
        %1165 = vst [vmem:[%s235 + $0x180] sm:$0xff] %v1101
        %1166 = vst [vmem:[%s235 + $0x188] sm:$0xff] %v1102
        %1167 = vst [vmem:[%s235 + $0x190] sm:$0xff] %v1103
        %1168 = vst [vmem:[%s235 + $0x198] sm:$0xff] %v1104
        %1169 = vst [vmem:[%s235 + $0x1a0] sm:$0xff] %v1105
        %1170 = vst [vmem:[%s235 + $0x1a8] sm:$0xff] %v1106
        %1171 = vst [vmem:[%s235 + $0x1b0] sm:$0xff] %v1107
        %1172 = vst [vmem:[%s235 + $0x1b8] sm:$0xff] %v1108
        %1173 = vst [vmem:[%s235 + $0x1c0] sm:$0xff] %v1109
        %1174 = vst [vmem:[%s235 + $0x1c8] sm:$0xff] %v1110
        %1175 = vst [vmem:[%s235 + $0x1d0] sm:$0xff] %v1111
        %1176 = vst [vmem:[%s235 + $0x1d8] sm:$0xff] %v1112
        %1177 = vst [vmem:[%s235 + $0x1e0] sm:$0xff] %v1113
        %1178 = vst [vmem:[%s235 + $0x1e8] sm:$0xff] %v1114
        %1179 = vst [vmem:[%s235 + $0x1f0] sm:$0xff] %v1115
        %1180 = vst [vmem:[%s235 + $0x1f8] sm:$0xff] %v1116
      $region36: #{_lambda_.7} parent=27 // pred_fallthru
        _
      %s1181 = smul.u32 64, %s19
      %p1182 = scmp.lt.s32.totalorder %s18, 3
      %s1183 = scalar_select %p1182, %s18, 3
      %p1184 = scmp.lt.s32.totalorder %s1181, 63
      %s1185 = scalar_select %p1184, %s1181, 63
      %s1186 = smul.addr %s1183, 64
      %s1187 = sadd.s32 %s1185, %s1186
      %s1188 = smul.addr %s1187, 8
      %s1189 = scalar_lea.vmem %s2, %s1188
      // Predicated region
      $region37: #{_lambda_.7} parent=27 // pred_check
        %p1190 = pneg %p110
      $region38: #{_lambda_.7} parent=27 // pred_check_branch
        %1192 = sbr.rel (%p1190) target = $region40
      $region39: #{_lambda_.7} parent=27 // pred_region
        %s1193 = smul.u32 64, %s19
      $region40: #{_lambda_.7} parent=27 // pred_fallthru
        _
    $region28: #{_lambda_.7} parent=5 // pred_fallthru
      _
    %p1194 = scmp.le.s32.totalorder 2, %s8
    // Predicated region
    $region41: #{_lambda_.7} parent=5 // pred_check
      %p1195 = pneg %p1194
    $region42: #{_lambda_.7} parent=5 // pred_check_branch
      %1197 = sbr.rel (%p1195) target = $region44
    $region43: #{_lambda_.7} parent=5 // pred_region
      %s1198 = ssub.s32 %s8, 2
      // Predicated region
      $region45: #{_lambda_.7} parent=43 // pred_check
        %p1199 = pneg %p116
      $region46: #{_lambda_.7} parent=43 // pred_check_branch
        %1201 = sbr.rel (%p1199) target = $region48
      $region47: #{_lambda_.7} parent=43 // pred_region
        %s1202 = smul.u32 64, %s22
        %p1203 = scmp.lt.s32.totalorder %s21, 3
        %s1204 = scalar_select %p1203, %s21, 3
        %p1205 = scmp.lt.s32.totalorder %s1202, 63
        %s1206 = scalar_select %p1205, %s1202, 63
        %s1207 = smul.addr %s1204, 64
        %s1208 = sadd.s32 %s1206, %s1207
        %s1209 = smul.addr %s1208, 8
        %s1210 = scalar_lea.vmem %s2, %s1209
      $region48: #{_lambda_.7} parent=43 // pred_fallthru
        _
    $region44: #{_lambda_.7} parent=5 // pred_fallthru
      _
  $region6: #{_lambda_.7} parent=0 // loop_footer
    %s12 = sadd.s32 1, %s8
  $region7: #{_lambda_.7} parent=0 // loop_footer_branch
    %7 = sbr.rel target = $region3
  $region8: #{_lambda_.7} parent=0 // loop_exit
    _

</llo_original>
